<compile_context>
chip_gen: v7x
topology: tpu7x:2x2x1
jax: 0.10.0
libtpu: 0.0.40
codegen_flags: <defaults>
</compile_context>

<pallas_src>
import jax
import jax.numpy as jnp
from jax import lax
from jax.experimental import pallas as pl
from jax.experimental.pallas import tpu as pltpu

B = 2
NUM_GRIDS = 2
H, W = 8, 8 * NUM_GRIDS          # 8 x 16
C1, C2 = 16, 32
HW = H * W                       # 128
FLAT_IN = H * W                  # 128  -> fc_overall1 input
FLAT_CONV = C2 * H * W           # 4096 -> fc1 input
PAD_H1 = 128                     # fc_overall hidden 80 padded to a full lane tile
PAD_H2 = 128                     # fc1 hidden 100 padded to a full lane tile


# --------------------------------------------------------------------------- #
# Fused Pallas kernel
# --------------------------------------------------------------------------- #
def fused_kernel(xflat_ref, xpad_ref,
                 w1_ref, b1_ref, w2t_ref, b2_ref,
                 wo1_ref, bo1_ref, wo2_ref, bo2_ref,
                 wfc1_ref, bfc1_ref, wfc2_ref, bfc2_ref,
                 wcx_ref, wca_ref, bc_ref,
                 out_ref, y1pad_ref):
    """Whole forward pass in one kernel.

    xflat_ref : (B, 128)           heatmap1.view(B, -1)
    xpad_ref  : (B, H+2, W+2, 1)   zero-padded NHWC input
    w1_ref    : (3, 3, C1)                 conv1 weights (HWC)
    w2t_ref   : (3, 3, C2, C1)             conv2 weights, (co, ci) per tap
    b2_ref    : (C2, 1)                    conv2 bias as a column
    wo1/wo2   : fc_overall1/2, transposed + zero-padded 80 -> 128
    wfc1      : (4096, 128) bf16, fc1^T zero-padded 100 -> 128 (PyTorch (c,h,w) order)
    wfc2      : (128, 2)    fc2^T, rows zero-padded
    wcx/wca   : fc_combined weight split for [x2 | activity]
    out_ref   : (B, 4)  columns 0:2 = activity, 2:4 = combined
    y1pad_ref : (B, H+2, W+2, C1) VMEM scratch (zero-padded conv1 output)
    """
    relu = lambda t: jnp.maximum(t, 0.0)

    # ---- conv1 (1->16, 3x3, pad 1) + ReLU : 9 shifted broadcast MACs ----
    acc1 = jnp.zeros((B, H, W, C1), jnp.float32)
    for dh in range(3):
        for dw in range(3):
            win = xpad_ref[:, dh:dh + H, dw:dw + W, :]          # (B,H,W,1)
            acc1 = acc1 + win * w1_ref[dh, dw, :]               # lane-broadcast over C1
    y1 = relu(acc1 + b1_ref[...])                               # (B,H,W,C1)

    # zero-padded copy so conv2 can read shifted windows
    y1pad_ref[...] = jnp.zeros(y1pad_ref.shape, y1pad_ref.dtype)
    y1pad_ref[:, 1:H + 1, 1:W + 1, :] = y1

    # ---- conv2 (16->32, 3x3, pad 1) + ReLU, accumulated TRANSPOSED: (C2, B*H*W) ----
    # acc2t[co, b*HW + h*W + w] = sum_{dh,dw,ci} w2[co,ci,dh,dw] * y1pad[b,h+dh,w+dw,ci]
    trans_b = (((1,), (1,)), ((), ()))
    acc2t = jnp.zeros((C2, B * HW), jnp.float32)
    for dh in range(3):
        for dw in range(3):
            win = y1pad_ref[:, dh:dh + H, dw:dw + W, :]         # (B,H,W,C1)
            win2 = win.reshape(B * HW, C1)                      # (256, 16), rows (b,h,w)
            acc2t = acc2t + lax.dot_general(
                w2t_ref[dh, dw], win2, dimension_numbers=trans_b,
                preferred_element_type=jnp.float32)             # (32, 256)
    z2t = relu(acc2t + b2_ref[...])                             # (C2, B*HW)

    # ---- fc_overall branch (this is what the PyTorch module returns) ----
    a = relu(jnp.dot(xflat_ref[...], wo1_ref[...],
                     preferred_element_type=jnp.float32) + bo1_ref[...])   # (B, 128)
    act = relu(jnp.dot(a, wo2_ref[...],
                       preferred_element_type=jnp.float32) + bo2_ref[...])  # (B, 2)
    out_ref[:, 0:2] = act

    # ---- conv branch: fc1 -> fc2 -> fc_combined, one batch row at a time ----
    for b in range(B):
        blk = z2t[:, b * HW:(b + 1) * HW]                       # (C2, HW) = (32, 128)
        # PyTorch NCHW flatten (c, h, w): lane-aligned concat of the 32 channel rows
        row = jnp.concatenate([blk[c:c + 1, :] for c in range(C2)], axis=1)  # (1, 4096)
        h1 = relu(jnp.dot(row.astype(jnp.bfloat16), wfc1_ref[...],
                          preferred_element_type=jnp.float32) + bfc1_ref[...])  # (1, 128)
        x2 = relu(jnp.dot(h1, wfc2_ref[...],
                          preferred_element_type=jnp.float32) + bfc2_ref[...])  # (1, 2)
        # fc_combined(cat([x2, act], -1)) as a split matmul (no lane concat needed)
        comb = relu(jnp.dot(x2, wcx_ref[...], preferred_element_type=jnp.float32)
                    + jnp.dot(act[b:b + 1, :], wca_ref[...],
                              preferred_element_type=jnp.float32)
                    + bc_ref[...])                              # (1, 2)
        out_ref[b:b + 1, 2:4] = comb


# --------------------------------------------------------------------------- #
# pallas_call wrapper (everything fits whole in VMEM -> no grid)
# --------------------------------------------------------------------------- #
_VMEM = pl.BlockSpec(memory_space=pltpu.MemorySpace.VMEM)


def run_fused(xflat, xpad4, prepped):
    return pl.pallas_call(
        fused_kernel,
        out_shape=jax.ShapeDtypeStruct((B, 4), jnp.float32),
        in_specs=[_VMEM] * 17,
        out_specs=_VMEM,
        scratch_shapes=[pltpu.VMEM((B, H + 2, W + 2, C1), jnp.float32)],
    )(xflat, xpad4, *prepped)


# --------------------------------------------------------------------------- #
# Parameters (deterministic xavier-uniform weights, zero biases)
# --------------------------------------------------------------------------- #
def xavier_uniform(key, shape, fan_in, fan_out):
    bound = float(jnp.sqrt(6.0 / (fan_in + fan_out)))
    return jax.random.uniform(key, shape, jnp.float32, -bound, bound)


def init_params(key):
    ks = jax.random.split(key, 7)
    p = {}
    p["conv1_w"] = xavier_uniform(ks[0], (C1, 1, 3, 3), 1 * 9, C1 * 9)     # OIHW
    p["conv1_b"] = jnp.zeros((C1,), jnp.float32)
    p["conv2_w"] = xavier_uniform(ks[1], (C2, C1, 3, 3), C1 * 9, C2 * 9)   # OIHW
    p["conv2_b"] = jnp.zeros((C2,), jnp.float32)
    p["fc_overall1_w"] = xavier_uniform(ks[2], (80, FLAT_IN), FLAT_IN, 80)
    p["fc_overall1_b"] = jnp.zeros((80,), jnp.float32)
    p["fc_overall2_w"] = xavier_uniform(ks[3], (2, 80), 80, 2)
    p["fc_overall2_b"] = jnp.zeros((2,), jnp.float32)
    p["fc1_w"] = xavier_uniform(ks[4], (100, FLAT_CONV), FLAT_CONV, 100)
    p["fc1_b"] = jnp.zeros((100,), jnp.float32)
    p["fc2_w"] = xavier_uniform(ks[5], (2, 100), 100, 2)
    p["fc2_b"] = jnp.zeros((2,), jnp.float32)
    p["fc_combined_w"] = xavier_uniform(ks[6], (2, 4), 4, 2)
    p["fc_combined_b"] = jnp.zeros((2,), jnp.float32)
    return p


def prepare_params(p):
    """One-time weight transforms: transposes, lane padding, bf16 cast, layouts."""
    w1 = jnp.transpose(p["conv1_w"][:, 0], (1, 2, 0))                       # (3,3,C1)
    b1 = p["conv1_b"][None, :]                                              # (1,C1)
    w2t = jnp.transpose(p["conv2_w"], (2, 3, 0, 1))                         # (3,3,C2,C1)
    b2c = p["conv2_b"][:, None]                                             # (C2,1)
    wo1 = jnp.pad(p["fc_overall1_w"].T, ((0, 0), (0, PAD_H1 - 80)))         # (128,128)
    bo1 = jnp.pad(p["fc_overall1_b"], (0, PAD_H1 - 80))[None, :]            # (1,128)
    wo2 = jnp.pad(p["fc_overall2_w"].T, ((0, PAD_H1 - 80), (0, 0)))         # (128,2)
    bo2 = p["fc_overall2_b"][None, :]
    wfc1 = jnp.pad(p["fc1_w"].T, ((0, 0), (0, PAD_H2 - 100))).astype(jnp.bfloat16)  # (4096,128) bf16
    bfc1 = jnp.pad(p["fc1_b"], (0, PAD_H2 - 100))[None, :]                  # (1,128)
    wfc2 = jnp.pad(p["fc2_w"].T, ((0, PAD_H2 - 100), (0, 0)))               # (128,2)
    bfc2 = p["fc2_b"][None, :]
    wc = p["fc_combined_w"]                                                 # (2,4)
    wcx = wc[:, :2].T
    wca = wc[:, 2:].T
    bc = p["fc_combined_b"][None, :]
    return (w1, b1, w2t, b2c, wo1, bo1, wo2, bo2,
            wfc1, bfc1, wfc2, bfc2, wcx, wca, bc)


# --------------------------------------------------------------------------- #
# Forward pass (Pallas) and pure-JAX reference
# --------------------------------------------------------------------------- #
@jax.jit
def forward(heatmap1, prepped):
    xflat = heatmap1.reshape(B, FLAT_IN).astype(jnp.float32)
    xpad4 = jnp.pad(heatmap1.reshape(B, H, W),
                    ((0, 0), (1, 1), (1, 1)))[..., None].astype(jnp.float32)
    out = run_fused(xflat, xpad4, prepped)
    # The PyTorch module returns `activity`; `combined` is computed then discarded.
    return out[:, 0:2], out[:, 2:4]


def reference_forward(heatmap1, p):
    relu = jax.nn.relu
    xflat = heatmap1.reshape(heatmap1.shape[0], -1)
    act = relu(xflat @ p["fc_overall1_w"].T + p["fc_overall1_b"])
    act = relu(act @ p["fc_overall2_w"].T + p["fc_overall2_b"])
    dn = ("NCHW", "OIHW", "NCHW")
    y = relu(lax.conv_general_dilated(heatmap1, p["conv1_w"], (1, 1),
                                      ((1, 1), (1, 1)), dimension_numbers=dn)
             + p["conv1_b"][None, :, None, None])
    y = relu(lax.conv_general_dilated(y, p["conv2_w"], (1, 1),
                                      ((1, 1), (1, 1)), dimension_numbers=dn)
             + p["conv2_b"][None, :, None, None])
    yf = y.reshape(y.shape[0], -1)
    h1 = relu(yf @ p["fc1_w"].T + p["fc1_b"])
    x2 = relu(h1 @ p["fc2_w"].T + p["fc2_b"])
    comb = relu(jnp.concatenate([x2, act], axis=-1) @ p["fc_combined_w"].T
                + p["fc_combined_b"])
    return act, comb


if __name__ == "__main__":
    key = jax.random.PRNGKey(0)
    k_param, k_x = jax.random.split(key)
    params = init_params(k_param)
    prepped = prepare_params(params)
    heatmap1 = jax.random.normal(k_x, (B, 1, H, W), jnp.float32)

    activity, combined = forward(heatmap1, prepped)
    jax.block_until_ready(activity)
    jax.block_until_ready(combined)

    ref_act, ref_comb = reference_forward(heatmap1, params)
    assert activity.shape == (B, 2) and combined.shape == (B, 2)
    assert bool(jnp.all(jnp.isfinite(activity))) and bool(jnp.all(jnp.isfinite(combined)))
    assert jnp.allclose(activity, ref_act, rtol=2e-2, atol=2e-2)
    assert jnp.allclose(combined, ref_comb, rtol=2e-2, atol=2e-2)
    print("KERNEL_OK")
</pallas_src>

<mosaic_0001>
module attributes {stable_mosaic.version = 11 : i64} {
  func.func @fused_kernel(%arg0: memref<2x128xf32, #tpu.memory_space<vmem>>, %arg1: memref<2x10x18x1xf32, #tpu.memory_space<vmem>>, %arg2: memref<3x3x16xf32, #tpu.memory_space<vmem>>, %arg3: memref<1x16xf32, #tpu.memory_space<vmem>>, %arg4: memref<3x3x32x16xf32, #tpu.memory_space<vmem>>, %arg5: memref<32x1xf32, #tpu.memory_space<vmem>>, %arg6: memref<128x128xf32, #tpu.memory_space<vmem>>, %arg7: memref<1x128xf32, #tpu.memory_space<vmem>>, %arg8: memref<128x2xf32, #tpu.memory_space<vmem>>, %arg9: memref<1x2xf32, #tpu.memory_space<vmem>>, %arg10: memref<4096x128xbf16, #tpu.memory_space<vmem>>, %arg11: memref<1x128xf32, #tpu.memory_space<vmem>>, %arg12: memref<128x2xf32, #tpu.memory_space<vmem>>, %arg13: memref<1x2xf32, #tpu.memory_space<vmem>>, %arg14: memref<2x2xf32, #tpu.memory_space<vmem>>, %arg15: memref<2x2xf32, #tpu.memory_space<vmem>>, %arg16: memref<1x2xf32, #tpu.memory_space<vmem>>, %arg17: memref<2x4xf32, #tpu.memory_space<vmem>>, %arg18: memref<2x10x18x16xf32, #tpu.memory_space<vmem>>) attributes {dimension_semantics = [], scalar_prefetch = 0 : i64, scratch_operands = 1 : i64, tpu.core_type = #tpu.core_type<tc>} {
    %cst = arith.constant 0.000000e+00 : f32
    %0 = vector.broadcast %cst : f32 to vector<2x8x16x16xf32>
    %c0 = arith.constant 0 : index
    %c0_0 = arith.constant 0 : index
    %c0_1 = arith.constant 0 : index
    %c0_2 = arith.constant 0 : index
    %1 = vector.load %arg1[%c0, %c0_0, %c0_1, %c0_2] : memref<2x10x18x1xf32, #tpu.memory_space<vmem>>, vector<2x8x16x1xf32>
    %c0_3 = arith.constant 0 : index
    %c0_4 = arith.constant 0 : index
    %c0_5 = arith.constant 0 : index
    %2 = vector.load %arg2[%c0_3, %c0_4, %c0_5] : memref<3x3x16xf32, #tpu.memory_space<vmem>>, vector<1x1x16xf32>
    %3 = vector.shape_cast %2 : vector<1x1x16xf32> to vector<16xf32>
    %4 = vector.shape_cast %3 : vector<16xf32> to vector<1x1x1x16xf32>
    %5 = vector.broadcast %1 : vector<2x8x16x1xf32> to vector<2x8x16x16xf32>
    %6 = vector.broadcast %4 : vector<1x1x1x16xf32> to vector<2x8x16x16xf32>
    %7 = arith.mulf %5, %6 : vector<2x8x16x16xf32>
    %8 = arith.addf %0, %7 : vector<2x8x16x16xf32>
    %c0_6 = arith.constant 0 : index
    %c0_7 = arith.constant 0 : index
    %c1 = arith.constant 1 : index
    %c0_8 = arith.constant 0 : index
    %9 = vector.load %arg1[%c0_6, %c0_7, %c1, %c0_8] : memref<2x10x18x1xf32, #tpu.memory_space<vmem>>, vector<2x8x16x1xf32>
    %c0_9 = arith.constant 0 : index
    %c1_10 = arith.constant 1 : index
    %c0_11 = arith.constant 0 : index
    %10 = vector.load %arg2[%c0_9, %c1_10, %c0_11] : memref<3x3x16xf32, #tpu.memory_space<vmem>>, vector<1x1x16xf32>
    %11 = vector.shape_cast %10 : vector<1x1x16xf32> to vector<16xf32>
    %12 = vector.shape_cast %11 : vector<16xf32> to vector<1x1x1x16xf32>
    %13 = vector.broadcast %9 : vector<2x8x16x1xf32> to vector<2x8x16x16xf32>
    %14 = vector.broadcast %12 : vector<1x1x1x16xf32> to vector<2x8x16x16xf32>
    %15 = arith.mulf %13, %14 : vector<2x8x16x16xf32>
    %16 = arith.addf %8, %15 : vector<2x8x16x16xf32>
    %c0_12 = arith.constant 0 : index
    %c0_13 = arith.constant 0 : index
    %c2 = arith.constant 2 : index
    %c0_14 = arith.constant 0 : index
    %17 = vector.load %arg1[%c0_12, %c0_13, %c2, %c0_14] : memref<2x10x18x1xf32, #tpu.memory_space<vmem>>, vector<2x8x16x1xf32>
    %c0_15 = arith.constant 0 : index
    %c2_16 = arith.constant 2 : index
    %c0_17 = arith.constant 0 : index
    %18 = vector.load %arg2[%c0_15, %c2_16, %c0_17] : memref<3x3x16xf32, #tpu.memory_space<vmem>>, vector<1x1x16xf32>
    %19 = vector.shape_cast %18 : vector<1x1x16xf32> to vector<16xf32>
    %20 = vector.shape_cast %19 : vector<16xf32> to vector<1x1x1x16xf32>
    %21 = vector.broadcast %17 : vector<2x8x16x1xf32> to vector<2x8x16x16xf32>
    %22 = vector.broadcast %20 : vector<1x1x1x16xf32> to vector<2x8x16x16xf32>
    %23 = arith.mulf %21, %22 : vector<2x8x16x16xf32>
    %24 = arith.addf %16, %23 : vector<2x8x16x16xf32>
    %c0_18 = arith.constant 0 : index
    %c1_19 = arith.constant 1 : index
    %c0_20 = arith.constant 0 : index
    %c0_21 = arith.constant 0 : index
    %25 = vector.load %arg1[%c0_18, %c1_19, %c0_20, %c0_21] : memref<2x10x18x1xf32, #tpu.memory_space<vmem>>, vector<2x8x16x1xf32>
    %c1_22 = arith.constant 1 : index
    %c0_23 = arith.constant 0 : index
    %c0_24 = arith.constant 0 : index
    %26 = vector.load %arg2[%c1_22, %c0_23, %c0_24] : memref<3x3x16xf32, #tpu.memory_space<vmem>>, vector<1x1x16xf32>
    %27 = vector.shape_cast %26 : vector<1x1x16xf32> to vector<16xf32>
    %28 = vector.shape_cast %27 : vector<16xf32> to vector<1x1x1x16xf32>
    %29 = vector.broadcast %25 : vector<2x8x16x1xf32> to vector<2x8x16x16xf32>
    %30 = vector.broadcast %28 : vector<1x1x1x16xf32> to vector<2x8x16x16xf32>
    %31 = arith.mulf %29, %30 : vector<2x8x16x16xf32>
    %32 = arith.addf %24, %31 : vector<2x8x16x16xf32>
    %c0_25 = arith.constant 0 : index
    %c1_26 = arith.constant 1 : index
    %c1_27 = arith.constant 1 : index
    %c0_28 = arith.constant 0 : index
    %33 = vector.load %arg1[%c0_25, %c1_26, %c1_27, %c0_28] : memref<2x10x18x1xf32, #tpu.memory_space<vmem>>, vector<2x8x16x1xf32>
    %c1_29 = arith.constant 1 : index
    %c1_30 = arith.constant 1 : index
    %c0_31 = arith.constant 0 : index
    %34 = vector.load %arg2[%c1_29, %c1_30, %c0_31] : memref<3x3x16xf32, #tpu.memory_space<vmem>>, vector<1x1x16xf32>
    %35 = vector.shape_cast %34 : vector<1x1x16xf32> to vector<16xf32>
    %36 = vector.shape_cast %35 : vector<16xf32> to vector<1x1x1x16xf32>
    %37 = vector.broadcast %33 : vector<2x8x16x1xf32> to vector<2x8x16x16xf32>
    %38 = vector.broadcast %36 : vector<1x1x1x16xf32> to vector<2x8x16x16xf32>
    %39 = arith.mulf %37, %38 : vector<2x8x16x16xf32>
    %40 = arith.addf %32, %39 : vector<2x8x16x16xf32>
    %c0_32 = arith.constant 0 : index
    %c1_33 = arith.constant 1 : index
    %c2_34 = arith.constant 2 : index
    %c0_35 = arith.constant 0 : index
    %41 = vector.load %arg1[%c0_32, %c1_33, %c2_34, %c0_35] : memref<2x10x18x1xf32, #tpu.memory_space<vmem>>, vector<2x8x16x1xf32>
    %c1_36 = arith.constant 1 : index
    %c2_37 = arith.constant 2 : index
    %c0_38 = arith.constant 0 : index
    %42 = vector.load %arg2[%c1_36, %c2_37, %c0_38] : memref<3x3x16xf32, #tpu.memory_space<vmem>>, vector<1x1x16xf32>
    %43 = vector.shape_cast %42 : vector<1x1x16xf32> to vector<16xf32>
    %44 = vector.shape_cast %43 : vector<16xf32> to vector<1x1x1x16xf32>
    %45 = vector.broadcast %41 : vector<2x8x16x1xf32> to vector<2x8x16x16xf32>
    %46 = vector.broadcast %44 : vector<1x1x1x16xf32> to vector<2x8x16x16xf32>
    %47 = arith.mulf %45, %46 : vector<2x8x16x16xf32>
    %48 = arith.addf %40, %47 : vector<2x8x16x16xf32>
    %c0_39 = arith.constant 0 : index
    %c2_40 = arith.constant 2 : index
    %c0_41 = arith.constant 0 : index
    %c0_42 = arith.constant 0 : index
    %49 = vector.load %arg1[%c0_39, %c2_40, %c0_41, %c0_42] : memref<2x10x18x1xf32, #tpu.memory_space<vmem>>, vector<2x8x16x1xf32>
    %c2_43 = arith.constant 2 : index
    %c0_44 = arith.constant 0 : index
    %c0_45 = arith.constant 0 : index
    %50 = vector.load %arg2[%c2_43, %c0_44, %c0_45] : memref<3x3x16xf32, #tpu.memory_space<vmem>>, vector<1x1x16xf32>
    %51 = vector.shape_cast %50 : vector<1x1x16xf32> to vector<16xf32>
    %52 = vector.shape_cast %51 : vector<16xf32> to vector<1x1x1x16xf32>
    %53 = vector.broadcast %49 : vector<2x8x16x1xf32> to vector<2x8x16x16xf32>
    %54 = vector.broadcast %52 : vector<1x1x1x16xf32> to vector<2x8x16x16xf32>
    %55 = arith.mulf %53, %54 : vector<2x8x16x16xf32>
    %56 = arith.addf %48, %55 : vector<2x8x16x16xf32>
    %c0_46 = arith.constant 0 : index
    %c2_47 = arith.constant 2 : index
    %c1_48 = arith.constant 1 : index
    %c0_49 = arith.constant 0 : index
    %57 = vector.load %arg1[%c0_46, %c2_47, %c1_48, %c0_49] : memref<2x10x18x1xf32, #tpu.memory_space<vmem>>, vector<2x8x16x1xf32>
    %c2_50 = arith.constant 2 : index
    %c1_51 = arith.constant 1 : index
    %c0_52 = arith.constant 0 : index
    %58 = vector.load %arg2[%c2_50, %c1_51, %c0_52] : memref<3x3x16xf32, #tpu.memory_space<vmem>>, vector<1x1x16xf32>
    %59 = vector.shape_cast %58 : vector<1x1x16xf32> to vector<16xf32>
    %60 = vector.shape_cast %59 : vector<16xf32> to vector<1x1x1x16xf32>
    %61 = vector.broadcast %57 : vector<2x8x16x1xf32> to vector<2x8x16x16xf32>
    %62 = vector.broadcast %60 : vector<1x1x1x16xf32> to vector<2x8x16x16xf32>
    %63 = arith.mulf %61, %62 : vector<2x8x16x16xf32>
    %64 = arith.addf %56, %63 : vector<2x8x16x16xf32>
    %c0_53 = arith.constant 0 : index
    %c2_54 = arith.constant 2 : index
    %c2_55 = arith.constant 2 : index
    %c0_56 = arith.constant 0 : index
    %65 = vector.load %arg1[%c0_53, %c2_54, %c2_55, %c0_56] : memref<2x10x18x1xf32, #tpu.memory_space<vmem>>, vector<2x8x16x1xf32>
    %c2_57 = arith.constant 2 : index
    %c2_58 = arith.constant 2 : index
    %c0_59 = arith.constant 0 : index
    %66 = vector.load %arg2[%c2_57, %c2_58, %c0_59] : memref<3x3x16xf32, #tpu.memory_space<vmem>>, vector<1x1x16xf32>
    %67 = vector.shape_cast %66 : vector<1x1x16xf32> to vector<16xf32>
    %68 = vector.shape_cast %67 : vector<16xf32> to vector<1x1x1x16xf32>
    %69 = vector.broadcast %65 : vector<2x8x16x1xf32> to vector<2x8x16x16xf32>
    %70 = vector.broadcast %68 : vector<1x1x1x16xf32> to vector<2x8x16x16xf32>
    %71 = arith.mulf %69, %70 : vector<2x8x16x16xf32>
    %72 = arith.addf %64, %71 : vector<2x8x16x16xf32>
    %c0_60 = arith.constant 0 : index
    %c0_61 = arith.constant 0 : index
    %73 = vector.load %arg3[%c0_60, %c0_61] : memref<1x16xf32, #tpu.memory_space<vmem>>, vector<1x16xf32>
    %74 = vector.shape_cast %73 : vector<1x16xf32> to vector<1x1x1x16xf32>
    %75 = vector.broadcast %74 : vector<1x1x1x16xf32> to vector<2x8x16x16xf32>
    %76 = arith.addf %72, %75 : vector<2x8x16x16xf32>
    %cst_62 = arith.constant 0.000000e+00 : f32
    %77 = vector.broadcast %cst_62 : f32 to vector<2x8x16x16xf32>
    %78 = arith.maximumf %76, %77 : vector<2x8x16x16xf32>
    %cst_63 = arith.constant 0.000000e+00 : f32
    %79 = vector.broadcast %cst_63 : f32 to vector<2x10x18x16xf32>
    %c0_64 = arith.constant 0 : index
    %c0_65 = arith.constant 0 : index
    %c0_66 = arith.constant 0 : index
    %c0_67 = arith.constant 0 : index
    %80 = vector.load %arg18[%c0_64, %c0_65, %c0_66, %c0_67] : memref<2x10x18x16xf32, #tpu.memory_space<vmem>>, vector<2x10x18x16xf32>
    tpu.vector_store %arg18[%c0_64, %c0_65, %c0_66, %c0_67], %79 {strides = array<i32>} : memref<2x10x18x16xf32, #tpu.memory_space<vmem>>, vector<2x10x18x16xf32>,
    %c0_68 = arith.constant 0 : index
    %c1_69 = arith.constant 1 : index
    %c1_70 = arith.constant 1 : index
    %c0_71 = arith.constant 0 : index
    %81 = vector.load %arg18[%c0_68, %c1_69, %c1_70, %c0_71] : memref<2x10x18x16xf32, #tpu.memory_space<vmem>>, vector<2x8x16x16xf32>
    tpu.vector_store %arg18[%c0_68, %c1_69, %c1_70, %c0_71], %78 {strides = array<i32>} : memref<2x10x18x16xf32, #tpu.memory_space<vmem>>, vector<2x8x16x16xf32>,
    %cst_72 = arith.constant 0.000000e+00 : f32
    %82 = vector.broadcast %cst_72 : f32 to vector<32x256xf32>
    %c0_73 = arith.constant 0 : index
    %c0_74 = arith.constant 0 : index
    %c0_75 = arith.constant 0 : index
    %c0_76 = arith.constant 0 : index
    %83 = vector.load %arg18[%c0_73, %c0_74, %c0_75, %c0_76] : memref<2x10x18x16xf32, #tpu.memory_space<vmem>>, vector<2x8x16x16xf32>
    %84 = vector.shape_cast %83 : vector<2x8x16x16xf32> to vector<256x16xf32>
    %c0_77 = arith.constant 0 : index
    %c0_78 = arith.constant 0 : index
    %c0_79 = arith.constant 0 : index
    %c0_80 = arith.constant 0 : index
    %85 = vector.load %arg4[%c0_77, %c0_78, %c0_79, %c0_80] : memref<3x3x32x16xf32, #tpu.memory_space<vmem>>, vector<1x1x32x16xf32>
    %86 = vector.shape_cast %85 : vector<1x1x32x16xf32> to vector<32x16xf32>
    %cst_81 = arith.constant dense<0.000000e+00> : vector<32x256xf32>
    %87 = tpu.matmul %86, %84, %cst_81 {dimension_numbers = #tpu.dot_dimension_numbers<[1], [1], [0], [0], [0, 0, 1, 0], [], []>} : vector<32x16xf32>, vector<256x16xf32>, vector<32x256xf32> -> vector<32x256xf32>
    %88 = arith.addf %82, %87 : vector<32x256xf32>
    %c0_82 = arith.constant 0 : index
    %c0_83 = arith.constant 0 : index
    %c1_84 = arith.constant 1 : index
    %c0_85 = arith.constant 0 : index
    %89 = vector.load %arg18[%c0_82, %c0_83, %c1_84, %c0_85] : memref<2x10x18x16xf32, #tpu.memory_space<vmem>>, vector<2x8x16x16xf32>
    %90 = vector.shape_cast %89 : vector<2x8x16x16xf32> to vector<256x16xf32>
    %c0_86 = arith.constant 0 : index
    %c1_87 = arith.constant 1 : index
    %c0_88 = arith.constant 0 : index
    %c0_89 = arith.constant 0 : index
    %91 = vector.load %arg4[%c0_86, %c1_87, %c0_88, %c0_89] : memref<3x3x32x16xf32, #tpu.memory_space<vmem>>, vector<1x1x32x16xf32>
    %92 = vector.shape_cast %91 : vector<1x1x32x16xf32> to vector<32x16xf32>
    %cst_90 = arith.constant dense<0.000000e+00> : vector<32x256xf32>
    %93 = tpu.matmul %92, %90, %cst_90 {dimension_numbers = #tpu.dot_dimension_numbers<[1], [1], [0], [0], [0, 0, 1, 0], [], []>} : vector<32x16xf32>, vector<256x16xf32>, vector<32x256xf32> -> vector<32x256xf32>
    %94 = arith.addf %88, %93 : vector<32x256xf32>
    %c0_91 = arith.constant 0 : index
    %c0_92 = arith.constant 0 : index
    %c2_93 = arith.constant 2 : index
    %c0_94 = arith.constant 0 : index
    %95 = vector.load %arg18[%c0_91, %c0_92, %c2_93, %c0_94] : memref<2x10x18x16xf32, #tpu.memory_space<vmem>>, vector<2x8x16x16xf32>
    %96 = vector.shape_cast %95 : vector<2x8x16x16xf32> to vector<256x16xf32>
    %c0_95 = arith.constant 0 : index
    %c2_96 = arith.constant 2 : index
    %c0_97 = arith.constant 0 : index
    %c0_98 = arith.constant 0 : index
    %97 = vector.load %arg4[%c0_95, %c2_96, %c0_97, %c0_98] : memref<3x3x32x16xf32, #tpu.memory_space<vmem>>, vector<1x1x32x16xf32>
    %98 = vector.shape_cast %97 : vector<1x1x32x16xf32> to vector<32x16xf32>
    %cst_99 = arith.constant dense<0.000000e+00> : vector<32x256xf32>
    %99 = tpu.matmul %98, %96, %cst_99 {dimension_numbers = #tpu.dot_dimension_numbers<[1], [1], [0], [0], [0, 0, 1, 0], [], []>} : vector<32x16xf32>, vector<256x16xf32>, vector<32x256xf32> -> vector<32x256xf32>
    %100 = arith.addf %94, %99 : vector<32x256xf32>
    %c0_100 = arith.constant 0 : index
    %c1_101 = arith.constant 1 : index
    %c0_102 = arith.constant 0 : index
    %c0_103 = arith.constant 0 : index
    %101 = vector.load %arg18[%c0_100, %c1_101, %c0_102, %c0_103] : memref<2x10x18x16xf32, #tpu.memory_space<vmem>>, vector<2x8x16x16xf32>
    %102 = vector.shape_cast %101 : vector<2x8x16x16xf32> to vector<256x16xf32>
    %c1_104 = arith.constant 1 : index
    %c0_105 = arith.constant 0 : index
    %c0_106 = arith.constant 0 : index
    %c0_107 = arith.constant 0 : index
    %103 = vector.load %arg4[%c1_104, %c0_105, %c0_106, %c0_107] : memref<3x3x32x16xf32, #tpu.memory_space<vmem>>, vector<1x1x32x16xf32>
    %104 = vector.shape_cast %103 : vector<1x1x32x16xf32> to vector<32x16xf32>
    %cst_108 = arith.constant dense<0.000000e+00> : vector<32x256xf32>
    %105 = tpu.matmul %104, %102, %cst_108 {dimension_numbers = #tpu.dot_dimension_numbers<[1], [1], [0], [0], [0, 0, 1, 0], [], []>} : vector<32x16xf32>, vector<256x16xf32>, vector<32x256xf32> -> vector<32x256xf32>
    %106 = arith.addf %100, %105 : vector<32x256xf32>
    %c0_109 = arith.constant 0 : index
    %c1_110 = arith.constant 1 : index
    %c1_111 = arith.constant 1 : index
    %c0_112 = arith.constant 0 : index
    %107 = vector.load %arg18[%c0_109, %c1_110, %c1_111, %c0_112] : memref<2x10x18x16xf32, #tpu.memory_space<vmem>>, vector<2x8x16x16xf32>
    %108 = vector.shape_cast %107 : vector<2x8x16x16xf32> to vector<256x16xf32>
    %c1_113 = arith.constant 1 : index
    %c1_114 = arith.constant 1 : index
    %c0_115 = arith.constant 0 : index
    %c0_116 = arith.constant 0 : index
    %109 = vector.load %arg4[%c1_113, %c1_114, %c0_115, %c0_116] : memref<3x3x32x16xf32, #tpu.memory_space<vmem>>, vector<1x1x32x16xf32>
    %110 = vector.shape_cast %109 : vector<1x1x32x16xf32> to vector<32x16xf32>
    %cst_117 = arith.constant dense<0.000000e+00> : vector<32x256xf32>
    %111 = tpu.matmul %110, %108, %cst_117 {dimension_numbers = #tpu.dot_dimension_numbers<[1], [1], [0], [0], [0, 0, 1, 0], [], []>} : vector<32x16xf32>, vector<256x16xf32>, vector<32x256xf32> -> vector<32x256xf32>
    %112 = arith.addf %106, %111 : vector<32x256xf32>
    %c0_118 = arith.constant 0 : index
    %c1_119 = arith.constant 1 : index
    %c2_120 = arith.constant 2 : index
    %c0_121 = arith.constant 0 : index
    %113 = vector.load %arg18[%c0_118, %c1_119, %c2_120, %c0_121] : memref<2x10x18x16xf32, #tpu.memory_space<vmem>>, vector<2x8x16x16xf32>
    %114 = vector.shape_cast %113 : vector<2x8x16x16xf32> to vector<256x16xf32>
    %c1_122 = arith.constant 1 : index
    %c2_123 = arith.constant 2 : index
    %c0_124 = arith.constant 0 : index
    %c0_125 = arith.constant 0 : index
    %115 = vector.load %arg4[%c1_122, %c2_123, %c0_124, %c0_125] : memref<3x3x32x16xf32, #tpu.memory_space<vmem>>, vector<1x1x32x16xf32>
    %116 = vector.shape_cast %115 : vector<1x1x32x16xf32> to vector<32x16xf32>
    %cst_126 = arith.constant dense<0.000000e+00> : vector<32x256xf32>
    %117 = tpu.matmul %116, %114, %cst_126 {dimension_numbers = #tpu.dot_dimension_numbers<[1], [1], [0], [0], [0, 0, 1, 0], [], []>} : vector<32x16xf32>, vector<256x16xf32>, vector<32x256xf32> -> vector<32x256xf32>
    %118 = arith.addf %112, %117 : vector<32x256xf32>
    %c0_127 = arith.constant 0 : index
    %c2_128 = arith.constant 2 : index
    %c0_129 = arith.constant 0 : index
    %c0_130 = arith.constant 0 : index
    %119 = vector.load %arg18[%c0_127, %c2_128, %c0_129, %c0_130] : memref<2x10x18x16xf32, #tpu.memory_space<vmem>>, vector<2x8x16x16xf32>
    %120 = vector.shape_cast %119 : vector<2x8x16x16xf32> to vector<256x16xf32>
    %c2_131 = arith.constant 2 : index
    %c0_132 = arith.constant 0 : index
    %c0_133 = arith.constant 0 : index
    %c0_134 = arith.constant 0 : index
    %121 = vector.load %arg4[%c2_131, %c0_132, %c0_133, %c0_134] : memref<3x3x32x16xf32, #tpu.memory_space<vmem>>, vector<1x1x32x16xf32>
    %122 = vector.shape_cast %121 : vector<1x1x32x16xf32> to vector<32x16xf32>
    %cst_135 = arith.constant dense<0.000000e+00> : vector<32x256xf32>
    %123 = tpu.matmul %122, %120, %cst_135 {dimension_numbers = #tpu.dot_dimension_numbers<[1], [1], [0], [0], [0, 0, 1, 0], [], []>} : vector<32x16xf32>, vector<256x16xf32>, vector<32x256xf32> -> vector<32x256xf32>
    %124 = arith.addf %118, %123 : vector<32x256xf32>
    %c0_136 = arith.constant 0 : index
    %c2_137 = arith.constant 2 : index
    %c1_138 = arith.constant 1 : index
    %c0_139 = arith.constant 0 : index
    %125 = vector.load %arg18[%c0_136, %c2_137, %c1_138, %c0_139] : memref<2x10x18x16xf32, #tpu.memory_space<vmem>>, vector<2x8x16x16xf32>
    %126 = vector.shape_cast %125 : vector<2x8x16x16xf32> to vector<256x16xf32>
    %c2_140 = arith.constant 2 : index
    %c1_141 = arith.constant 1 : index
    %c0_142 = arith.constant 0 : index
    %c0_143 = arith.constant 0 : index
    %127 = vector.load %arg4[%c2_140, %c1_141, %c0_142, %c0_143] : memref<3x3x32x16xf32, #tpu.memory_space<vmem>>, vector<1x1x32x16xf32>
    %128 = vector.shape_cast %127 : vector<1x1x32x16xf32> to vector<32x16xf32>
    %cst_144 = arith.constant dense<0.000000e+00> : vector<32x256xf32>
    %129 = tpu.matmul %128, %126, %cst_144 {dimension_numbers = #tpu.dot_dimension_numbers<[1], [1], [0], [0], [0, 0, 1, 0], [], []>} : vector<32x16xf32>, vector<256x16xf32>, vector<32x256xf32> -> vector<32x256xf32>
    %130 = arith.addf %124, %129 : vector<32x256xf32>
    %c0_145 = arith.constant 0 : index
    %c2_146 = arith.constant 2 : index
    %c2_147 = arith.constant 2 : index
    %c0_148 = arith.constant 0 : index
    %131 = vector.load %arg18[%c0_145, %c2_146, %c2_147, %c0_148] : memref<2x10x18x16xf32, #tpu.memory_space<vmem>>, vector<2x8x16x16xf32>
    %132 = vector.shape_cast %131 : vector<2x8x16x16xf32> to vector<256x16xf32>
    %c2_149 = arith.constant 2 : index
    %c2_150 = arith.constant 2 : index
    %c0_151 = arith.constant 0 : index
    %c0_152 = arith.constant 0 : index
    %133 = vector.load %arg4[%c2_149, %c2_150, %c0_151, %c0_152] : memref<3x3x32x16xf32, #tpu.memory_space<vmem>>, vector<1x1x32x16xf32>
    %134 = vector.shape_cast %133 : vector<1x1x32x16xf32> to vector<32x16xf32>
    %cst_153 = arith.constant dense<0.000000e+00> : vector<32x256xf32>
    %135 = tpu.matmul %134, %132, %cst_153 {dimension_numbers = #tpu.dot_dimension_numbers<[1], [1], [0], [0], [0, 0, 1, 0], [], []>} : vector<32x16xf32>, vector<256x16xf32>, vector<32x256xf32> -> vector<32x256xf32>
    %136 = arith.addf %130, %135 : vector<32x256xf32>
    %c0_154 = arith.constant 0 : index
    %c0_155 = arith.constant 0 : index
    %137 = vector.load %arg5[%c0_154, %c0_155] : memref<32x1xf32, #tpu.memory_space<vmem>>, vector<32x1xf32>
    %138 = vector.broadcast %137 : vector<32x1xf32> to vector<32x256xf32>
    %139 = arith.addf %136, %138 : vector<32x256xf32>
    %cst_156 = arith.constant 0.000000e+00 : f32
    %140 = vector.broadcast %cst_156 : f32 to vector<32x256xf32>
    %141 = arith.maximumf %139, %140 : vector<32x256xf32>
    %c0_157 = arith.constant 0 : index
    %c0_158 = arith.constant 0 : index
    %142 = vector.load %arg0[%c0_157, %c0_158] : memref<2x128xf32, #tpu.memory_space<vmem>>, vector<2x128xf32>
    %c0_159 = arith.constant 0 : index
    %c0_160 = arith.constant 0 : index
    %143 = vector.load %arg6[%c0_159, %c0_160] : memref<128x128xf32, #tpu.memory_space<vmem>>, vector<128x128xf32>
    %cst_161 = arith.constant dense<0.000000e+00> : vector<2x128xf32>
    %144 = tpu.matmul %142, %143, %cst_161 {dimension_numbers = #tpu.dot_dimension_numbers<[1], [0], [0], [1], [0, 0, 1, 1], [], []>} : vector<2x128xf32>, vector<128x128xf32>, vector<2x128xf32> -> vector<2x128xf32>
    %c0_162 = arith.constant 0 : index
    %c0_163 = arith.constant 0 : index
    %145 = vector.load %arg7[%c0_162, %c0_163] : memref<1x128xf32, #tpu.memory_space<vmem>>, vector<1x128xf32>
    %146 = vector.broadcast %145 : vector<1x128xf32> to vector<2x128xf32>
    %147 = arith.addf %144, %146 : vector<2x128xf32>
    %cst_164 = arith.constant 0.000000e+00 : f32
    %148 = vector.broadcast %cst_164 : f32 to vector<2x128xf32>
    %149 = arith.maximumf %147, %148 : vector<2x128xf32>
    %c0_165 = arith.constant 0 : index
    %c0_166 = arith.constant 0 : index
    %150 = vector.load %arg8[%c0_165, %c0_166] : memref<128x2xf32, #tpu.memory_space<vmem>>, vector<128x2xf32>
    %cst_167 = arith.constant dense<0.000000e+00> : vector<2x2xf32>
    %151 = tpu.matmul %149, %150, %cst_167 {dimension_numbers = #tpu.dot_dimension_numbers<[1], [0], [0], [1], [0, 0, 1, 1], [], []>} : vector<2x128xf32>, vector<128x2xf32>, vector<2x2xf32> -> vector<2x2xf32>
    %c0_168 = arith.constant 0 : index
    %c0_169 = arith.constant 0 : index
    %152 = vector.load %arg9[%c0_168, %c0_169] : memref<1x2xf32, #tpu.memory_space<vmem>>, vector<1x2xf32>
    %153 = vector.broadcast %152 : vector<1x2xf32> to vector<2x2xf32>
    %154 = arith.addf %151, %153 : vector<2x2xf32>
    %cst_170 = arith.constant 0.000000e+00 : f32
    %155 = vector.broadcast %cst_170 : f32 to vector<2x2xf32>
    %156 = arith.maximumf %154, %155 : vector<2x2xf32>
    %c0_171 = arith.constant 0 : index
    %c0_172 = arith.constant 0 : index
    %157 = vector.load %arg17[%c0_171, %c0_172] : memref<2x4xf32, #tpu.memory_space<vmem>>, vector<2x2xf32>
    tpu.vector_store %arg17[%c0_171, %c0_172], %156 {strides = array<i32>} : memref<2x4xf32, #tpu.memory_space<vmem>>, vector<2x2xf32>,
    %158 = vector.extract_strided_slice %141 {offsets = [0, 0], sizes = [32, 128], strides = [1, 1]} : vector<32x256xf32> to vector<32x128xf32>
    %159 = vector.extract_strided_slice %158 {offsets = [0, 0], sizes = [1, 128], strides = [1, 1]} : vector<32x128xf32> to vector<1x128xf32>
    %160 = vector.extract_strided_slice %158 {offsets = [1, 0], sizes = [1, 128], strides = [1, 1]} : vector<32x128xf32> to vector<1x128xf32>
    %161 = vector.extract_strided_slice %158 {offsets = [2, 0], sizes = [1, 128], strides = [1, 1]} : vector<32x128xf32> to vector<1x128xf32>
    %162 = vector.extract_strided_slice %158 {offsets = [3, 0], sizes = [1, 128], strides = [1, 1]} : vector<32x128xf32> to vector<1x128xf32>
    %163 = vector.extract_strided_slice %158 {offsets = [4, 0], sizes = [1, 128], strides = [1, 1]} : vector<32x128xf32> to vector<1x128xf32>
    %164 = vector.extract_strided_slice %158 {offsets = [5, 0], sizes = [1, 128], strides = [1, 1]} : vector<32x128xf32> to vector<1x128xf32>
    %165 = vector.extract_strided_slice %158 {offsets = [6, 0], sizes = [1, 128], strides = [1, 1]} : vector<32x128xf32> to vector<1x128xf32>
    %166 = vector.extract_strided_slice %158 {offsets = [7, 0], sizes = [1, 128], strides = [1, 1]} : vector<32x128xf32> to vector<1x128xf32>
    %167 = vector.extract_strided_slice %158 {offsets = [8, 0], sizes = [1, 128], strides = [1, 1]} : vector<32x128xf32> to vector<1x128xf32>
    %168 = vector.extract_strided_slice %158 {offsets = [9, 0], sizes = [1, 128], strides = [1, 1]} : vector<32x128xf32> to vector<1x128xf32>
    %169 = vector.extract_strided_slice %158 {offsets = [10, 0], sizes = [1, 128], strides = [1, 1]} : vector<32x128xf32> to vector<1x128xf32>
    %170 = vector.extract_strided_slice %158 {offsets = [11, 0], sizes = [1, 128], strides = [1, 1]} : vector<32x128xf32> to vector<1x128xf32>
    %171 = vector.extract_strided_slice %158 {offsets = [12, 0], sizes = [1, 128], strides = [1, 1]} : vector<32x128xf32> to vector<1x128xf32>
    %172 = vector.extract_strided_slice %158 {offsets = [13, 0], sizes = [1, 128], strides = [1, 1]} : vector<32x128xf32> to vector<1x128xf32>
    %173 = vector.extract_strided_slice %158 {offsets = [14, 0], sizes = [1, 128], strides = [1, 1]} : vector<32x128xf32> to vector<1x128xf32>
    %174 = vector.extract_strided_slice %158 {offsets = [15, 0], sizes = [1, 128], strides = [1, 1]} : vector<32x128xf32> to vector<1x128xf32>
    %175 = vector.extract_strided_slice %158 {offsets = [16, 0], sizes = [1, 128], strides = [1, 1]} : vector<32x128xf32> to vector<1x128xf32>
    %176 = vector.extract_strided_slice %158 {offsets = [17, 0], sizes = [1, 128], strides = [1, 1]} : vector<32x128xf32> to vector<1x128xf32>
    %177 = vector.extract_strided_slice %158 {offsets = [18, 0], sizes = [1, 128], strides = [1, 1]} : vector<32x128xf32> to vector<1x128xf32>
    %178 = vector.extract_strided_slice %158 {offsets = [19, 0], sizes = [1, 128], strides = [1, 1]} : vector<32x128xf32> to vector<1x128xf32>
    %179 = vector.extract_strided_slice %158 {offsets = [20, 0], sizes = [1, 128], strides = [1, 1]} : vector<32x128xf32> to vector<1x128xf32>
    %180 = vector.extract_strided_slice %158 {offsets = [21, 0], sizes = [1, 128], strides = [1, 1]} : vector<32x128xf32> to vector<1x128xf32>
    %181 = vector.extract_strided_slice %158 {offsets = [22, 0], sizes = [1, 128], strides = [1, 1]} : vector<32x128xf32> to vector<1x128xf32>
    %182 = vector.extract_strided_slice %158 {offsets = [23, 0], sizes = [1, 128], strides = [1, 1]} : vector<32x128xf32> to vector<1x128xf32>
    %183 = vector.extract_strided_slice %158 {offsets = [24, 0], sizes = [1, 128], strides = [1, 1]} : vector<32x128xf32> to vector<1x128xf32>
    %184 = vector.extract_strided_slice %158 {offsets = [25, 0], sizes = [1, 128], strides = [1, 1]} : vector<32x128xf32> to vector<1x128xf32>
    %185 = vector.extract_strided_slice %158 {offsets = [26, 0], sizes = [1, 128], strides = [1, 1]} : vector<32x128xf32> to vector<1x128xf32>
    %186 = vector.extract_strided_slice %158 {offsets = [27, 0], sizes = [1, 128], strides = [1, 1]} : vector<32x128xf32> to vector<1x128xf32>
    %187 = vector.extract_strided_slice %158 {offsets = [28, 0], sizes = [1, 128], strides = [1, 1]} : vector<32x128xf32> to vector<1x128xf32>
    %188 = vector.extract_strided_slice %158 {offsets = [29, 0], sizes = [1, 128], strides = [1, 1]} : vector<32x128xf32> to vector<1x128xf32>
    %189 = vector.extract_strided_slice %158 {offsets = [30, 0], sizes = [1, 128], strides = [1, 1]} : vector<32x128xf32> to vector<1x128xf32>
    %190 = vector.extract_strided_slice %158 {offsets = [31, 0], sizes = [1, 128], strides = [1, 1]} : vector<32x128xf32> to vector<1x128xf32>
    %191 = tpu.concatenate %159, %160, %161, %162, %163, %164, %165, %166, %167, %168, %169, %170, %171, %172, %173, %174 in 1 : vector<1x128xf32>, vector<1x128xf32>, vector<1x128xf32>, vector<1x128xf32>, vector<1x128xf32>, vector<1x128xf32>, vector<1x128xf32>, vector<1x128xf32>, vector<1x128xf32>, vector<1x128xf32>, vector<1x128xf32>, vector<1x128xf32>, vector<1x128xf32>, vector<1x128xf32>, vector<1x128xf32>, vector<1x128xf32> -> vector<1x2048xf32>
    %192 = tpu.concatenate %175, %176, %177, %178, %179, %180, %181, %182, %183, %184, %185, %186, %187, %188, %189, %190 in 1 : vector<1x128xf32>, vector<1x128xf32>, vector<1x128xf32>, vector<1x128xf32>, vector<1x128xf32>, vector<1x128xf32>, vector<1x128xf32>, vector<1x128xf32>, vector<1x128xf32>, vector<1x128xf32>, vector<1x128xf32>, vector<1x128xf32>, vector<1x128xf32>, vector<1x128xf32>, vector<1x128xf32>, vector<1x128xf32> -> vector<1x2048xf32>
    %193 = tpu.concatenate %191, %192 in 1 : vector<1x2048xf32>, vector<1x2048xf32> -> vector<1x4096xf32>
    %194 = arith.truncf %193 : vector<1x4096xf32> to vector<1x4096xbf16>
    %c0_173 = arith.constant 0 : index
    %c0_174 = arith.constant 0 : index
    %195 = vector.load %arg10[%c0_173, %c0_174] : memref<4096x128xbf16, #tpu.memory_space<vmem>>, vector<4096x128xbf16>
    %cst_175 = arith.constant dense<0.000000e+00> : vector<1x128xf32>
    %196 = tpu.matmul %194, %195, %cst_175 {dimension_numbers = #tpu.dot_dimension_numbers<[1], [0], [0], [1], [0, 0, 1, 1], [], []>} : vector<1x4096xbf16>, vector<4096x128xbf16>, vector<1x128xf32> -> vector<1x128xf32>
    %c0_176 = arith.constant 0 : index
    %c0_177 = arith.constant 0 : index
    %197 = vector.load %arg11[%c0_176, %c0_177] : memref<1x128xf32, #tpu.memory_space<vmem>>, vector<1x128xf32>
    %198 = arith.addf %196, %197 : vector<1x128xf32>
    %cst_178 = arith.constant 0.000000e+00 : f32
    %199 = vector.broadcast %cst_178 : f32 to vector<1x128xf32>
    %200 = arith.maximumf %198, %199 : vector<1x128xf32>
    %c0_179 = arith.constant 0 : index
    %c0_180 = arith.constant 0 : index
    %201 = vector.load %arg12[%c0_179, %c0_180] : memref<128x2xf32, #tpu.memory_space<vmem>>, vector<128x2xf32>
    %cst_181 = arith.constant dense<0.000000e+00> : vector<1x2xf32>
    %202 = tpu.matmul %200, %201, %cst_181 {dimension_numbers = #tpu.dot_dimension_numbers<[1], [0], [0], [1], [0, 0, 1, 1], [], []>} : vector<1x128xf32>, vector<128x2xf32>, vector<1x2xf32> -> vector<1x2xf32>
    %c0_182 = arith.constant 0 : index
    %c0_183 = arith.constant 0 : index
    %203 = vector.load %arg13[%c0_182, %c0_183] : memref<1x2xf32, #tpu.memory_space<vmem>>, vector<1x2xf32>
    %204 = arith.addf %202, %203 : vector<1x2xf32>
    %cst_184 = arith.constant 0.000000e+00 : f32
    %205 = vector.broadcast %cst_184 : f32 to vector<1x2xf32>
    %206 = arith.maximumf %204, %205 : vector<1x2xf32>
    %c0_185 = arith.constant 0 : index
    %c0_186 = arith.constant 0 : index
    %207 = vector.load %arg14[%c0_185, %c0_186] : memref<2x2xf32, #tpu.memory_space<vmem>>, vector<2x2xf32>
    %cst_187 = arith.constant dense<0.000000e+00> : vector<1x2xf32>
    %208 = tpu.matmul %206, %207, %cst_187 {dimension_numbers = #tpu.dot_dimension_numbers<[1], [0], [0], [1], [0, 0, 1, 1], [], []>} : vector<1x2xf32>, vector<2x2xf32>, vector<1x2xf32> -> vector<1x2xf32>
    %209 = vector.extract_strided_slice %156 {offsets = [0, 0], sizes = [1, 2], strides = [1, 1]} : vector<2x2xf32> to vector<1x2xf32>
    %c0_188 = arith.constant 0 : index
    %c0_189 = arith.constant 0 : index
    %210 = vector.load %arg15[%c0_188, %c0_189] : memref<2x2xf32, #tpu.memory_space<vmem>>, vector<2x2xf32>
    %cst_190 = arith.constant dense<0.000000e+00> : vector<1x2xf32>
    %211 = tpu.matmul %209, %210, %cst_190 {dimension_numbers = #tpu.dot_dimension_numbers<[1], [0], [0], [1], [0, 0, 1, 1], [], []>} : vector<1x2xf32>, vector<2x2xf32>, vector<1x2xf32> -> vector<1x2xf32>
    %212 = arith.addf %208, %211 : vector<1x2xf32>
    %c0_191 = arith.constant 0 : index
    %c0_192 = arith.constant 0 : index
    %213 = vector.load %arg16[%c0_191, %c0_192] : memref<1x2xf32, #tpu.memory_space<vmem>>, vector<1x2xf32>
    %214 = arith.addf %212, %213 : vector<1x2xf32>
    %cst_193 = arith.constant 0.000000e+00 : f32
    %215 = vector.broadcast %cst_193 : f32 to vector<1x2xf32>
    %216 = arith.maximumf %214, %215 : vector<1x2xf32>
    %c0_194 = arith.constant 0 : index
    %c2_195 = arith.constant 2 : index
    %217 = vector.load %arg17[%c0_194, %c2_195] : memref<2x4xf32, #tpu.memory_space<vmem>>, vector<1x2xf32>
    tpu.vector_store %arg17[%c0_194, %c2_195], %216 {strides = array<i32>} : memref<2x4xf32, #tpu.memory_space<vmem>>, vector<1x2xf32>,
    %218 = vector.extract_strided_slice %141 {offsets = [0, 128], sizes = [32, 128], strides = [1, 1]} : vector<32x256xf32> to vector<32x128xf32>
    %219 = vector.extract_strided_slice %218 {offsets = [0, 0], sizes = [1, 128], strides = [1, 1]} : vector<32x128xf32> to vector<1x128xf32>
    %220 = vector.extract_strided_slice %218 {offsets = [1, 0], sizes = [1, 128], strides = [1, 1]} : vector<32x128xf32> to vector<1x128xf32>
    %221 = vector.extract_strided_slice %218 {offsets = [2, 0], sizes = [1, 128], strides = [1, 1]} : vector<32x128xf32> to vector<1x128xf32>
    %222 = vector.extract_strided_slice %218 {offsets = [3, 0], sizes = [1, 128], strides = [1, 1]} : vector<32x128xf32> to vector<1x128xf32>
    %223 = vector.extract_strided_slice %218 {offsets = [4, 0], sizes = [1, 128], strides = [1, 1]} : vector<32x128xf32> to vector<1x128xf32>
    %224 = vector.extract_strided_slice %218 {offsets = [5, 0], sizes = [1, 128], strides = [1, 1]} : vector<32x128xf32> to vector<1x128xf32>
    %225 = vector.extract_strided_slice %218 {offsets = [6, 0], sizes = [1, 128], strides = [1, 1]} : vector<32x128xf32> to vector<1x128xf32>
    %226 = vector.extract_strided_slice %218 {offsets = [7, 0], sizes = [1, 128], strides = [1, 1]} : vector<32x128xf32> to vector<1x128xf32>
    %227 = vector.extract_strided_slice %218 {offsets = [8, 0], sizes = [1, 128], strides = [1, 1]} : vector<32x128xf32> to vector<1x128xf32>
    %228 = vector.extract_strided_slice %218 {offsets = [9, 0], sizes = [1, 128], strides = [1, 1]} : vector<32x128xf32> to vector<1x128xf32>
    %229 = vector.extract_strided_slice %218 {offsets = [10, 0], sizes = [1, 128], strides = [1, 1]} : vector<32x128xf32> to vector<1x128xf32>
    %230 = vector.extract_strided_slice %218 {offsets = [11, 0], sizes = [1, 128], strides = [1, 1]} : vector<32x128xf32> to vector<1x128xf32>
    %231 = vector.extract_strided_slice %218 {offsets = [12, 0], sizes = [1, 128], strides = [1, 1]} : vector<32x128xf32> to vector<1x128xf32>
    %232 = vector.extract_strided_slice %218 {offsets = [13, 0], sizes = [1, 128], strides = [1, 1]} : vector<32x128xf32> to vector<1x128xf32>
    %233 = vector.extract_strided_slice %218 {offsets = [14, 0], sizes = [1, 128], strides = [1, 1]} : vector<32x128xf32> to vector<1x128xf32>
    %234 = vector.extract_strided_slice %218 {offsets = [15, 0], sizes = [1, 128], strides = [1, 1]} : vector<32x128xf32> to vector<1x128xf32>
    %235 = vector.extract_strided_slice %218 {offsets = [16, 0], sizes = [1, 128], strides = [1, 1]} : vector<32x128xf32> to vector<1x128xf32>
    %236 = vector.extract_strided_slice %218 {offsets = [17, 0], sizes = [1, 128], strides = [1, 1]} : vector<32x128xf32> to vector<1x128xf32>
    %237 = vector.extract_strided_slice %218 {offsets = [18, 0], sizes = [1, 128], strides = [1, 1]} : vector<32x128xf32> to vector<1x128xf32>
    %238 = vector.extract_strided_slice %218 {offsets = [19, 0], sizes = [1, 128], strides = [1, 1]} : vector<32x128xf32> to vector<1x128xf32>
    %239 = vector.extract_strided_slice %218 {offsets = [20, 0], sizes = [1, 128], strides = [1, 1]} : vector<32x128xf32> to vector<1x128xf32>
    %240 = vector.extract_strided_slice %218 {offsets = [21, 0], sizes = [1, 128], strides = [1, 1]} : vector<32x128xf32> to vector<1x128xf32>
    %241 = vector.extract_strided_slice %218 {offsets = [22, 0], sizes = [1, 128], strides = [1, 1]} : vector<32x128xf32> to vector<1x128xf32>
    %242 = vector.extract_strided_slice %218 {offsets = [23, 0], sizes = [1, 128], strides = [1, 1]} : vector<32x128xf32> to vector<1x128xf32>
    %243 = vector.extract_strided_slice %218 {offsets = [24, 0], sizes = [1, 128], strides = [1, 1]} : vector<32x128xf32> to vector<1x128xf32>
    %244 = vector.extract_strided_slice %218 {offsets = [25, 0], sizes = [1, 128], strides = [1, 1]} : vector<32x128xf32> to vector<1x128xf32>
    %245 = vector.extract_strided_slice %218 {offsets = [26, 0], sizes = [1, 128], strides = [1, 1]} : vector<32x128xf32> to vector<1x128xf32>
    %246 = vector.extract_strided_slice %218 {offsets = [27, 0], sizes = [1, 128], strides = [1, 1]} : vector<32x128xf32> to vector<1x128xf32>
    %247 = vector.extract_strided_slice %218 {offsets = [28, 0], sizes = [1, 128], strides = [1, 1]} : vector<32x128xf32> to vector<1x128xf32>
    %248 = vector.extract_strided_slice %218 {offsets = [29, 0], sizes = [1, 128], strides = [1, 1]} : vector<32x128xf32> to vector<1x128xf32>
    %249 = vector.extract_strided_slice %218 {offsets = [30, 0], sizes = [1, 128], strides = [1, 1]} : vector<32x128xf32> to vector<1x128xf32>
    %250 = vector.extract_strided_slice %218 {offsets = [31, 0], sizes = [1, 128], strides = [1, 1]} : vector<32x128xf32> to vector<1x128xf32>
    %251 = tpu.concatenate %219, %220, %221, %222, %223, %224, %225, %226, %227, %228, %229, %230, %231, %232, %233, %234 in 1 : vector<1x128xf32>, vector<1x128xf32>, vector<1x128xf32>, vector<1x128xf32>, vector<1x128xf32>, vector<1x128xf32>, vector<1x128xf32>, vector<1x128xf32>, vector<1x128xf32>, vector<1x128xf32>, vector<1x128xf32>, vector<1x128xf32>, vector<1x128xf32>, vector<1x128xf32>, vector<1x128xf32>, vector<1x128xf32> -> vector<1x2048xf32>
    %252 = tpu.concatenate %235, %236, %237, %238, %239, %240, %241, %242, %243, %244, %245, %246, %247, %248, %249, %250 in 1 : vector<1x128xf32>, vector<1x128xf32>, vector<1x128xf32>, vector<1x128xf32>, vector<1x128xf32>, vector<1x128xf32>, vector<1x128xf32>, vector<1x128xf32>, vector<1x128xf32>, vector<1x128xf32>, vector<1x128xf32>, vector<1x128xf32>, vector<1x128xf32>, vector<1x128xf32>, vector<1x128xf32>, vector<1x128xf32> -> vector<1x2048xf32>
    %253 = tpu.concatenate %251, %252 in 1 : vector<1x2048xf32>, vector<1x2048xf32> -> vector<1x4096xf32>
    %254 = arith.truncf %253 : vector<1x4096xf32> to vector<1x4096xbf16>
    %c0_196 = arith.constant 0 : index
    %c0_197 = arith.constant 0 : index
    %255 = vector.load %arg10[%c0_196, %c0_197] : memref<4096x128xbf16, #tpu.memory_space<vmem>>, vector<4096x128xbf16>
    %cst_198 = arith.constant dense<0.000000e+00> : vector<1x128xf32>
    %256 = tpu.matmul %254, %255, %cst_198 {dimension_numbers = #tpu.dot_dimension_numbers<[1], [0], [0], [1], [0, 0, 1, 1], [], []>} : vector<1x4096xbf16>, vector<4096x128xbf16>, vector<1x128xf32> -> vector<1x128xf32>
    %c0_199 = arith.constant 0 : index
    %c0_200 = arith.constant 0 : index
    %257 = vector.load %arg11[%c0_199, %c0_200] : memref<1x128xf32, #tpu.memory_space<vmem>>, vector<1x128xf32>
    %258 = arith.addf %256, %257 : vector<1x128xf32>
    %cst_201 = arith.constant 0.000000e+00 : f32
    %259 = vector.broadcast %cst_201 : f32 to vector<1x128xf32>
    %260 = arith.maximumf %258, %259 : vector<1x128xf32>
    %c0_202 = arith.constant 0 : index
    %c0_203 = arith.constant 0 : index
    %261 = vector.load %arg12[%c0_202, %c0_203] : memref<128x2xf32, #tpu.memory_space<vmem>>, vector<128x2xf32>
    %cst_204 = arith.constant dense<0.000000e+00> : vector<1x2xf32>
    %262 = tpu.matmul %260, %261, %cst_204 {dimension_numbers = #tpu.dot_dimension_numbers<[1], [0], [0], [1], [0, 0, 1, 1], [], []>} : vector<1x128xf32>, vector<128x2xf32>, vector<1x2xf32> -> vector<1x2xf32>
    %c0_205 = arith.constant 0 : index
    %c0_206 = arith.constant 0 : index
    %263 = vector.load %arg13[%c0_205, %c0_206] : memref<1x2xf32, #tpu.memory_space<vmem>>, vector<1x2xf32>
    %264 = arith.addf %262, %263 : vector<1x2xf32>
    %cst_207 = arith.constant 0.000000e+00 : f32
    %265 = vector.broadcast %cst_207 : f32 to vector<1x2xf32>
    %266 = arith.maximumf %264, %265 : vector<1x2xf32>
    %c0_208 = arith.constant 0 : index
    %c0_209 = arith.constant 0 : index
    %267 = vector.load %arg14[%c0_208, %c0_209] : memref<2x2xf32, #tpu.memory_space<vmem>>, vector<2x2xf32>
    %cst_210 = arith.constant dense<0.000000e+00> : vector<1x2xf32>
    %268 = tpu.matmul %266, %267, %cst_210 {dimension_numbers = #tpu.dot_dimension_numbers<[1], [0], [0], [1], [0, 0, 1, 1], [], []>} : vector<1x2xf32>, vector<2x2xf32>, vector<1x2xf32> -> vector<1x2xf32>
    %269 = vector.extract_strided_slice %156 {offsets = [1, 0], sizes = [1, 2], strides = [1, 1]} : vector<2x2xf32> to vector<1x2xf32>
    %c0_211 = arith.constant 0 : index
    %c0_212 = arith.constant 0 : index
    %270 = vector.load %arg15[%c0_211, %c0_212] : memref<2x2xf32, #tpu.memory_space<vmem>>, vector<2x2xf32>
    %cst_213 = arith.constant dense<0.000000e+00> : vector<1x2xf32>
    %271 = tpu.matmul %269, %270, %cst_213 {dimension_numbers = #tpu.dot_dimension_numbers<[1], [0], [0], [1], [0, 0, 1, 1], [], []>} : vector<1x2xf32>, vector<2x2xf32>, vector<1x2xf32> -> vector<1x2xf32>
    %272 = arith.addf %268, %271 : vector<1x2xf32>
    %c0_214 = arith.constant 0 : index
    %c0_215 = arith.constant 0 : index
    %273 = vector.load %arg16[%c0_214, %c0_215] : memref<1x2xf32, #tpu.memory_space<vmem>>, vector<1x2xf32>
    %274 = arith.addf %272, %273 : vector<1x2xf32>
    %cst_216 = arith.constant 0.000000e+00 : f32
    %275 = vector.broadcast %cst_216 : f32 to vector<1x2xf32>
    %276 = arith.maximumf %274, %275 : vector<1x2xf32>
    %c1_217 = arith.constant 1 : index
    %c2_218 = arith.constant 2 : index
    %277 = vector.load %arg17[%c1_217, %c2_218] : memref<2x4xf32, #tpu.memory_space<vmem>>, vector<1x2xf32>
    tpu.vector_store %arg17[%c1_217, %c2_218], %276 {strides = array<i32>} : memref<2x4xf32, #tpu.memory_space<vmem>>, vector<1x2xf32>,
    return
  }
}

</mosaic_0001>

<llo_original>
// kernel: forward.1
$region0: #{forward.1}
  #allocation0 [shape = 'u32[]', space=smem, size = 0x4, offset = 0x4, fixed_abs, tag = 'smem constant byte address 0x4 - core index']
  #allocation1 [shape = 'u32[144,128]{1,0:T(1,128)}', space=vmem, size = 0x12000, scoped, tag = 'internal scratch']
  #allocation2 [shape = 'f32[2,10,18,16]{3,2,1,0:T(8,128)}', space=vmem, size = 0x3c000, scoped, tag = 'scratch operand']
  %s0 = inlined_call_operand.vmem [shape: f32[2,128], index: 0, kind: input, shape index: {}]
  %s1 = inlined_call_operand.vmem [shape: f32[2,10,18,1], index: 1, kind: input, shape index: {}]
  %s2 = inlined_call_operand.vmem [shape: f32[3,3,16], index: 2, kind: input, shape index: {}]
  %s3 = inlined_call_operand.vmem [shape: f32[1,16], index: 3, kind: input, shape index: {}]
  %s4 = inlined_call_operand.vmem [shape: f32[3,3,32,16], index: 4, kind: input, shape index: {}]
  %s5 = inlined_call_operand.vmem [shape: f32[32,1], index: 5, kind: input, shape index: {}]
  %s6 = inlined_call_operand.vmem [shape: f32[128,128], index: 6, kind: input, shape index: {}]
  %s7 = inlined_call_operand.vmem [shape: f32[1,128], index: 7, kind: input, shape index: {}]
  %s8 = inlined_call_operand.vmem [shape: f32[128,2], index: 8, kind: input, shape index: {}]
  %s9 = inlined_call_operand.vmem [shape: f32[1,2], index: 9, kind: input, shape index: {}]
  %s10 = inlined_call_operand.hbm [shape: bf16[4096,128], index: 10, kind: input, shape index: {}]
  %s11 = inlined_call_operand.vmem [shape: f32[1,128], index: 11, kind: input, shape index: {}]
  %s12 = inlined_call_operand.vmem [shape: f32[128,2], index: 12, kind: input, shape index: {}]
  %s13 = inlined_call_operand.vmem [shape: f32[1,2], index: 13, kind: input, shape index: {}]
  %s14 = inlined_call_operand.vmem [shape: f32[2,2], index: 14, kind: input, shape index: {}]
  %s15 = inlined_call_operand.vmem [shape: f32[2,2], index: 15, kind: input, shape index: {}]
  %s16 = inlined_call_operand.vmem [shape: f32[1,2], index: 16, kind: input, shape index: {}]
  %s17 = inlined_call_operand.vmem [shape: f32[2,4], index: 17, kind: output, shape index: {}]
  %s18 = sld [smem:[#allocation0]]
  $region82: #{forward.1} parent=0
    _
  %s20 = ssub.s32 1, %s18
  %s21 = scalar_select 0, %s20, %s18
  $region1: #{forward.1} parent=0
    #allocation3 [shape = 'u8[1048576]{0}', space=vmem, size = 0x100000, scoped, tag = 'input window, operand 10, single buffered']
    #allocation4 [shape = 's32[1]{0}', space=sflag, size = 0x4, scoped, tag = 'scoped memory for forward.1']
    %22 = vsyncpa [#allocation4], 0
    // Predicated region
    $region2: #{forward.1} parent=1 // pred_check
      _
    $region3: #{forward.1} parent=1 // pred_check_branch
      %24 = sbr.rel (0) target = $region5
    $region4: #{forward.1} parent=1 // pred_region
      _
    $region5: #{forward.1} parent=1 // pred_fallthru
      _
    // Predicated region
    $region6: #{forward.1} parent=1 // pred_check
      _
    $region7: #{forward.1} parent=1 // pred_check_branch
      %26 = sbr.rel (0) target = $region9
    $region8: #{forward.1} parent=1 // pred_region
      _
    $region9: #{forward.1} parent=1 // pred_fallthru
      _
    // Predicated region
    $region10: #{forward.1} parent=1 // pred_check
      _
    $region11: #{forward.1} parent=1 // pred_check_branch
      %28 = sbr.rel (0) target = $region13
    $region12: #{forward.1} parent=1 // pred_region
      _
    $region13: #{forward.1} parent=1 // pred_fallthru
      _
    // Predicated region
    $region14: #{forward.1} parent=1 // pred_check
      _
    $region15: #{forward.1} parent=1 // pred_check_branch
      %30 = sbr.rel (0) target = $region17
    $region16: #{forward.1} parent=1 // pred_region
      _
    $region17: #{forward.1} parent=1 // pred_fallthru
      _
    // Predicated region
    $region18: #{forward.1} parent=1 // pred_check
      _
    $region19: #{forward.1} parent=1 // pred_check_branch
      %32 = sbr.rel (0) target = $region21
    $region20: #{forward.1} parent=1 // pred_region
      _
    $region21: #{forward.1} parent=1 // pred_fallthru
      _
    // Predicated region
    $region22: #{forward.1} parent=1 // pred_check
      _
    $region23: #{forward.1} parent=1 // pred_check_branch
      %34 = sbr.rel (0) target = $region25
    $region24: #{forward.1} parent=1 // pred_region
      _
    $region25: #{forward.1} parent=1 // pred_fallthru
      _
    // Predicated region
    $region26: #{forward.1} parent=1 // pred_check
      _
    $region27: #{forward.1} parent=1 // pred_check_branch
      %36 = sbr.rel (0) target = $region29
    $region28: #{forward.1} parent=1 // pred_region
      _
    $region29: #{forward.1} parent=1 // pred_fallthru
      _
    // Predicated region
    $region30: #{forward.1} parent=1 // pred_check
      _
    $region31: #{forward.1} parent=1 // pred_check_branch
      %38 = sbr.rel (0) target = $region33
    $region32: #{forward.1} parent=1 // pred_region
      _
    $region33: #{forward.1} parent=1 // pred_fallthru
      _
    // Predicated region
    $region34: #{forward.1} parent=1 // pred_check
      _
    $region35: #{forward.1} parent=1 // pred_check_branch
      %40 = sbr.rel (0) target = $region37
    $region36: #{forward.1} parent=1 // pred_region
      _
    $region37: #{forward.1} parent=1 // pred_fallthru
      _
    // Predicated region
    $region38: #{forward.1} parent=1 // pred_check
      _
    $region39: #{forward.1} parent=1 // pred_check_branch
      %42 = sbr.rel (0) target = $region41
    $region40: #{forward.1} parent=1 // pred_region
      _
    $region41: #{forward.1} parent=1 // pred_fallthru
      _
    // Predicated region
    $region42: #{forward.1} parent=1 // pred_check
      _
    $region43: #{forward.1} parent=1 // pred_check_branch
      %44 = sbr.rel (0) target = $region45
    $region44: #{forward.1} parent=1 // pred_region
      %s46 = ssub.s32 32768, 32768
      %47 = vsyncadd [#allocation4], %s46
      %s48 = sshll.u32 [#allocation3], 4
      %s49 = int_to_ptr.vmem [resolvable:$true] %s48
      %54 = dma.hbm_to_vmem [thread:$0]  %s10, 32768, %s49, [#allocation4], 64, 64, 4
    $region45: #{forward.1} parent=1 // pred_fallthru
      _
    // Predicated region
    $region46: #{forward.1} parent=1 // pred_check
      _
    $region47: #{forward.1} parent=1 // pred_check_branch
      %56 = sbr.rel (0) target = $region49
    $region48: #{forward.1} parent=1 // pred_region
      _
    $region49: #{forward.1} parent=1 // pred_fallthru
      _
    // Predicated region
    $region50: #{forward.1} parent=1 // pred_check
      _
    $region51: #{forward.1} parent=1 // pred_check_branch
      %58 = sbr.rel (0) target = $region53
    $region52: #{forward.1} parent=1 // pred_region
      _
    $region53: #{forward.1} parent=1 // pred_fallthru
      _
    // Predicated region
    $region54: #{forward.1} parent=1 // pred_check
      _
    $region55: #{forward.1} parent=1 // pred_check_branch
      %60 = sbr.rel (0) target = $region57
    $region56: #{forward.1} parent=1 // pred_region
      _
    $region57: #{forward.1} parent=1 // pred_fallthru
      _
    // Predicated region
    $region58: #{forward.1} parent=1 // pred_check
      _
    $region59: #{forward.1} parent=1 // pred_check_branch
      %62 = sbr.rel (0) target = $region61
    $region60: #{forward.1} parent=1 // pred_region
      _
    $region61: #{forward.1} parent=1 // pred_fallthru
      _
    // Predicated region
    $region62: #{forward.1} parent=1 // pred_check
      _
    $region63: #{forward.1} parent=1 // pred_check_branch
      %64 = sbr.rel (0) target = $region65
    $region64: #{forward.1} parent=1 // pred_region
      _
    $region65: #{forward.1} parent=1 // pred_fallthru
      _
    // Predicated region
    $region66: #{forward.1} parent=1 // pred_check
      _
    $region67: #{forward.1} parent=1 // pred_check_branch
      %66 = sbr.rel (0) target = $region69
    $region68: #{forward.1} parent=1 // pred_region
      _
    $region69: #{forward.1} parent=1 // pred_fallthru
      _
    // Predicated region
    $region70: #{forward.1} parent=1 // pred_check
      _
    $region71: #{forward.1} parent=1 // pred_check_branch
      %68 = sbr.rel (0) target = $region73
    $region72: #{forward.1} parent=1 // pred_region
      %69 = dma.done [#allocation4], 32768
    $region73: #{forward.1} parent=1 // pred_fallthru
      _
    %v71 = vld [vmem:[%s1] sm:$0xff]
    %v72 = vld [vmem:[%s1 + $0x8] sm:$0xff]
    %v73 = vld [vmem:[%s1 + $0x18] sm:$0xff]
    %v74 = vld [vmem:[%s1 + $0x20] sm:$0xff]
    %v75 = vld [vmem:[%s1 + $0x30] sm:$0xff]
    %v76 = vld [vmem:[%s1 + $0x38] sm:$0xff]
    %v77 = vld [vmem:[%s1 + $0x48] sm:$0xff]
    %v78 = vld [vmem:[%s1 + $0x50] sm:$0xff]
    %v79 = vld [vmem:[%s1 + $0x60] sm:$0xff]
    %v80 = vld [vmem:[%s1 + $0x68] sm:$0xff]
    %v81 = vld [vmem:[%s1 + $0x78] sm:$0xff]
    %v82 = vld [vmem:[%s1 + $0x80] sm:$0xff]
    %v83 = vld [vmem:[%s1 + $0x90] sm:$0xff]
    %v84 = vld [vmem:[%s1 + $0x98] sm:$0xff]
    %v85 = vld [vmem:[%s1 + $0xa8] sm:$0xff]
    %v86 = vld [vmem:[%s1 + $0xb0] sm:$0xff]
    %v87 = vld [vmem:[%s1 + $0xf0] sm:$0xff]
    %v88 = vld [vmem:[%s1 + $0xf8] sm:$0xff]
    %v89 = vld [vmem:[%s1 + $0x108] sm:$0xff]
    %v90 = vld [vmem:[%s1 + $0x110] sm:$0xff]
    %v91 = vld [vmem:[%s1 + $0x120] sm:$0xff]
    %v92 = vld [vmem:[%s1 + $0x128] sm:$0xff]
    %v93 = vld [vmem:[%s1 + $0x138] sm:$0xff]
    %v94 = vld [vmem:[%s1 + $0x140] sm:$0xff]
    %v95 = vld [vmem:[%s1 + $0x150] sm:$0xff]
    %v96 = vld [vmem:[%s1 + $0x158] sm:$0xff]
    %v97 = vld [vmem:[%s1 + $0x168] sm:$0xff]
    %v98 = vld [vmem:[%s1 + $0x170] sm:$0xff]
    %v99 = vld [vmem:[%s1 + $0x180] sm:$0xff]
    %v100 = vld [vmem:[%s1 + $0x188] sm:$0xff]
    %v101 = vld [vmem:[%s1 + $0x198] sm:$0xff]
    %v102 = vld [vmem:[%s1 + $0x1a0] sm:$0xff]
    %v103 = vld [vmem:[%s2] sm:$0x1]
    %105 = vset.pattern.permute.xlu0 0
    %106 = vperm.xlu0 %105, %v71
    %v107 = vpop.permute.xlu0 %106
    %110 = vset.pattern.permute.xlu0 0
    %111 = vperm.xlu0 %110, %v72
    %v112 = vpop.permute.xlu0 %111
    %115 = vset.pattern.permute.xlu0 0
    %116 = vperm.xlu0 %115, %v73
    %v117 = vpop.permute.xlu0 %116
    %120 = vset.pattern.permute.xlu0 0
    %121 = vperm.xlu0 %120, %v74
    %v122 = vpop.permute.xlu0 %121
    %125 = vset.pattern.permute.xlu0 0
    %126 = vperm.xlu0 %125, %v75
    %v127 = vpop.permute.xlu0 %126
    %130 = vset.pattern.permute.xlu0 0
    %131 = vperm.xlu0 %130, %v76
    %v132 = vpop.permute.xlu0 %131
    %135 = vset.pattern.permute.xlu0 0
    %136 = vperm.xlu0 %135, %v77
    %v137 = vpop.permute.xlu0 %136
    %140 = vset.pattern.permute.xlu0 0
    %141 = vperm.xlu0 %140, %v78
    %v142 = vpop.permute.xlu0 %141
    %145 = vset.pattern.permute.xlu0 0
    %146 = vperm.xlu0 %145, %v79
    %v147 = vpop.permute.xlu0 %146
    %150 = vset.pattern.permute.xlu0 0
    %151 = vperm.xlu0 %150, %v80
    %v152 = vpop.permute.xlu0 %151
    %155 = vset.pattern.permute.xlu0 0
    %156 = vperm.xlu0 %155, %v81
    %v157 = vpop.permute.xlu0 %156
    %160 = vset.pattern.permute.xlu0 0
    %161 = vperm.xlu0 %160, %v82
    %v162 = vpop.permute.xlu0 %161
    %165 = vset.pattern.permute.xlu0 0
    %166 = vperm.xlu0 %165, %v83
    %v167 = vpop.permute.xlu0 %166
    %170 = vset.pattern.permute.xlu0 0
    %171 = vperm.xlu0 %170, %v84
    %v172 = vpop.permute.xlu0 %171
    %175 = vset.pattern.permute.xlu0 0
    %176 = vperm.xlu0 %175, %v85
    %v177 = vpop.permute.xlu0 %176
    %180 = vset.pattern.permute.xlu0 0
    %181 = vperm.xlu0 %180, %v86
    %v182 = vpop.permute.xlu0 %181
    %185 = vset.pattern.permute.xlu0 0
    %186 = vperm.xlu0 %185, %v87
    %v187 = vpop.permute.xlu0 %186
    %190 = vset.pattern.permute.xlu0 0
    %191 = vperm.xlu0 %190, %v88
    %v192 = vpop.permute.xlu0 %191
    %195 = vset.pattern.permute.xlu0 0
    %196 = vperm.xlu0 %195, %v89
    %v197 = vpop.permute.xlu0 %196
    %200 = vset.pattern.permute.xlu0 0
    %201 = vperm.xlu0 %200, %v90
    %v202 = vpop.permute.xlu0 %201
    %205 = vset.pattern.permute.xlu0 0
    %206 = vperm.xlu0 %205, %v91
    %v207 = vpop.permute.xlu0 %206
    %210 = vset.pattern.permute.xlu0 0
    %211 = vperm.xlu0 %210, %v92
    %v212 = vpop.permute.xlu0 %211
    %215 = vset.pattern.permute.xlu0 0
    %216 = vperm.xlu0 %215, %v93
    %v217 = vpop.permute.xlu0 %216
    %220 = vset.pattern.permute.xlu0 0
    %221 = vperm.xlu0 %220, %v94
    %v222 = vpop.permute.xlu0 %221
    %225 = vset.pattern.permute.xlu0 0
    %226 = vperm.xlu0 %225, %v95
    %v227 = vpop.permute.xlu0 %226
    %230 = vset.pattern.permute.xlu0 0
    %231 = vperm.xlu0 %230, %v96
    %v232 = vpop.permute.xlu0 %231
    %235 = vset.pattern.permute.xlu0 0
    %236 = vperm.xlu0 %235, %v97
    %v237 = vpop.permute.xlu0 %236
    %240 = vset.pattern.permute.xlu0 0
    %241 = vperm.xlu0 %240, %v98
    %v242 = vpop.permute.xlu0 %241
    %245 = vset.pattern.permute.xlu0 0
    %246 = vperm.xlu0 %245, %v99
    %v247 = vpop.permute.xlu0 %246
    %250 = vset.pattern.permute.xlu0 0
    %251 = vperm.xlu0 %250, %v100
    %v252 = vpop.permute.xlu0 %251
    %255 = vset.pattern.permute.xlu0 0
    %256 = vperm.xlu0 %255, %v101
    %v257 = vpop.permute.xlu0 %256
    %260 = vset.pattern.permute.xlu0 0
    %261 = vperm.xlu0 %260, %v102
    %v262 = vpop.permute.xlu0 %261
    %v264 = vlaneseq
    %v265 = vshrl.u32 %v264, 7
    %v266 = vsub.s32 0, %v265
    %v267 = vrot.slane %v103, %v266
    %v268 = vmul.f32 %v107, %v267
    %v269 = vmul.f32 %v112, %v267
    %v270 = vmul.f32 %v117, %v267
    %v271 = vmul.f32 %v122, %v267
    %v272 = vmul.f32 %v127, %v267
    %v273 = vmul.f32 %v132, %v267
    %v274 = vmul.f32 %v137, %v267
    %v275 = vmul.f32 %v142, %v267
    %v276 = vmul.f32 %v147, %v267
    %v277 = vmul.f32 %v152, %v267
    %v278 = vmul.f32 %v157, %v267
    %v279 = vmul.f32 %v162, %v267
    %v280 = vmul.f32 %v167, %v267
    %v281 = vmul.f32 %v172, %v267
    %v282 = vmul.f32 %v177, %v267
    %v283 = vmul.f32 %v182, %v267
    %v284 = vmul.f32 %v187, %v267
    %v285 = vmul.f32 %v192, %v267
    %v286 = vmul.f32 %v197, %v267
    %v287 = vmul.f32 %v202, %v267
    %v288 = vmul.f32 %v207, %v267
    %v289 = vmul.f32 %v212, %v267
    %v290 = vmul.f32 %v217, %v267
    %v291 = vmul.f32 %v222, %v267
    %v292 = vmul.f32 %v227, %v267
    %v293 = vmul.f32 %v232, %v267
    %v294 = vmul.f32 %v237, %v267
    %v295 = vmul.f32 %v242, %v267
    %v296 = vmul.f32 %v247, %v267
    %v297 = vmul.f32 %v252, %v267
    %v298 = vmul.f32 %v257, %v267
    %v299 = vmul.f32 %v262, %v267
    %v300 = vadd.f32 %v268, 0.0
    %v301 = vadd.f32 %v269, 0.0
    %v302 = vadd.f32 %v270, 0.0
    %v303 = vadd.f32 %v271, 0.0
    %v304 = vadd.f32 %v272, 0.0
    %v305 = vadd.f32 %v273, 0.0
    %v306 = vadd.f32 %v274, 0.0
    %v307 = vadd.f32 %v275, 0.0
    %v308 = vadd.f32 %v276, 0.0
    %v309 = vadd.f32 %v277, 0.0
    %v310 = vadd.f32 %v278, 0.0
    %v311 = vadd.f32 %v279, 0.0
    %v312 = vadd.f32 %v280, 0.0
    %v313 = vadd.f32 %v281, 0.0
    %v314 = vadd.f32 %v282, 0.0
    %v315 = vadd.f32 %v283, 0.0
    %v316 = vadd.f32 %v284, 0.0
    %v317 = vadd.f32 %v285, 0.0
    %v318 = vadd.f32 %v286, 0.0
    %v319 = vadd.f32 %v287, 0.0
    %v320 = vadd.f32 %v288, 0.0
    %v321 = vadd.f32 %v289, 0.0
    %v322 = vadd.f32 %v290, 0.0
    %v323 = vadd.f32 %v291, 0.0
    %v324 = vadd.f32 %v292, 0.0
    %v325 = vadd.f32 %v293, 0.0
    %v326 = vadd.f32 %v294, 0.0
    %v327 = vadd.f32 %v295, 0.0
    %v328 = vadd.f32 %v296, 0.0
    %v329 = vadd.f32 %v297, 0.0
    %v330 = vadd.f32 %v298, 0.0
    %v331 = vadd.f32 %v299, 0.0
    %v332 = vld [vmem:[%s1 + $0x1] sm:$0xff]
    %v333 = vld [vmem:[%s1 + $0x9] sm:$0xff]
    %v334 = vld [vmem:[%s1 + $0x19] sm:$0xff]
    %v335 = vld [vmem:[%s1 + $0x21] sm:$0xff]
    %v336 = vld [vmem:[%s1 + $0x31] sm:$0xff]
    %v337 = vld [vmem:[%s1 + $0x39] sm:$0xff]
    %v338 = vld [vmem:[%s1 + $0x49] sm:$0xff]
    %v339 = vld [vmem:[%s1 + $0x51] sm:$0xff]
    %v340 = vld [vmem:[%s1 + $0x61] sm:$0xff]
    %v341 = vld [vmem:[%s1 + $0x69] sm:$0xff]
    %v342 = vld [vmem:[%s1 + $0x79] sm:$0xff]
    %v343 = vld [vmem:[%s1 + $0x81] sm:$0xff]
    %v344 = vld [vmem:[%s1 + $0x91] sm:$0xff]
    %v345 = vld [vmem:[%s1 + $0x99] sm:$0xff]
    %v346 = vld [vmem:[%s1 + $0xa9] sm:$0xff]
    %v347 = vld [vmem:[%s1 + $0xb1] sm:$0xff]
    %v348 = vld [vmem:[%s1 + $0xf1] sm:$0xff]
    %v349 = vld [vmem:[%s1 + $0xf9] sm:$0xff]
    %v350 = vld [vmem:[%s1 + $0x109] sm:$0xff]
    %v351 = vld [vmem:[%s1 + $0x111] sm:$0xff]
    %v352 = vld [vmem:[%s1 + $0x121] sm:$0xff]
    %v353 = vld [vmem:[%s1 + $0x129] sm:$0xff]
    %v354 = vld [vmem:[%s1 + $0x139] sm:$0xff]
    %v355 = vld [vmem:[%s1 + $0x141] sm:$0xff]
    %v356 = vld [vmem:[%s1 + $0x151] sm:$0xff]
    %v357 = vld [vmem:[%s1 + $0x159] sm:$0xff]
    %v358 = vld [vmem:[%s1 + $0x169] sm:$0xff]
    %v359 = vld [vmem:[%s1 + $0x171] sm:$0xff]
    %v360 = vld [vmem:[%s1 + $0x181] sm:$0xff]
    %v361 = vld [vmem:[%s1 + $0x189] sm:$0xff]
    %v362 = vld [vmem:[%s1 + $0x199] sm:$0xff]
    %v363 = vld [vmem:[%s1 + $0x1a1] sm:$0xff]
    %v364 = vld [vmem:[%s2 + $0x1] sm:$0x1]
    %366 = vset.pattern.permute.xlu0 0
    %367 = vperm.xlu0 %366, %v332
    %v368 = vpop.permute.xlu0 %367
    %371 = vset.pattern.permute.xlu0 0
    %372 = vperm.xlu0 %371, %v333
    %v373 = vpop.permute.xlu0 %372
    %376 = vset.pattern.permute.xlu0 0
    %377 = vperm.xlu0 %376, %v334
    %v378 = vpop.permute.xlu0 %377
    %381 = vset.pattern.permute.xlu0 0
    %382 = vperm.xlu0 %381, %v335
    %v383 = vpop.permute.xlu0 %382
    %386 = vset.pattern.permute.xlu0 0
    %387 = vperm.xlu0 %386, %v336
    %v388 = vpop.permute.xlu0 %387
    %391 = vset.pattern.permute.xlu0 0
    %392 = vperm.xlu0 %391, %v337
    %v393 = vpop.permute.xlu0 %392
    %396 = vset.pattern.permute.xlu0 0
    %397 = vperm.xlu0 %396, %v338
    %v398 = vpop.permute.xlu0 %397
    %401 = vset.pattern.permute.xlu0 0
    %402 = vperm.xlu0 %401, %v339
    %v403 = vpop.permute.xlu0 %402
    %406 = vset.pattern.permute.xlu0 0
    %407 = vperm.xlu0 %406, %v340
    %v408 = vpop.permute.xlu0 %407
    %411 = vset.pattern.permute.xlu0 0
    %412 = vperm.xlu0 %411, %v341
    %v413 = vpop.permute.xlu0 %412
    %416 = vset.pattern.permute.xlu0 0
    %417 = vperm.xlu0 %416, %v342
    %v418 = vpop.permute.xlu0 %417
    %421 = vset.pattern.permute.xlu0 0
    %422 = vperm.xlu0 %421, %v343
    %v423 = vpop.permute.xlu0 %422
    %426 = vset.pattern.permute.xlu0 0
    %427 = vperm.xlu0 %426, %v344
    %v428 = vpop.permute.xlu0 %427
    %431 = vset.pattern.permute.xlu0 0
    %432 = vperm.xlu0 %431, %v345
    %v433 = vpop.permute.xlu0 %432
    %436 = vset.pattern.permute.xlu0 0
    %437 = vperm.xlu0 %436, %v346
    %v438 = vpop.permute.xlu0 %437
    %441 = vset.pattern.permute.xlu0 0
    %442 = vperm.xlu0 %441, %v347
    %v443 = vpop.permute.xlu0 %442
    %446 = vset.pattern.permute.xlu0 0
    %447 = vperm.xlu0 %446, %v348
    %v448 = vpop.permute.xlu0 %447
    %451 = vset.pattern.permute.xlu0 0
    %452 = vperm.xlu0 %451, %v349
    %v453 = vpop.permute.xlu0 %452
    %456 = vset.pattern.permute.xlu0 0
    %457 = vperm.xlu0 %456, %v350
    %v458 = vpop.permute.xlu0 %457
    %461 = vset.pattern.permute.xlu0 0
    %462 = vperm.xlu0 %461, %v351
    %v463 = vpop.permute.xlu0 %462
    %466 = vset.pattern.permute.xlu0 0
    %467 = vperm.xlu0 %466, %v352
    %v468 = vpop.permute.xlu0 %467
    %471 = vset.pattern.permute.xlu0 0
    %472 = vperm.xlu0 %471, %v353
    %v473 = vpop.permute.xlu0 %472
    %476 = vset.pattern.permute.xlu0 0
    %477 = vperm.xlu0 %476, %v354
    %v478 = vpop.permute.xlu0 %477
    %481 = vset.pattern.permute.xlu0 0
    %482 = vperm.xlu0 %481, %v355
    %v483 = vpop.permute.xlu0 %482
    %486 = vset.pattern.permute.xlu0 0
    %487 = vperm.xlu0 %486, %v356
    %v488 = vpop.permute.xlu0 %487
    %491 = vset.pattern.permute.xlu0 0
    %492 = vperm.xlu0 %491, %v357
    %v493 = vpop.permute.xlu0 %492
    %496 = vset.pattern.permute.xlu0 0
    %497 = vperm.xlu0 %496, %v358
    %v498 = vpop.permute.xlu0 %497
    %501 = vset.pattern.permute.xlu0 0
    %502 = vperm.xlu0 %501, %v359
    %v503 = vpop.permute.xlu0 %502
    %506 = vset.pattern.permute.xlu0 0
    %507 = vperm.xlu0 %506, %v360
    %v508 = vpop.permute.xlu0 %507
    %511 = vset.pattern.permute.xlu0 0
    %512 = vperm.xlu0 %511, %v361
    %v513 = vpop.permute.xlu0 %512
    %516 = vset.pattern.permute.xlu0 0
    %517 = vperm.xlu0 %516, %v362
    %v518 = vpop.permute.xlu0 %517
    %521 = vset.pattern.permute.xlu0 0
    %522 = vperm.xlu0 %521, %v363
    %v523 = vpop.permute.xlu0 %522
    %v525 = vlaneseq
    %v526 = vshrl.u32 %v525, 7
    %v527 = vsub.s32 0, %v526
    %v528 = vrot.slane %v364, %v527
    %v529 = vmul.f32 %v368, %v528
    %v530 = vmul.f32 %v373, %v528
    %v531 = vmul.f32 %v378, %v528
    %v532 = vmul.f32 %v383, %v528
    %v533 = vmul.f32 %v388, %v528
    %v534 = vmul.f32 %v393, %v528
    %v535 = vmul.f32 %v398, %v528
    %v536 = vmul.f32 %v403, %v528
    %v537 = vmul.f32 %v408, %v528
    %v538 = vmul.f32 %v413, %v528
    %v539 = vmul.f32 %v418, %v528
    %v540 = vmul.f32 %v423, %v528
    %v541 = vmul.f32 %v428, %v528
    %v542 = vmul.f32 %v433, %v528
    %v543 = vmul.f32 %v438, %v528
    %v544 = vmul.f32 %v443, %v528
    %v545 = vmul.f32 %v448, %v528
    %v546 = vmul.f32 %v453, %v528
    %v547 = vmul.f32 %v458, %v528
    %v548 = vmul.f32 %v463, %v528
    %v549 = vmul.f32 %v468, %v528
    %v550 = vmul.f32 %v473, %v528
    %v551 = vmul.f32 %v478, %v528
    %v552 = vmul.f32 %v483, %v528
    %v553 = vmul.f32 %v488, %v528
    %v554 = vmul.f32 %v493, %v528
    %v555 = vmul.f32 %v498, %v528
    %v556 = vmul.f32 %v503, %v528
    %v557 = vmul.f32 %v508, %v528
    %v558 = vmul.f32 %v513, %v528
    %v559 = vmul.f32 %v518, %v528
    %v560 = vmul.f32 %v523, %v528
    %v561 = vadd.f32 %v300, %v529
    %v562 = vadd.f32 %v301, %v530
    %v563 = vadd.f32 %v302, %v531
    %v564 = vadd.f32 %v303, %v532
    %v565 = vadd.f32 %v304, %v533
    %v566 = vadd.f32 %v305, %v534
    %v567 = vadd.f32 %v306, %v535
    %v568 = vadd.f32 %v307, %v536
    %v569 = vadd.f32 %v308, %v537
    %v570 = vadd.f32 %v309, %v538
    %v571 = vadd.f32 %v310, %v539
    %v572 = vadd.f32 %v311, %v540
    %v573 = vadd.f32 %v312, %v541
    %v574 = vadd.f32 %v313, %v542
    %v575 = vadd.f32 %v314, %v543
    %v576 = vadd.f32 %v315, %v544
    %v577 = vadd.f32 %v316, %v545
    %v578 = vadd.f32 %v317, %v546
    %v579 = vadd.f32 %v318, %v547
    %v580 = vadd.f32 %v319, %v548
    %v581 = vadd.f32 %v320, %v549
    %v582 = vadd.f32 %v321, %v550
    %v583 = vadd.f32 %v322, %v551
    %v584 = vadd.f32 %v323, %v552
    %v585 = vadd.f32 %v324, %v553
    %v586 = vadd.f32 %v325, %v554
    %v587 = vadd.f32 %v326, %v555
    %v588 = vadd.f32 %v327, %v556
    %v589 = vadd.f32 %v328, %v557
    %v590 = vadd.f32 %v329, %v558
    %v591 = vadd.f32 %v330, %v559
    %v592 = vadd.f32 %v331, %v560
    %v593 = vld [vmem:[%s1 + $0x2] sm:$0xff]
    %v594 = vld [vmem:[%s1 + $0xa] sm:$0xff]
    %v595 = vld [vmem:[%s1 + $0x1a] sm:$0xff]
    %v596 = vld [vmem:[%s1 + $0x22] sm:$0xff]
    %v597 = vld [vmem:[%s1 + $0x32] sm:$0xff]
    %v598 = vld [vmem:[%s1 + $0x3a] sm:$0xff]
    %v599 = vld [vmem:[%s1 + $0x4a] sm:$0xff]
    %v600 = vld [vmem:[%s1 + $0x52] sm:$0xff]
    %v601 = vld [vmem:[%s1 + $0x62] sm:$0xff]
    %v602 = vld [vmem:[%s1 + $0x6a] sm:$0xff]
    %v603 = vld [vmem:[%s1 + $0x7a] sm:$0xff]
    %v604 = vld [vmem:[%s1 + $0x82] sm:$0xff]
    %v605 = vld [vmem:[%s1 + $0x92] sm:$0xff]
    %v606 = vld [vmem:[%s1 + $0x9a] sm:$0xff]
    %v607 = vld [vmem:[%s1 + $0xaa] sm:$0xff]
    %v608 = vld [vmem:[%s1 + $0xb2] sm:$0xff]
    %v609 = vld [vmem:[%s1 + $0xf2] sm:$0xff]
    %v610 = vld [vmem:[%s1 + $0xfa] sm:$0xff]
    %v611 = vld [vmem:[%s1 + $0x10a] sm:$0xff]
    %v612 = vld [vmem:[%s1 + $0x112] sm:$0xff]
    %v613 = vld [vmem:[%s1 + $0x122] sm:$0xff]
    %v614 = vld [vmem:[%s1 + $0x12a] sm:$0xff]
    %v615 = vld [vmem:[%s1 + $0x13a] sm:$0xff]
    %v616 = vld [vmem:[%s1 + $0x142] sm:$0xff]
    %v617 = vld [vmem:[%s1 + $0x152] sm:$0xff]
    %v618 = vld [vmem:[%s1 + $0x15a] sm:$0xff]
    %v619 = vld [vmem:[%s1 + $0x16a] sm:$0xff]
    %v620 = vld [vmem:[%s1 + $0x172] sm:$0xff]
    %v621 = vld [vmem:[%s1 + $0x182] sm:$0xff]
    %v622 = vld [vmem:[%s1 + $0x18a] sm:$0xff]
    %v623 = vld [vmem:[%s1 + $0x19a] sm:$0xff]
    %v624 = vld [vmem:[%s1 + $0x1a2] sm:$0xff]
    %v625 = vld [vmem:[%s2 + $0x2] sm:$0x1]
    %627 = vset.pattern.permute.xlu0 0
    %628 = vperm.xlu0 %627, %v593
    %v629 = vpop.permute.xlu0 %628
    %632 = vset.pattern.permute.xlu0 0
    %633 = vperm.xlu0 %632, %v594
    %v634 = vpop.permute.xlu0 %633
    %637 = vset.pattern.permute.xlu0 0
    %638 = vperm.xlu0 %637, %v595
    %v639 = vpop.permute.xlu0 %638
    %642 = vset.pattern.permute.xlu0 0
    %643 = vperm.xlu0 %642, %v596
    %v644 = vpop.permute.xlu0 %643
    %647 = vset.pattern.permute.xlu0 0
    %648 = vperm.xlu0 %647, %v597
    %v649 = vpop.permute.xlu0 %648
    %652 = vset.pattern.permute.xlu0 0
    %653 = vperm.xlu0 %652, %v598
    %v654 = vpop.permute.xlu0 %653
    %657 = vset.pattern.permute.xlu0 0
    %658 = vperm.xlu0 %657, %v599
    %v659 = vpop.permute.xlu0 %658
    %662 = vset.pattern.permute.xlu0 0
    %663 = vperm.xlu0 %662, %v600
    %v664 = vpop.permute.xlu0 %663
    %667 = vset.pattern.permute.xlu0 0
    %668 = vperm.xlu0 %667, %v601
    %v669 = vpop.permute.xlu0 %668
    %672 = vset.pattern.permute.xlu0 0
    %673 = vperm.xlu0 %672, %v602
    %v674 = vpop.permute.xlu0 %673
    %677 = vset.pattern.permute.xlu0 0
    %678 = vperm.xlu0 %677, %v603
    %v679 = vpop.permute.xlu0 %678
    %682 = vset.pattern.permute.xlu0 0
    %683 = vperm.xlu0 %682, %v604
    %v684 = vpop.permute.xlu0 %683
    %687 = vset.pattern.permute.xlu0 0
    %688 = vperm.xlu0 %687, %v605
    %v689 = vpop.permute.xlu0 %688
    %692 = vset.pattern.permute.xlu0 0
    %693 = vperm.xlu0 %692, %v606
    %v694 = vpop.permute.xlu0 %693
    %697 = vset.pattern.permute.xlu0 0
    %698 = vperm.xlu0 %697, %v607
    %v699 = vpop.permute.xlu0 %698
    %702 = vset.pattern.permute.xlu0 0
    %703 = vperm.xlu0 %702, %v608
    %v704 = vpop.permute.xlu0 %703
    %707 = vset.pattern.permute.xlu0 0
    %708 = vperm.xlu0 %707, %v609
    %v709 = vpop.permute.xlu0 %708
    %712 = vset.pattern.permute.xlu0 0
    %713 = vperm.xlu0 %712, %v610
    %v714 = vpop.permute.xlu0 %713
    %717 = vset.pattern.permute.xlu0 0
    %718 = vperm.xlu0 %717, %v611
    %v719 = vpop.permute.xlu0 %718
    %722 = vset.pattern.permute.xlu0 0
    %723 = vperm.xlu0 %722, %v612
    %v724 = vpop.permute.xlu0 %723
    %727 = vset.pattern.permute.xlu0 0
    %728 = vperm.xlu0 %727, %v613
    %v729 = vpop.permute.xlu0 %728
    %732 = vset.pattern.permute.xlu0 0
    %733 = vperm.xlu0 %732, %v614
    %v734 = vpop.permute.xlu0 %733
    %737 = vset.pattern.permute.xlu0 0
    %738 = vperm.xlu0 %737, %v615
    %v739 = vpop.permute.xlu0 %738
    %742 = vset.pattern.permute.xlu0 0
    %743 = vperm.xlu0 %742, %v616
    %v744 = vpop.permute.xlu0 %743
    %747 = vset.pattern.permute.xlu0 0
    %748 = vperm.xlu0 %747, %v617
    %v749 = vpop.permute.xlu0 %748
    %752 = vset.pattern.permute.xlu0 0
    %753 = vperm.xlu0 %752, %v618
    %v754 = vpop.permute.xlu0 %753
    %757 = vset.pattern.permute.xlu0 0
    %758 = vperm.xlu0 %757, %v619
    %v759 = vpop.permute.xlu0 %758
    %762 = vset.pattern.permute.xlu0 0
    %763 = vperm.xlu0 %762, %v620
    %v764 = vpop.permute.xlu0 %763
    %767 = vset.pattern.permute.xlu0 0
    %768 = vperm.xlu0 %767, %v621
    %v769 = vpop.permute.xlu0 %768
    %772 = vset.pattern.permute.xlu0 0
    %773 = vperm.xlu0 %772, %v622
    %v774 = vpop.permute.xlu0 %773
    %777 = vset.pattern.permute.xlu0 0
    %778 = vperm.xlu0 %777, %v623
    %v779 = vpop.permute.xlu0 %778
    %782 = vset.pattern.permute.xlu0 0
    %783 = vperm.xlu0 %782, %v624
    %v784 = vpop.permute.xlu0 %783
    %v786 = vlaneseq
    %v787 = vshrl.u32 %v786, 7
    %v788 = vsub.s32 0, %v787
    %v789 = vrot.slane %v625, %v788
    %v790 = vmul.f32 %v629, %v789
    %v791 = vmul.f32 %v634, %v789
    %v792 = vmul.f32 %v639, %v789
    %v793 = vmul.f32 %v644, %v789
    %v794 = vmul.f32 %v649, %v789
    %v795 = vmul.f32 %v654, %v789
    %v796 = vmul.f32 %v659, %v789
    %v797 = vmul.f32 %v664, %v789
    %v798 = vmul.f32 %v669, %v789
    %v799 = vmul.f32 %v674, %v789
    %v800 = vmul.f32 %v679, %v789
    %v801 = vmul.f32 %v684, %v789
    %v802 = vmul.f32 %v689, %v789
    %v803 = vmul.f32 %v694, %v789
    %v804 = vmul.f32 %v699, %v789
    %v805 = vmul.f32 %v704, %v789
    %v806 = vmul.f32 %v709, %v789
    %v807 = vmul.f32 %v714, %v789
    %v808 = vmul.f32 %v719, %v789
    %v809 = vmul.f32 %v724, %v789
    %v810 = vmul.f32 %v729, %v789
    %v811 = vmul.f32 %v734, %v789
    %v812 = vmul.f32 %v739, %v789
    %v813 = vmul.f32 %v744, %v789
    %v814 = vmul.f32 %v749, %v789
    %v815 = vmul.f32 %v754, %v789
    %v816 = vmul.f32 %v759, %v789
    %v817 = vmul.f32 %v764, %v789
    %v818 = vmul.f32 %v769, %v789
    %v819 = vmul.f32 %v774, %v789
    %v820 = vmul.f32 %v779, %v789
    %v821 = vmul.f32 %v784, %v789
    %v822 = vadd.f32 %v561, %v790
    %v823 = vadd.f32 %v562, %v791
    %v824 = vadd.f32 %v563, %v792
    %v825 = vadd.f32 %v564, %v793
    %v826 = vadd.f32 %v565, %v794
    %v827 = vadd.f32 %v566, %v795
    %v828 = vadd.f32 %v567, %v796
    %v829 = vadd.f32 %v568, %v797
    %v830 = vadd.f32 %v569, %v798
    %v831 = vadd.f32 %v570, %v799
    %v832 = vadd.f32 %v571, %v800
    %v833 = vadd.f32 %v572, %v801
    %v834 = vadd.f32 %v573, %v802
    %v835 = vadd.f32 %v574, %v803
    %v836 = vadd.f32 %v575, %v804
    %v837 = vadd.f32 %v576, %v805
    %v838 = vadd.f32 %v577, %v806
    %v839 = vadd.f32 %v578, %v807
    %v840 = vadd.f32 %v579, %v808
    %v841 = vadd.f32 %v580, %v809
    %v842 = vadd.f32 %v581, %v810
    %v843 = vadd.f32 %v582, %v811
    %v844 = vadd.f32 %v583, %v812
    %v845 = vadd.f32 %v584, %v813
    %v846 = vadd.f32 %v585, %v814
    %v847 = vadd.f32 %v586, %v815
    %v848 = vadd.f32 %v587, %v816
    %v849 = vadd.f32 %v588, %v817
    %v850 = vadd.f32 %v589, %v818
    %v851 = vadd.f32 %v590, %v819
    %v852 = vadd.f32 %v591, %v820
    %v853 = vadd.f32 %v592, %v821
    %s854 = scalar_lea.vmem %s1, 24
    %v855 = vld [vmem:[%s854] sm:$0xff]
    %v856 = vld [vmem:[%s854 + $0x8] sm:$0xff]
    %v857 = vld [vmem:[%s854 + $0x18] sm:$0xff]
    %v858 = vld [vmem:[%s854 + $0x20] sm:$0xff]
    %v859 = vld [vmem:[%s854 + $0x30] sm:$0xff]
    %v860 = vld [vmem:[%s854 + $0x38] sm:$0xff]
    %v861 = vld [vmem:[%s854 + $0x48] sm:$0xff]
    %v862 = vld [vmem:[%s854 + $0x50] sm:$0xff]
    %v863 = vld [vmem:[%s854 + $0x60] sm:$0xff]
    %v864 = vld [vmem:[%s854 + $0x68] sm:$0xff]
    %v865 = vld [vmem:[%s854 + $0x78] sm:$0xff]
    %v866 = vld [vmem:[%s854 + $0x80] sm:$0xff]
    %v867 = vld [vmem:[%s854 + $0x90] sm:$0xff]
    %v868 = vld [vmem:[%s854 + $0x98] sm:$0xff]
    %v869 = vld [vmem:[%s854 + $0xa8] sm:$0xff]
    %v870 = vld [vmem:[%s854 + $0xb0] sm:$0xff]
    %v871 = vld [vmem:[%s854 + $0xf0] sm:$0xff]
    %v872 = vld [vmem:[%s854 + $0xf8] sm:$0xff]
    %v873 = vld [vmem:[%s854 + $0x108] sm:$0xff]
    %v874 = vld [vmem:[%s854 + $0x110] sm:$0xff]
    %v875 = vld [vmem:[%s854 + $0x120] sm:$0xff]
    %v876 = vld [vmem:[%s854 + $0x128] sm:$0xff]
    %v877 = vld [vmem:[%s854 + $0x138] sm:$0xff]
    %v878 = vld [vmem:[%s854 + $0x140] sm:$0xff]
    %v879 = vld [vmem:[%s854 + $0x150] sm:$0xff]
    %v880 = vld [vmem:[%s854 + $0x158] sm:$0xff]
    %v881 = vld [vmem:[%s854 + $0x168] sm:$0xff]
    %v882 = vld [vmem:[%s854 + $0x170] sm:$0xff]
    %v883 = vld [vmem:[%s854 + $0x180] sm:$0xff]
    %v884 = vld [vmem:[%s854 + $0x188] sm:$0xff]
    %v885 = vld [vmem:[%s854 + $0x198] sm:$0xff]
    %v886 = vld [vmem:[%s854 + $0x1a0] sm:$0xff]
    %s887 = scalar_lea.vmem %s2, 4
    %v888 = vld [vmem:[%s887] sm:$0x1]
    %890 = vset.pattern.permute.xlu0 0
    %891 = vperm.xlu0 %890, %v855
    %v892 = vpop.permute.xlu0 %891
    %895 = vset.pattern.permute.xlu0 0
    %896 = vperm.xlu0 %895, %v856
    %v897 = vpop.permute.xlu0 %896
    %900 = vset.pattern.permute.xlu0 0
    %901 = vperm.xlu0 %900, %v857
    %v902 = vpop.permute.xlu0 %901
    %905 = vset.pattern.permute.xlu0 0
    %906 = vperm.xlu0 %905, %v858
    %v907 = vpop.permute.xlu0 %906
    %910 = vset.pattern.permute.xlu0 0
    %911 = vperm.xlu0 %910, %v859
    %v912 = vpop.permute.xlu0 %911
    %915 = vset.pattern.permute.xlu0 0
    %916 = vperm.xlu0 %915, %v860
    %v917 = vpop.permute.xlu0 %916
    %920 = vset.pattern.permute.xlu0 0
    %921 = vperm.xlu0 %920, %v861
    %v922 = vpop.permute.xlu0 %921
    %925 = vset.pattern.permute.xlu0 0
    %926 = vperm.xlu0 %925, %v862
    %v927 = vpop.permute.xlu0 %926
    %930 = vset.pattern.permute.xlu0 0
    %931 = vperm.xlu0 %930, %v863
    %v932 = vpop.permute.xlu0 %931
    %935 = vset.pattern.permute.xlu0 0
    %936 = vperm.xlu0 %935, %v864
    %v937 = vpop.permute.xlu0 %936
    %940 = vset.pattern.permute.xlu0 0
    %941 = vperm.xlu0 %940, %v865
    %v942 = vpop.permute.xlu0 %941
    %945 = vset.pattern.permute.xlu0 0
    %946 = vperm.xlu0 %945, %v866
    %v947 = vpop.permute.xlu0 %946
    %950 = vset.pattern.permute.xlu0 0
    %951 = vperm.xlu0 %950, %v867
    %v952 = vpop.permute.xlu0 %951
    %955 = vset.pattern.permute.xlu0 0
    %956 = vperm.xlu0 %955, %v868
    %v957 = vpop.permute.xlu0 %956
    %960 = vset.pattern.permute.xlu0 0
    %961 = vperm.xlu0 %960, %v869
    %v962 = vpop.permute.xlu0 %961
    %965 = vset.pattern.permute.xlu0 0
    %966 = vperm.xlu0 %965, %v870
    %v967 = vpop.permute.xlu0 %966
    %970 = vset.pattern.permute.xlu0 0
    %971 = vperm.xlu0 %970, %v871
    %v972 = vpop.permute.xlu0 %971
    %975 = vset.pattern.permute.xlu0 0
    %976 = vperm.xlu0 %975, %v872
    %v977 = vpop.permute.xlu0 %976
    %980 = vset.pattern.permute.xlu0 0
    %981 = vperm.xlu0 %980, %v873
    %v982 = vpop.permute.xlu0 %981
    %985 = vset.pattern.permute.xlu0 0
    %986 = vperm.xlu0 %985, %v874
    %v987 = vpop.permute.xlu0 %986
    %990 = vset.pattern.permute.xlu0 0
    %991 = vperm.xlu0 %990, %v875
    %v992 = vpop.permute.xlu0 %991
    %995 = vset.pattern.permute.xlu0 0
    %996 = vperm.xlu0 %995, %v876
    %v997 = vpop.permute.xlu0 %996
    %1000 = vset.pattern.permute.xlu0 0
    %1001 = vperm.xlu0 %1000, %v877
    %v1002 = vpop.permute.xlu0 %1001
    %1005 = vset.pattern.permute.xlu0 0
    %1006 = vperm.xlu0 %1005, %v878
    %v1007 = vpop.permute.xlu0 %1006
    %1010 = vset.pattern.permute.xlu0 0
    %1011 = vperm.xlu0 %1010, %v879
    %v1012 = vpop.permute.xlu0 %1011
    %1015 = vset.pattern.permute.xlu0 0
    %1016 = vperm.xlu0 %1015, %v880
    %v1017 = vpop.permute.xlu0 %1016
    %1020 = vset.pattern.permute.xlu0 0
    %1021 = vperm.xlu0 %1020, %v881
    %v1022 = vpop.permute.xlu0 %1021
    %1025 = vset.pattern.permute.xlu0 0
    %1026 = vperm.xlu0 %1025, %v882
    %v1027 = vpop.permute.xlu0 %1026
    %1030 = vset.pattern.permute.xlu0 0
    %1031 = vperm.xlu0 %1030, %v883
    %v1032 = vpop.permute.xlu0 %1031
    %1035 = vset.pattern.permute.xlu0 0
    %1036 = vperm.xlu0 %1035, %v884
    %v1037 = vpop.permute.xlu0 %1036
    %1040 = vset.pattern.permute.xlu0 0
    %1041 = vperm.xlu0 %1040, %v885
    %v1042 = vpop.permute.xlu0 %1041
    %1045 = vset.pattern.permute.xlu0 0
    %1046 = vperm.xlu0 %1045, %v886
    %v1047 = vpop.permute.xlu0 %1046
    %v1049 = vlaneseq
    %v1050 = vshrl.u32 %v1049, 7
    %v1051 = vsub.s32 0, %v1050
    %v1052 = vrot.slane %v888, %v1051
    %v1053 = vmul.f32 %v892, %v1052
    %v1054 = vmul.f32 %v897, %v1052
    %v1055 = vmul.f32 %v902, %v1052
    %v1056 = vmul.f32 %v907, %v1052
    %v1057 = vmul.f32 %v912, %v1052
    %v1058 = vmul.f32 %v917, %v1052
    %v1059 = vmul.f32 %v922, %v1052
    %v1060 = vmul.f32 %v927, %v1052
    %v1061 = vmul.f32 %v932, %v1052
    %v1062 = vmul.f32 %v937, %v1052
    %v1063 = vmul.f32 %v942, %v1052
    %v1064 = vmul.f32 %v947, %v1052
    %v1065 = vmul.f32 %v952, %v1052
    %v1066 = vmul.f32 %v957, %v1052
    %v1067 = vmul.f32 %v962, %v1052
    %v1068 = vmul.f32 %v967, %v1052
    %v1069 = vmul.f32 %v972, %v1052
    %v1070 = vmul.f32 %v977, %v1052
    %v1071 = vmul.f32 %v982, %v1052
    %v1072 = vmul.f32 %v987, %v1052
    %v1073 = vmul.f32 %v992, %v1052
    %v1074 = vmul.f32 %v997, %v1052
    %v1075 = vmul.f32 %v1002, %v1052
    %v1076 = vmul.f32 %v1007, %v1052
    %v1077 = vmul.f32 %v1012, %v1052
    %v1078 = vmul.f32 %v1017, %v1052
    %v1079 = vmul.f32 %v1022, %v1052
    %v1080 = vmul.f32 %v1027, %v1052
    %v1081 = vmul.f32 %v1032, %v1052
    %v1082 = vmul.f32 %v1037, %v1052
    %v1083 = vmul.f32 %v1042, %v1052
    %v1084 = vmul.f32 %v1047, %v1052
    %v1085 = vadd.f32 %v822, %v1053
    %v1086 = vadd.f32 %v823, %v1054
    %v1087 = vadd.f32 %v824, %v1055
    %v1088 = vadd.f32 %v825, %v1056
    %v1089 = vadd.f32 %v826, %v1057
    %v1090 = vadd.f32 %v827, %v1058
    %v1091 = vadd.f32 %v828, %v1059
    %v1092 = vadd.f32 %v829, %v1060
    %v1093 = vadd.f32 %v830, %v1061
    %v1094 = vadd.f32 %v831, %v1062
    %v1095 = vadd.f32 %v832, %v1063
    %v1096 = vadd.f32 %v833, %v1064
    %v1097 = vadd.f32 %v834, %v1065
    %v1098 = vadd.f32 %v835, %v1066
    %v1099 = vadd.f32 %v836, %v1067
    %v1100 = vadd.f32 %v837, %v1068
    %v1101 = vadd.f32 %v838, %v1069
    %v1102 = vadd.f32 %v839, %v1070
    %v1103 = vadd.f32 %v840, %v1071
    %v1104 = vadd.f32 %v841, %v1072
    %v1105 = vadd.f32 %v842, %v1073
    %v1106 = vadd.f32 %v843, %v1074
    %v1107 = vadd.f32 %v844, %v1075
    %v1108 = vadd.f32 %v845, %v1076
    %v1109 = vadd.f32 %v846, %v1077
    %v1110 = vadd.f32 %v847, %v1078
    %v1111 = vadd.f32 %v848, %v1079
    %v1112 = vadd.f32 %v849, %v1080
    %v1113 = vadd.f32 %v850, %v1081
    %v1114 = vadd.f32 %v851, %v1082
    %v1115 = vadd.f32 %v852, %v1083
    %v1116 = vadd.f32 %v853, %v1084
    %v1117 = vld [vmem:[%s854 + $0x1] sm:$0xff]
    %v1118 = vld [vmem:[%s854 + $0x9] sm:$0xff]
    %v1119 = vld [vmem:[%s854 + $0x19] sm:$0xff]
    %v1120 = vld [vmem:[%s854 + $0x21] sm:$0xff]
    %v1121 = vld [vmem:[%s854 + $0x31] sm:$0xff]
    %v1122 = vld [vmem:[%s854 + $0x39] sm:$0xff]
    %v1123 = vld [vmem:[%s854 + $0x49] sm:$0xff]
    %v1124 = vld [vmem:[%s854 + $0x51] sm:$0xff]
    %v1125 = vld [vmem:[%s854 + $0x61] sm:$0xff]
    %v1126 = vld [vmem:[%s854 + $0x69] sm:$0xff]
    %v1127 = vld [vmem:[%s854 + $0x79] sm:$0xff]
    %v1128 = vld [vmem:[%s854 + $0x81] sm:$0xff]
    %v1129 = vld [vmem:[%s854 + $0x91] sm:$0xff]
    %v1130 = vld [vmem:[%s854 + $0x99] sm:$0xff]
    %v1131 = vld [vmem:[%s854 + $0xa9] sm:$0xff]
    %v1132 = vld [vmem:[%s854 + $0xb1] sm:$0xff]
    %v1133 = vld [vmem:[%s854 + $0xf1] sm:$0xff]
    %v1134 = vld [vmem:[%s854 + $0xf9] sm:$0xff]
    %v1135 = vld [vmem:[%s854 + $0x109] sm:$0xff]
    %v1136 = vld [vmem:[%s854 + $0x111] sm:$0xff]
    %v1137 = vld [vmem:[%s854 + $0x121] sm:$0xff]
    %v1138 = vld [vmem:[%s854 + $0x129] sm:$0xff]
    %v1139 = vld [vmem:[%s854 + $0x139] sm:$0xff]
    %v1140 = vld [vmem:[%s854 + $0x141] sm:$0xff]
    %v1141 = vld [vmem:[%s854 + $0x151] sm:$0xff]
    %v1142 = vld [vmem:[%s854 + $0x159] sm:$0xff]
    %v1143 = vld [vmem:[%s854 + $0x169] sm:$0xff]
    %v1144 = vld [vmem:[%s854 + $0x171] sm:$0xff]
    %v1145 = vld [vmem:[%s854 + $0x181] sm:$0xff]
    %v1146 = vld [vmem:[%s854 + $0x189] sm:$0xff]
    %v1147 = vld [vmem:[%s854 + $0x199] sm:$0xff]
    %v1148 = vld [vmem:[%s854 + $0x1a1] sm:$0xff]
    %v1149 = vld [vmem:[%s887 + $0x1] sm:$0x1]
    %1151 = vset.pattern.permute.xlu0 0
    %1152 = vperm.xlu0 %1151, %v1117
    %v1153 = vpop.permute.xlu0 %1152
    %1156 = vset.pattern.permute.xlu0 0
    %1157 = vperm.xlu0 %1156, %v1118
    %v1158 = vpop.permute.xlu0 %1157
    %1161 = vset.pattern.permute.xlu0 0
    %1162 = vperm.xlu0 %1161, %v1119
    %v1163 = vpop.permute.xlu0 %1162
    %1166 = vset.pattern.permute.xlu0 0
    %1167 = vperm.xlu0 %1166, %v1120
    %v1168 = vpop.permute.xlu0 %1167
    %1171 = vset.pattern.permute.xlu0 0
    %1172 = vperm.xlu0 %1171, %v1121
    %v1173 = vpop.permute.xlu0 %1172
    %1176 = vset.pattern.permute.xlu0 0
    %1177 = vperm.xlu0 %1176, %v1122
    %v1178 = vpop.permute.xlu0 %1177
    %1181 = vset.pattern.permute.xlu0 0
    %1182 = vperm.xlu0 %1181, %v1123
    %v1183 = vpop.permute.xlu0 %1182
    %1186 = vset.pattern.permute.xlu0 0
    %1187 = vperm.xlu0 %1186, %v1124
    %v1188 = vpop.permute.xlu0 %1187
    %1191 = vset.pattern.permute.xlu0 0
    %1192 = vperm.xlu0 %1191, %v1125
    %v1193 = vpop.permute.xlu0 %1192
    %1196 = vset.pattern.permute.xlu0 0
    %1197 = vperm.xlu0 %1196, %v1126
    %v1198 = vpop.permute.xlu0 %1197
    %1201 = vset.pattern.permute.xlu0 0
    %1202 = vperm.xlu0 %1201, %v1127
    %v1203 = vpop.permute.xlu0 %1202
    %1206 = vset.pattern.permute.xlu0 0
    %1207 = vperm.xlu0 %1206, %v1128
    %v1208 = vpop.permute.xlu0 %1207
    %1211 = vset.pattern.permute.xlu0 0
    %1212 = vperm.xlu0 %1211, %v1129
    %v1213 = vpop.permute.xlu0 %1212
    %1216 = vset.pattern.permute.xlu0 0
    %1217 = vperm.xlu0 %1216, %v1130
    %v1218 = vpop.permute.xlu0 %1217
    %1221 = vset.pattern.permute.xlu0 0
    %1222 = vperm.xlu0 %1221, %v1131
    %v1223 = vpop.permute.xlu0 %1222
    %1226 = vset.pattern.permute.xlu0 0
    %1227 = vperm.xlu0 %1226, %v1132
    %v1228 = vpop.permute.xlu0 %1227
    %1231 = vset.pattern.permute.xlu0 0
    %1232 = vperm.xlu0 %1231, %v1133
    %v1233 = vpop.permute.xlu0 %1232
    %1236 = vset.pattern.permute.xlu0 0
    %1237 = vperm.xlu0 %1236, %v1134
    %v1238 = vpop.permute.xlu0 %1237
    %1241 = vset.pattern.permute.xlu0 0
    %1242 = vperm.xlu0 %1241, %v1135
    %v1243 = vpop.permute.xlu0 %1242
    %1246 = vset.pattern.permute.xlu0 0
    %1247 = vperm.xlu0 %1246, %v1136
    %v1248 = vpop.permute.xlu0 %1247
    %1251 = vset.pattern.permute.xlu0 0
    %1252 = vperm.xlu0 %1251, %v1137
    %v1253 = vpop.permute.xlu0 %1252
    %1256 = vset.pattern.permute.xlu0 0
    %1257 = vperm.xlu0 %1256, %v1138
    %v1258 = vpop.permute.xlu0 %1257
    %1261 = vset.pattern.permute.xlu0 0
    %1262 = vperm.xlu0 %1261, %v1139
    %v1263 = vpop.permute.xlu0 %1262
    %1266 = vset.pattern.permute.xlu0 0
    %1267 = vperm.xlu0 %1266, %v1140
    %v1268 = vpop.permute.xlu0 %1267
    %1271 = vset.pattern.permute.xlu0 0
    %1272 = vperm.xlu0 %1271, %v1141
    %v1273 = vpop.permute.xlu0 %1272
    %1276 = vset.pattern.permute.xlu0 0
    %1277 = vperm.xlu0 %1276, %v1142
    %v1278 = vpop.permute.xlu0 %1277
    %1281 = vset.pattern.permute.xlu0 0
    %1282 = vperm.xlu0 %1281, %v1143
    %v1283 = vpop.permute.xlu0 %1282
    %1286 = vset.pattern.permute.xlu0 0
    %1287 = vperm.xlu0 %1286, %v1144
    %v1288 = vpop.permute.xlu0 %1287
    %1291 = vset.pattern.permute.xlu0 0
    %1292 = vperm.xlu0 %1291, %v1145
    %v1293 = vpop.permute.xlu0 %1292
    %1296 = vset.pattern.permute.xlu0 0
    %1297 = vperm.xlu0 %1296, %v1146
    %v1298 = vpop.permute.xlu0 %1297
    %1301 = vset.pattern.permute.xlu0 0
    %1302 = vperm.xlu0 %1301, %v1147
    %v1303 = vpop.permute.xlu0 %1302
    %1306 = vset.pattern.permute.xlu0 0
    %1307 = vperm.xlu0 %1306, %v1148
    %v1308 = vpop.permute.xlu0 %1307
    %v1310 = vlaneseq
    %v1311 = vshrl.u32 %v1310, 7
    %v1312 = vsub.s32 0, %v1311
    %v1313 = vrot.slane %v1149, %v1312
    %v1314 = vmul.f32 %v1153, %v1313
    %v1315 = vmul.f32 %v1158, %v1313
    %v1316 = vmul.f32 %v1163, %v1313
    %v1317 = vmul.f32 %v1168, %v1313
    %v1318 = vmul.f32 %v1173, %v1313
    %v1319 = vmul.f32 %v1178, %v1313
    %v1320 = vmul.f32 %v1183, %v1313
    %v1321 = vmul.f32 %v1188, %v1313
    %v1322 = vmul.f32 %v1193, %v1313
    %v1323 = vmul.f32 %v1198, %v1313
    %v1324 = vmul.f32 %v1203, %v1313
    %v1325 = vmul.f32 %v1208, %v1313
    %v1326 = vmul.f32 %v1213, %v1313
    %v1327 = vmul.f32 %v1218, %v1313
    %v1328 = vmul.f32 %v1223, %v1313
    %v1329 = vmul.f32 %v1228, %v1313
    %v1330 = vmul.f32 %v1233, %v1313
    %v1331 = vmul.f32 %v1238, %v1313
    %v1332 = vmul.f32 %v1243, %v1313
    %v1333 = vmul.f32 %v1248, %v1313
    %v1334 = vmul.f32 %v1253, %v1313
    %v1335 = vmul.f32 %v1258, %v1313
    %v1336 = vmul.f32 %v1263, %v1313
    %v1337 = vmul.f32 %v1268, %v1313
    %v1338 = vmul.f32 %v1273, %v1313
    %v1339 = vmul.f32 %v1278, %v1313
    %v1340 = vmul.f32 %v1283, %v1313
    %v1341 = vmul.f32 %v1288, %v1313
    %v1342 = vmul.f32 %v1293, %v1313
    %v1343 = vmul.f32 %v1298, %v1313
    %v1344 = vmul.f32 %v1303, %v1313
    %v1345 = vmul.f32 %v1308, %v1313
    %v1346 = vadd.f32 %v1085, %v1314
    %v1347 = vadd.f32 %v1086, %v1315
    %v1348 = vadd.f32 %v1087, %v1316
    %v1349 = vadd.f32 %v1088, %v1317
    %v1350 = vadd.f32 %v1089, %v1318
    %v1351 = vadd.f32 %v1090, %v1319
    %v1352 = vadd.f32 %v1091, %v1320
    %v1353 = vadd.f32 %v1092, %v1321
    %v1354 = vadd.f32 %v1093, %v1322
    %v1355 = vadd.f32 %v1094, %v1323
    %v1356 = vadd.f32 %v1095, %v1324
    %v1357 = vadd.f32 %v1096, %v1325
    %v1358 = vadd.f32 %v1097, %v1326
    %v1359 = vadd.f32 %v1098, %v1327
    %v1360 = vadd.f32 %v1099, %v1328
    %v1361 = vadd.f32 %v1100, %v1329
    %v1362 = vadd.f32 %v1101, %v1330
    %v1363 = vadd.f32 %v1102, %v1331
    %v1364 = vadd.f32 %v1103, %v1332
    %v1365 = vadd.f32 %v1104, %v1333
    %v1366 = vadd.f32 %v1105, %v1334
    %v1367 = vadd.f32 %v1106, %v1335
    %v1368 = vadd.f32 %v1107, %v1336
    %v1369 = vadd.f32 %v1108, %v1337
    %v1370 = vadd.f32 %v1109, %v1338
    %v1371 = vadd.f32 %v1110, %v1339
    %v1372 = vadd.f32 %v1111, %v1340
    %v1373 = vadd.f32 %v1112, %v1341
    %v1374 = vadd.f32 %v1113, %v1342
    %v1375 = vadd.f32 %v1114, %v1343
    %v1376 = vadd.f32 %v1115, %v1344
    %v1377 = vadd.f32 %v1116, %v1345
    %v1378 = vld [vmem:[%s854 + $0x2] sm:$0xff]
    %v1379 = vld [vmem:[%s854 + $0xa] sm:$0xff]
    %v1380 = vld [vmem:[%s854 + $0x1a] sm:$0xff]
    %v1381 = vld [vmem:[%s854 + $0x22] sm:$0xff]
    %v1382 = vld [vmem:[%s854 + $0x32] sm:$0xff]
    %v1383 = vld [vmem:[%s854 + $0x3a] sm:$0xff]
    %v1384 = vld [vmem:[%s854 + $0x4a] sm:$0xff]
    %v1385 = vld [vmem:[%s854 + $0x52] sm:$0xff]
    %v1386 = vld [vmem:[%s854 + $0x62] sm:$0xff]
    %v1387 = vld [vmem:[%s854 + $0x6a] sm:$0xff]
    %v1388 = vld [vmem:[%s854 + $0x7a] sm:$0xff]
    %v1389 = vld [vmem:[%s854 + $0x82] sm:$0xff]
    %v1390 = vld [vmem:[%s854 + $0x92] sm:$0xff]
    %v1391 = vld [vmem:[%s854 + $0x9a] sm:$0xff]
    %v1392 = vld [vmem:[%s854 + $0xaa] sm:$0xff]
    %v1393 = vld [vmem:[%s854 + $0xb2] sm:$0xff]
    %v1394 = vld [vmem:[%s854 + $0xf2] sm:$0xff]
    %v1395 = vld [vmem:[%s854 + $0xfa] sm:$0xff]
    %v1396 = vld [vmem:[%s854 + $0x10a] sm:$0xff]
    %v1397 = vld [vmem:[%s854 + $0x112] sm:$0xff]
    %v1398 = vld [vmem:[%s854 + $0x122] sm:$0xff]
    %v1399 = vld [vmem:[%s854 + $0x12a] sm:$0xff]
    %v1400 = vld [vmem:[%s854 + $0x13a] sm:$0xff]
    %v1401 = vld [vmem:[%s854 + $0x142] sm:$0xff]
    %v1402 = vld [vmem:[%s854 + $0x152] sm:$0xff]
    %v1403 = vld [vmem:[%s854 + $0x15a] sm:$0xff]
    %v1404 = vld [vmem:[%s854 + $0x16a] sm:$0xff]
    %v1405 = vld [vmem:[%s854 + $0x172] sm:$0xff]
    %v1406 = vld [vmem:[%s854 + $0x182] sm:$0xff]
    %v1407 = vld [vmem:[%s854 + $0x18a] sm:$0xff]
    %v1408 = vld [vmem:[%s854 + $0x19a] sm:$0xff]
    %v1409 = vld [vmem:[%s854 + $0x1a2] sm:$0xff]
    %v1410 = vld [vmem:[%s887 + $0x2] sm:$0x1]
    %1412 = vset.pattern.permute.xlu0 0
    %1413 = vperm.xlu0 %1412, %v1378
    %v1414 = vpop.permute.xlu0 %1413
    %1417 = vset.pattern.permute.xlu0 0
    %1418 = vperm.xlu0 %1417, %v1379
    %v1419 = vpop.permute.xlu0 %1418
    %1422 = vset.pattern.permute.xlu0 0
    %1423 = vperm.xlu0 %1422, %v1380
    %v1424 = vpop.permute.xlu0 %1423
    %1427 = vset.pattern.permute.xlu0 0
    %1428 = vperm.xlu0 %1427, %v1381
    %v1429 = vpop.permute.xlu0 %1428
    %1432 = vset.pattern.permute.xlu0 0
    %1433 = vperm.xlu0 %1432, %v1382
    %v1434 = vpop.permute.xlu0 %1433
    %1437 = vset.pattern.permute.xlu0 0
    %1438 = vperm.xlu0 %1437, %v1383
    %v1439 = vpop.permute.xlu0 %1438
    %1442 = vset.pattern.permute.xlu0 0
    %1443 = vperm.xlu0 %1442, %v1384
    %v1444 = vpop.permute.xlu0 %1443
    %1447 = vset.pattern.permute.xlu0 0
    %1448 = vperm.xlu0 %1447, %v1385
    %v1449 = vpop.permute.xlu0 %1448
    %1452 = vset.pattern.permute.xlu0 0
    %1453 = vperm.xlu0 %1452, %v1386
    %v1454 = vpop.permute.xlu0 %1453
    %1457 = vset.pattern.permute.xlu0 0
    %1458 = vperm.xlu0 %1457, %v1387
    %v1459 = vpop.permute.xlu0 %1458
    %1462 = vset.pattern.permute.xlu0 0
    %1463 = vperm.xlu0 %1462, %v1388
    %v1464 = vpop.permute.xlu0 %1463
    %1467 = vset.pattern.permute.xlu0 0
    %1468 = vperm.xlu0 %1467, %v1389
    %v1469 = vpop.permute.xlu0 %1468
    %1472 = vset.pattern.permute.xlu0 0
    %1473 = vperm.xlu0 %1472, %v1390
    %v1474 = vpop.permute.xlu0 %1473
    %1477 = vset.pattern.permute.xlu0 0
    %1478 = vperm.xlu0 %1477, %v1391
    %v1479 = vpop.permute.xlu0 %1478
    %1482 = vset.pattern.permute.xlu0 0
    %1483 = vperm.xlu0 %1482, %v1392
    %v1484 = vpop.permute.xlu0 %1483
    %1487 = vset.pattern.permute.xlu0 0
    %1488 = vperm.xlu0 %1487, %v1393
    %v1489 = vpop.permute.xlu0 %1488
    %1492 = vset.pattern.permute.xlu0 0
    %1493 = vperm.xlu0 %1492, %v1394
    %v1494 = vpop.permute.xlu0 %1493
    %1497 = vset.pattern.permute.xlu0 0
    %1498 = vperm.xlu0 %1497, %v1395
    %v1499 = vpop.permute.xlu0 %1498
    %1502 = vset.pattern.permute.xlu0 0
    %1503 = vperm.xlu0 %1502, %v1396
    %v1504 = vpop.permute.xlu0 %1503
    %1507 = vset.pattern.permute.xlu0 0
    %1508 = vperm.xlu0 %1507, %v1397
    %v1509 = vpop.permute.xlu0 %1508
    %1512 = vset.pattern.permute.xlu0 0
    %1513 = vperm.xlu0 %1512, %v1398
    %v1514 = vpop.permute.xlu0 %1513
    %1517 = vset.pattern.permute.xlu0 0
    %1518 = vperm.xlu0 %1517, %v1399
    %v1519 = vpop.permute.xlu0 %1518
    %1522 = vset.pattern.permute.xlu0 0
    %1523 = vperm.xlu0 %1522, %v1400
    %v1524 = vpop.permute.xlu0 %1523
    %1527 = vset.pattern.permute.xlu0 0
    %1528 = vperm.xlu0 %1527, %v1401
    %v1529 = vpop.permute.xlu0 %1528
    %1532 = vset.pattern.permute.xlu0 0
    %1533 = vperm.xlu0 %1532, %v1402
    %v1534 = vpop.permute.xlu0 %1533
    %1537 = vset.pattern.permute.xlu0 0
    %1538 = vperm.xlu0 %1537, %v1403
    %v1539 = vpop.permute.xlu0 %1538
    %1542 = vset.pattern.permute.xlu0 0
    %1543 = vperm.xlu0 %1542, %v1404
    %v1544 = vpop.permute.xlu0 %1543
    %1547 = vset.pattern.permute.xlu0 0
    %1548 = vperm.xlu0 %1547, %v1405
    %v1549 = vpop.permute.xlu0 %1548
    %1552 = vset.pattern.permute.xlu0 0
    %1553 = vperm.xlu0 %1552, %v1406
    %v1554 = vpop.permute.xlu0 %1553
    %1557 = vset.pattern.permute.xlu0 0
    %1558 = vperm.xlu0 %1557, %v1407
    %v1559 = vpop.permute.xlu0 %1558
    %1562 = vset.pattern.permute.xlu0 0
    %1563 = vperm.xlu0 %1562, %v1408
    %v1564 = vpop.permute.xlu0 %1563
    %1567 = vset.pattern.permute.xlu0 0
    %1568 = vperm.xlu0 %1567, %v1409
    %v1569 = vpop.permute.xlu0 %1568
    %v1571 = vlaneseq
    %v1572 = vshrl.u32 %v1571, 7
    %v1573 = vsub.s32 0, %v1572
    %v1574 = vrot.slane %v1410, %v1573
    %v1575 = vmul.f32 %v1414, %v1574
    %v1576 = vmul.f32 %v1419, %v1574
    %v1577 = vmul.f32 %v1424, %v1574
    %v1578 = vmul.f32 %v1429, %v1574
    %v1579 = vmul.f32 %v1434, %v1574
    %v1580 = vmul.f32 %v1439, %v1574
    %v1581 = vmul.f32 %v1444, %v1574
    %v1582 = vmul.f32 %v1449, %v1574
    %v1583 = vmul.f32 %v1454, %v1574
    %v1584 = vmul.f32 %v1459, %v1574
    %v1585 = vmul.f32 %v1464, %v1574
    %v1586 = vmul.f32 %v1469, %v1574
    %v1587 = vmul.f32 %v1474, %v1574
    %v1588 = vmul.f32 %v1479, %v1574
    %v1589 = vmul.f32 %v1484, %v1574
    %v1590 = vmul.f32 %v1489, %v1574
    %v1591 = vmul.f32 %v1494, %v1574
    %v1592 = vmul.f32 %v1499, %v1574
    %v1593 = vmul.f32 %v1504, %v1574
    %v1594 = vmul.f32 %v1509, %v1574
    %v1595 = vmul.f32 %v1514, %v1574
    %v1596 = vmul.f32 %v1519, %v1574
    %v1597 = vmul.f32 %v1524, %v1574
    %v1598 = vmul.f32 %v1529, %v1574
    %v1599 = vmul.f32 %v1534, %v1574
    %v1600 = vmul.f32 %v1539, %v1574
    %v1601 = vmul.f32 %v1544, %v1574
    %v1602 = vmul.f32 %v1549, %v1574
    %v1603 = vmul.f32 %v1554, %v1574
    %v1604 = vmul.f32 %v1559, %v1574
    %v1605 = vmul.f32 %v1564, %v1574
    %v1606 = vmul.f32 %v1569, %v1574
    %v1607 = vadd.f32 %v1346, %v1575
    %v1608 = vadd.f32 %v1347, %v1576
    %v1609 = vadd.f32 %v1348, %v1577
    %v1610 = vadd.f32 %v1349, %v1578
    %v1611 = vadd.f32 %v1350, %v1579
    %v1612 = vadd.f32 %v1351, %v1580
    %v1613 = vadd.f32 %v1352, %v1581
    %v1614 = vadd.f32 %v1353, %v1582
    %v1615 = vadd.f32 %v1354, %v1583
    %v1616 = vadd.f32 %v1355, %v1584
    %v1617 = vadd.f32 %v1356, %v1585
    %v1618 = vadd.f32 %v1357, %v1586
    %v1619 = vadd.f32 %v1358, %v1587
    %v1620 = vadd.f32 %v1359, %v1588
    %v1621 = vadd.f32 %v1360, %v1589
    %v1622 = vadd.f32 %v1361, %v1590
    %v1623 = vadd.f32 %v1362, %v1591
    %v1624 = vadd.f32 %v1363, %v1592
    %v1625 = vadd.f32 %v1364, %v1593
    %v1626 = vadd.f32 %v1365, %v1594
    %v1627 = vadd.f32 %v1366, %v1595
    %v1628 = vadd.f32 %v1367, %v1596
    %v1629 = vadd.f32 %v1368, %v1597
    %v1630 = vadd.f32 %v1369, %v1598
    %v1631 = vadd.f32 %v1370, %v1599
    %v1632 = vadd.f32 %v1371, %v1600
    %v1633 = vadd.f32 %v1372, %v1601
    %v1634 = vadd.f32 %v1373, %v1602
    %v1635 = vadd.f32 %v1374, %v1603
    %v1636 = vadd.f32 %v1375, %v1604
    %v1637 = vadd.f32 %v1376, %v1605
    %v1638 = vadd.f32 %v1377, %v1606
    %s1639 = scalar_lea.vmem %s1, 48
    %v1640 = vld [vmem:[%s1639] sm:$0xff]
    %v1641 = vld [vmem:[%s1639 + $0x8] sm:$0xff]
    %v1642 = vld [vmem:[%s1639 + $0x18] sm:$0xff]
    %v1643 = vld [vmem:[%s1639 + $0x20] sm:$0xff]
    %v1644 = vld [vmem:[%s1639 + $0x30] sm:$0xff]
    %v1645 = vld [vmem:[%s1639 + $0x38] sm:$0xff]
    %v1646 = vld [vmem:[%s1639 + $0x48] sm:$0xff]
    %v1647 = vld [vmem:[%s1639 + $0x50] sm:$0xff]
    %v1648 = vld [vmem:[%s1639 + $0x60] sm:$0xff]
    %v1649 = vld [vmem:[%s1639 + $0x68] sm:$0xff]
    %v1650 = vld [vmem:[%s1639 + $0x78] sm:$0xff]
    %v1651 = vld [vmem:[%s1639 + $0x80] sm:$0xff]
    %v1652 = vld [vmem:[%s1639 + $0x90] sm:$0xff]
    %v1653 = vld [vmem:[%s1639 + $0x98] sm:$0xff]
    %v1654 = vld [vmem:[%s1639 + $0xa8] sm:$0xff]
    %v1655 = vld [vmem:[%s1639 + $0xb0] sm:$0xff]
    %v1656 = vld [vmem:[%s1639 + $0xf0] sm:$0xff]
    %v1657 = vld [vmem:[%s1639 + $0xf8] sm:$0xff]
    %v1658 = vld [vmem:[%s1639 + $0x108] sm:$0xff]
    %v1659 = vld [vmem:[%s1639 + $0x110] sm:$0xff]
    %v1660 = vld [vmem:[%s1639 + $0x120] sm:$0xff]
    %v1661 = vld [vmem:[%s1639 + $0x128] sm:$0xff]
    %v1662 = vld [vmem:[%s1639 + $0x138] sm:$0xff]
    %v1663 = vld [vmem:[%s1639 + $0x140] sm:$0xff]
    %v1664 = vld [vmem:[%s1639 + $0x150] sm:$0xff]
    %v1665 = vld [vmem:[%s1639 + $0x158] sm:$0xff]
    %v1666 = vld [vmem:[%s1639 + $0x168] sm:$0xff]
    %v1667 = vld [vmem:[%s1639 + $0x170] sm:$0xff]
    %v1668 = vld [vmem:[%s1639 + $0x180] sm:$0xff]
    %v1669 = vld [vmem:[%s1639 + $0x188] sm:$0xff]
    %v1670 = vld [vmem:[%s1639 + $0x198] sm:$0xff]
    %v1671 = vld [vmem:[%s1639 + $0x1a0] sm:$0xff]
    %s1672 = scalar_lea.vmem %s2, 8
    %v1673 = vld [vmem:[%s1672] sm:$0x1]
    %1675 = vset.pattern.permute.xlu0 0
    %1676 = vperm.xlu0 %1675, %v1640
    %v1677 = vpop.permute.xlu0 %1676
    %1680 = vset.pattern.permute.xlu0 0
    %1681 = vperm.xlu0 %1680, %v1641
    %v1682 = vpop.permute.xlu0 %1681
    %1685 = vset.pattern.permute.xlu0 0
    %1686 = vperm.xlu0 %1685, %v1642
    %v1687 = vpop.permute.xlu0 %1686
    %1690 = vset.pattern.permute.xlu0 0
    %1691 = vperm.xlu0 %1690, %v1643
    %v1692 = vpop.permute.xlu0 %1691
    %1695 = vset.pattern.permute.xlu0 0
    %1696 = vperm.xlu0 %1695, %v1644
    %v1697 = vpop.permute.xlu0 %1696
    %1700 = vset.pattern.permute.xlu0 0
    %1701 = vperm.xlu0 %1700, %v1645
    %v1702 = vpop.permute.xlu0 %1701
    %1705 = vset.pattern.permute.xlu0 0
    %1706 = vperm.xlu0 %1705, %v1646
    %v1707 = vpop.permute.xlu0 %1706
    %1710 = vset.pattern.permute.xlu0 0
    %1711 = vperm.xlu0 %1710, %v1647
    %v1712 = vpop.permute.xlu0 %1711
    %1715 = vset.pattern.permute.xlu0 0
    %1716 = vperm.xlu0 %1715, %v1648
    %v1717 = vpop.permute.xlu0 %1716
    %1720 = vset.pattern.permute.xlu0 0
    %1721 = vperm.xlu0 %1720, %v1649
    %v1722 = vpop.permute.xlu0 %1721
    %1725 = vset.pattern.permute.xlu0 0
    %1726 = vperm.xlu0 %1725, %v1650
    %v1727 = vpop.permute.xlu0 %1726
    %1730 = vset.pattern.permute.xlu0 0
    %1731 = vperm.xlu0 %1730, %v1651
    %v1732 = vpop.permute.xlu0 %1731
    %1735 = vset.pattern.permute.xlu0 0
    %1736 = vperm.xlu0 %1735, %v1652
    %v1737 = vpop.permute.xlu0 %1736
    %1740 = vset.pattern.permute.xlu0 0
    %1741 = vperm.xlu0 %1740, %v1653
    %v1742 = vpop.permute.xlu0 %1741
    %1745 = vset.pattern.permute.xlu0 0
    %1746 = vperm.xlu0 %1745, %v1654
    %v1747 = vpop.permute.xlu0 %1746
    %1750 = vset.pattern.permute.xlu0 0
    %1751 = vperm.xlu0 %1750, %v1655
    %v1752 = vpop.permute.xlu0 %1751
    %1755 = vset.pattern.permute.xlu0 0
    %1756 = vperm.xlu0 %1755, %v1656
    %v1757 = vpop.permute.xlu0 %1756
    %1760 = vset.pattern.permute.xlu0 0
    %1761 = vperm.xlu0 %1760, %v1657
    %v1762 = vpop.permute.xlu0 %1761
    %1765 = vset.pattern.permute.xlu0 0
    %1766 = vperm.xlu0 %1765, %v1658
    %v1767 = vpop.permute.xlu0 %1766
    %1770 = vset.pattern.permute.xlu0 0
    %1771 = vperm.xlu0 %1770, %v1659
    %v1772 = vpop.permute.xlu0 %1771
    %1775 = vset.pattern.permute.xlu0 0
    %1776 = vperm.xlu0 %1775, %v1660
    %v1777 = vpop.permute.xlu0 %1776
    %1780 = vset.pattern.permute.xlu0 0
    %1781 = vperm.xlu0 %1780, %v1661
    %v1782 = vpop.permute.xlu0 %1781
    %1785 = vset.pattern.permute.xlu0 0
    %1786 = vperm.xlu0 %1785, %v1662
    %v1787 = vpop.permute.xlu0 %1786
    %1790 = vset.pattern.permute.xlu0 0
    %1791 = vperm.xlu0 %1790, %v1663
    %v1792 = vpop.permute.xlu0 %1791
    %1795 = vset.pattern.permute.xlu0 0
    %1796 = vperm.xlu0 %1795, %v1664
    %v1797 = vpop.permute.xlu0 %1796
    %1800 = vset.pattern.permute.xlu0 0
    %1801 = vperm.xlu0 %1800, %v1665
    %v1802 = vpop.permute.xlu0 %1801
    %1805 = vset.pattern.permute.xlu0 0
    %1806 = vperm.xlu0 %1805, %v1666
    %v1807 = vpop.permute.xlu0 %1806
    %1810 = vset.pattern.permute.xlu0 0
    %1811 = vperm.xlu0 %1810, %v1667
    %v1812 = vpop.permute.xlu0 %1811
    %1815 = vset.pattern.permute.xlu0 0
    %1816 = vperm.xlu0 %1815, %v1668
    %v1817 = vpop.permute.xlu0 %1816
    %1820 = vset.pattern.permute.xlu0 0
    %1821 = vperm.xlu0 %1820, %v1669
    %v1822 = vpop.permute.xlu0 %1821
    %1825 = vset.pattern.permute.xlu0 0
    %1826 = vperm.xlu0 %1825, %v1670
    %v1827 = vpop.permute.xlu0 %1826
    %1830 = vset.pattern.permute.xlu0 0
    %1831 = vperm.xlu0 %1830, %v1671
    %v1832 = vpop.permute.xlu0 %1831
    %v1834 = vlaneseq
    %v1835 = vshrl.u32 %v1834, 7
    %v1836 = vsub.s32 0, %v1835
    %v1837 = vrot.slane %v1673, %v1836
    %v1838 = vmul.f32 %v1677, %v1837
    %v1839 = vmul.f32 %v1682, %v1837
    %v1840 = vmul.f32 %v1687, %v1837
    %v1841 = vmul.f32 %v1692, %v1837
    %v1842 = vmul.f32 %v1697, %v1837
    %v1843 = vmul.f32 %v1702, %v1837
    %v1844 = vmul.f32 %v1707, %v1837
    %v1845 = vmul.f32 %v1712, %v1837
    %v1846 = vmul.f32 %v1717, %v1837
    %v1847 = vmul.f32 %v1722, %v1837
    %v1848 = vmul.f32 %v1727, %v1837
    %v1849 = vmul.f32 %v1732, %v1837
    %v1850 = vmul.f32 %v1737, %v1837
    %v1851 = vmul.f32 %v1742, %v1837
    %v1852 = vmul.f32 %v1747, %v1837
    %v1853 = vmul.f32 %v1752, %v1837
    %v1854 = vmul.f32 %v1757, %v1837
    %v1855 = vmul.f32 %v1762, %v1837
    %v1856 = vmul.f32 %v1767, %v1837
    %v1857 = vmul.f32 %v1772, %v1837
    %v1858 = vmul.f32 %v1777, %v1837
    %v1859 = vmul.f32 %v1782, %v1837
    %v1860 = vmul.f32 %v1787, %v1837
    %v1861 = vmul.f32 %v1792, %v1837
    %v1862 = vmul.f32 %v1797, %v1837
    %v1863 = vmul.f32 %v1802, %v1837
    %v1864 = vmul.f32 %v1807, %v1837
    %v1865 = vmul.f32 %v1812, %v1837
    %v1866 = vmul.f32 %v1817, %v1837
    %v1867 = vmul.f32 %v1822, %v1837
    %v1868 = vmul.f32 %v1827, %v1837
    %v1869 = vmul.f32 %v1832, %v1837
    %v1870 = vadd.f32 %v1607, %v1838
    %v1871 = vadd.f32 %v1608, %v1839
    %v1872 = vadd.f32 %v1609, %v1840
    %v1873 = vadd.f32 %v1610, %v1841
    %v1874 = vadd.f32 %v1611, %v1842
    %v1875 = vadd.f32 %v1612, %v1843
    %v1876 = vadd.f32 %v1613, %v1844
    %v1877 = vadd.f32 %v1614, %v1845
    %v1878 = vadd.f32 %v1615, %v1846
    %v1879 = vadd.f32 %v1616, %v1847
    %v1880 = vadd.f32 %v1617, %v1848
    %v1881 = vadd.f32 %v1618, %v1849
    %v1882 = vadd.f32 %v1619, %v1850
    %v1883 = vadd.f32 %v1620, %v1851
    %v1884 = vadd.f32 %v1621, %v1852
    %v1885 = vadd.f32 %v1622, %v1853
    %v1886 = vadd.f32 %v1623, %v1854
    %v1887 = vadd.f32 %v1624, %v1855
    %v1888 = vadd.f32 %v1625, %v1856
    %v1889 = vadd.f32 %v1626, %v1857
    %v1890 = vadd.f32 %v1627, %v1858
    %v1891 = vadd.f32 %v1628, %v1859
    %v1892 = vadd.f32 %v1629, %v1860
    %v1893 = vadd.f32 %v1630, %v1861
    %v1894 = vadd.f32 %v1631, %v1862
    %v1895 = vadd.f32 %v1632, %v1863
    %v1896 = vadd.f32 %v1633, %v1864
    %v1897 = vadd.f32 %v1634, %v1865
    %v1898 = vadd.f32 %v1635, %v1866
    %v1899 = vadd.f32 %v1636, %v1867
    %v1900 = vadd.f32 %v1637, %v1868
    %v1901 = vadd.f32 %v1638, %v1869
    %v1902 = vld [vmem:[%s1639 + $0x1] sm:$0xff]
    %v1903 = vld [vmem:[%s1639 + $0x9] sm:$0xff]
    %v1904 = vld [vmem:[%s1639 + $0x19] sm:$0xff]
    %v1905 = vld [vmem:[%s1639 + $0x21] sm:$0xff]
    %v1906 = vld [vmem:[%s1639 + $0x31] sm:$0xff]
    %v1907 = vld [vmem:[%s1639 + $0x39] sm:$0xff]
    %v1908 = vld [vmem:[%s1639 + $0x49] sm:$0xff]
    %v1909 = vld [vmem:[%s1639 + $0x51] sm:$0xff]
    %v1910 = vld [vmem:[%s1639 + $0x61] sm:$0xff]
    %v1911 = vld [vmem:[%s1639 + $0x69] sm:$0xff]
    %v1912 = vld [vmem:[%s1639 + $0x79] sm:$0xff]
    %v1913 = vld [vmem:[%s1639 + $0x81] sm:$0xff]
    %v1914 = vld [vmem:[%s1639 + $0x91] sm:$0xff]
    %v1915 = vld [vmem:[%s1639 + $0x99] sm:$0xff]
    %v1916 = vld [vmem:[%s1639 + $0xa9] sm:$0xff]
    %v1917 = vld [vmem:[%s1639 + $0xb1] sm:$0xff]
    %v1918 = vld [vmem:[%s1639 + $0xf1] sm:$0xff]
    %v1919 = vld [vmem:[%s1639 + $0xf9] sm:$0xff]
    %v1920 = vld [vmem:[%s1639 + $0x109] sm:$0xff]
    %v1921 = vld [vmem:[%s1639 + $0x111] sm:$0xff]
    %v1922 = vld [vmem:[%s1639 + $0x121] sm:$0xff]
    %v1923 = vld [vmem:[%s1639 + $0x129] sm:$0xff]
    %v1924 = vld [vmem:[%s1639 + $0x139] sm:$0xff]
    %v1925 = vld [vmem:[%s1639 + $0x141] sm:$0xff]
    %v1926 = vld [vmem:[%s1639 + $0x151] sm:$0xff]
    %v1927 = vld [vmem:[%s1639 + $0x159] sm:$0xff]
    %v1928 = vld [vmem:[%s1639 + $0x169] sm:$0xff]
    %v1929 = vld [vmem:[%s1639 + $0x171] sm:$0xff]
    %v1930 = vld [vmem:[%s1639 + $0x181] sm:$0xff]
    %v1931 = vld [vmem:[%s1639 + $0x189] sm:$0xff]
    %v1932 = vld [vmem:[%s1639 + $0x199] sm:$0xff]
    %v1933 = vld [vmem:[%s1639 + $0x1a1] sm:$0xff]
    %v1934 = vld [vmem:[%s1672 + $0x1] sm:$0x1]
    %1936 = vset.pattern.permute.xlu0 0
    %1937 = vperm.xlu0 %1936, %v1902
    %v1938 = vpop.permute.xlu0 %1937
    %1941 = vset.pattern.permute.xlu0 0
    %1942 = vperm.xlu0 %1941, %v1903
    %v1943 = vpop.permute.xlu0 %1942
    %1946 = vset.pattern.permute.xlu0 0
    %1947 = vperm.xlu0 %1946, %v1904
    %v1948 = vpop.permute.xlu0 %1947
    %1951 = vset.pattern.permute.xlu0 0
    %1952 = vperm.xlu0 %1951, %v1905
    %v1953 = vpop.permute.xlu0 %1952
    %1956 = vset.pattern.permute.xlu0 0
    %1957 = vperm.xlu0 %1956, %v1906
    %v1958 = vpop.permute.xlu0 %1957
    %1961 = vset.pattern.permute.xlu0 0
    %1962 = vperm.xlu0 %1961, %v1907
    %v1963 = vpop.permute.xlu0 %1962
    %1966 = vset.pattern.permute.xlu0 0
    %1967 = vperm.xlu0 %1966, %v1908
    %v1968 = vpop.permute.xlu0 %1967
    %1971 = vset.pattern.permute.xlu0 0
    %1972 = vperm.xlu0 %1971, %v1909
    %v1973 = vpop.permute.xlu0 %1972
    %1976 = vset.pattern.permute.xlu0 0
    %1977 = vperm.xlu0 %1976, %v1910
    %v1978 = vpop.permute.xlu0 %1977
    %1981 = vset.pattern.permute.xlu0 0
    %1982 = vperm.xlu0 %1981, %v1911
    %v1983 = vpop.permute.xlu0 %1982
    %1986 = vset.pattern.permute.xlu0 0
    %1987 = vperm.xlu0 %1986, %v1912
    %v1988 = vpop.permute.xlu0 %1987
    %1991 = vset.pattern.permute.xlu0 0
    %1992 = vperm.xlu0 %1991, %v1913
    %v1993 = vpop.permute.xlu0 %1992
    %1996 = vset.pattern.permute.xlu0 0
    %1997 = vperm.xlu0 %1996, %v1914
    %v1998 = vpop.permute.xlu0 %1997
    %2001 = vset.pattern.permute.xlu0 0
    %2002 = vperm.xlu0 %2001, %v1915
    %v2003 = vpop.permute.xlu0 %2002
    %2006 = vset.pattern.permute.xlu0 0
    %2007 = vperm.xlu0 %2006, %v1916
    %v2008 = vpop.permute.xlu0 %2007
    %2011 = vset.pattern.permute.xlu0 0
    %2012 = vperm.xlu0 %2011, %v1917
    %v2013 = vpop.permute.xlu0 %2012
    %2016 = vset.pattern.permute.xlu0 0
    %2017 = vperm.xlu0 %2016, %v1918
    %v2018 = vpop.permute.xlu0 %2017
    %2021 = vset.pattern.permute.xlu0 0
    %2022 = vperm.xlu0 %2021, %v1919
    %v2023 = vpop.permute.xlu0 %2022
    %2026 = vset.pattern.permute.xlu0 0
    %2027 = vperm.xlu0 %2026, %v1920
    %v2028 = vpop.permute.xlu0 %2027
    %2031 = vset.pattern.permute.xlu0 0
    %2032 = vperm.xlu0 %2031, %v1921
    %v2033 = vpop.permute.xlu0 %2032
    %2036 = vset.pattern.permute.xlu0 0
    %2037 = vperm.xlu0 %2036, %v1922
    %v2038 = vpop.permute.xlu0 %2037
    %2041 = vset.pattern.permute.xlu0 0
    %2042 = vperm.xlu0 %2041, %v1923
    %v2043 = vpop.permute.xlu0 %2042
    %2046 = vset.pattern.permute.xlu0 0
    %2047 = vperm.xlu0 %2046, %v1924
    %v2048 = vpop.permute.xlu0 %2047
    %2051 = vset.pattern.permute.xlu0 0
    %2052 = vperm.xlu0 %2051, %v1925
    %v2053 = vpop.permute.xlu0 %2052
    %2056 = vset.pattern.permute.xlu0 0
    %2057 = vperm.xlu0 %2056, %v1926
    %v2058 = vpop.permute.xlu0 %2057
    %2061 = vset.pattern.permute.xlu0 0
    %2062 = vperm.xlu0 %2061, %v1927
    %v2063 = vpop.permute.xlu0 %2062
    %2066 = vset.pattern.permute.xlu0 0
    %2067 = vperm.xlu0 %2066, %v1928
    %v2068 = vpop.permute.xlu0 %2067
    %2071 = vset.pattern.permute.xlu0 0
    %2072 = vperm.xlu0 %2071, %v1929
    %v2073 = vpop.permute.xlu0 %2072
    %2076 = vset.pattern.permute.xlu0 0
    %2077 = vperm.xlu0 %2076, %v1930
    %v2078 = vpop.permute.xlu0 %2077
    %2081 = vset.pattern.permute.xlu0 0
    %2082 = vperm.xlu0 %2081, %v1931
    %v2083 = vpop.permute.xlu0 %2082
    %2086 = vset.pattern.permute.xlu0 0
    %2087 = vperm.xlu0 %2086, %v1932
    %v2088 = vpop.permute.xlu0 %2087
    %2091 = vset.pattern.permute.xlu0 0
    %2092 = vperm.xlu0 %2091, %v1933
    %v2093 = vpop.permute.xlu0 %2092
    %v2095 = vlaneseq
    %v2096 = vshrl.u32 %v2095, 7
    %v2097 = vsub.s32 0, %v2096
    %v2098 = vrot.slane %v1934, %v2097
    %v2099 = vmul.f32 %v1938, %v2098
    %v2100 = vmul.f32 %v1943, %v2098
    %v2101 = vmul.f32 %v1948, %v2098
    %v2102 = vmul.f32 %v1953, %v2098
    %v2103 = vmul.f32 %v1958, %v2098
    %v2104 = vmul.f32 %v1963, %v2098
    %v2105 = vmul.f32 %v1968, %v2098
    %v2106 = vmul.f32 %v1973, %v2098
    %v2107 = vmul.f32 %v1978, %v2098
    %v2108 = vmul.f32 %v1983, %v2098
    %v2109 = vmul.f32 %v1988, %v2098
    %v2110 = vmul.f32 %v1993, %v2098
    %v2111 = vmul.f32 %v1998, %v2098
    %v2112 = vmul.f32 %v2003, %v2098
    %v2113 = vmul.f32 %v2008, %v2098
    %v2114 = vmul.f32 %v2013, %v2098
    %v2115 = vmul.f32 %v2018, %v2098
    %v2116 = vmul.f32 %v2023, %v2098
    %v2117 = vmul.f32 %v2028, %v2098
    %v2118 = vmul.f32 %v2033, %v2098
    %v2119 = vmul.f32 %v2038, %v2098
    %v2120 = vmul.f32 %v2043, %v2098
    %v2121 = vmul.f32 %v2048, %v2098
    %v2122 = vmul.f32 %v2053, %v2098
    %v2123 = vmul.f32 %v2058, %v2098
    %v2124 = vmul.f32 %v2063, %v2098
    %v2125 = vmul.f32 %v2068, %v2098
    %v2126 = vmul.f32 %v2073, %v2098
    %v2127 = vmul.f32 %v2078, %v2098
    %v2128 = vmul.f32 %v2083, %v2098
    %v2129 = vmul.f32 %v2088, %v2098
    %v2130 = vmul.f32 %v2093, %v2098
    %v2131 = vadd.f32 %v1870, %v2099
    %v2132 = vadd.f32 %v1871, %v2100
    %v2133 = vadd.f32 %v1872, %v2101
    %v2134 = vadd.f32 %v1873, %v2102
    %v2135 = vadd.f32 %v1874, %v2103
    %v2136 = vadd.f32 %v1875, %v2104
    %v2137 = vadd.f32 %v1876, %v2105
    %v2138 = vadd.f32 %v1877, %v2106
    %v2139 = vadd.f32 %v1878, %v2107
    %v2140 = vadd.f32 %v1879, %v2108
    %v2141 = vadd.f32 %v1880, %v2109
    %v2142 = vadd.f32 %v1881, %v2110
    %v2143 = vadd.f32 %v1882, %v2111
    %v2144 = vadd.f32 %v1883, %v2112
    %v2145 = vadd.f32 %v1884, %v2113
    %v2146 = vadd.f32 %v1885, %v2114
    %v2147 = vadd.f32 %v1886, %v2115
    %v2148 = vadd.f32 %v1887, %v2116
    %v2149 = vadd.f32 %v1888, %v2117
    %v2150 = vadd.f32 %v1889, %v2118
    %v2151 = vadd.f32 %v1890, %v2119
    %v2152 = vadd.f32 %v1891, %v2120
    %v2153 = vadd.f32 %v1892, %v2121
    %v2154 = vadd.f32 %v1893, %v2122
    %v2155 = vadd.f32 %v1894, %v2123
    %v2156 = vadd.f32 %v1895, %v2124
    %v2157 = vadd.f32 %v1896, %v2125
    %v2158 = vadd.f32 %v1897, %v2126
    %v2159 = vadd.f32 %v1898, %v2127
    %v2160 = vadd.f32 %v1899, %v2128
    %v2161 = vadd.f32 %v1900, %v2129
    %v2162 = vadd.f32 %v1901, %v2130
    %v2163 = vld [vmem:[%s1639 + $0x2] sm:$0xff]
    %v2164 = vld [vmem:[%s1639 + $0xa] sm:$0xff]
    %v2165 = vld [vmem:[%s1639 + $0x1a] sm:$0xff]
    %v2166 = vld [vmem:[%s1639 + $0x22] sm:$0xff]
    %v2167 = vld [vmem:[%s1639 + $0x32] sm:$0xff]
    %v2168 = vld [vmem:[%s1639 + $0x3a] sm:$0xff]
    %v2169 = vld [vmem:[%s1639 + $0x4a] sm:$0xff]
    %v2170 = vld [vmem:[%s1639 + $0x52] sm:$0xff]
    %v2171 = vld [vmem:[%s1639 + $0x62] sm:$0xff]
    %v2172 = vld [vmem:[%s1639 + $0x6a] sm:$0xff]
    %v2173 = vld [vmem:[%s1639 + $0x7a] sm:$0xff]
    %v2174 = vld [vmem:[%s1639 + $0x82] sm:$0xff]
    %v2175 = vld [vmem:[%s1639 + $0x92] sm:$0xff]
    %v2176 = vld [vmem:[%s1639 + $0x9a] sm:$0xff]
    %v2177 = vld [vmem:[%s1639 + $0xaa] sm:$0xff]
    %v2178 = vld [vmem:[%s1639 + $0xb2] sm:$0xff]
    %v2179 = vld [vmem:[%s1639 + $0xf2] sm:$0xff]
    %v2180 = vld [vmem:[%s1639 + $0xfa] sm:$0xff]
    %v2181 = vld [vmem:[%s1639 + $0x10a] sm:$0xff]
    %v2182 = vld [vmem:[%s1639 + $0x112] sm:$0xff]
    %v2183 = vld [vmem:[%s1639 + $0x122] sm:$0xff]
    %v2184 = vld [vmem:[%s1639 + $0x12a] sm:$0xff]
    %v2185 = vld [vmem:[%s1639 + $0x13a] sm:$0xff]
    %v2186 = vld [vmem:[%s1639 + $0x142] sm:$0xff]
    %v2187 = vld [vmem:[%s1639 + $0x152] sm:$0xff]
    %v2188 = vld [vmem:[%s1639 + $0x15a] sm:$0xff]
    %v2189 = vld [vmem:[%s1639 + $0x16a] sm:$0xff]
    %v2190 = vld [vmem:[%s1639 + $0x172] sm:$0xff]
    %v2191 = vld [vmem:[%s1639 + $0x182] sm:$0xff]
    %v2192 = vld [vmem:[%s1639 + $0x18a] sm:$0xff]
    %v2193 = vld [vmem:[%s1639 + $0x19a] sm:$0xff]
    %v2194 = vld [vmem:[%s1639 + $0x1a2] sm:$0xff]
    %v2195 = vld [vmem:[%s1672 + $0x2] sm:$0x1]
    %2197 = vset.pattern.permute.xlu0 0
    %2198 = vperm.xlu0 %2197, %v2163
    %v2199 = vpop.permute.xlu0 %2198
    %2202 = vset.pattern.permute.xlu0 0
    %2203 = vperm.xlu0 %2202, %v2164
    %v2204 = vpop.permute.xlu0 %2203
    %2207 = vset.pattern.permute.xlu0 0
    %2208 = vperm.xlu0 %2207, %v2165
    %v2209 = vpop.permute.xlu0 %2208
    %2212 = vset.pattern.permute.xlu0 0
    %2213 = vperm.xlu0 %2212, %v2166
    %v2214 = vpop.permute.xlu0 %2213
    %2217 = vset.pattern.permute.xlu0 0
    %2218 = vperm.xlu0 %2217, %v2167
    %v2219 = vpop.permute.xlu0 %2218
    %2222 = vset.pattern.permute.xlu0 0
    %2223 = vperm.xlu0 %2222, %v2168
    %v2224 = vpop.permute.xlu0 %2223
    %2227 = vset.pattern.permute.xlu0 0
    %2228 = vperm.xlu0 %2227, %v2169
    %v2229 = vpop.permute.xlu0 %2228
    %2232 = vset.pattern.permute.xlu0 0
    %2233 = vperm.xlu0 %2232, %v2170
    %v2234 = vpop.permute.xlu0 %2233
    %2237 = vset.pattern.permute.xlu0 0
    %2238 = vperm.xlu0 %2237, %v2171
    %v2239 = vpop.permute.xlu0 %2238
    %2242 = vset.pattern.permute.xlu0 0
    %2243 = vperm.xlu0 %2242, %v2172
    %v2244 = vpop.permute.xlu0 %2243
    %2247 = vset.pattern.permute.xlu0 0
    %2248 = vperm.xlu0 %2247, %v2173
    %v2249 = vpop.permute.xlu0 %2248
    %2252 = vset.pattern.permute.xlu0 0
    %2253 = vperm.xlu0 %2252, %v2174
    %v2254 = vpop.permute.xlu0 %2253
    %2257 = vset.pattern.permute.xlu0 0
    %2258 = vperm.xlu0 %2257, %v2175
    %v2259 = vpop.permute.xlu0 %2258
    %2262 = vset.pattern.permute.xlu0 0
    %2263 = vperm.xlu0 %2262, %v2176
    %v2264 = vpop.permute.xlu0 %2263
    %2267 = vset.pattern.permute.xlu0 0
    %2268 = vperm.xlu0 %2267, %v2177
    %v2269 = vpop.permute.xlu0 %2268
    %2272 = vset.pattern.permute.xlu0 0
    %2273 = vperm.xlu0 %2272, %v2178
    %v2274 = vpop.permute.xlu0 %2273
    %2277 = vset.pattern.permute.xlu0 0
    %2278 = vperm.xlu0 %2277, %v2179
    %v2279 = vpop.permute.xlu0 %2278
    %2282 = vset.pattern.permute.xlu0 0
    %2283 = vperm.xlu0 %2282, %v2180
    %v2284 = vpop.permute.xlu0 %2283
    %2287 = vset.pattern.permute.xlu0 0
    %2288 = vperm.xlu0 %2287, %v2181
    %v2289 = vpop.permute.xlu0 %2288
    %2292 = vset.pattern.permute.xlu0 0
    %2293 = vperm.xlu0 %2292, %v2182
    %v2294 = vpop.permute.xlu0 %2293
    %2297 = vset.pattern.permute.xlu0 0
    %2298 = vperm.xlu0 %2297, %v2183
    %v2299 = vpop.permute.xlu0 %2298
    %2302 = vset.pattern.permute.xlu0 0
    %2303 = vperm.xlu0 %2302, %v2184
    %v2304 = vpop.permute.xlu0 %2303
    %2307 = vset.pattern.permute.xlu0 0
    %2308 = vperm.xlu0 %2307, %v2185
    %v2309 = vpop.permute.xlu0 %2308
    %2312 = vset.pattern.permute.xlu0 0
    %2313 = vperm.xlu0 %2312, %v2186
    %v2314 = vpop.permute.xlu0 %2313
    %2317 = vset.pattern.permute.xlu0 0
    %2318 = vperm.xlu0 %2317, %v2187
    %v2319 = vpop.permute.xlu0 %2318
    %2322 = vset.pattern.permute.xlu0 0
    %2323 = vperm.xlu0 %2322, %v2188
    %v2324 = vpop.permute.xlu0 %2323
    %2327 = vset.pattern.permute.xlu0 0
    %2328 = vperm.xlu0 %2327, %v2189
    %v2329 = vpop.permute.xlu0 %2328
    %2332 = vset.pattern.permute.xlu0 0
    %2333 = vperm.xlu0 %2332, %v2190
    %v2334 = vpop.permute.xlu0 %2333
    %2337 = vset.pattern.permute.xlu0 0
    %2338 = vperm.xlu0 %2337, %v2191
    %v2339 = vpop.permute.xlu0 %2338
    %2342 = vset.pattern.permute.xlu0 0
    %2343 = vperm.xlu0 %2342, %v2192
    %v2344 = vpop.permute.xlu0 %2343
    %2347 = vset.pattern.permute.xlu0 0
    %2348 = vperm.xlu0 %2347, %v2193
    %v2349 = vpop.permute.xlu0 %2348
    %2352 = vset.pattern.permute.xlu0 0
    %2353 = vperm.xlu0 %2352, %v2194
    %v2354 = vpop.permute.xlu0 %2353
    %v2356 = vlaneseq
    %v2357 = vshrl.u32 %v2356, 7
    %v2358 = vsub.s32 0, %v2357
    %v2359 = vrot.slane %v2195, %v2358
    %v2360 = vmul.f32 %v2199, %v2359
    %v2361 = vmul.f32 %v2204, %v2359
    %v2362 = vmul.f32 %v2209, %v2359
    %v2363 = vmul.f32 %v2214, %v2359
    %v2364 = vmul.f32 %v2219, %v2359
    %v2365 = vmul.f32 %v2224, %v2359
    %v2366 = vmul.f32 %v2229, %v2359
    %v2367 = vmul.f32 %v2234, %v2359
    %v2368 = vmul.f32 %v2239, %v2359
    %v2369 = vmul.f32 %v2244, %v2359
    %v2370 = vmul.f32 %v2249, %v2359
    %v2371 = vmul.f32 %v2254, %v2359
    %v2372 = vmul.f32 %v2259, %v2359
    %v2373 = vmul.f32 %v2264, %v2359
    %v2374 = vmul.f32 %v2269, %v2359
    %v2375 = vmul.f32 %v2274, %v2359
    %v2376 = vmul.f32 %v2279, %v2359
    %v2377 = vmul.f32 %v2284, %v2359
    %v2378 = vmul.f32 %v2289, %v2359
    %v2379 = vmul.f32 %v2294, %v2359
    %v2380 = vmul.f32 %v2299, %v2359
    %v2381 = vmul.f32 %v2304, %v2359
    %v2382 = vmul.f32 %v2309, %v2359
    %v2383 = vmul.f32 %v2314, %v2359
    %v2384 = vmul.f32 %v2319, %v2359
    %v2385 = vmul.f32 %v2324, %v2359
    %v2386 = vmul.f32 %v2329, %v2359
    %v2387 = vmul.f32 %v2334, %v2359
    %v2388 = vmul.f32 %v2339, %v2359
    %v2389 = vmul.f32 %v2344, %v2359
    %v2390 = vmul.f32 %v2349, %v2359
    %v2391 = vmul.f32 %v2354, %v2359
    %v2392 = vadd.f32 %v2131, %v2360
    %v2393 = vadd.f32 %v2132, %v2361
    %v2394 = vadd.f32 %v2133, %v2362
    %v2395 = vadd.f32 %v2134, %v2363
    %v2396 = vadd.f32 %v2135, %v2364
    %v2397 = vadd.f32 %v2136, %v2365
    %v2398 = vadd.f32 %v2137, %v2366
    %v2399 = vadd.f32 %v2138, %v2367
    %v2400 = vadd.f32 %v2139, %v2368
    %v2401 = vadd.f32 %v2140, %v2369
    %v2402 = vadd.f32 %v2141, %v2370
    %v2403 = vadd.f32 %v2142, %v2371
    %v2404 = vadd.f32 %v2143, %v2372
    %v2405 = vadd.f32 %v2144, %v2373
    %v2406 = vadd.f32 %v2145, %v2374
    %v2407 = vadd.f32 %v2146, %v2375
    %v2408 = vadd.f32 %v2147, %v2376
    %v2409 = vadd.f32 %v2148, %v2377
    %v2410 = vadd.f32 %v2149, %v2378
    %v2411 = vadd.f32 %v2150, %v2379
    %v2412 = vadd.f32 %v2151, %v2380
    %v2413 = vadd.f32 %v2152, %v2381
    %v2414 = vadd.f32 %v2153, %v2382
    %v2415 = vadd.f32 %v2154, %v2383
    %v2416 = vadd.f32 %v2155, %v2384
    %v2417 = vadd.f32 %v2156, %v2385
    %v2418 = vadd.f32 %v2157, %v2386
    %v2419 = vadd.f32 %v2158, %v2387
    %v2420 = vadd.f32 %v2159, %v2388
    %v2421 = vadd.f32 %v2160, %v2389
    %v2422 = vadd.f32 %v2161, %v2390
    %v2423 = vadd.f32 %v2162, %v2391
    %v2424 = vld [vmem:[%s3] sm:$0x1]
    %v2426 = vlaneseq
    %v2427 = vshrl.u32 %v2426, 7
    %v2428 = vsub.s32 0, %v2427
    %v2429 = vrot.slane %v2424, %v2428
    %v2431 = vadd.f32 %v2392, %v2429
    %v2432 = vadd.f32 %v2393, %v2429
    %v2433 = vadd.f32 %v2394, %v2429
    %v2434 = vadd.f32 %v2395, %v2429
    %v2435 = vadd.f32 %v2396, %v2429
    %v2436 = vadd.f32 %v2397, %v2429
    %v2437 = vadd.f32 %v2398, %v2429
    %v2438 = vadd.f32 %v2399, %v2429
    %v2439 = vadd.f32 %v2400, %v2429
    %v2440 = vadd.f32 %v2401, %v2429
    %v2441 = vadd.f32 %v2402, %v2429
    %v2442 = vadd.f32 %v2403, %v2429
    %v2443 = vadd.f32 %v2404, %v2429
    %v2444 = vadd.f32 %v2405, %v2429
    %v2445 = vadd.f32 %v2406, %v2429
    %v2446 = vadd.f32 %v2407, %v2429
    %v2447 = vadd.f32 %v2408, %v2429
    %v2448 = vadd.f32 %v2409, %v2429
    %v2449 = vadd.f32 %v2410, %v2429
    %v2450 = vadd.f32 %v2411, %v2429
    %v2451 = vadd.f32 %v2412, %v2429
    %v2452 = vadd.f32 %v2413, %v2429
    %v2453 = vadd.f32 %v2414, %v2429
    %v2454 = vadd.f32 %v2415, %v2429
    %v2455 = vadd.f32 %v2416, %v2429
    %v2456 = vadd.f32 %v2417, %v2429
    %v2457 = vadd.f32 %v2418, %v2429
    %v2458 = vadd.f32 %v2419, %v2429
    %v2459 = vadd.f32 %v2420, %v2429
    %v2460 = vadd.f32 %v2421, %v2429
    %v2461 = vadd.f32 %v2422, %v2429
    %v2462 = vadd.f32 %v2423, %v2429
    %v2463 = vmax.f32 %v2431, 0.0
    %v2464 = vmax.f32 %v2432, 0.0
    %v2465 = vmax.f32 %v2433, 0.0
    %v2466 = vmax.f32 %v2434, 0.0
    %v2467 = vmax.f32 %v2435, 0.0
    %v2468 = vmax.f32 %v2436, 0.0
    %v2469 = vmax.f32 %v2437, 0.0
    %v2470 = vmax.f32 %v2438, 0.0
    %v2471 = vmax.f32 %v2439, 0.0
    %v2472 = vmax.f32 %v2440, 0.0
    %v2473 = vmax.f32 %v2441, 0.0
    %v2474 = vmax.f32 %v2442, 0.0
    %v2475 = vmax.f32 %v2443, 0.0
    %v2476 = vmax.f32 %v2444, 0.0
    %v2477 = vmax.f32 %v2445, 0.0
    %v2478 = vmax.f32 %v2446, 0.0
    %v2479 = vmax.f32 %v2447, 0.0
    %v2480 = vmax.f32 %v2448, 0.0
    %v2481 = vmax.f32 %v2449, 0.0
    %v2482 = vmax.f32 %v2450, 0.0
    %v2483 = vmax.f32 %v2451, 0.0
    %v2484 = vmax.f32 %v2452, 0.0
    %v2485 = vmax.f32 %v2453, 0.0
    %v2486 = vmax.f32 %v2454, 0.0
    %v2487 = vmax.f32 %v2455, 0.0
    %v2488 = vmax.f32 %v2456, 0.0
    %v2489 = vmax.f32 %v2457, 0.0
    %v2490 = vmax.f32 %v2458, 0.0
    %v2491 = vmax.f32 %v2459, 0.0
    %v2492 = vmax.f32 %v2460, 0.0
    %v2493 = vmax.f32 %v2461, 0.0
    %v2494 = vmax.f32 %v2462, 0.0
    %vm2495 = vcmask 130048
    %2496 = vst.msk [vmem:[#allocation2] sm:$0xff] %vm2495, 0.0
    %2497 = vst.msk [vmem:[#allocation2 + $0x8] sm:$0xff] %vm2495, 0.0
    %vm2498 = vcmask 123904
    %2499 = vst.msk [vmem:[#allocation2 + $0x10] sm:$0x3] %vm2498, 0.0
    %2500 = vst.msk [vmem:[#allocation2 + $0x18] sm:$0xff] %vm2495, 0.0
    %2501 = vst.msk [vmem:[#allocation2 + $0x20] sm:$0xff] %vm2495, 0.0
    %2502 = vst.msk [vmem:[#allocation2 + $0x28] sm:$0x3] %vm2498, 0.0
    %2503 = vst.msk [vmem:[#allocation2 + $0x30] sm:$0xff] %vm2495, 0.0
    %2504 = vst.msk [vmem:[#allocation2 + $0x38] sm:$0xff] %vm2495, 0.0
    %2505 = vst.msk [vmem:[#allocation2 + $0x40] sm:$0x3] %vm2498, 0.0
    %2506 = vst.msk [vmem:[#allocation2 + $0x48] sm:$0xff] %vm2495, 0.0
    %2507 = vst.msk [vmem:[#allocation2 + $0x50] sm:$0xff] %vm2495, 0.0
    %2508 = vst.msk [vmem:[#allocation2 + $0x58] sm:$0x3] %vm2498, 0.0
    %2509 = vst.msk [vmem:[#allocation2 + $0x60] sm:$0xff] %vm2495, 0.0
    %2510 = vst.msk [vmem:[#allocation2 + $0x68] sm:$0xff] %vm2495, 0.0
    %2511 = vst.msk [vmem:[#allocation2 + $0x70] sm:$0x3] %vm2498, 0.0
    %2512 = vst.msk [vmem:[#allocation2 + $0x78] sm:$0xff] %vm2495, 0.0
    %2513 = vst.msk [vmem:[#allocation2 + $0x80] sm:$0xff] %vm2495, 0.0
    %2514 = vst.msk [vmem:[#allocation2 + $0x88] sm:$0x3] %vm2498, 0.0
    %2515 = vst.msk [vmem:[#allocation2 + $0x90] sm:$0xff] %vm2495, 0.0
    %2516 = vst.msk [vmem:[#allocation2 + $0x98] sm:$0xff] %vm2495, 0.0
    %2517 = vst.msk [vmem:[#allocation2 + $0xa0] sm:$0x3] %vm2498, 0.0
    %2518 = vst.msk [vmem:[#allocation2 + $0xa8] sm:$0xff] %vm2495, 0.0
    %2519 = vst.msk [vmem:[#allocation2 + $0xb0] sm:$0xff] %vm2495, 0.0
    %2520 = vst.msk [vmem:[#allocation2 + $0xb8] sm:$0x3] %vm2498, 0.0
    %2521 = vst.msk [vmem:[#allocation2 + $0xc0] sm:$0xff] %vm2495, 0.0
    %2522 = vst.msk [vmem:[#allocation2 + $0xc8] sm:$0xff] %vm2495, 0.0
    %2523 = vst.msk [vmem:[#allocation2 + $0xd0] sm:$0x3] %vm2498, 0.0
    %2524 = vst.msk [vmem:[#allocation2 + $0xd8] sm:$0xff] %vm2495, 0.0
    %2525 = vst.msk [vmem:[#allocation2 + $0xe0] sm:$0xff] %vm2495, 0.0
    %2526 = vst.msk [vmem:[#allocation2 + $0xe8] sm:$0x3] %vm2498, 0.0
    %2527 = vst.msk [vmem:[#allocation2 + $0xf0] sm:$0xff] %vm2495, 0.0
    %2528 = vst.msk [vmem:[#allocation2 + $0xf8] sm:$0xff] %vm2495, 0.0
    %2529 = vst.msk [vmem:[#allocation2 + $0x100] sm:$0x3] %vm2498, 0.0
    %2530 = vst.msk [vmem:[#allocation2 + $0x108] sm:$0xff] %vm2495, 0.0
    %2531 = vst.msk [vmem:[#allocation2 + $0x110] sm:$0xff] %vm2495, 0.0
    %2532 = vst.msk [vmem:[#allocation2 + $0x118] sm:$0x3] %vm2498, 0.0
    %2533 = vst.msk [vmem:[#allocation2 + $0x120] sm:$0xff] %vm2495, 0.0
    %2534 = vst.msk [vmem:[#allocation2 + $0x128] sm:$0xff] %vm2495, 0.0
    %2535 = vst.msk [vmem:[#allocation2 + $0x130] sm:$0x3] %vm2498, 0.0
    %2536 = vst.msk [vmem:[#allocation2 + $0x138] sm:$0xff] %vm2495, 0.0
    %2537 = vst.msk [vmem:[#allocation2 + $0x140] sm:$0xff] %vm2495, 0.0
    %2538 = vst.msk [vmem:[#allocation2 + $0x148] sm:$0x3] %vm2498, 0.0
    %2539 = vst.msk [vmem:[#allocation2 + $0x150] sm:$0xff] %vm2495, 0.0
    %2540 = vst.msk [vmem:[#allocation2 + $0x158] sm:$0xff] %vm2495, 0.0
    %2541 = vst.msk [vmem:[#allocation2 + $0x160] sm:$0x3] %vm2498, 0.0
    %2542 = vst.msk [vmem:[#allocation2 + $0x168] sm:$0xff] %vm2495, 0.0
    %2543 = vst.msk [vmem:[#allocation2 + $0x170] sm:$0xff] %vm2495, 0.0
    %2544 = vst.msk [vmem:[#allocation2 + $0x178] sm:$0x3] %vm2498, 0.0
    %2545 = vst.msk [vmem:[#allocation2 + $0x180] sm:$0xff] %vm2495, 0.0
    %2546 = vst.msk [vmem:[#allocation2 + $0x188] sm:$0xff] %vm2495, 0.0
    %2547 = vst.msk [vmem:[#allocation2 + $0x190] sm:$0x3] %vm2498, 0.0
    %2548 = vst.msk [vmem:[#allocation2 + $0x198] sm:$0xff] %vm2495, 0.0
    %2549 = vst.msk [vmem:[#allocation2 + $0x1a0] sm:$0xff] %vm2495, 0.0
    %2550 = vst.msk [vmem:[#allocation2 + $0x1a8] sm:$0x3] %vm2498, 0.0
    %2551 = vst.msk [vmem:[#allocation2 + $0x1b0] sm:$0xff] %vm2495, 0.0
    %2552 = vst.msk [vmem:[#allocation2 + $0x1b8] sm:$0xff] %vm2495, 0.0
    %2553 = vst.msk [vmem:[#allocation2 + $0x1c0] sm:$0x3] %vm2498, 0.0
    %2554 = vst.msk [vmem:[#allocation2 + $0x1c8] sm:$0xff] %vm2495, 0.0
    %2555 = vst.msk [vmem:[#allocation2 + $0x1d0] sm:$0xff] %vm2495, 0.0
    %2556 = vst.msk [vmem:[#allocation2 + $0x1d8] sm:$0x3] %vm2498, 0.0
    %s2557 = scalar_lea.vmem [#allocation2], 24
    %2558 = vst.msk [vmem:[%s2557 + $0x1] sm:$0xff] %vm2495, %v2463
    %2559 = vst.msk [vmem:[%s2557 + $0x9] sm:$0xff] %vm2495, %v2464
    %2560 = vst.msk [vmem:[%s2557 + $0x19] sm:$0xff] %vm2495, %v2465
    %2561 = vst.msk [vmem:[%s2557 + $0x21] sm:$0xff] %vm2495, %v2466
    %2562 = vst.msk [vmem:[%s2557 + $0x31] sm:$0xff] %vm2495, %v2467
    %2563 = vst.msk [vmem:[%s2557 + $0x39] sm:$0xff] %vm2495, %v2468
    %2564 = vst.msk [vmem:[%s2557 + $0x49] sm:$0xff] %vm2495, %v2469
    %2565 = vst.msk [vmem:[%s2557 + $0x51] sm:$0xff] %vm2495, %v2470
    %2566 = vst.msk [vmem:[%s2557 + $0x61] sm:$0xff] %vm2495, %v2471
    %2567 = vst.msk [vmem:[%s2557 + $0x69] sm:$0xff] %vm2495, %v2472
    %2568 = vst.msk [vmem:[%s2557 + $0x79] sm:$0xff] %vm2495, %v2473
    %2569 = vst.msk [vmem:[%s2557 + $0x81] sm:$0xff] %vm2495, %v2474
    %2570 = vst.msk [vmem:[%s2557 + $0x91] sm:$0xff] %vm2495, %v2475
    %2571 = vst.msk [vmem:[%s2557 + $0x99] sm:$0xff] %vm2495, %v2476
    %2572 = vst.msk [vmem:[%s2557 + $0xa9] sm:$0xff] %vm2495, %v2477
    %2573 = vst.msk [vmem:[%s2557 + $0xb1] sm:$0xff] %vm2495, %v2478
    %2574 = vst.msk [vmem:[%s2557 + $0xf1] sm:$0xff] %vm2495, %v2479
    %2575 = vst.msk [vmem:[%s2557 + $0xf9] sm:$0xff] %vm2495, %v2480
    %2576 = vst.msk [vmem:[%s2557 + $0x109] sm:$0xff] %vm2495, %v2481
    %2577 = vst.msk [vmem:[%s2557 + $0x111] sm:$0xff] %vm2495, %v2482
    %2578 = vst.msk [vmem:[%s2557 + $0x121] sm:$0xff] %vm2495, %v2483
    %2579 = vst.msk [vmem:[%s2557 + $0x129] sm:$0xff] %vm2495, %v2484
    %2580 = vst.msk [vmem:[%s2557 + $0x139] sm:$0xff] %vm2495, %v2485
    %2581 = vst.msk [vmem:[%s2557 + $0x141] sm:$0xff] %vm2495, %v2486
    %2582 = vst.msk [vmem:[%s2557 + $0x151] sm:$0xff] %vm2495, %v2487
    %2583 = vst.msk [vmem:[%s2557 + $0x159] sm:$0xff] %vm2495, %v2488
    %2584 = vst.msk [vmem:[%s2557 + $0x169] sm:$0xff] %vm2495, %v2489
    %2585 = vst.msk [vmem:[%s2557 + $0x171] sm:$0xff] %vm2495, %v2490
    %2586 = vst.msk [vmem:[%s2557 + $0x181] sm:$0xff] %vm2495, %v2491
    %2587 = vst.msk [vmem:[%s2557 + $0x189] sm:$0xff] %vm2495, %v2492
    %2588 = vst.msk [vmem:[%s2557 + $0x199] sm:$0xff] %vm2495, %v2493
    %2589 = vst.msk [vmem:[%s2557 + $0x1a1] sm:$0xff] %vm2495, %v2494
    %v2590 = vld [vmem:[#allocation2] sm:$0xff]
    %v2591 = vld [vmem:[#allocation2 + $0x8] sm:$0xff]
    %v2592 = vld [vmem:[#allocation2 + $0x18] sm:$0xff]
    %v2593 = vld [vmem:[#allocation2 + $0x20] sm:$0xff]
    %v2594 = vld [vmem:[#allocation2 + $0x30] sm:$0xff]
    %v2595 = vld [vmem:[#allocation2 + $0x38] sm:$0xff]
    %v2596 = vld [vmem:[#allocation2 + $0x48] sm:$0xff]
    %v2597 = vld [vmem:[#allocation2 + $0x50] sm:$0xff]
    %v2598 = vld [vmem:[#allocation2 + $0x60] sm:$0xff]
    %v2599 = vld [vmem:[#allocation2 + $0x68] sm:$0xff]
    %v2600 = vld [vmem:[#allocation2 + $0x78] sm:$0xff]
    %v2601 = vld [vmem:[#allocation2 + $0x80] sm:$0xff]
    %v2602 = vld [vmem:[#allocation2 + $0x90] sm:$0xff]
    %v2603 = vld [vmem:[#allocation2 + $0x98] sm:$0xff]
    %v2604 = vld [vmem:[#allocation2 + $0xa8] sm:$0xff]
    %v2605 = vld [vmem:[#allocation2 + $0xb0] sm:$0xff]
    %v2606 = vld [vmem:[#allocation2 + $0xf0] sm:$0xff]
    %v2607 = vld [vmem:[#allocation2 + $0xf8] sm:$0xff]
    %v2608 = vld [vmem:[#allocation2 + $0x108] sm:$0xff]
    %v2609 = vld [vmem:[#allocation2 + $0x110] sm:$0xff]
    %v2610 = vld [vmem:[#allocation2 + $0x120] sm:$0xff]
    %v2611 = vld [vmem:[#allocation2 + $0x128] sm:$0xff]
    %v2612 = vld [vmem:[#allocation2 + $0x138] sm:$0xff]
    %v2613 = vld [vmem:[#allocation2 + $0x140] sm:$0xff]
    %v2614 = vld [vmem:[#allocation2 + $0x150] sm:$0xff]
    %v2615 = vld [vmem:[#allocation2 + $0x158] sm:$0xff]
    %v2616 = vld [vmem:[#allocation2 + $0x168] sm:$0xff]
    %v2617 = vld [vmem:[#allocation2 + $0x170] sm:$0xff]
    %v2618 = vld [vmem:[#allocation2 + $0x180] sm:$0xff]
    %v2619 = vld [vmem:[#allocation2 + $0x188] sm:$0xff]
    %v2620 = vld [vmem:[#allocation2 + $0x198] sm:$0xff]
    %v2621 = vld [vmem:[#allocation2 + $0x1a0] sm:$0xff]
    %v2622 = vld [vmem:[%s4] sm:$0xff]
    %v2623 = vld [vmem:[%s4 + $0x8] sm:$0xff]
    %v2624 = vld [vmem:[%s4 + $0x10] sm:$0xff]
    %v2625 = vld [vmem:[%s4 + $0x18] sm:$0xff]
    %v2626 = vld [vmem:[#allocation2 + $0x1] sm:$0xff]
    %v2627 = vld [vmem:[#allocation2 + $0x9] sm:$0xff]
    %v2628 = vld [vmem:[#allocation2 + $0x19] sm:$0xff]
    %v2629 = vld [vmem:[#allocation2 + $0x21] sm:$0xff]
    %v2630 = vld [vmem:[#allocation2 + $0x31] sm:$0xff]
    %v2631 = vld [vmem:[#allocation2 + $0x39] sm:$0xff]
    %v2632 = vld [vmem:[#allocation2 + $0x49] sm:$0xff]
    %v2633 = vld [vmem:[#allocation2 + $0x51] sm:$0xff]
    %v2634 = vld [vmem:[#allocation2 + $0x61] sm:$0xff]
    %v2635 = vld [vmem:[#allocation2 + $0x69] sm:$0xff]
    %v2636 = vld [vmem:[#allocation2 + $0x79] sm:$0xff]
    %v2637 = vld [vmem:[#allocation2 + $0x81] sm:$0xff]
    %v2638 = vld [vmem:[#allocation2 + $0x91] sm:$0xff]
    %v2639 = vld [vmem:[#allocation2 + $0x99] sm:$0xff]
    %v2640 = vld [vmem:[#allocation2 + $0xa9] sm:$0xff]
    %v2641 = vld [vmem:[#allocation2 + $0xb1] sm:$0xff]
    %v2642 = vld [vmem:[#allocation2 + $0xf1] sm:$0xff]
    %v2643 = vld [vmem:[#allocation2 + $0xf9] sm:$0xff]
    %v2644 = vld [vmem:[#allocation2 + $0x109] sm:$0xff]
    %v2645 = vld [vmem:[#allocation2 + $0x111] sm:$0xff]
    %v2646 = vld [vmem:[#allocation2 + $0x121] sm:$0xff]
    %v2647 = vld [vmem:[#allocation2 + $0x129] sm:$0xff]
    %v2648 = vld [vmem:[#allocation2 + $0x139] sm:$0xff]
    %v2649 = vld [vmem:[#allocation2 + $0x141] sm:$0xff]
    %v2650 = vld [vmem:[#allocation2 + $0x151] sm:$0xff]
    %v2651 = vld [vmem:[#allocation2 + $0x159] sm:$0xff]
    %v2652 = vld [vmem:[#allocation2 + $0x169] sm:$0xff]
    %v2653 = vld [vmem:[#allocation2 + $0x171] sm:$0xff]
    %v2654 = vld [vmem:[#allocation2 + $0x181] sm:$0xff]
    %v2655 = vld [vmem:[#allocation2 + $0x189] sm:$0xff]
    %v2656 = vld [vmem:[#allocation2 + $0x199] sm:$0xff]
    %v2657 = vld [vmem:[#allocation2 + $0x1a1] sm:$0xff]
    %s2658 = scalar_lea.vmem %s4, 32
    %v2659 = vld [vmem:[%s2658] sm:$0xff]
    %v2660 = vld [vmem:[%s2658 + $0x8] sm:$0xff]
    %v2661 = vld [vmem:[%s2658 + $0x10] sm:$0xff]
    %v2662 = vld [vmem:[%s2658 + $0x18] sm:$0xff]
    %v2664 = vsel %vm2495, %v2659, 0
    %v2667 = vsel %vm2495, %v2660, 0
    %v2670 = vsel %vm2495, %v2661, 0
    %v2673 = vsel %vm2495, %v2662, 0
    %v2676 = vsel %vm2495, %v2626, 0
    %v2679 = vsel %vm2495, %v2627, 0
    %v2682 = vsel %vm2495, %v2628, 0
    %v2685 = vsel %vm2495, %v2629, 0
    %v2688 = vsel %vm2495, %v2630, 0
    %v2691 = vsel %vm2495, %v2631, 0
    %v2694 = vsel %vm2495, %v2632, 0
    %v2697 = vsel %vm2495, %v2633, 0
    %v2700 = vsel %vm2495, %v2634, 0
    %v2703 = vsel %vm2495, %v2635, 0
    %v2706 = vsel %vm2495, %v2636, 0
    %v2709 = vsel %vm2495, %v2637, 0
    %v2712 = vsel %vm2495, %v2638, 0
    %v2715 = vsel %vm2495, %v2639, 0
    %v2718 = vsel %vm2495, %v2640, 0
    %v2721 = vsel %vm2495, %v2641, 0
    %v2724 = vsel %vm2495, %v2642, 0
    %v2727 = vsel %vm2495, %v2643, 0
    %v2730 = vsel %vm2495, %v2644, 0
    %v2733 = vsel %vm2495, %v2645, 0
    %v2736 = vsel %vm2495, %v2646, 0
    %v2739 = vsel %vm2495, %v2647, 0
    %v2742 = vsel %vm2495, %v2648, 0
    %v2745 = vsel %vm2495, %v2649, 0
    %v2748 = vsel %vm2495, %v2650, 0
    %v2751 = vsel %vm2495, %v2651, 0
    %v2754 = vsel %vm2495, %v2652, 0
    %v2757 = vsel %vm2495, %v2653, 0
    %v2760 = vsel %vm2495, %v2654, 0
    %v2763 = vsel %vm2495, %v2655, 0
    %v2766 = vsel %vm2495, %v2656, 0
    %v2769 = vsel %vm2495, %v2657, 0
    %2771 = vmatprep.subr.mxu0 0.0
    %2772 = vmatpush1.xpose.msra.mxu0 %v2676
    %2773 = vmatprep.subr.mxu0 0.0
    %2774 = vmatpush1.xpose.msra.mxu0 %v2679
    %2775 = vmatprep.subr.mxu0 0.0
    %2776 = vmatpush1.xpose.msra.mxu0 %v2682
    %2777 = vmatprep.subr.mxu0 0.0
    %2778 = vmatpush1.xpose.msra.mxu0 %v2685
    %2779 = vmatprep.subr.mxu0 0.0
    %2780 = vmatpush1.xpose.msra.mxu0 %v2688
    %2781 = vmatprep.subr.mxu0 0.0
    %2782 = vmatpush1.xpose.msra.mxu0 %v2691
    %2783 = vmatprep.subr.mxu0 0.0
    %2784 = vmatpush1.xpose.msra.mxu0 %v2694
    %2785 = vmatprep.subr.mxu0 0.0
    %2786 = vmatpush1.xpose.msra.mxu0 %v2697
    %2787 = vmatprep.subr.mxu0 0.0
    %2788 = vmatpush1.xpose.msra.mxu0 %v2700
    %2789 = vmatprep.subr.mxu0 0.0
    %2790 = vmatpush1.xpose.msra.mxu0 %v2703
    %2791 = vmatprep.subr.mxu0 0.0
    %2792 = vmatpush1.xpose.msra.mxu0 %v2706
    %2793 = vmatprep.subr.mxu0 0.0
    %2794 = vmatpush1.xpose.msra.mxu0 %v2709
    %2795 = vmatprep.subr.mxu0 0.0
    %2796 = vmatpush1.xpose.msra.mxu0 %v2712
    %2797 = vmatprep.subr.mxu0 0.0
    %2798 = vmatpush1.xpose.msra.mxu0 %v2715
    %2799 = vmatprep.subr.mxu0 0.0
    %2800 = vmatpush1.xpose.msra.mxu0 %v2718
    %2801 = vmatprep.subr.mxu0 0.0
    %2802 = vmatpush1.xpose.msra.mxu0 %v2721
    %2803 = vmatprep.subr.mxu0 0.0
    %2804 = vmatpush1.xpose.msra.mxu0 %v2724
    %2805 = vmatprep.subr.mxu0 0.0
    %2806 = vmatpush1.xpose.msra.mxu0 %v2727
    %2807 = vmatprep.subr.mxu0 0.0
    %2808 = vmatpush1.xpose.msra.mxu0 %v2730
    %2809 = vmatprep.subr.mxu0 0.0
    %2810 = vmatpush1.xpose.msra.mxu0 %v2733
    %2811 = vmatprep.subr.mxu0 0.0
    %2812 = vmatpush1.xpose.msra.mxu0 %v2736
    %2813 = vmatprep.subr.mxu0 0.0
    %2814 = vmatpush1.xpose.msra.mxu0 %v2739
    %2815 = vmatprep.subr.mxu0 0.0
    %2816 = vmatpush1.xpose.msra.mxu0 %v2742
    %2817 = vmatprep.subr.mxu0 0.0
    %2818 = vmatpush1.xpose.msra.mxu0 %v2745
    %2819 = vmatprep.subr.mxu0 0.0
    %2820 = vmatpush1.xpose.msra.mxu0 %v2748
    %2821 = vmatprep.subr.mxu0 0.0
    %2822 = vmatpush1.xpose.msra.mxu0 %v2751
    %2823 = vmatprep.subr.mxu0 0.0
    %2824 = vmatpush1.xpose.msra.mxu0 %v2754
    %2825 = vmatprep.subr.mxu0 0.0
    %2826 = vmatpush1.xpose.msra.mxu0 %v2757
    %2827 = vmatprep.subr.mxu0 0.0
    %2828 = vmatpush1.xpose.msra.mxu0 %v2760
    %2829 = vmatprep.subr.mxu0 0.0
    %2830 = vmatpush1.xpose.msra.mxu0 %v2763
    %2831 = vmatprep.subr.mxu0 0.0
    %2832 = vmatpush1.xpose.msra.mxu0 %v2766
    %2833 = vmatprep.subr.mxu0 0.0
    %2834 = vmatpush1.xpose.msra.mxu0 %v2769
    %2835 = vmatprep.mubr.f32.mxu0 0.0
    %2836 = vmatmul.mubr.f32.gmra.mrb[0].mxu0 %v2664
    %v2837 = vpop.f32.mrb[0].mxu0
    %v2838 = vadd.f32 0.0, %v2837
    %v2839 = vpop.f32.mrb[0].mxu0
    %v2840 = vadd.f32 0.0, %v2839
    %2841 = vmatprep.mubr.f32.mxu0 0.0
    %2842 = vmatmul.mubr.f32.gmra.mrb[0].mxu0 %v2667
    %v2843 = vpop.f32.mrb[0].mxu0
    %v2844 = vadd.f32 0.0, %v2843
    %v2845 = vpop.f32.mrb[0].mxu0
    %v2846 = vadd.f32 0.0, %v2845
    %2847 = vmatprep.mubr.f32.mxu0 0.0
    %2848 = vmatmul.mubr.f32.gmra.mrb[0].mxu0 %v2670
    %v2849 = vpop.f32.mrb[0].mxu0
    %v2850 = vadd.f32 0.0, %v2849
    %v2851 = vpop.f32.mrb[0].mxu0
    %v2852 = vadd.f32 0.0, %v2851
    %2853 = vmatprep.mubr.f32.mxu0 0.0
    %2854 = vmatmul.mubr.f32.gmra.mrb[0].mxu0 %v2673
    %v2855 = vpop.f32.mrb[0].mxu0
    %v2856 = vadd.f32 0.0, %v2855
    %v2857 = vpop.f32.mrb[0].mxu0
    %v2858 = vadd.f32 0.0, %v2857
    %2859 = vdwg.mxu0
    %v2861 = vsel %vm2495, %v2622, 0
    %v2864 = vsel %vm2495, %v2623, 0
    %v2867 = vsel %vm2495, %v2624, 0
    %v2870 = vsel %vm2495, %v2625, 0
    %v2873 = vsel %vm2495, %v2590, 0
    %v2876 = vsel %vm2495, %v2591, 0
    %v2879 = vsel %vm2495, %v2592, 0
    %v2882 = vsel %vm2495, %v2593, 0
    %v2885 = vsel %vm2495, %v2594, 0
    %v2888 = vsel %vm2495, %v2595, 0
    %v2891 = vsel %vm2495, %v2596, 0
    %v2894 = vsel %vm2495, %v2597, 0
    %v2897 = vsel %vm2495, %v2598, 0
    %v2900 = vsel %vm2495, %v2599, 0
    %v2903 = vsel %vm2495, %v2600, 0
    %v2906 = vsel %vm2495, %v2601, 0
    %v2909 = vsel %vm2495, %v2602, 0
    %v2912 = vsel %vm2495, %v2603, 0
    %v2915 = vsel %vm2495, %v2604, 0
    %v2918 = vsel %vm2495, %v2605, 0
    %v2921 = vsel %vm2495, %v2606, 0
    %v2924 = vsel %vm2495, %v2607, 0
    %v2927 = vsel %vm2495, %v2608, 0
    %v2930 = vsel %vm2495, %v2609, 0
    %v2933 = vsel %vm2495, %v2610, 0
    %v2936 = vsel %vm2495, %v2611, 0
    %v2939 = vsel %vm2495, %v2612, 0
    %v2942 = vsel %vm2495, %v2613, 0
    %v2945 = vsel %vm2495, %v2614, 0
    %v2948 = vsel %vm2495, %v2615, 0
    %v2951 = vsel %vm2495, %v2616, 0
    %v2954 = vsel %vm2495, %v2617, 0
    %v2957 = vsel %vm2495, %v2618, 0
    %v2960 = vsel %vm2495, %v2619, 0
    %v2963 = vsel %vm2495, %v2620, 0
    %v2966 = vsel %vm2495, %v2621, 0
    %2968 = vmatprep.subr.mxu0 0.0
    %2969 = vmatpush1.xpose.msra.mxu0 %v2873
    %2970 = vmatprep.subr.mxu0 0.0
    %2971 = vmatpush1.xpose.msra.mxu0 %v2876
    %2972 = vmatprep.subr.mxu0 0.0
    %2973 = vmatpush1.xpose.msra.mxu0 %v2879
    %2974 = vmatprep.subr.mxu0 0.0
    %2975 = vmatpush1.xpose.msra.mxu0 %v2882
    %2976 = vmatprep.subr.mxu0 0.0
    %2977 = vmatpush1.xpose.msra.mxu0 %v2885
    %2978 = vmatprep.subr.mxu0 0.0
    %2979 = vmatpush1.xpose.msra.mxu0 %v2888
    %2980 = vmatprep.subr.mxu0 0.0
    %2981 = vmatpush1.xpose.msra.mxu0 %v2891
    %2982 = vmatprep.subr.mxu0 0.0
    %2983 = vmatpush1.xpose.msra.mxu0 %v2894
    %2984 = vmatprep.subr.mxu0 0.0
    %2985 = vmatpush1.xpose.msra.mxu0 %v2897
    %2986 = vmatprep.subr.mxu0 0.0
    %2987 = vmatpush1.xpose.msra.mxu0 %v2900
    %2988 = vmatprep.subr.mxu0 0.0
    %2989 = vmatpush1.xpose.msra.mxu0 %v2903
    %2990 = vmatprep.subr.mxu0 0.0
    %2991 = vmatpush1.xpose.msra.mxu0 %v2906
    %2992 = vmatprep.subr.mxu0 0.0
    %2993 = vmatpush1.xpose.msra.mxu0 %v2909
    %2994 = vmatprep.subr.mxu0 0.0
    %2995 = vmatpush1.xpose.msra.mxu0 %v2912
    %2996 = vmatprep.subr.mxu0 0.0
    %2997 = vmatpush1.xpose.msra.mxu0 %v2915
    %2998 = vmatprep.subr.mxu0 0.0
    %2999 = vmatpush1.xpose.msra.mxu0 %v2918
    %3000 = vmatprep.subr.mxu0 0.0
    %3001 = vmatpush1.xpose.msra.mxu0 %v2921
    %3002 = vmatprep.subr.mxu0 0.0
    %3003 = vmatpush1.xpose.msra.mxu0 %v2924
    %3004 = vmatprep.subr.mxu0 0.0
    %3005 = vmatpush1.xpose.msra.mxu0 %v2927
    %3006 = vmatprep.subr.mxu0 0.0
    %3007 = vmatpush1.xpose.msra.mxu0 %v2930
    %3008 = vmatprep.subr.mxu0 0.0
    %3009 = vmatpush1.xpose.msra.mxu0 %v2933
    %3010 = vmatprep.subr.mxu0 0.0
    %3011 = vmatpush1.xpose.msra.mxu0 %v2936
    %3012 = vmatprep.subr.mxu0 0.0
    %3013 = vmatpush1.xpose.msra.mxu0 %v2939
    %3014 = vmatprep.subr.mxu0 0.0
    %3015 = vmatpush1.xpose.msra.mxu0 %v2942
    %3016 = vmatprep.subr.mxu0 0.0
    %3017 = vmatpush1.xpose.msra.mxu0 %v2945
    %3018 = vmatprep.subr.mxu0 0.0
    %3019 = vmatpush1.xpose.msra.mxu0 %v2948
    %3020 = vmatprep.subr.mxu0 0.0
    %3021 = vmatpush1.xpose.msra.mxu0 %v2951
    %3022 = vmatprep.subr.mxu0 0.0
    %3023 = vmatpush1.xpose.msra.mxu0 %v2954
    %3024 = vmatprep.subr.mxu0 0.0
    %3025 = vmatpush1.xpose.msra.mxu0 %v2957
    %3026 = vmatprep.subr.mxu0 0.0
    %3027 = vmatpush1.xpose.msra.mxu0 %v2960
    %3028 = vmatprep.subr.mxu0 0.0
    %3029 = vmatpush1.xpose.msra.mxu0 %v2963
    %3030 = vmatprep.subr.mxu0 0.0
    %3031 = vmatpush1.xpose.msra.mxu0 %v2966
    %3032 = vmatprep.mubr.f32.mxu0 0.0
    %3033 = vmatmul.mubr.f32.gmra.mrb[0].mxu0 %v2861
    %v3034 = vpop.f32.mrb[0].mxu0
    %v3035 = vadd.f32 %v2838, %v3034
    %v3036 = vpop.f32.mrb[0].mxu0
    %v3037 = vadd.f32 %v2840, %v3036
    %3038 = vmatprep.mubr.f32.mxu0 0.0
    %3039 = vmatmul.mubr.f32.gmra.mrb[0].mxu0 %v2864
    %v3040 = vpop.f32.mrb[0].mxu0
    %v3041 = vadd.f32 %v2844, %v3040
    %v3042 = vpop.f32.mrb[0].mxu0
    %v3043 = vadd.f32 %v2846, %v3042
    %3044 = vmatprep.mubr.f32.mxu0 0.0
    %3045 = vmatmul.mubr.f32.gmra.mrb[0].mxu0 %v2867
    %v3046 = vpop.f32.mrb[0].mxu0
    %v3047 = vadd.f32 %v2850, %v3046
    %v3048 = vpop.f32.mrb[0].mxu0
    %v3049 = vadd.f32 %v2852, %v3048
    %3050 = vmatprep.mubr.f32.mxu0 0.0
    %3051 = vmatmul.mubr.f32.gmra.mrb[0].mxu0 %v2870
    %v3052 = vpop.f32.mrb[0].mxu0
    %v3053 = vadd.f32 %v2856, %v3052
    %v3054 = vpop.f32.mrb[0].mxu0
    %v3055 = vadd.f32 %v2858, %v3054
    %3056 = vdwg.mxu0
    %v3057 = vld [vmem:[#allocation2 + $0x2] sm:$0xff]
    %v3058 = vld [vmem:[#allocation2 + $0xa] sm:$0xff]
    %v3059 = vld [vmem:[#allocation2 + $0x1a] sm:$0xff]
    %v3060 = vld [vmem:[#allocation2 + $0x22] sm:$0xff]
    %v3061 = vld [vmem:[#allocation2 + $0x32] sm:$0xff]
    %v3062 = vld [vmem:[#allocation2 + $0x3a] sm:$0xff]
    %v3063 = vld [vmem:[#allocation2 + $0x4a] sm:$0xff]
    %v3064 = vld [vmem:[#allocation2 + $0x52] sm:$0xff]
    %v3065 = vld [vmem:[#allocation2 + $0x62] sm:$0xff]
    %v3066 = vld [vmem:[#allocation2 + $0x6a] sm:$0xff]
    %v3067 = vld [vmem:[#allocation2 + $0x7a] sm:$0xff]
    %v3068 = vld [vmem:[#allocation2 + $0x82] sm:$0xff]
    %v3069 = vld [vmem:[#allocation2 + $0x92] sm:$0xff]
    %v3070 = vld [vmem:[#allocation2 + $0x9a] sm:$0xff]
    %v3071 = vld [vmem:[#allocation2 + $0xaa] sm:$0xff]
    %v3072 = vld [vmem:[#allocation2 + $0xb2] sm:$0xff]
    %v3073 = vld [vmem:[#allocation2 + $0xf2] sm:$0xff]
    %v3074 = vld [vmem:[#allocation2 + $0xfa] sm:$0xff]
    %v3075 = vld [vmem:[#allocation2 + $0x10a] sm:$0xff]
    %v3076 = vld [vmem:[#allocation2 + $0x112] sm:$0xff]
    %v3077 = vld [vmem:[#allocation2 + $0x122] sm:$0xff]
    %v3078 = vld [vmem:[#allocation2 + $0x12a] sm:$0xff]
    %v3079 = vld [vmem:[#allocation2 + $0x13a] sm:$0xff]
    %v3080 = vld [vmem:[#allocation2 + $0x142] sm:$0xff]
    %v3081 = vld [vmem:[#allocation2 + $0x152] sm:$0xff]
    %v3082 = vld [vmem:[#allocation2 + $0x15a] sm:$0xff]
    %v3083 = vld [vmem:[#allocation2 + $0x16a] sm:$0xff]
    %v3084 = vld [vmem:[#allocation2 + $0x172] sm:$0xff]
    %v3085 = vld [vmem:[#allocation2 + $0x182] sm:$0xff]
    %v3086 = vld [vmem:[#allocation2 + $0x18a] sm:$0xff]
    %v3087 = vld [vmem:[#allocation2 + $0x19a] sm:$0xff]
    %v3088 = vld [vmem:[#allocation2 + $0x1a2] sm:$0xff]
    %s3089 = scalar_lea.vmem %s4, 64
    %v3090 = vld [vmem:[%s3089] sm:$0xff]
    %v3091 = vld [vmem:[%s3089 + $0x8] sm:$0xff]
    %v3092 = vld [vmem:[%s3089 + $0x10] sm:$0xff]
    %v3093 = vld [vmem:[%s3089 + $0x18] sm:$0xff]
    %v3095 = vsel %vm2495, %v3090, 0
    %v3098 = vsel %vm2495, %v3091, 0
    %v3101 = vsel %vm2495, %v3092, 0
    %v3104 = vsel %vm2495, %v3093, 0
    %v3107 = vsel %vm2495, %v3057, 0
    %v3110 = vsel %vm2495, %v3058, 0
    %v3113 = vsel %vm2495, %v3059, 0
    %v3116 = vsel %vm2495, %v3060, 0
    %v3119 = vsel %vm2495, %v3061, 0
    %v3122 = vsel %vm2495, %v3062, 0
    %v3125 = vsel %vm2495, %v3063, 0
    %v3128 = vsel %vm2495, %v3064, 0
    %v3131 = vsel %vm2495, %v3065, 0
    %v3134 = vsel %vm2495, %v3066, 0
    %v3137 = vsel %vm2495, %v3067, 0
    %v3140 = vsel %vm2495, %v3068, 0
    %v3143 = vsel %vm2495, %v3069, 0
    %v3146 = vsel %vm2495, %v3070, 0
    %v3149 = vsel %vm2495, %v3071, 0
    %v3152 = vsel %vm2495, %v3072, 0
    %v3155 = vsel %vm2495, %v3073, 0
    %v3158 = vsel %vm2495, %v3074, 0
    %v3161 = vsel %vm2495, %v3075, 0
    %v3164 = vsel %vm2495, %v3076, 0
    %v3167 = vsel %vm2495, %v3077, 0
    %v3170 = vsel %vm2495, %v3078, 0
    %v3173 = vsel %vm2495, %v3079, 0
    %v3176 = vsel %vm2495, %v3080, 0
    %v3179 = vsel %vm2495, %v3081, 0
    %v3182 = vsel %vm2495, %v3082, 0
    %v3185 = vsel %vm2495, %v3083, 0
    %v3188 = vsel %vm2495, %v3084, 0
    %v3191 = vsel %vm2495, %v3085, 0
    %v3194 = vsel %vm2495, %v3086, 0
    %v3197 = vsel %vm2495, %v3087, 0
    %v3200 = vsel %vm2495, %v3088, 0
    %3202 = vmatprep.subr.mxu0 0.0
    %3203 = vmatpush1.xpose.msra.mxu0 %v3107
    %3204 = vmatprep.subr.mxu0 0.0
    %3205 = vmatpush1.xpose.msra.mxu0 %v3110
    %3206 = vmatprep.subr.mxu0 0.0
    %3207 = vmatpush1.xpose.msra.mxu0 %v3113
    %3208 = vmatprep.subr.mxu0 0.0
    %3209 = vmatpush1.xpose.msra.mxu0 %v3116
    %3210 = vmatprep.subr.mxu0 0.0
    %3211 = vmatpush1.xpose.msra.mxu0 %v3119
    %3212 = vmatprep.subr.mxu0 0.0
    %3213 = vmatpush1.xpose.msra.mxu0 %v3122
    %3214 = vmatprep.subr.mxu0 0.0
    %3215 = vmatpush1.xpose.msra.mxu0 %v3125
    %3216 = vmatprep.subr.mxu0 0.0
    %3217 = vmatpush1.xpose.msra.mxu0 %v3128
    %3218 = vmatprep.subr.mxu0 0.0
    %3219 = vmatpush1.xpose.msra.mxu0 %v3131
    %3220 = vmatprep.subr.mxu0 0.0
    %3221 = vmatpush1.xpose.msra.mxu0 %v3134
    %3222 = vmatprep.subr.mxu0 0.0
    %3223 = vmatpush1.xpose.msra.mxu0 %v3137
    %3224 = vmatprep.subr.mxu0 0.0
    %3225 = vmatpush1.xpose.msra.mxu0 %v3140
    %3226 = vmatprep.subr.mxu0 0.0
    %3227 = vmatpush1.xpose.msra.mxu0 %v3143
    %3228 = vmatprep.subr.mxu0 0.0
    %3229 = vmatpush1.xpose.msra.mxu0 %v3146
    %3230 = vmatprep.subr.mxu0 0.0
    %3231 = vmatpush1.xpose.msra.mxu0 %v3149
    %3232 = vmatprep.subr.mxu0 0.0
    %3233 = vmatpush1.xpose.msra.mxu0 %v3152
    %3234 = vmatprep.subr.mxu0 0.0
    %3235 = vmatpush1.xpose.msra.mxu0 %v3155
    %3236 = vmatprep.subr.mxu0 0.0
    %3237 = vmatpush1.xpose.msra.mxu0 %v3158
    %3238 = vmatprep.subr.mxu0 0.0
    %3239 = vmatpush1.xpose.msra.mxu0 %v3161
    %3240 = vmatprep.subr.mxu0 0.0
    %3241 = vmatpush1.xpose.msra.mxu0 %v3164
    %3242 = vmatprep.subr.mxu0 0.0
    %3243 = vmatpush1.xpose.msra.mxu0 %v3167
    %3244 = vmatprep.subr.mxu0 0.0
    %3245 = vmatpush1.xpose.msra.mxu0 %v3170
    %3246 = vmatprep.subr.mxu0 0.0
    %3247 = vmatpush1.xpose.msra.mxu0 %v3173
    %3248 = vmatprep.subr.mxu0 0.0
    %3249 = vmatpush1.xpose.msra.mxu0 %v3176
    %3250 = vmatprep.subr.mxu0 0.0
    %3251 = vmatpush1.xpose.msra.mxu0 %v3179
    %3252 = vmatprep.subr.mxu0 0.0
    %3253 = vmatpush1.xpose.msra.mxu0 %v3182
    %3254 = vmatprep.subr.mxu0 0.0
    %3255 = vmatpush1.xpose.msra.mxu0 %v3185
    %3256 = vmatprep.subr.mxu0 0.0
    %3257 = vmatpush1.xpose.msra.mxu0 %v3188
    %3258 = vmatprep.subr.mxu0 0.0
    %3259 = vmatpush1.xpose.msra.mxu0 %v3191
    %3260 = vmatprep.subr.mxu0 0.0
    %3261 = vmatpush1.xpose.msra.mxu0 %v3194
    %3262 = vmatprep.subr.mxu0 0.0
    %3263 = vmatpush1.xpose.msra.mxu0 %v3197
    %3264 = vmatprep.subr.mxu0 0.0
    %3265 = vmatpush1.xpose.msra.mxu0 %v3200
    %3266 = vmatprep.mubr.f32.mxu0 0.0
    %3267 = vmatmul.mubr.f32.gmra.mrb[0].mxu0 %v3095
    %v3268 = vpop.f32.mrb[0].mxu0
    %v3269 = vadd.f32 0.0, %v3268
    %v3270 = vpop.f32.mrb[0].mxu0
    %v3271 = vadd.f32 0.0, %v3270
    %3272 = vmatprep.mubr.f32.mxu0 0.0
    %3273 = vmatmul.mubr.f32.gmra.mrb[0].mxu0 %v3098
    %v3274 = vpop.f32.mrb[0].mxu0
    %v3275 = vadd.f32 0.0, %v3274
    %v3276 = vpop.f32.mrb[0].mxu0
    %v3277 = vadd.f32 0.0, %v3276
    %3278 = vmatprep.mubr.f32.mxu0 0.0
    %3279 = vmatmul.mubr.f32.gmra.mrb[0].mxu0 %v3101
    %v3280 = vpop.f32.mrb[0].mxu0
    %v3281 = vadd.f32 0.0, %v3280
    %v3282 = vpop.f32.mrb[0].mxu0
    %v3283 = vadd.f32 0.0, %v3282
    %3284 = vmatprep.mubr.f32.mxu0 0.0
    %3285 = vmatmul.mubr.f32.gmra.mrb[0].mxu0 %v3104
    %v3286 = vpop.f32.mrb[0].mxu0
    %v3287 = vadd.f32 0.0, %v3286
    %v3288 = vpop.f32.mrb[0].mxu0
    %v3289 = vadd.f32 0.0, %v3288
    %3290 = vdwg.mxu0
    %v3291 = vadd.f32 %v3035, %v3269
    %v3292 = vadd.f32 %v3037, %v3271
    %v3293 = vadd.f32 %v3041, %v3275
    %v3294 = vadd.f32 %v3043, %v3277
    %v3295 = vadd.f32 %v3047, %v3281
    %v3296 = vadd.f32 %v3049, %v3283
    %v3297 = vadd.f32 %v3053, %v3287
    %v3298 = vadd.f32 %v3055, %v3289
    %v3299 = vld [vmem:[%s2557] sm:$0xff]
    %v3300 = vld [vmem:[%s2557 + $0x8] sm:$0xff]
    %v3301 = vld [vmem:[%s2557 + $0x18] sm:$0xff]
    %v3302 = vld [vmem:[%s2557 + $0x20] sm:$0xff]
    %v3303 = vld [vmem:[%s2557 + $0x30] sm:$0xff]
    %v3304 = vld [vmem:[%s2557 + $0x38] sm:$0xff]
    %v3305 = vld [vmem:[%s2557 + $0x48] sm:$0xff]
    %v3306 = vld [vmem:[%s2557 + $0x50] sm:$0xff]
    %v3307 = vld [vmem:[%s2557 + $0x60] sm:$0xff]
    %v3308 = vld [vmem:[%s2557 + $0x68] sm:$0xff]
    %v3309 = vld [vmem:[%s2557 + $0x78] sm:$0xff]
    %v3310 = vld [vmem:[%s2557 + $0x80] sm:$0xff]
    %v3311 = vld [vmem:[%s2557 + $0x90] sm:$0xff]
    %v3312 = vld [vmem:[%s2557 + $0x98] sm:$0xff]
    %v3313 = vld [vmem:[%s2557 + $0xa8] sm:$0xff]
    %v3314 = vld [vmem:[%s2557 + $0xb0] sm:$0xff]
    %v3315 = vld [vmem:[%s2557 + $0xf0] sm:$0xff]
    %v3316 = vld [vmem:[%s2557 + $0xf8] sm:$0xff]
    %v3317 = vld [vmem:[%s2557 + $0x108] sm:$0xff]
    %v3318 = vld [vmem:[%s2557 + $0x110] sm:$0xff]
    %v3319 = vld [vmem:[%s2557 + $0x120] sm:$0xff]
    %v3320 = vld [vmem:[%s2557 + $0x128] sm:$0xff]
    %v3321 = vld [vmem:[%s2557 + $0x138] sm:$0xff]
    %v3322 = vld [vmem:[%s2557 + $0x140] sm:$0xff]
    %v3323 = vld [vmem:[%s2557 + $0x150] sm:$0xff]
    %v3324 = vld [vmem:[%s2557 + $0x158] sm:$0xff]
    %v3325 = vld [vmem:[%s2557 + $0x168] sm:$0xff]
    %v3326 = vld [vmem:[%s2557 + $0x170] sm:$0xff]
    %v3327 = vld [vmem:[%s2557 + $0x180] sm:$0xff]
    %v3328 = vld [vmem:[%s2557 + $0x188] sm:$0xff]
    %v3329 = vld [vmem:[%s2557 + $0x198] sm:$0xff]
    %v3330 = vld [vmem:[%s2557 + $0x1a0] sm:$0xff]
    %s3331 = scalar_lea.vmem %s4, 96
    %v3332 = vld [vmem:[%s3331] sm:$0xff]
    %v3333 = vld [vmem:[%s3331 + $0x8] sm:$0xff]
    %v3334 = vld [vmem:[%s3331 + $0x10] sm:$0xff]
    %v3335 = vld [vmem:[%s3331 + $0x18] sm:$0xff]
    %v3337 = vsel %vm2495, %v3332, 0
    %v3340 = vsel %vm2495, %v3333, 0
    %v3343 = vsel %vm2495, %v3334, 0
    %v3346 = vsel %vm2495, %v3335, 0
    %v3349 = vsel %vm2495, %v3299, 0
    %v3352 = vsel %vm2495, %v3300, 0
    %v3355 = vsel %vm2495, %v3301, 0
    %v3358 = vsel %vm2495, %v3302, 0
    %v3361 = vsel %vm2495, %v3303, 0
    %v3364 = vsel %vm2495, %v3304, 0
    %v3367 = vsel %vm2495, %v3305, 0
    %v3370 = vsel %vm2495, %v3306, 0
    %v3373 = vsel %vm2495, %v3307, 0
    %v3376 = vsel %vm2495, %v3308, 0
    %v3379 = vsel %vm2495, %v3309, 0
    %v3382 = vsel %vm2495, %v3310, 0
    %v3385 = vsel %vm2495, %v3311, 0
    %v3388 = vsel %vm2495, %v3312, 0
    %v3391 = vsel %vm2495, %v3313, 0
    %v3394 = vsel %vm2495, %v3314, 0
    %v3397 = vsel %vm2495, %v3315, 0
    %v3400 = vsel %vm2495, %v3316, 0
    %v3403 = vsel %vm2495, %v3317, 0
    %v3406 = vsel %vm2495, %v3318, 0
    %v3409 = vsel %vm2495, %v3319, 0
    %v3412 = vsel %vm2495, %v3320, 0
    %v3415 = vsel %vm2495, %v3321, 0
    %v3418 = vsel %vm2495, %v3322, 0
    %v3421 = vsel %vm2495, %v3323, 0
    %v3424 = vsel %vm2495, %v3324, 0
    %v3427 = vsel %vm2495, %v3325, 0
    %v3430 = vsel %vm2495, %v3326, 0
    %v3433 = vsel %vm2495, %v3327, 0
    %v3436 = vsel %vm2495, %v3328, 0
    %v3439 = vsel %vm2495, %v3329, 0
    %v3442 = vsel %vm2495, %v3330, 0
    %3444 = vmatprep.subr.mxu0 0.0
    %3445 = vmatpush1.xpose.msra.mxu0 %v3349
    %3446 = vmatprep.subr.mxu0 0.0
    %3447 = vmatpush1.xpose.msra.mxu0 %v3352
    %3448 = vmatprep.subr.mxu0 0.0
    %3449 = vmatpush1.xpose.msra.mxu0 %v3355
    %3450 = vmatprep.subr.mxu0 0.0
    %3451 = vmatpush1.xpose.msra.mxu0 %v3358
    %3452 = vmatprep.subr.mxu0 0.0
    %3453 = vmatpush1.xpose.msra.mxu0 %v3361
    %3454 = vmatprep.subr.mxu0 0.0
    %3455 = vmatpush1.xpose.msra.mxu0 %v3364
    %3456 = vmatprep.subr.mxu0 0.0
    %3457 = vmatpush1.xpose.msra.mxu0 %v3367
    %3458 = vmatprep.subr.mxu0 0.0
    %3459 = vmatpush1.xpose.msra.mxu0 %v3370
    %3460 = vmatprep.subr.mxu0 0.0
    %3461 = vmatpush1.xpose.msra.mxu0 %v3373
    %3462 = vmatprep.subr.mxu0 0.0
    %3463 = vmatpush1.xpose.msra.mxu0 %v3376
    %3464 = vmatprep.subr.mxu0 0.0
    %3465 = vmatpush1.xpose.msra.mxu0 %v3379
    %3466 = vmatprep.subr.mxu0 0.0
    %3467 = vmatpush1.xpose.msra.mxu0 %v3382
    %3468 = vmatprep.subr.mxu0 0.0
    %3469 = vmatpush1.xpose.msra.mxu0 %v3385
    %3470 = vmatprep.subr.mxu0 0.0
    %3471 = vmatpush1.xpose.msra.mxu0 %v3388
    %3472 = vmatprep.subr.mxu0 0.0
    %3473 = vmatpush1.xpose.msra.mxu0 %v3391
    %3474 = vmatprep.subr.mxu0 0.0
    %3475 = vmatpush1.xpose.msra.mxu0 %v3394
    %3476 = vmatprep.subr.mxu0 0.0
    %3477 = vmatpush1.xpose.msra.mxu0 %v3397
    %3478 = vmatprep.subr.mxu0 0.0
    %3479 = vmatpush1.xpose.msra.mxu0 %v3400
    %3480 = vmatprep.subr.mxu0 0.0
    %3481 = vmatpush1.xpose.msra.mxu0 %v3403
    %3482 = vmatprep.subr.mxu0 0.0
    %3483 = vmatpush1.xpose.msra.mxu0 %v3406
    %3484 = vmatprep.subr.mxu0 0.0
    %3485 = vmatpush1.xpose.msra.mxu0 %v3409
    %3486 = vmatprep.subr.mxu0 0.0
    %3487 = vmatpush1.xpose.msra.mxu0 %v3412
    %3488 = vmatprep.subr.mxu0 0.0
    %3489 = vmatpush1.xpose.msra.mxu0 %v3415
    %3490 = vmatprep.subr.mxu0 0.0
    %3491 = vmatpush1.xpose.msra.mxu0 %v3418
    %3492 = vmatprep.subr.mxu0 0.0
    %3493 = vmatpush1.xpose.msra.mxu0 %v3421
    %3494 = vmatprep.subr.mxu0 0.0
    %3495 = vmatpush1.xpose.msra.mxu0 %v3424
    %3496 = vmatprep.subr.mxu0 0.0
    %3497 = vmatpush1.xpose.msra.mxu0 %v3427
    %3498 = vmatprep.subr.mxu0 0.0
    %3499 = vmatpush1.xpose.msra.mxu0 %v3430
    %3500 = vmatprep.subr.mxu0 0.0
    %3501 = vmatpush1.xpose.msra.mxu0 %v3433
    %3502 = vmatprep.subr.mxu0 0.0
    %3503 = vmatpush1.xpose.msra.mxu0 %v3436
    %3504 = vmatprep.subr.mxu0 0.0
    %3505 = vmatpush1.xpose.msra.mxu0 %v3439
    %3506 = vmatprep.subr.mxu0 0.0
    %3507 = vmatpush1.xpose.msra.mxu0 %v3442
    %3508 = vmatprep.mubr.f32.mxu0 0.0
    %3509 = vmatmul.mubr.f32.gmra.mrb[0].mxu0 %v3337
    %v3510 = vpop.f32.mrb[0].mxu0
    %v3511 = vadd.f32 0.0, %v3510
    %v3512 = vpop.f32.mrb[0].mxu0
    %v3513 = vadd.f32 0.0, %v3512
    %3514 = vmatprep.mubr.f32.mxu0 0.0
    %3515 = vmatmul.mubr.f32.gmra.mrb[0].mxu0 %v3340
    %v3516 = vpop.f32.mrb[0].mxu0
    %v3517 = vadd.f32 0.0, %v3516
    %v3518 = vpop.f32.mrb[0].mxu0
    %v3519 = vadd.f32 0.0, %v3518
    %3520 = vmatprep.mubr.f32.mxu0 0.0
    %3521 = vmatmul.mubr.f32.gmra.mrb[0].mxu0 %v3343
    %v3522 = vpop.f32.mrb[0].mxu0
    %v3523 = vadd.f32 0.0, %v3522
    %v3524 = vpop.f32.mrb[0].mxu0
    %v3525 = vadd.f32 0.0, %v3524
    %3526 = vmatprep.mubr.f32.mxu0 0.0
    %3527 = vmatmul.mubr.f32.gmra.mrb[0].mxu0 %v3346
    %v3528 = vpop.f32.mrb[0].mxu0
    %v3529 = vadd.f32 0.0, %v3528
    %v3530 = vpop.f32.mrb[0].mxu0
    %v3531 = vadd.f32 0.0, %v3530
    %3532 = vdwg.mxu0
    %v3533 = vadd.f32 %v3291, %v3511
    %v3534 = vadd.f32 %v3292, %v3513
    %v3535 = vadd.f32 %v3293, %v3517
    %v3536 = vadd.f32 %v3294, %v3519
    %v3537 = vadd.f32 %v3295, %v3523
    %v3538 = vadd.f32 %v3296, %v3525
    %v3539 = vadd.f32 %v3297, %v3529
    %v3540 = vadd.f32 %v3298, %v3531
    %v3541 = vld [vmem:[%s2557 + $0x1] sm:$0xff]
    %v3542 = vld [vmem:[%s2557 + $0x9] sm:$0xff]
    %v3543 = vld [vmem:[%s2557 + $0x19] sm:$0xff]
    %v3544 = vld [vmem:[%s2557 + $0x21] sm:$0xff]
    %v3545 = vld [vmem:[%s2557 + $0x31] sm:$0xff]
    %v3546 = vld [vmem:[%s2557 + $0x39] sm:$0xff]
    %v3547 = vld [vmem:[%s2557 + $0x49] sm:$0xff]
    %v3548 = vld [vmem:[%s2557 + $0x51] sm:$0xff]
    %v3549 = vld [vmem:[%s2557 + $0x61] sm:$0xff]
    %v3550 = vld [vmem:[%s2557 + $0x69] sm:$0xff]
    %v3551 = vld [vmem:[%s2557 + $0x79] sm:$0xff]
    %v3552 = vld [vmem:[%s2557 + $0x81] sm:$0xff]
    %v3553 = vld [vmem:[%s2557 + $0x91] sm:$0xff]
    %v3554 = vld [vmem:[%s2557 + $0x99] sm:$0xff]
    %v3555 = vld [vmem:[%s2557 + $0xa9] sm:$0xff]
    %v3556 = vld [vmem:[%s2557 + $0xb1] sm:$0xff]
    %v3557 = vld [vmem:[%s2557 + $0xf1] sm:$0xff]
    %v3558 = vld [vmem:[%s2557 + $0xf9] sm:$0xff]
    %v3559 = vld [vmem:[%s2557 + $0x109] sm:$0xff]
    %v3560 = vld [vmem:[%s2557 + $0x111] sm:$0xff]
    %v3561 = vld [vmem:[%s2557 + $0x121] sm:$0xff]
    %v3562 = vld [vmem:[%s2557 + $0x129] sm:$0xff]
    %v3563 = vld [vmem:[%s2557 + $0x139] sm:$0xff]
    %v3564 = vld [vmem:[%s2557 + $0x141] sm:$0xff]
    %v3565 = vld [vmem:[%s2557 + $0x151] sm:$0xff]
    %v3566 = vld [vmem:[%s2557 + $0x159] sm:$0xff]
    %v3567 = vld [vmem:[%s2557 + $0x169] sm:$0xff]
    %v3568 = vld [vmem:[%s2557 + $0x171] sm:$0xff]
    %v3569 = vld [vmem:[%s2557 + $0x181] sm:$0xff]
    %v3570 = vld [vmem:[%s2557 + $0x189] sm:$0xff]
    %v3571 = vld [vmem:[%s2557 + $0x199] sm:$0xff]
    %v3572 = vld [vmem:[%s2557 + $0x1a1] sm:$0xff]
    %s3573 = scalar_lea.vmem %s4, 128
    %v3574 = vld [vmem:[%s3573] sm:$0xff]
    %v3575 = vld [vmem:[%s3573 + $0x8] sm:$0xff]
    %v3576 = vld [vmem:[%s3573 + $0x10] sm:$0xff]
    %v3577 = vld [vmem:[%s3573 + $0x18] sm:$0xff]
    %v3579 = vsel %vm2495, %v3574, 0
    %v3582 = vsel %vm2495, %v3575, 0
    %v3585 = vsel %vm2495, %v3576, 0
    %v3588 = vsel %vm2495, %v3577, 0
    %v3591 = vsel %vm2495, %v3541, 0
    %v3594 = vsel %vm2495, %v3542, 0
    %v3597 = vsel %vm2495, %v3543, 0
    %v3600 = vsel %vm2495, %v3544, 0
    %v3603 = vsel %vm2495, %v3545, 0
    %v3606 = vsel %vm2495, %v3546, 0
    %v3609 = vsel %vm2495, %v3547, 0
    %v3612 = vsel %vm2495, %v3548, 0
    %v3615 = vsel %vm2495, %v3549, 0
    %v3618 = vsel %vm2495, %v3550, 0
    %v3621 = vsel %vm2495, %v3551, 0
    %v3624 = vsel %vm2495, %v3552, 0
    %v3627 = vsel %vm2495, %v3553, 0
    %v3630 = vsel %vm2495, %v3554, 0
    %v3633 = vsel %vm2495, %v3555, 0
    %v3636 = vsel %vm2495, %v3556, 0
    %v3639 = vsel %vm2495, %v3557, 0
    %v3642 = vsel %vm2495, %v3558, 0
    %v3645 = vsel %vm2495, %v3559, 0
    %v3648 = vsel %vm2495, %v3560, 0
    %v3651 = vsel %vm2495, %v3561, 0
    %v3654 = vsel %vm2495, %v3562, 0
    %v3657 = vsel %vm2495, %v3563, 0
    %v3660 = vsel %vm2495, %v3564, 0
    %v3663 = vsel %vm2495, %v3565, 0
    %v3666 = vsel %vm2495, %v3566, 0
    %v3669 = vsel %vm2495, %v3567, 0
    %v3672 = vsel %vm2495, %v3568, 0
    %v3675 = vsel %vm2495, %v3569, 0
    %v3678 = vsel %vm2495, %v3570, 0
    %v3681 = vsel %vm2495, %v3571, 0
    %v3684 = vsel %vm2495, %v3572, 0
    %3686 = vmatprep.subr.mxu0 0.0
    %3687 = vmatpush1.xpose.msra.mxu0 %v3591
    %3688 = vmatprep.subr.mxu0 0.0
    %3689 = vmatpush1.xpose.msra.mxu0 %v3594
    %3690 = vmatprep.subr.mxu0 0.0
    %3691 = vmatpush1.xpose.msra.mxu0 %v3597
    %3692 = vmatprep.subr.mxu0 0.0
    %3693 = vmatpush1.xpose.msra.mxu0 %v3600
    %3694 = vmatprep.subr.mxu0 0.0
    %3695 = vmatpush1.xpose.msra.mxu0 %v3603
    %3696 = vmatprep.subr.mxu0 0.0
    %3697 = vmatpush1.xpose.msra.mxu0 %v3606
    %3698 = vmatprep.subr.mxu0 0.0
    %3699 = vmatpush1.xpose.msra.mxu0 %v3609
    %3700 = vmatprep.subr.mxu0 0.0
    %3701 = vmatpush1.xpose.msra.mxu0 %v3612
    %3702 = vmatprep.subr.mxu0 0.0
    %3703 = vmatpush1.xpose.msra.mxu0 %v3615
    %3704 = vmatprep.subr.mxu0 0.0
    %3705 = vmatpush1.xpose.msra.mxu0 %v3618
    %3706 = vmatprep.subr.mxu0 0.0
    %3707 = vmatpush1.xpose.msra.mxu0 %v3621
    %3708 = vmatprep.subr.mxu0 0.0
    %3709 = vmatpush1.xpose.msra.mxu0 %v3624
    %3710 = vmatprep.subr.mxu0 0.0
    %3711 = vmatpush1.xpose.msra.mxu0 %v3627
    %3712 = vmatprep.subr.mxu0 0.0
    %3713 = vmatpush1.xpose.msra.mxu0 %v3630
    %3714 = vmatprep.subr.mxu0 0.0
    %3715 = vmatpush1.xpose.msra.mxu0 %v3633
    %3716 = vmatprep.subr.mxu0 0.0
    %3717 = vmatpush1.xpose.msra.mxu0 %v3636
    %3718 = vmatprep.subr.mxu0 0.0
    %3719 = vmatpush1.xpose.msra.mxu0 %v3639
    %3720 = vmatprep.subr.mxu0 0.0
    %3721 = vmatpush1.xpose.msra.mxu0 %v3642
    %3722 = vmatprep.subr.mxu0 0.0
    %3723 = vmatpush1.xpose.msra.mxu0 %v3645
    %3724 = vmatprep.subr.mxu0 0.0
    %3725 = vmatpush1.xpose.msra.mxu0 %v3648
    %3726 = vmatprep.subr.mxu0 0.0
    %3727 = vmatpush1.xpose.msra.mxu0 %v3651
    %3728 = vmatprep.subr.mxu0 0.0
    %3729 = vmatpush1.xpose.msra.mxu0 %v3654
    %3730 = vmatprep.subr.mxu0 0.0
    %3731 = vmatpush1.xpose.msra.mxu0 %v3657
    %3732 = vmatprep.subr.mxu0 0.0
    %3733 = vmatpush1.xpose.msra.mxu0 %v3660
    %3734 = vmatprep.subr.mxu0 0.0
    %3735 = vmatpush1.xpose.msra.mxu0 %v3663
    %3736 = vmatprep.subr.mxu0 0.0
    %3737 = vmatpush1.xpose.msra.mxu0 %v3666
    %3738 = vmatprep.subr.mxu0 0.0
    %3739 = vmatpush1.xpose.msra.mxu0 %v3669
    %3740 = vmatprep.subr.mxu0 0.0
    %3741 = vmatpush1.xpose.msra.mxu0 %v3672
    %3742 = vmatprep.subr.mxu0 0.0
    %3743 = vmatpush1.xpose.msra.mxu0 %v3675
    %3744 = vmatprep.subr.mxu0 0.0
    %3745 = vmatpush1.xpose.msra.mxu0 %v3678
    %3746 = vmatprep.subr.mxu0 0.0
    %3747 = vmatpush1.xpose.msra.mxu0 %v3681
    %3748 = vmatprep.subr.mxu0 0.0
    %3749 = vmatpush1.xpose.msra.mxu0 %v3684
    %3750 = vmatprep.mubr.f32.mxu0 0.0
    %3751 = vmatmul.mubr.f32.gmra.mrb[0].mxu0 %v3579
    %v3752 = vpop.f32.mrb[0].mxu0
    %v3753 = vadd.f32 0.0, %v3752
    %v3754 = vpop.f32.mrb[0].mxu0
    %v3755 = vadd.f32 0.0, %v3754
    %3756 = vmatprep.mubr.f32.mxu0 0.0
    %3757 = vmatmul.mubr.f32.gmra.mrb[0].mxu0 %v3582
    %v3758 = vpop.f32.mrb[0].mxu0
    %v3759 = vadd.f32 0.0, %v3758
    %v3760 = vpop.f32.mrb[0].mxu0
    %v3761 = vadd.f32 0.0, %v3760
    %3762 = vmatprep.mubr.f32.mxu0 0.0
    %3763 = vmatmul.mubr.f32.gmra.mrb[0].mxu0 %v3585
    %v3764 = vpop.f32.mrb[0].mxu0
    %v3765 = vadd.f32 0.0, %v3764
    %v3766 = vpop.f32.mrb[0].mxu0
    %v3767 = vadd.f32 0.0, %v3766
    %3768 = vmatprep.mubr.f32.mxu0 0.0
    %3769 = vmatmul.mubr.f32.gmra.mrb[0].mxu0 %v3588
    %v3770 = vpop.f32.mrb[0].mxu0
    %v3771 = vadd.f32 0.0, %v3770
    %v3772 = vpop.f32.mrb[0].mxu0
    %v3773 = vadd.f32 0.0, %v3772
    %3774 = vdwg.mxu0
    %v3775 = vadd.f32 %v3533, %v3753
    %v3776 = vadd.f32 %v3534, %v3755
    %v3777 = vadd.f32 %v3535, %v3759
    %v3778 = vadd.f32 %v3536, %v3761
    %v3779 = vadd.f32 %v3537, %v3765
    %v3780 = vadd.f32 %v3538, %v3767
    %v3781 = vadd.f32 %v3539, %v3771
    %v3782 = vadd.f32 %v3540, %v3773
    %v3783 = vld [vmem:[%s2557 + $0x2] sm:$0xff]
    %v3784 = vld [vmem:[%s2557 + $0xa] sm:$0xff]
    %v3785 = vld [vmem:[%s2557 + $0x1a] sm:$0xff]
    %v3786 = vld [vmem:[%s2557 + $0x22] sm:$0xff]
    %v3787 = vld [vmem:[%s2557 + $0x32] sm:$0xff]
    %v3788 = vld [vmem:[%s2557 + $0x3a] sm:$0xff]
    %v3789 = vld [vmem:[%s2557 + $0x4a] sm:$0xff]
    %v3790 = vld [vmem:[%s2557 + $0x52] sm:$0xff]
    %v3791 = vld [vmem:[%s2557 + $0x62] sm:$0xff]
    %v3792 = vld [vmem:[%s2557 + $0x6a] sm:$0xff]
    %v3793 = vld [vmem:[%s2557 + $0x7a] sm:$0xff]
    %v3794 = vld [vmem:[%s2557 + $0x82] sm:$0xff]
    %v3795 = vld [vmem:[%s2557 + $0x92] sm:$0xff]
    %v3796 = vld [vmem:[%s2557 + $0x9a] sm:$0xff]
    %v3797 = vld [vmem:[%s2557 + $0xaa] sm:$0xff]
    %v3798 = vld [vmem:[%s2557 + $0xb2] sm:$0xff]
    %v3799 = vld [vmem:[%s2557 + $0xf2] sm:$0xff]
    %v3800 = vld [vmem:[%s2557 + $0xfa] sm:$0xff]
    %v3801 = vld [vmem:[%s2557 + $0x10a] sm:$0xff]
    %v3802 = vld [vmem:[%s2557 + $0x112] sm:$0xff]
    %v3803 = vld [vmem:[%s2557 + $0x122] sm:$0xff]
    %v3804 = vld [vmem:[%s2557 + $0x12a] sm:$0xff]
    %v3805 = vld [vmem:[%s2557 + $0x13a] sm:$0xff]
    %v3806 = vld [vmem:[%s2557 + $0x142] sm:$0xff]
    %v3807 = vld [vmem:[%s2557 + $0x152] sm:$0xff]
    %v3808 = vld [vmem:[%s2557 + $0x15a] sm:$0xff]
    %v3809 = vld [vmem:[%s2557 + $0x16a] sm:$0xff]
    %v3810 = vld [vmem:[%s2557 + $0x172] sm:$0xff]
    %v3811 = vld [vmem:[%s2557 + $0x182] sm:$0xff]
    %v3812 = vld [vmem:[%s2557 + $0x18a] sm:$0xff]
    %v3813 = vld [vmem:[%s2557 + $0x19a] sm:$0xff]
    %v3814 = vld [vmem:[%s2557 + $0x1a2] sm:$0xff]
    %s3815 = scalar_lea.vmem %s4, 160
    %v3816 = vld [vmem:[%s3815] sm:$0xff]
    %v3817 = vld [vmem:[%s3815 + $0x8] sm:$0xff]
    %v3818 = vld [vmem:[%s3815 + $0x10] sm:$0xff]
    %v3819 = vld [vmem:[%s3815 + $0x18] sm:$0xff]
    %v3821 = vsel %vm2495, %v3816, 0
    %v3824 = vsel %vm2495, %v3817, 0
    %v3827 = vsel %vm2495, %v3818, 0
    %v3830 = vsel %vm2495, %v3819, 0
    %v3833 = vsel %vm2495, %v3783, 0
    %v3836 = vsel %vm2495, %v3784, 0
    %v3839 = vsel %vm2495, %v3785, 0
    %v3842 = vsel %vm2495, %v3786, 0
    %v3845 = vsel %vm2495, %v3787, 0
    %v3848 = vsel %vm2495, %v3788, 0
    %v3851 = vsel %vm2495, %v3789, 0
    %v3854 = vsel %vm2495, %v3790, 0
    %v3857 = vsel %vm2495, %v3791, 0
    %v3860 = vsel %vm2495, %v3792, 0
    %v3863 = vsel %vm2495, %v3793, 0
    %v3866 = vsel %vm2495, %v3794, 0
    %v3869 = vsel %vm2495, %v3795, 0
    %v3872 = vsel %vm2495, %v3796, 0
    %v3875 = vsel %vm2495, %v3797, 0
    %v3878 = vsel %vm2495, %v3798, 0
    %v3881 = vsel %vm2495, %v3799, 0
    %v3884 = vsel %vm2495, %v3800, 0
    %v3887 = vsel %vm2495, %v3801, 0
    %v3890 = vsel %vm2495, %v3802, 0
    %v3893 = vsel %vm2495, %v3803, 0
    %v3896 = vsel %vm2495, %v3804, 0
    %v3899 = vsel %vm2495, %v3805, 0
    %v3902 = vsel %vm2495, %v3806, 0
    %v3905 = vsel %vm2495, %v3807, 0
    %v3908 = vsel %vm2495, %v3808, 0
    %v3911 = vsel %vm2495, %v3809, 0
    %v3914 = vsel %vm2495, %v3810, 0
    %v3917 = vsel %vm2495, %v3811, 0
    %v3920 = vsel %vm2495, %v3812, 0
    %v3923 = vsel %vm2495, %v3813, 0
    %v3926 = vsel %vm2495, %v3814, 0
    %3928 = vmatprep.subr.mxu0 0.0
    %3929 = vmatpush1.xpose.msra.mxu0 %v3833
    %3930 = vmatprep.subr.mxu0 0.0
    %3931 = vmatpush1.xpose.msra.mxu0 %v3836
    %3932 = vmatprep.subr.mxu0 0.0
    %3933 = vmatpush1.xpose.msra.mxu0 %v3839
    %3934 = vmatprep.subr.mxu0 0.0
    %3935 = vmatpush1.xpose.msra.mxu0 %v3842
    %3936 = vmatprep.subr.mxu0 0.0
    %3937 = vmatpush1.xpose.msra.mxu0 %v3845
    %3938 = vmatprep.subr.mxu0 0.0
    %3939 = vmatpush1.xpose.msra.mxu0 %v3848
    %3940 = vmatprep.subr.mxu0 0.0
    %3941 = vmatpush1.xpose.msra.mxu0 %v3851
    %3942 = vmatprep.subr.mxu0 0.0
    %3943 = vmatpush1.xpose.msra.mxu0 %v3854
    %3944 = vmatprep.subr.mxu0 0.0
    %3945 = vmatpush1.xpose.msra.mxu0 %v3857
    %3946 = vmatprep.subr.mxu0 0.0
    %3947 = vmatpush1.xpose.msra.mxu0 %v3860
    %3948 = vmatprep.subr.mxu0 0.0
    %3949 = vmatpush1.xpose.msra.mxu0 %v3863
    %3950 = vmatprep.subr.mxu0 0.0
    %3951 = vmatpush1.xpose.msra.mxu0 %v3866
    %3952 = vmatprep.subr.mxu0 0.0
    %3953 = vmatpush1.xpose.msra.mxu0 %v3869
    %3954 = vmatprep.subr.mxu0 0.0
    %3955 = vmatpush1.xpose.msra.mxu0 %v3872
    %3956 = vmatprep.subr.mxu0 0.0
    %3957 = vmatpush1.xpose.msra.mxu0 %v3875
    %3958 = vmatprep.subr.mxu0 0.0
    %3959 = vmatpush1.xpose.msra.mxu0 %v3878
    %3960 = vmatprep.subr.mxu0 0.0
    %3961 = vmatpush1.xpose.msra.mxu0 %v3881
    %3962 = vmatprep.subr.mxu0 0.0
    %3963 = vmatpush1.xpose.msra.mxu0 %v3884
    %3964 = vmatprep.subr.mxu0 0.0
    %3965 = vmatpush1.xpose.msra.mxu0 %v3887
    %3966 = vmatprep.subr.mxu0 0.0
    %3967 = vmatpush1.xpose.msra.mxu0 %v3890
    %3968 = vmatprep.subr.mxu0 0.0
    %3969 = vmatpush1.xpose.msra.mxu0 %v3893
    %3970 = vmatprep.subr.mxu0 0.0
    %3971 = vmatpush1.xpose.msra.mxu0 %v3896
    %3972 = vmatprep.subr.mxu0 0.0
    %3973 = vmatpush1.xpose.msra.mxu0 %v3899
    %3974 = vmatprep.subr.mxu0 0.0
    %3975 = vmatpush1.xpose.msra.mxu0 %v3902
    %3976 = vmatprep.subr.mxu0 0.0
    %3977 = vmatpush1.xpose.msra.mxu0 %v3905
    %3978 = vmatprep.subr.mxu0 0.0
    %3979 = vmatpush1.xpose.msra.mxu0 %v3908
    %3980 = vmatprep.subr.mxu0 0.0
    %3981 = vmatpush1.xpose.msra.mxu0 %v3911
    %3982 = vmatprep.subr.mxu0 0.0
    %3983 = vmatpush1.xpose.msra.mxu0 %v3914
    %3984 = vmatprep.subr.mxu0 0.0
    %3985 = vmatpush1.xpose.msra.mxu0 %v3917
    %3986 = vmatprep.subr.mxu0 0.0
    %3987 = vmatpush1.xpose.msra.mxu0 %v3920
    %3988 = vmatprep.subr.mxu0 0.0
    %3989 = vmatpush1.xpose.msra.mxu0 %v3923
    %3990 = vmatprep.subr.mxu0 0.0
    %3991 = vmatpush1.xpose.msra.mxu0 %v3926
    %3992 = vmatprep.mubr.f32.mxu0 0.0
    %3993 = vmatmul.mubr.f32.gmra.mrb[0].mxu0 %v3821
    %v3994 = vpop.f32.mrb[0].mxu0
    %v3995 = vadd.f32 0.0, %v3994
    %v3996 = vpop.f32.mrb[0].mxu0
    %v3997 = vadd.f32 0.0, %v3996
    %3998 = vmatprep.mubr.f32.mxu0 0.0
    %3999 = vmatmul.mubr.f32.gmra.mrb[0].mxu0 %v3824
    %v4000 = vpop.f32.mrb[0].mxu0
    %v4001 = vadd.f32 0.0, %v4000
    %v4002 = vpop.f32.mrb[0].mxu0
    %v4003 = vadd.f32 0.0, %v4002
    %4004 = vmatprep.mubr.f32.mxu0 0.0
    %4005 = vmatmul.mubr.f32.gmra.mrb[0].mxu0 %v3827
    %v4006 = vpop.f32.mrb[0].mxu0
    %v4007 = vadd.f32 0.0, %v4006
    %v4008 = vpop.f32.mrb[0].mxu0
    %v4009 = vadd.f32 0.0, %v4008
    %4010 = vmatprep.mubr.f32.mxu0 0.0
    %4011 = vmatmul.mubr.f32.gmra.mrb[0].mxu0 %v3830
    %v4012 = vpop.f32.mrb[0].mxu0
    %v4013 = vadd.f32 0.0, %v4012
    %v4014 = vpop.f32.mrb[0].mxu0
    %v4015 = vadd.f32 0.0, %v4014
    %4016 = vdwg.mxu0
    %v4017 = vadd.f32 %v3775, %v3995
    %v4018 = vadd.f32 %v3776, %v3997
    %v4019 = vadd.f32 %v3777, %v4001
    %v4020 = vadd.f32 %v3778, %v4003
    %v4021 = vadd.f32 %v3779, %v4007
    %v4022 = vadd.f32 %v3780, %v4009
    %v4023 = vadd.f32 %v3781, %v4013
    %v4024 = vadd.f32 %v3782, %v4015
    %s4025 = scalar_lea.vmem [#allocation2], 48
    %v4026 = vld [vmem:[%s4025] sm:$0xff]
    %v4027 = vld [vmem:[%s4025 + $0x8] sm:$0xff]
    %v4028 = vld [vmem:[%s4025 + $0x18] sm:$0xff]
    %v4029 = vld [vmem:[%s4025 + $0x20] sm:$0xff]
    %v4030 = vld [vmem:[%s4025 + $0x30] sm:$0xff]
    %v4031 = vld [vmem:[%s4025 + $0x38] sm:$0xff]
    %v4032 = vld [vmem:[%s4025 + $0x48] sm:$0xff]
    %v4033 = vld [vmem:[%s4025 + $0x50] sm:$0xff]
    %v4034 = vld [vmem:[%s4025 + $0x60] sm:$0xff]
    %v4035 = vld [vmem:[%s4025 + $0x68] sm:$0xff]
    %v4036 = vld [vmem:[%s4025 + $0x78] sm:$0xff]
    %v4037 = vld [vmem:[%s4025 + $0x80] sm:$0xff]
    %v4038 = vld [vmem:[%s4025 + $0x90] sm:$0xff]
    %v4039 = vld [vmem:[%s4025 + $0x98] sm:$0xff]
    %v4040 = vld [vmem:[%s4025 + $0xa8] sm:$0xff]
    %v4041 = vld [vmem:[%s4025 + $0xb0] sm:$0xff]
    %v4042 = vld [vmem:[%s4025 + $0xf0] sm:$0xff]
    %v4043 = vld [vmem:[%s4025 + $0xf8] sm:$0xff]
    %v4044 = vld [vmem:[%s4025 + $0x108] sm:$0xff]
    %v4045 = vld [vmem:[%s4025 + $0x110] sm:$0xff]
    %v4046 = vld [vmem:[%s4025 + $0x120] sm:$0xff]
    %v4047 = vld [vmem:[%s4025 + $0x128] sm:$0xff]
    %v4048 = vld [vmem:[%s4025 + $0x138] sm:$0xff]
    %v4049 = vld [vmem:[%s4025 + $0x140] sm:$0xff]
    %v4050 = vld [vmem:[%s4025 + $0x150] sm:$0xff]
    %v4051 = vld [vmem:[%s4025 + $0x158] sm:$0xff]
    %v4052 = vld [vmem:[%s4025 + $0x168] sm:$0xff]
    %v4053 = vld [vmem:[%s4025 + $0x170] sm:$0xff]
    %v4054 = vld [vmem:[%s4025 + $0x180] sm:$0xff]
    %v4055 = vld [vmem:[%s4025 + $0x188] sm:$0xff]
    %v4056 = vld [vmem:[%s4025 + $0x198] sm:$0xff]
    %v4057 = vld [vmem:[%s4025 + $0x1a0] sm:$0xff]
    %s4058 = scalar_lea.vmem %s4, 192
    %v4059 = vld [vmem:[%s4058] sm:$0xff]
    %v4060 = vld [vmem:[%s4058 + $0x8] sm:$0xff]
    %v4061 = vld [vmem:[%s4058 + $0x10] sm:$0xff]
    %v4062 = vld [vmem:[%s4058 + $0x18] sm:$0xff]
    %v4064 = vsel %vm2495, %v4059, 0
    %v4067 = vsel %vm2495, %v4060, 0
    %v4070 = vsel %vm2495, %v4061, 0
    %v4073 = vsel %vm2495, %v4062, 0
    %v4076 = vsel %vm2495, %v4026, 0
    %v4079 = vsel %vm2495, %v4027, 0
    %v4082 = vsel %vm2495, %v4028, 0
    %v4085 = vsel %vm2495, %v4029, 0
    %v4088 = vsel %vm2495, %v4030, 0
    %v4091 = vsel %vm2495, %v4031, 0
    %v4094 = vsel %vm2495, %v4032, 0
    %v4097 = vsel %vm2495, %v4033, 0
    %v4100 = vsel %vm2495, %v4034, 0
    %v4103 = vsel %vm2495, %v4035, 0
    %v4106 = vsel %vm2495, %v4036, 0
    %v4109 = vsel %vm2495, %v4037, 0
    %v4112 = vsel %vm2495, %v4038, 0
    %v4115 = vsel %vm2495, %v4039, 0
    %v4118 = vsel %vm2495, %v4040, 0
    %v4121 = vsel %vm2495, %v4041, 0
    %v4124 = vsel %vm2495, %v4042, 0
    %v4127 = vsel %vm2495, %v4043, 0
    %v4130 = vsel %vm2495, %v4044, 0
    %v4133 = vsel %vm2495, %v4045, 0
    %v4136 = vsel %vm2495, %v4046, 0
    %v4139 = vsel %vm2495, %v4047, 0
    %v4142 = vsel %vm2495, %v4048, 0
    %v4145 = vsel %vm2495, %v4049, 0
    %v4148 = vsel %vm2495, %v4050, 0
    %v4151 = vsel %vm2495, %v4051, 0
    %v4154 = vsel %vm2495, %v4052, 0
    %v4157 = vsel %vm2495, %v4053, 0
    %v4160 = vsel %vm2495, %v4054, 0
    %v4163 = vsel %vm2495, %v4055, 0
    %v4166 = vsel %vm2495, %v4056, 0
    %v4169 = vsel %vm2495, %v4057, 0
    %4171 = vmatprep.subr.mxu0 0.0
    %4172 = vmatpush1.xpose.msra.mxu0 %v4076
    %4173 = vmatprep.subr.mxu0 0.0
    %4174 = vmatpush1.xpose.msra.mxu0 %v4079
    %4175 = vmatprep.subr.mxu0 0.0
    %4176 = vmatpush1.xpose.msra.mxu0 %v4082
    %4177 = vmatprep.subr.mxu0 0.0
    %4178 = vmatpush1.xpose.msra.mxu0 %v4085
    %4179 = vmatprep.subr.mxu0 0.0
    %4180 = vmatpush1.xpose.msra.mxu0 %v4088
    %4181 = vmatprep.subr.mxu0 0.0
    %4182 = vmatpush1.xpose.msra.mxu0 %v4091
    %4183 = vmatprep.subr.mxu0 0.0
    %4184 = vmatpush1.xpose.msra.mxu0 %v4094
    %4185 = vmatprep.subr.mxu0 0.0
    %4186 = vmatpush1.xpose.msra.mxu0 %v4097
    %4187 = vmatprep.subr.mxu0 0.0
    %4188 = vmatpush1.xpose.msra.mxu0 %v4100
    %4189 = vmatprep.subr.mxu0 0.0
    %4190 = vmatpush1.xpose.msra.mxu0 %v4103
    %4191 = vmatprep.subr.mxu0 0.0
    %4192 = vmatpush1.xpose.msra.mxu0 %v4106
    %4193 = vmatprep.subr.mxu0 0.0
    %4194 = vmatpush1.xpose.msra.mxu0 %v4109
    %4195 = vmatprep.subr.mxu0 0.0
    %4196 = vmatpush1.xpose.msra.mxu0 %v4112
    %4197 = vmatprep.subr.mxu0 0.0
    %4198 = vmatpush1.xpose.msra.mxu0 %v4115
    %4199 = vmatprep.subr.mxu0 0.0
    %4200 = vmatpush1.xpose.msra.mxu0 %v4118
    %4201 = vmatprep.subr.mxu0 0.0
    %4202 = vmatpush1.xpose.msra.mxu0 %v4121
    %4203 = vmatprep.subr.mxu0 0.0
    %4204 = vmatpush1.xpose.msra.mxu0 %v4124
    %4205 = vmatprep.subr.mxu0 0.0
    %4206 = vmatpush1.xpose.msra.mxu0 %v4127
    %4207 = vmatprep.subr.mxu0 0.0
    %4208 = vmatpush1.xpose.msra.mxu0 %v4130
    %4209 = vmatprep.subr.mxu0 0.0
    %4210 = vmatpush1.xpose.msra.mxu0 %v4133
    %4211 = vmatprep.subr.mxu0 0.0
    %4212 = vmatpush1.xpose.msra.mxu0 %v4136
    %4213 = vmatprep.subr.mxu0 0.0
    %4214 = vmatpush1.xpose.msra.mxu0 %v4139
    %4215 = vmatprep.subr.mxu0 0.0
    %4216 = vmatpush1.xpose.msra.mxu0 %v4142
    %4217 = vmatprep.subr.mxu0 0.0
    %4218 = vmatpush1.xpose.msra.mxu0 %v4145
    %4219 = vmatprep.subr.mxu0 0.0
    %4220 = vmatpush1.xpose.msra.mxu0 %v4148
    %4221 = vmatprep.subr.mxu0 0.0
    %4222 = vmatpush1.xpose.msra.mxu0 %v4151
    %4223 = vmatprep.subr.mxu0 0.0
    %4224 = vmatpush1.xpose.msra.mxu0 %v4154
    %4225 = vmatprep.subr.mxu0 0.0
    %4226 = vmatpush1.xpose.msra.mxu0 %v4157
    %4227 = vmatprep.subr.mxu0 0.0
    %4228 = vmatpush1.xpose.msra.mxu0 %v4160
    %4229 = vmatprep.subr.mxu0 0.0
    %4230 = vmatpush1.xpose.msra.mxu0 %v4163
    %4231 = vmatprep.subr.mxu0 0.0
    %4232 = vmatpush1.xpose.msra.mxu0 %v4166
    %4233 = vmatprep.subr.mxu0 0.0
    %4234 = vmatpush1.xpose.msra.mxu0 %v4169
    %4235 = vmatprep.mubr.f32.mxu0 0.0
    %4236 = vmatmul.mubr.f32.gmra.mrb[0].mxu0 %v4064
    %v4237 = vpop.f32.mrb[0].mxu0
    %v4238 = vadd.f32 0.0, %v4237
    %v4239 = vpop.f32.mrb[0].mxu0
    %v4240 = vadd.f32 0.0, %v4239
    %4241 = vmatprep.mubr.f32.mxu0 0.0
    %4242 = vmatmul.mubr.f32.gmra.mrb[0].mxu0 %v4067
    %v4243 = vpop.f32.mrb[0].mxu0
    %v4244 = vadd.f32 0.0, %v4243
    %v4245 = vpop.f32.mrb[0].mxu0
    %v4246 = vadd.f32 0.0, %v4245
    %4247 = vmatprep.mubr.f32.mxu0 0.0
    %4248 = vmatmul.mubr.f32.gmra.mrb[0].mxu0 %v4070
    %v4249 = vpop.f32.mrb[0].mxu0
    %v4250 = vadd.f32 0.0, %v4249
    %v4251 = vpop.f32.mrb[0].mxu0
    %v4252 = vadd.f32 0.0, %v4251
    %4253 = vmatprep.mubr.f32.mxu0 0.0
    %4254 = vmatmul.mubr.f32.gmra.mrb[0].mxu0 %v4073
    %v4255 = vpop.f32.mrb[0].mxu0
    %v4256 = vadd.f32 0.0, %v4255
    %v4257 = vpop.f32.mrb[0].mxu0
    %v4258 = vadd.f32 0.0, %v4257
    %4259 = vdwg.mxu0
    %v4260 = vadd.f32 %v4017, %v4238
    %v4261 = vadd.f32 %v4018, %v4240
    %v4262 = vadd.f32 %v4019, %v4244
    %v4263 = vadd.f32 %v4020, %v4246
    %v4264 = vadd.f32 %v4021, %v4250
    %v4265 = vadd.f32 %v4022, %v4252
    %v4266 = vadd.f32 %v4023, %v4256
    %v4267 = vadd.f32 %v4024, %v4258
    %v4268 = vld [vmem:[%s4025 + $0x1] sm:$0xff]
    %v4269 = vld [vmem:[%s4025 + $0x9] sm:$0xff]
    %v4270 = vld [vmem:[%s4025 + $0x19] sm:$0xff]
    %v4271 = vld [vmem:[%s4025 + $0x21] sm:$0xff]
    %v4272 = vld [vmem:[%s4025 + $0x31] sm:$0xff]
    %v4273 = vld [vmem:[%s4025 + $0x39] sm:$0xff]
    %v4274 = vld [vmem:[%s4025 + $0x49] sm:$0xff]
    %v4275 = vld [vmem:[%s4025 + $0x51] sm:$0xff]
    %v4276 = vld [vmem:[%s4025 + $0x61] sm:$0xff]
    %v4277 = vld [vmem:[%s4025 + $0x69] sm:$0xff]
    %v4278 = vld [vmem:[%s4025 + $0x79] sm:$0xff]
    %v4279 = vld [vmem:[%s4025 + $0x81] sm:$0xff]
    %v4280 = vld [vmem:[%s4025 + $0x91] sm:$0xff]
    %v4281 = vld [vmem:[%s4025 + $0x99] sm:$0xff]
    %v4282 = vld [vmem:[%s4025 + $0xa9] sm:$0xff]
    %v4283 = vld [vmem:[%s4025 + $0xb1] sm:$0xff]
    %v4284 = vld [vmem:[%s4025 + $0xf1] sm:$0xff]
    %v4285 = vld [vmem:[%s4025 + $0xf9] sm:$0xff]
    %v4286 = vld [vmem:[%s4025 + $0x109] sm:$0xff]
    %v4287 = vld [vmem:[%s4025 + $0x111] sm:$0xff]
    %v4288 = vld [vmem:[%s4025 + $0x121] sm:$0xff]
    %v4289 = vld [vmem:[%s4025 + $0x129] sm:$0xff]
    %v4290 = vld [vmem:[%s4025 + $0x139] sm:$0xff]
    %v4291 = vld [vmem:[%s4025 + $0x141] sm:$0xff]
    %v4292 = vld [vmem:[%s4025 + $0x151] sm:$0xff]
    %v4293 = vld [vmem:[%s4025 + $0x159] sm:$0xff]
    %v4294 = vld [vmem:[%s4025 + $0x169] sm:$0xff]
    %v4295 = vld [vmem:[%s4025 + $0x171] sm:$0xff]
    %v4296 = vld [vmem:[%s4025 + $0x181] sm:$0xff]
    %v4297 = vld [vmem:[%s4025 + $0x189] sm:$0xff]
    %v4298 = vld [vmem:[%s4025 + $0x199] sm:$0xff]
    %v4299 = vld [vmem:[%s4025 + $0x1a1] sm:$0xff]
    %s4300 = scalar_lea.vmem %s4, 224
    %v4301 = vld [vmem:[%s4300] sm:$0xff]
    %v4302 = vld [vmem:[%s4300 + $0x8] sm:$0xff]
    %v4303 = vld [vmem:[%s4300 + $0x10] sm:$0xff]
    %v4304 = vld [vmem:[%s4300 + $0x18] sm:$0xff]
    %v4306 = vsel %vm2495, %v4301, 0
    %v4309 = vsel %vm2495, %v4302, 0
    %v4312 = vsel %vm2495, %v4303, 0
    %v4315 = vsel %vm2495, %v4304, 0
    %v4318 = vsel %vm2495, %v4268, 0
    %v4321 = vsel %vm2495, %v4269, 0
    %v4324 = vsel %vm2495, %v4270, 0
    %v4327 = vsel %vm2495, %v4271, 0
    %v4330 = vsel %vm2495, %v4272, 0
    %v4333 = vsel %vm2495, %v4273, 0
    %v4336 = vsel %vm2495, %v4274, 0
    %v4339 = vsel %vm2495, %v4275, 0
    %v4342 = vsel %vm2495, %v4276, 0
    %v4345 = vsel %vm2495, %v4277, 0
    %v4348 = vsel %vm2495, %v4278, 0
    %v4351 = vsel %vm2495, %v4279, 0
    %v4354 = vsel %vm2495, %v4280, 0
    %v4357 = vsel %vm2495, %v4281, 0
    %v4360 = vsel %vm2495, %v4282, 0
    %v4363 = vsel %vm2495, %v4283, 0
    %v4366 = vsel %vm2495, %v4284, 0
    %v4369 = vsel %vm2495, %v4285, 0
    %v4372 = vsel %vm2495, %v4286, 0
    %v4375 = vsel %vm2495, %v4287, 0
    %v4378 = vsel %vm2495, %v4288, 0
    %v4381 = vsel %vm2495, %v4289, 0
    %v4384 = vsel %vm2495, %v4290, 0
    %v4387 = vsel %vm2495, %v4291, 0
    %v4390 = vsel %vm2495, %v4292, 0
    %v4393 = vsel %vm2495, %v4293, 0
    %v4396 = vsel %vm2495, %v4294, 0
    %v4399 = vsel %vm2495, %v4295, 0
    %v4402 = vsel %vm2495, %v4296, 0
    %v4405 = vsel %vm2495, %v4297, 0
    %v4408 = vsel %vm2495, %v4298, 0
    %v4411 = vsel %vm2495, %v4299, 0
    %4413 = vmatprep.subr.mxu0 0.0
    %4414 = vmatpush1.xpose.msra.mxu0 %v4318
    %4415 = vmatprep.subr.mxu0 0.0
    %4416 = vmatpush1.xpose.msra.mxu0 %v4321
    %4417 = vmatprep.subr.mxu0 0.0
    %4418 = vmatpush1.xpose.msra.mxu0 %v4324
    %4419 = vmatprep.subr.mxu0 0.0
    %4420 = vmatpush1.xpose.msra.mxu0 %v4327
    %4421 = vmatprep.subr.mxu0 0.0
    %4422 = vmatpush1.xpose.msra.mxu0 %v4330
    %4423 = vmatprep.subr.mxu0 0.0
    %4424 = vmatpush1.xpose.msra.mxu0 %v4333
    %4425 = vmatprep.subr.mxu0 0.0
    %4426 = vmatpush1.xpose.msra.mxu0 %v4336
    %4427 = vmatprep.subr.mxu0 0.0
    %4428 = vmatpush1.xpose.msra.mxu0 %v4339
    %4429 = vmatprep.subr.mxu0 0.0
    %4430 = vmatpush1.xpose.msra.mxu0 %v4342
    %4431 = vmatprep.subr.mxu0 0.0
    %4432 = vmatpush1.xpose.msra.mxu0 %v4345
    %4433 = vmatprep.subr.mxu0 0.0
    %4434 = vmatpush1.xpose.msra.mxu0 %v4348
    %4435 = vmatprep.subr.mxu0 0.0
    %4436 = vmatpush1.xpose.msra.mxu0 %v4351
    %4437 = vmatprep.subr.mxu0 0.0
    %4438 = vmatpush1.xpose.msra.mxu0 %v4354
    %4439 = vmatprep.subr.mxu0 0.0
    %4440 = vmatpush1.xpose.msra.mxu0 %v4357
    %4441 = vmatprep.subr.mxu0 0.0
    %4442 = vmatpush1.xpose.msra.mxu0 %v4360
    %4443 = vmatprep.subr.mxu0 0.0
    %4444 = vmatpush1.xpose.msra.mxu0 %v4363
    %4445 = vmatprep.subr.mxu0 0.0
    %4446 = vmatpush1.xpose.msra.mxu0 %v4366
    %4447 = vmatprep.subr.mxu0 0.0
    %4448 = vmatpush1.xpose.msra.mxu0 %v4369
    %4449 = vmatprep.subr.mxu0 0.0
    %4450 = vmatpush1.xpose.msra.mxu0 %v4372
    %4451 = vmatprep.subr.mxu0 0.0
    %4452 = vmatpush1.xpose.msra.mxu0 %v4375
    %4453 = vmatprep.subr.mxu0 0.0
    %4454 = vmatpush1.xpose.msra.mxu0 %v4378
    %4455 = vmatprep.subr.mxu0 0.0
    %4456 = vmatpush1.xpose.msra.mxu0 %v4381
    %4457 = vmatprep.subr.mxu0 0.0
    %4458 = vmatpush1.xpose.msra.mxu0 %v4384
    %4459 = vmatprep.subr.mxu0 0.0
    %4460 = vmatpush1.xpose.msra.mxu0 %v4387
    %4461 = vmatprep.subr.mxu0 0.0
    %4462 = vmatpush1.xpose.msra.mxu0 %v4390
    %4463 = vmatprep.subr.mxu0 0.0
    %4464 = vmatpush1.xpose.msra.mxu0 %v4393
    %4465 = vmatprep.subr.mxu0 0.0
    %4466 = vmatpush1.xpose.msra.mxu0 %v4396
    %4467 = vmatprep.subr.mxu0 0.0
    %4468 = vmatpush1.xpose.msra.mxu0 %v4399
    %4469 = vmatprep.subr.mxu0 0.0
    %4470 = vmatpush1.xpose.msra.mxu0 %v4402
    %4471 = vmatprep.subr.mxu0 0.0
    %4472 = vmatpush1.xpose.msra.mxu0 %v4405
    %4473 = vmatprep.subr.mxu0 0.0
    %4474 = vmatpush1.xpose.msra.mxu0 %v4408
    %4475 = vmatprep.subr.mxu0 0.0
    %4476 = vmatpush1.xpose.msra.mxu0 %v4411
    %4477 = vmatprep.mubr.f32.mxu0 0.0
    %4478 = vmatmul.mubr.f32.gmra.mrb[0].mxu0 %v4306
    %v4479 = vpop.f32.mrb[0].mxu0
    %v4480 = vadd.f32 0.0, %v4479
    %v4481 = vpop.f32.mrb[0].mxu0
    %v4482 = vadd.f32 0.0, %v4481
    %4483 = vmatprep.mubr.f32.mxu0 0.0
    %4484 = vmatmul.mubr.f32.gmra.mrb[0].mxu0 %v4309
    %v4485 = vpop.f32.mrb[0].mxu0
    %v4486 = vadd.f32 0.0, %v4485
    %v4487 = vpop.f32.mrb[0].mxu0
    %v4488 = vadd.f32 0.0, %v4487
    %4489 = vmatprep.mubr.f32.mxu0 0.0
    %4490 = vmatmul.mubr.f32.gmra.mrb[0].mxu0 %v4312
    %v4491 = vpop.f32.mrb[0].mxu0
    %v4492 = vadd.f32 0.0, %v4491
    %v4493 = vpop.f32.mrb[0].mxu0
    %v4494 = vadd.f32 0.0, %v4493
    %4495 = vmatprep.mubr.f32.mxu0 0.0
    %4496 = vmatmul.mubr.f32.gmra.mrb[0].mxu0 %v4315
    %v4497 = vpop.f32.mrb[0].mxu0
    %v4498 = vadd.f32 0.0, %v4497
    %v4499 = vpop.f32.mrb[0].mxu0
    %v4500 = vadd.f32 0.0, %v4499
    %4501 = vdwg.mxu0
    %v4502 = vadd.f32 %v4260, %v4480
    %v4503 = vadd.f32 %v4261, %v4482
    %v4504 = vadd.f32 %v4262, %v4486
    %v4505 = vadd.f32 %v4263, %v4488
    %v4506 = vadd.f32 %v4264, %v4492
    %v4507 = vadd.f32 %v4265, %v4494
    %v4508 = vadd.f32 %v4266, %v4498
    %v4509 = vadd.f32 %v4267, %v4500
    %v4510 = vld [vmem:[%s4025 + $0x2] sm:$0xff]
    %v4511 = vld [vmem:[%s4025 + $0xa] sm:$0xff]
    %v4512 = vld [vmem:[%s4025 + $0x1a] sm:$0xff]
    %v4513 = vld [vmem:[%s4025 + $0x22] sm:$0xff]
    %v4514 = vld [vmem:[%s4025 + $0x32] sm:$0xff]
    %v4515 = vld [vmem:[%s4025 + $0x3a] sm:$0xff]
    %v4516 = vld [vmem:[%s4025 + $0x4a] sm:$0xff]
    %v4517 = vld [vmem:[%s4025 + $0x52] sm:$0xff]
    %v4518 = vld [vmem:[%s4025 + $0x62] sm:$0xff]
    %v4519 = vld [vmem:[%s4025 + $0x6a] sm:$0xff]
    %v4520 = vld [vmem:[%s4025 + $0x7a] sm:$0xff]
    %v4521 = vld [vmem:[%s4025 + $0x82] sm:$0xff]
    %v4522 = vld [vmem:[%s4025 + $0x92] sm:$0xff]
    %v4523 = vld [vmem:[%s4025 + $0x9a] sm:$0xff]
    %v4524 = vld [vmem:[%s4025 + $0xaa] sm:$0xff]
    %v4525 = vld [vmem:[%s4025 + $0xb2] sm:$0xff]
    %v4526 = vld [vmem:[%s4025 + $0xf2] sm:$0xff]
    %v4527 = vld [vmem:[%s4025 + $0xfa] sm:$0xff]
    %v4528 = vld [vmem:[%s4025 + $0x10a] sm:$0xff]
    %v4529 = vld [vmem:[%s4025 + $0x112] sm:$0xff]
    %v4530 = vld [vmem:[%s4025 + $0x122] sm:$0xff]
    %v4531 = vld [vmem:[%s4025 + $0x12a] sm:$0xff]
    %v4532 = vld [vmem:[%s4025 + $0x13a] sm:$0xff]
    %v4533 = vld [vmem:[%s4025 + $0x142] sm:$0xff]
    %v4534 = vld [vmem:[%s4025 + $0x152] sm:$0xff]
    %v4535 = vld [vmem:[%s4025 + $0x15a] sm:$0xff]
    %v4536 = vld [vmem:[%s4025 + $0x16a] sm:$0xff]
    %v4537 = vld [vmem:[%s4025 + $0x172] sm:$0xff]
    %v4538 = vld [vmem:[%s4025 + $0x182] sm:$0xff]
    %v4539 = vld [vmem:[%s4025 + $0x18a] sm:$0xff]
    %v4540 = vld [vmem:[%s4025 + $0x19a] sm:$0xff]
    %v4541 = vld [vmem:[%s4025 + $0x1a2] sm:$0xff]
    %s4542 = scalar_lea.vmem %s4, 256
    %v4543 = vld [vmem:[%s4542] sm:$0xff]
    %v4544 = vld [vmem:[%s4542 + $0x8] sm:$0xff]
    %v4545 = vld [vmem:[%s4542 + $0x10] sm:$0xff]
    %v4546 = vld [vmem:[%s4542 + $0x18] sm:$0xff]
    %v4548 = vsel %vm2495, %v4543, 0
    %v4551 = vsel %vm2495, %v4544, 0
    %v4554 = vsel %vm2495, %v4545, 0
    %v4557 = vsel %vm2495, %v4546, 0
    %v4560 = vsel %vm2495, %v4510, 0
    %v4563 = vsel %vm2495, %v4511, 0
    %v4566 = vsel %vm2495, %v4512, 0
    %v4569 = vsel %vm2495, %v4513, 0
    %v4572 = vsel %vm2495, %v4514, 0
    %v4575 = vsel %vm2495, %v4515, 0
    %v4578 = vsel %vm2495, %v4516, 0
    %v4581 = vsel %vm2495, %v4517, 0
    %v4584 = vsel %vm2495, %v4518, 0
    %v4587 = vsel %vm2495, %v4519, 0
    %v4590 = vsel %vm2495, %v4520, 0
    %v4593 = vsel %vm2495, %v4521, 0
    %v4596 = vsel %vm2495, %v4522, 0
    %v4599 = vsel %vm2495, %v4523, 0
    %v4602 = vsel %vm2495, %v4524, 0
    %v4605 = vsel %vm2495, %v4525, 0
    %v4608 = vsel %vm2495, %v4526, 0
    %v4611 = vsel %vm2495, %v4527, 0
    %v4614 = vsel %vm2495, %v4528, 0
    %v4617 = vsel %vm2495, %v4529, 0
    %v4620 = vsel %vm2495, %v4530, 0
    %v4623 = vsel %vm2495, %v4531, 0
    %v4626 = vsel %vm2495, %v4532, 0
    %v4629 = vsel %vm2495, %v4533, 0
    %v4632 = vsel %vm2495, %v4534, 0
    %v4635 = vsel %vm2495, %v4535, 0
    %v4638 = vsel %vm2495, %v4536, 0
    %v4641 = vsel %vm2495, %v4537, 0
    %v4644 = vsel %vm2495, %v4538, 0
    %v4647 = vsel %vm2495, %v4539, 0
    %v4650 = vsel %vm2495, %v4540, 0
    %v4653 = vsel %vm2495, %v4541, 0
    %4655 = vmatprep.subr.mxu0 0.0
    %4656 = vmatpush1.xpose.msra.mxu0 %v4560
    %4657 = vmatprep.subr.mxu0 0.0
    %4658 = vmatpush1.xpose.msra.mxu0 %v4563
    %4659 = vmatprep.subr.mxu0 0.0
    %4660 = vmatpush1.xpose.msra.mxu0 %v4566
    %4661 = vmatprep.subr.mxu0 0.0
    %4662 = vmatpush1.xpose.msra.mxu0 %v4569
    %4663 = vmatprep.subr.mxu0 0.0
    %4664 = vmatpush1.xpose.msra.mxu0 %v4572
    %4665 = vmatprep.subr.mxu0 0.0
    %4666 = vmatpush1.xpose.msra.mxu0 %v4575
    %4667 = vmatprep.subr.mxu0 0.0
    %4668 = vmatpush1.xpose.msra.mxu0 %v4578
    %4669 = vmatprep.subr.mxu0 0.0
    %4670 = vmatpush1.xpose.msra.mxu0 %v4581
    %4671 = vmatprep.subr.mxu0 0.0
    %4672 = vmatpush1.xpose.msra.mxu0 %v4584
    %4673 = vmatprep.subr.mxu0 0.0
    %4674 = vmatpush1.xpose.msra.mxu0 %v4587
    %4675 = vmatprep.subr.mxu0 0.0
    %4676 = vmatpush1.xpose.msra.mxu0 %v4590
    %4677 = vmatprep.subr.mxu0 0.0
    %4678 = vmatpush1.xpose.msra.mxu0 %v4593
    %4679 = vmatprep.subr.mxu0 0.0
    %4680 = vmatpush1.xpose.msra.mxu0 %v4596
    %4681 = vmatprep.subr.mxu0 0.0
    %4682 = vmatpush1.xpose.msra.mxu0 %v4599
    %4683 = vmatprep.subr.mxu0 0.0
    %4684 = vmatpush1.xpose.msra.mxu0 %v4602
    %4685 = vmatprep.subr.mxu0 0.0
    %4686 = vmatpush1.xpose.msra.mxu0 %v4605
    %4687 = vmatprep.subr.mxu0 0.0
    %4688 = vmatpush1.xpose.msra.mxu0 %v4608
    %4689 = vmatprep.subr.mxu0 0.0
    %4690 = vmatpush1.xpose.msra.mxu0 %v4611
    %4691 = vmatprep.subr.mxu0 0.0
    %4692 = vmatpush1.xpose.msra.mxu0 %v4614
    %4693 = vmatprep.subr.mxu0 0.0
    %4694 = vmatpush1.xpose.msra.mxu0 %v4617
    %4695 = vmatprep.subr.mxu0 0.0
    %4696 = vmatpush1.xpose.msra.mxu0 %v4620
    %4697 = vmatprep.subr.mxu0 0.0
    %4698 = vmatpush1.xpose.msra.mxu0 %v4623
    %4699 = vmatprep.subr.mxu0 0.0
    %4700 = vmatpush1.xpose.msra.mxu0 %v4626
    %4701 = vmatprep.subr.mxu0 0.0
    %4702 = vmatpush1.xpose.msra.mxu0 %v4629
    %4703 = vmatprep.subr.mxu0 0.0
    %4704 = vmatpush1.xpose.msra.mxu0 %v4632
    %4705 = vmatprep.subr.mxu0 0.0
    %4706 = vmatpush1.xpose.msra.mxu0 %v4635
    %4707 = vmatprep.subr.mxu0 0.0
    %4708 = vmatpush1.xpose.msra.mxu0 %v4638
    %4709 = vmatprep.subr.mxu0 0.0
    %4710 = vmatpush1.xpose.msra.mxu0 %v4641
    %4711 = vmatprep.subr.mxu0 0.0
    %4712 = vmatpush1.xpose.msra.mxu0 %v4644
    %4713 = vmatprep.subr.mxu0 0.0
    %4714 = vmatpush1.xpose.msra.mxu0 %v4647
    %4715 = vmatprep.subr.mxu0 0.0
    %4716 = vmatpush1.xpose.msra.mxu0 %v4650
    %4717 = vmatprep.subr.mxu0 0.0
    %4718 = vmatpush1.xpose.msra.mxu0 %v4653
    %4719 = vmatprep.mubr.f32.mxu0 0.0
    %4720 = vmatmul.mubr.f32.gmra.mrb[0].mxu0 %v4548
    %v4721 = vpop.f32.mrb[0].mxu0
    %v4722 = vadd.f32 0.0, %v4721
    %v4723 = vpop.f32.mrb[0].mxu0
    %v4724 = vadd.f32 0.0, %v4723
    %4725 = vmatprep.mubr.f32.mxu0 0.0
    %4726 = vmatmul.mubr.f32.gmra.mrb[0].mxu0 %v4551
    %v4727 = vpop.f32.mrb[0].mxu0
    %v4728 = vadd.f32 0.0, %v4727
    %v4729 = vpop.f32.mrb[0].mxu0
    %v4730 = vadd.f32 0.0, %v4729
    %4731 = vmatprep.mubr.f32.mxu0 0.0
    %4732 = vmatmul.mubr.f32.gmra.mrb[0].mxu0 %v4554
    %v4733 = vpop.f32.mrb[0].mxu0
    %v4734 = vadd.f32 0.0, %v4733
    %v4735 = vpop.f32.mrb[0].mxu0
    %v4736 = vadd.f32 0.0, %v4735
    %4737 = vmatprep.mubr.f32.mxu0 0.0
    %4738 = vmatmul.mubr.f32.gmra.mrb[0].mxu0 %v4557
    %v4739 = vpop.f32.mrb[0].mxu0
    %v4740 = vadd.f32 0.0, %v4739
    %v4741 = vpop.f32.mrb[0].mxu0
    %v4742 = vadd.f32 0.0, %v4741
    %4743 = vdwg.mxu0
    %v4744 = vadd.f32 %v4502, %v4722
    %v4745 = vadd.f32 %v4503, %v4724
    %v4746 = vadd.f32 %v4504, %v4728
    %v4747 = vadd.f32 %v4505, %v4730
    %v4748 = vadd.f32 %v4506, %v4734
    %v4749 = vadd.f32 %v4507, %v4736
    %v4750 = vadd.f32 %v4508, %v4740
    %v4751 = vadd.f32 %v4509, %v4742
    %v4752 = vld [vmem:[%s5] sm:$0xff]
    %v4753 = vld [vmem:[%s5 + $0x8] sm:$0xff]
    %v4754 = vld [vmem:[%s5 + $0x10] sm:$0xff]
    %v4755 = vld [vmem:[%s5 + $0x18] sm:$0xff]
    %4757 = vset.pattern.permute.xlu0 0
    %4758 = vperm.xlu0 %4757, %v4752
    %v4759 = vpop.permute.xlu0 %4758
    %4762 = vset.pattern.permute.xlu0 0
    %4763 = vperm.xlu0 %4762, %v4753
    %v4764 = vpop.permute.xlu0 %4763
    %4767 = vset.pattern.permute.xlu0 0
    %4768 = vperm.xlu0 %4767, %v4754
    %v4769 = vpop.permute.xlu0 %4768
    %4772 = vset.pattern.permute.xlu0 0
    %4773 = vperm.xlu0 %4772, %v4755
    %v4774 = vpop.permute.xlu0 %4773
    %v4776 = vadd.f32 %v4744, %v4759
    %v4777 = vadd.f32 %v4745, %v4759
    %v4778 = vadd.f32 %v4746, %v4764
    %v4779 = vadd.f32 %v4747, %v4764
    %v4780 = vadd.f32 %v4748, %v4769
    %v4781 = vadd.f32 %v4749, %v4769
    %v4782 = vadd.f32 %v4750, %v4774
    %v4783 = vadd.f32 %v4751, %v4774
    %v4784 = vmax.f32 %v4776, 0.0
    %v4785 = vmax.f32 %v4777, 0.0
    %v4786 = vmax.f32 %v4778, 0.0
    %v4787 = vmax.f32 %v4779, 0.0
    %v4788 = vmax.f32 %v4780, 0.0
    %v4789 = vmax.f32 %v4781, 0.0
    %v4790 = vmax.f32 %v4782, 0.0
    %v4791 = vmax.f32 %v4783, 0.0
    %v4792 = vld [vmem:[%s0] sm:$0x3]
    %v4793 = vld [vmem:[%s6] sm:$0xff]
    %v4794 = vld [vmem:[%s6 + $0x8] sm:$0xff]
    %v4795 = vld [vmem:[%s6 + $0x10] sm:$0xff]
    %v4796 = vld [vmem:[%s6 + $0x18] sm:$0xff]
    %v4797 = vld [vmem:[%s6 + $0x20] sm:$0xff]
    %v4798 = vld [vmem:[%s6 + $0x28] sm:$0xff]
    %v4799 = vld [vmem:[%s6 + $0x30] sm:$0xff]
    %v4800 = vld [vmem:[%s6 + $0x38] sm:$0xff]
    %v4801 = vld [vmem:[%s6 + $0x40] sm:$0xff]
    %v4802 = vld [vmem:[%s6 + $0x48] sm:$0xff]
    %v4803 = vld [vmem:[%s6 + $0x50] sm:$0xff]
    %v4804 = vld [vmem:[%s6 + $0x58] sm:$0xff]
    %v4805 = vld [vmem:[%s6 + $0x60] sm:$0xff]
    %v4806 = vld [vmem:[%s6 + $0x68] sm:$0xff]
    %v4807 = vld [vmem:[%s6 + $0x70] sm:$0xff]
    %v4808 = vld [vmem:[%s6 + $0x78] sm:$0xff]
    %v4809 = vld [vmem:[%s7] sm:$0x1]
    %v4811 = vlaneseq
    %v4812 = vshrl.u32 %v4811, 7
    %v4813 = vsub.s32 0, %v4812
    %v4814 = vrot.slane %v4809, %v4813
    %4816 = vmatprep.subr.mxu0 0.0
    %4817 = vmatpush1.msra.mxu0 %v4793
    %4818 = vmatprep.subr.mxu0 0.0
    %4819 = vmatpush1.msra.mxu0 %v4794
    %4820 = vmatprep.subr.mxu0 0.0
    %4821 = vmatpush1.msra.mxu0 %v4795
    %4822 = vmatprep.subr.mxu0 0.0
    %4823 = vmatpush1.msra.mxu0 %v4796
    %4824 = vmatprep.subr.mxu0 0.0
    %4825 = vmatpush1.msra.mxu0 %v4797
    %4826 = vmatprep.subr.mxu0 0.0
    %4827 = vmatpush1.msra.mxu0 %v4798
    %4828 = vmatprep.subr.mxu0 0.0
    %4829 = vmatpush1.msra.mxu0 %v4799
    %4830 = vmatprep.subr.mxu0 0.0
    %4831 = vmatpush1.msra.mxu0 %v4800
    %4832 = vmatprep.subr.mxu0 0.0
    %4833 = vmatpush1.msra.mxu0 %v4801
    %4834 = vmatprep.subr.mxu0 0.0
    %4835 = vmatpush1.msra.mxu0 %v4802
    %4836 = vmatprep.subr.mxu0 0.0
    %4837 = vmatpush1.msra.mxu0 %v4803
    %4838 = vmatprep.subr.mxu0 0.0
    %4839 = vmatpush1.msra.mxu0 %v4804
    %4840 = vmatprep.subr.mxu0 0.0
    %4841 = vmatpush1.msra.mxu0 %v4805
    %4842 = vmatprep.subr.mxu0 0.0
    %4843 = vmatpush1.msra.mxu0 %v4806
    %4844 = vmatprep.subr.mxu0 0.0
    %4845 = vmatpush1.msra.mxu0 %v4807
    %4846 = vmatprep.subr.mxu0 0.0
    %4847 = vmatpush1.msra.mxu0 %v4808
    %4848 = vmatprep.subr.mxu0 0.0
    %4849 = vmatpush1.msra.mxu0 0.0
    %4850 = vmatprep.subr.mxu0 0.0
    %4851 = vmatpush1.msra.mxu0 0.0
    %4852 = vmatprep.subr.mxu0 0.0
    %4853 = vmatpush1.msra.mxu0 0.0
    %4854 = vmatprep.subr.mxu0 0.0
    %4855 = vmatpush1.msra.mxu0 0.0
    %4856 = vmatprep.subr.mxu0 0.0
    %4857 = vmatpush1.msra.mxu0 0.0
    %4858 = vmatprep.subr.mxu0 0.0
    %4859 = vmatpush1.msra.mxu0 0.0
    %4860 = vmatprep.subr.mxu0 0.0
    %4861 = vmatpush1.msra.mxu0 0.0
    %4862 = vmatprep.subr.mxu0 0.0
    %4863 = vmatpush1.msra.mxu0 0.0
    %4864 = vmatprep.subr.mxu0 0.0
    %4865 = vmatpush1.msra.mxu0 0.0
    %4866 = vmatprep.subr.mxu0 0.0
    %4867 = vmatpush1.msra.mxu0 0.0
    %4868 = vmatprep.subr.mxu0 0.0
    %4869 = vmatpush1.msra.mxu0 0.0
    %4870 = vmatprep.subr.mxu0 0.0
    %4871 = vmatpush1.msra.mxu0 0.0
    %4872 = vmatprep.subr.mxu0 0.0
    %4873 = vmatpush1.msra.mxu0 0.0
    %4874 = vmatprep.subr.mxu0 0.0
    %4875 = vmatpush1.msra.mxu0 0.0
    %4876 = vmatprep.subr.mxu0 0.0
    %4877 = vmatpush1.msra.mxu0 0.0
    %4878 = vmatprep.subr.mxu0 0.0
    %4879 = vmatpush1.msra.mxu0 0.0
    %4880 = vmatprep.mubr.f32.mxu0 0.0
    %4881 = vmatmul.mubr.f32.gmra.mrb[0].mxu0 %v4792
    %v4882 = vpop.f32.mrb[0].mxu0
    %v4883 = vadd.f32 %v4814, %v4882
    %v4884 = vpop.f32.mrb[0].mxu0
    %4885 = vdwg.mxu0
    %v4886 = vmax.f32 %v4883, 0.0
    %v4887 = vld [vmem:[%s8] sm:$0xff]
    %v4888 = vld [vmem:[%s8 + $0x8] sm:$0xff]
    %v4889 = vld [vmem:[%s8 + $0x10] sm:$0xff]
    %v4890 = vld [vmem:[%s8 + $0x18] sm:$0xff]
    %v4891 = vld [vmem:[%s8 + $0x20] sm:$0xff]
    %v4892 = vld [vmem:[%s8 + $0x28] sm:$0xff]
    %v4893 = vld [vmem:[%s8 + $0x30] sm:$0xff]
    %v4894 = vld [vmem:[%s8 + $0x38] sm:$0xff]
    %v4895 = vld [vmem:[%s8 + $0x40] sm:$0xff]
    %v4896 = vld [vmem:[%s8 + $0x48] sm:$0xff]
    %v4897 = vld [vmem:[%s8 + $0x50] sm:$0xff]
    %v4898 = vld [vmem:[%s8 + $0x58] sm:$0xff]
    %v4899 = vld [vmem:[%s8 + $0x60] sm:$0xff]
    %v4900 = vld [vmem:[%s8 + $0x68] sm:$0xff]
    %v4901 = vld [vmem:[%s8 + $0x70] sm:$0xff]
    %v4902 = vld [vmem:[%s8 + $0x78] sm:$0xff]
    %v4903 = vld [vmem:[%s9] sm:$0x1]
    %v4905 = vlaneseq
    %v4906 = vshrl.u32 %v4905, 7
    %v4907 = vsub.s32 0, %v4906
    %v4908 = vrot.slane %v4903, %v4907
    %4910 = vmatprep.subr.mxu0 0.0
    %4911 = vmatpush1.msra.mxu0 %v4887
    %4912 = vmatprep.subr.mxu0 0.0
    %4913 = vmatpush1.msra.mxu0 %v4888
    %4914 = vmatprep.subr.mxu0 0.0
    %4915 = vmatpush1.msra.mxu0 %v4889
    %4916 = vmatprep.subr.mxu0 0.0
    %4917 = vmatpush1.msra.mxu0 %v4890
    %4918 = vmatprep.subr.mxu0 0.0
    %4919 = vmatpush1.msra.mxu0 %v4891
    %4920 = vmatprep.subr.mxu0 0.0
    %4921 = vmatpush1.msra.mxu0 %v4892
    %4922 = vmatprep.subr.mxu0 0.0
    %4923 = vmatpush1.msra.mxu0 %v4893
    %4924 = vmatprep.subr.mxu0 0.0
    %4925 = vmatpush1.msra.mxu0 %v4894
    %4926 = vmatprep.subr.mxu0 0.0
    %4927 = vmatpush1.msra.mxu0 %v4895
    %4928 = vmatprep.subr.mxu0 0.0
    %4929 = vmatpush1.msra.mxu0 %v4896
    %4930 = vmatprep.subr.mxu0 0.0
    %4931 = vmatpush1.msra.mxu0 %v4897
    %4932 = vmatprep.subr.mxu0 0.0
    %4933 = vmatpush1.msra.mxu0 %v4898
    %4934 = vmatprep.subr.mxu0 0.0
    %4935 = vmatpush1.msra.mxu0 %v4899
    %4936 = vmatprep.subr.mxu0 0.0
    %4937 = vmatpush1.msra.mxu0 %v4900
    %4938 = vmatprep.subr.mxu0 0.0
    %4939 = vmatpush1.msra.mxu0 %v4901
    %4940 = vmatprep.subr.mxu0 0.0
    %4941 = vmatpush1.msra.mxu0 %v4902
    %4942 = vmatprep.subr.mxu0 0.0
    %4943 = vmatpush1.msra.mxu0 0.0
    %4944 = vmatprep.subr.mxu0 0.0
    %4945 = vmatpush1.msra.mxu0 0.0
    %4946 = vmatprep.subr.mxu0 0.0
    %4947 = vmatpush1.msra.mxu0 0.0
    %4948 = vmatprep.subr.mxu0 0.0
    %4949 = vmatpush1.msra.mxu0 0.0
    %4950 = vmatprep.subr.mxu0 0.0
    %4951 = vmatpush1.msra.mxu0 0.0
    %4952 = vmatprep.subr.mxu0 0.0
    %4953 = vmatpush1.msra.mxu0 0.0
    %4954 = vmatprep.subr.mxu0 0.0
    %4955 = vmatpush1.msra.mxu0 0.0
    %4956 = vmatprep.subr.mxu0 0.0
    %4957 = vmatpush1.msra.mxu0 0.0
    %4958 = vmatprep.subr.mxu0 0.0
    %4959 = vmatpush1.msra.mxu0 0.0
    %4960 = vmatprep.subr.mxu0 0.0
    %4961 = vmatpush1.msra.mxu0 0.0
    %4962 = vmatprep.subr.mxu0 0.0
    %4963 = vmatpush1.msra.mxu0 0.0
    %4964 = vmatprep.subr.mxu0 0.0
    %4965 = vmatpush1.msra.mxu0 0.0
    %4966 = vmatprep.subr.mxu0 0.0
    %4967 = vmatpush1.msra.mxu0 0.0
    %4968 = vmatprep.subr.mxu0 0.0
    %4969 = vmatpush1.msra.mxu0 0.0
    %4970 = vmatprep.subr.mxu0 0.0
    %4971 = vmatpush1.msra.mxu0 0.0
    %4972 = vmatprep.subr.mxu0 0.0
    %4973 = vmatpush1.msra.mxu0 0.0
    %4974 = vmatprep.mubr.f32.mxu0 0.0
    %4975 = vmatmul.mubr.f32.gmra.mrb[0].mxu0 %v4886
    %v4976 = vpop.f32.mrb[0].mxu0
    %v4977 = vadd.f32 %v4908, %v4976
    %v4978 = vpop.f32.mrb[0].mxu0
    %4979 = vdwg.mxu0
    %v4980 = vmax.f32 %v4977, 0.0
    %vm4981 = vcmask 9216
    %4982 = vst.msk [vmem:[%s17] sm:$0x3] %vm4981, %v4980
    %v4984 = vrot.slane %v4784, 1
    %v4986 = vrot.slane %v4784, 2
    %v4988 = vrot.slane %v4784, 3
    %v4990 = vrot.slane %v4784, 4
    %v4992 = vrot.slane %v4784, 5
    %v4994 = vrot.slane %v4784, 6
    %v4996 = vrot.slane %v4784, 7
    %v4999 = vrot.slane %v4786, 1
    %v5001 = vrot.slane %v4786, 2
    %v5003 = vrot.slane %v4786, 3
    %v5005 = vrot.slane %v4786, 4
    %v5007 = vrot.slane %v4786, 5
    %v5009 = vrot.slane %v4786, 6
    %v5011 = vrot.slane %v4786, 7
    %v5014 = vrot.slane %v4788, 1
    %v5016 = vrot.slane %v4788, 2
    %v5018 = vrot.slane %v4788, 3
    %v5020 = vrot.slane %v4788, 4
    %v5022 = vrot.slane %v4788, 5
    %v5024 = vrot.slane %v4788, 6
    %v5026 = vrot.slane %v4788, 7
    %v5029 = vrot.slane %v4790, 1
    %v5031 = vrot.slane %v4790, 2
    %v5033 = vrot.slane %v4790, 3
    %v5035 = vrot.slane %v4790, 4
    %v5037 = vrot.slane %v4790, 5
    %v5039 = vrot.slane %v4790, 6
    %v5041 = vrot.slane %v4790, 7
    %v5043 = vpack.c.bf16 %v4784, %v4784
    %v5044 = vpack.c.bf16 %v4984, %v4984
    %v5045 = vpack.c.bf16 %v4986, %v4986
    %v5046 = vpack.c.bf16 %v4988, %v4988
    %v5047 = vpack.c.bf16 %v4990, %v4990
    %v5048 = vpack.c.bf16 %v4992, %v4992
    %v5049 = vpack.c.bf16 %v4994, %v4994
    %v5050 = vpack.c.bf16 %v4996, %v4996
    %v5051 = vpack.c.bf16 %v4786, %v4786
    %v5052 = vpack.c.bf16 %v4999, %v4999
    %v5053 = vpack.c.bf16 %v5001, %v5001
    %v5054 = vpack.c.bf16 %v5003, %v5003
    %v5055 = vpack.c.bf16 %v5005, %v5005
    %v5056 = vpack.c.bf16 %v5007, %v5007
    %v5057 = vpack.c.bf16 %v5009, %v5009
    %v5058 = vpack.c.bf16 %v5011, %v5011
    %v5059 = vpack.c.bf16 %v4788, %v4788
    %v5060 = vpack.c.bf16 %v5014, %v5014
    %v5061 = vpack.c.bf16 %v5016, %v5016
    %v5062 = vpack.c.bf16 %v5018, %v5018
    %v5063 = vpack.c.bf16 %v5020, %v5020
    %v5064 = vpack.c.bf16 %v5022, %v5022
    %v5065 = vpack.c.bf16 %v5024, %v5024
    %v5066 = vpack.c.bf16 %v5026, %v5026
    %v5067 = vpack.c.bf16 %v4790, %v4790
    %v5068 = vpack.c.bf16 %v5029, %v5029
    %v5069 = vpack.c.bf16 %v5031, %v5031
    %v5070 = vpack.c.bf16 %v5033, %v5033
    %v5071 = vpack.c.bf16 %v5035, %v5035
    %v5072 = vpack.c.bf16 %v5037, %v5037
    %v5073 = vpack.c.bf16 %v5039, %v5039
    %v5074 = vpack.c.bf16 %v5041, %v5041
    %v5075 = vld [vmem:[#allocation3] sm:$0xf]
    %v5076 = vld [vmem:[#allocation3 + $0x4] sm:$0xf]
    %v5077 = vld [vmem:[#allocation3 + $0x8] sm:$0xf]
    %v5078 = vld [vmem:[#allocation3 + $0xc] sm:$0xf]
    %v5079 = vld [vmem:[#allocation3 + $0x10] sm:$0xf]
    %v5080 = vld [vmem:[#allocation3 + $0x14] sm:$0xf]
    %v5081 = vld [vmem:[#allocation3 + $0x18] sm:$0xf]
    %v5082 = vld [vmem:[#allocation3 + $0x1c] sm:$0xf]
    %v5083 = vld [vmem:[#allocation3 + $0x20] sm:$0xf]
    %v5084 = vld [vmem:[#allocation3 + $0x24] sm:$0xf]
    %v5085 = vld [vmem:[#allocation3 + $0x28] sm:$0xf]
    %v5086 = vld [vmem:[#allocation3 + $0x2c] sm:$0xf]
    %v5087 = vld [vmem:[#allocation3 + $0x30] sm:$0xf]
    %v5088 = vld [vmem:[#allocation3 + $0x34] sm:$0xf]
    %v5089 = vld [vmem:[#allocation3 + $0x38] sm:$0xf]
    %v5090 = vld [vmem:[#allocation3 + $0x3c] sm:$0xf]
    %v5091 = vld [vmem:[#allocation3 + $0x40] sm:$0xf]
    %v5092 = vld [vmem:[#allocation3 + $0x44] sm:$0xf]
    %v5093 = vld [vmem:[#allocation3 + $0x48] sm:$0xf]
    %v5094 = vld [vmem:[#allocation3 + $0x4c] sm:$0xf]
    %v5095 = vld [vmem:[#allocation3 + $0x50] sm:$0xf]
    %v5096 = vld [vmem:[#allocation3 + $0x54] sm:$0xf]
    %v5097 = vld [vmem:[#allocation3 + $0x58] sm:$0xf]
    %v5098 = vld [vmem:[#allocation3 + $0x5c] sm:$0xf]
    %v5099 = vld [vmem:[#allocation3 + $0x60] sm:$0xf]
    %v5100 = vld [vmem:[#allocation3 + $0x64] sm:$0xf]
    %v5101 = vld [vmem:[#allocation3 + $0x68] sm:$0xf]
    %v5102 = vld [vmem:[#allocation3 + $0x6c] sm:$0xf]
    %v5103 = vld [vmem:[#allocation3 + $0x70] sm:$0xf]
    %v5104 = vld [vmem:[#allocation3 + $0x74] sm:$0xf]
    %v5105 = vld [vmem:[#allocation3 + $0x78] sm:$0xf]
    %v5106 = vld [vmem:[#allocation3 + $0x7c] sm:$0xf]
    %v5107 = vld [vmem:[#allocation3 + $0x80] sm:$0xf]
    %v5108 = vld [vmem:[#allocation3 + $0x84] sm:$0xf]
    %v5109 = vld [vmem:[#allocation3 + $0x88] sm:$0xf]
    %v5110 = vld [vmem:[#allocation3 + $0x8c] sm:$0xf]
    %v5111 = vld [vmem:[#allocation3 + $0x90] sm:$0xf]
    %v5112 = vld [vmem:[#allocation3 + $0x94] sm:$0xf]
    %v5113 = vld [vmem:[#allocation3 + $0x98] sm:$0xf]
    %v5114 = vld [vmem:[#allocation3 + $0x9c] sm:$0xf]
    %v5115 = vld [vmem:[#allocation3 + $0xa0] sm:$0xf]
    %v5116 = vld [vmem:[#allocation3 + $0xa4] sm:$0xf]
    %v5117 = vld [vmem:[#allocation3 + $0xa8] sm:$0xf]
    %v5118 = vld [vmem:[#allocation3 + $0xac] sm:$0xf]
    %v5119 = vld [vmem:[#allocation3 + $0xb0] sm:$0xf]
    %v5120 = vld [vmem:[#allocation3 + $0xb4] sm:$0xf]
    %v5121 = vld [vmem:[#allocation3 + $0xb8] sm:$0xf]
    %v5122 = vld [vmem:[#allocation3 + $0xbc] sm:$0xf]
    %v5123 = vld [vmem:[#allocation3 + $0xc0] sm:$0xf]
    %v5124 = vld [vmem:[#allocation3 + $0xc4] sm:$0xf]
    %v5125 = vld [vmem:[#allocation3 + $0xc8] sm:$0xf]
    %v5126 = vld [vmem:[#allocation3 + $0xcc] sm:$0xf]
    %v5127 = vld [vmem:[#allocation3 + $0xd0] sm:$0xf]
    %v5128 = vld [vmem:[#allocation3 + $0xd4] sm:$0xf]
    %v5129 = vld [vmem:[#allocation3 + $0xd8] sm:$0xf]
    %v5130 = vld [vmem:[#allocation3 + $0xdc] sm:$0xf]
    %v5131 = vld [vmem:[#allocation3 + $0xe0] sm:$0xf]
    %v5132 = vld [vmem:[#allocation3 + $0xe4] sm:$0xf]
    %v5133 = vld [vmem:[#allocation3 + $0xe8] sm:$0xf]
    %v5134 = vld [vmem:[#allocation3 + $0xec] sm:$0xf]
    %v5135 = vld [vmem:[#allocation3 + $0xf0] sm:$0xf]
    %v5136 = vld [vmem:[#allocation3 + $0xf4] sm:$0xf]
    %v5137 = vld [vmem:[#allocation3 + $0xf8] sm:$0xf]
    %v5138 = vld [vmem:[#allocation3 + $0xfc] sm:$0xf]
    %v5139 = vld [vmem:[#allocation3 + $0x100] sm:$0xf]
    %v5140 = vld [vmem:[#allocation3 + $0x104] sm:$0xf]
    %v5141 = vld [vmem:[#allocation3 + $0x108] sm:$0xf]
    %v5142 = vld [vmem:[#allocation3 + $0x10c] sm:$0xf]
    %v5143 = vld [vmem:[#allocation3 + $0x110] sm:$0xf]
    %v5144 = vld [vmem:[#allocation3 + $0x114] sm:$0xf]
    %v5145 = vld [vmem:[#allocation3 + $0x118] sm:$0xf]
    %v5146 = vld [vmem:[#allocation3 + $0x11c] sm:$0xf]
    %v5147 = vld [vmem:[#allocation3 + $0x120] sm:$0xf]
    %v5148 = vld [vmem:[#allocation3 + $0x124] sm:$0xf]
    %v5149 = vld [vmem:[#allocation3 + $0x128] sm:$0xf]
    %v5150 = vld [vmem:[#allocation3 + $0x12c] sm:$0xf]
    %v5151 = vld [vmem:[#allocation3 + $0x130] sm:$0xf]
    %v5152 = vld [vmem:[#allocation3 + $0x134] sm:$0xf]
    %v5153 = vld [vmem:[#allocation3 + $0x138] sm:$0xf]
    %v5154 = vld [vmem:[#allocation3 + $0x13c] sm:$0xf]
    %v5155 = vld [vmem:[#allocation3 + $0x140] sm:$0xf]
    %v5156 = vld [vmem:[#allocation3 + $0x144] sm:$0xf]
    %v5157 = vld [vmem:[#allocation3 + $0x148] sm:$0xf]
    %v5158 = vld [vmem:[#allocation3 + $0x14c] sm:$0xf]
    %v5159 = vld [vmem:[#allocation3 + $0x150] sm:$0xf]
    %v5160 = vld [vmem:[#allocation3 + $0x154] sm:$0xf]
    %v5161 = vld [vmem:[#allocation3 + $0x158] sm:$0xf]
    %v5162 = vld [vmem:[#allocation3 + $0x15c] sm:$0xf]
    %v5163 = vld [vmem:[#allocation3 + $0x160] sm:$0xf]
    %v5164 = vld [vmem:[#allocation3 + $0x164] sm:$0xf]
    %v5165 = vld [vmem:[#allocation3 + $0x168] sm:$0xf]
    %v5166 = vld [vmem:[#allocation3 + $0x16c] sm:$0xf]
    %v5167 = vld [vmem:[#allocation3 + $0x170] sm:$0xf]
    %v5168 = vld [vmem:[#allocation3 + $0x174] sm:$0xf]
    %v5169 = vld [vmem:[#allocation3 + $0x178] sm:$0xf]
    %v5170 = vld [vmem:[#allocation3 + $0x17c] sm:$0xf]
    %v5171 = vld [vmem:[#allocation3 + $0x180] sm:$0xf]
    %v5172 = vld [vmem:[#allocation3 + $0x184] sm:$0xf]
    %v5173 = vld [vmem:[#allocation3 + $0x188] sm:$0xf]
    %v5174 = vld [vmem:[#allocation3 + $0x18c] sm:$0xf]
    %v5175 = vld [vmem:[#allocation3 + $0x190] sm:$0xf]
    %v5176 = vld [vmem:[#allocation3 + $0x194] sm:$0xf]
    %v5177 = vld [vmem:[#allocation3 + $0x198] sm:$0xf]
    %v5178 = vld [vmem:[#allocation3 + $0x19c] sm:$0xf]
    %v5179 = vld [vmem:[#allocation3 + $0x1a0] sm:$0xf]
    %v5180 = vld [vmem:[#allocation3 + $0x1a4] sm:$0xf]
    %v5181 = vld [vmem:[#allocation3 + $0x1a8] sm:$0xf]
    %v5182 = vld [vmem:[#allocation3 + $0x1ac] sm:$0xf]
    %v5183 = vld [vmem:[#allocation3 + $0x1b0] sm:$0xf]
    %v5184 = vld [vmem:[#allocation3 + $0x1b4] sm:$0xf]
    %v5185 = vld [vmem:[#allocation3 + $0x1b8] sm:$0xf]
    %v5186 = vld [vmem:[#allocation3 + $0x1bc] sm:$0xf]
    %v5187 = vld [vmem:[#allocation3 + $0x1c0] sm:$0xf]
    %v5188 = vld [vmem:[#allocation3 + $0x1c4] sm:$0xf]
    %v5189 = vld [vmem:[#allocation3 + $0x1c8] sm:$0xf]
    %v5190 = vld [vmem:[#allocation3 + $0x1cc] sm:$0xf]
    %v5191 = vld [vmem:[#allocation3 + $0x1d0] sm:$0xf]
    %v5192 = vld [vmem:[#allocation3 + $0x1d4] sm:$0xf]
    %v5193 = vld [vmem:[#allocation3 + $0x1d8] sm:$0xf]
    %v5194 = vld [vmem:[#allocation3 + $0x1dc] sm:$0xf]
    %v5195 = vld [vmem:[#allocation3 + $0x1e0] sm:$0xf]
    %v5196 = vld [vmem:[#allocation3 + $0x1e4] sm:$0xf]
    %v5197 = vld [vmem:[#allocation3 + $0x1e8] sm:$0xf]
    %v5198 = vld [vmem:[#allocation3 + $0x1ec] sm:$0xf]
    %v5199 = vld [vmem:[#allocation3 + $0x1f0] sm:$0xf]
    %v5200 = vld [vmem:[#allocation3 + $0x1f4] sm:$0xf]
    %v5201 = vld [vmem:[#allocation3 + $0x1f8] sm:$0xf]
    %v5202 = vld [vmem:[#allocation3 + $0x1fc] sm:$0xf]
    %v5203 = vld [vmem:[#allocation3 + $0x200] sm:$0xf]
    %v5204 = vld [vmem:[#allocation3 + $0x204] sm:$0xf]
    %v5205 = vld [vmem:[#allocation3 + $0x208] sm:$0xf]
    %v5206 = vld [vmem:[#allocation3 + $0x20c] sm:$0xf]
    %v5207 = vld [vmem:[#allocation3 + $0x210] sm:$0xf]
    %v5208 = vld [vmem:[#allocation3 + $0x214] sm:$0xf]
    %v5209 = vld [vmem:[#allocation3 + $0x218] sm:$0xf]
    %v5210 = vld [vmem:[#allocation3 + $0x21c] sm:$0xf]
    %v5211 = vld [vmem:[#allocation3 + $0x220] sm:$0xf]
    %v5212 = vld [vmem:[#allocation3 + $0x224] sm:$0xf]
    %v5213 = vld [vmem:[#allocation3 + $0x228] sm:$0xf]
    %v5214 = vld [vmem:[#allocation3 + $0x22c] sm:$0xf]
    %v5215 = vld [vmem:[#allocation3 + $0x230] sm:$0xf]
    %v5216 = vld [vmem:[#allocation3 + $0x234] sm:$0xf]
    %v5217 = vld [vmem:[#allocation3 + $0x238] sm:$0xf]
    %v5218 = vld [vmem:[#allocation3 + $0x23c] sm:$0xf]
    %v5219 = vld [vmem:[#allocation3 + $0x240] sm:$0xf]
    %v5220 = vld [vmem:[#allocation3 + $0x244] sm:$0xf]
    %v5221 = vld [vmem:[#allocation3 + $0x248] sm:$0xf]
    %v5222 = vld [vmem:[#allocation3 + $0x24c] sm:$0xf]
    %v5223 = vld [vmem:[#allocation3 + $0x250] sm:$0xf]
    %v5224 = vld [vmem:[#allocation3 + $0x254] sm:$0xf]
    %v5225 = vld [vmem:[#allocation3 + $0x258] sm:$0xf]
    %v5226 = vld [vmem:[#allocation3 + $0x25c] sm:$0xf]
    %v5227 = vld [vmem:[#allocation3 + $0x260] sm:$0xf]
    %v5228 = vld [vmem:[#allocation3 + $0x264] sm:$0xf]
    %v5229 = vld [vmem:[#allocation3 + $0x268] sm:$0xf]
    %v5230 = vld [vmem:[#allocation3 + $0x26c] sm:$0xf]
    %v5231 = vld [vmem:[#allocation3 + $0x270] sm:$0xf]
    %v5232 = vld [vmem:[#allocation3 + $0x274] sm:$0xf]
    %v5233 = vld [vmem:[#allocation3 + $0x278] sm:$0xf]
    %v5234 = vld [vmem:[#allocation3 + $0x27c] sm:$0xf]
    %v5235 = vld [vmem:[#allocation3 + $0x280] sm:$0xf]
    %v5236 = vld [vmem:[#allocation3 + $0x284] sm:$0xf]
    %v5237 = vld [vmem:[#allocation3 + $0x288] sm:$0xf]
    %v5238 = vld [vmem:[#allocation3 + $0x28c] sm:$0xf]
    %v5239 = vld [vmem:[#allocation3 + $0x290] sm:$0xf]
    %v5240 = vld [vmem:[#allocation3 + $0x294] sm:$0xf]
    %v5241 = vld [vmem:[#allocation3 + $0x298] sm:$0xf]
    %v5242 = vld [vmem:[#allocation3 + $0x29c] sm:$0xf]
    %v5243 = vld [vmem:[#allocation3 + $0x2a0] sm:$0xf]
    %v5244 = vld [vmem:[#allocation3 + $0x2a4] sm:$0xf]
    %v5245 = vld [vmem:[#allocation3 + $0x2a8] sm:$0xf]
    %v5246 = vld [vmem:[#allocation3 + $0x2ac] sm:$0xf]
    %v5247 = vld [vmem:[#allocation3 + $0x2b0] sm:$0xf]
    %v5248 = vld [vmem:[#allocation3 + $0x2b4] sm:$0xf]
    %v5249 = vld [vmem:[#allocation3 + $0x2b8] sm:$0xf]
    %v5250 = vld [vmem:[#allocation3 + $0x2bc] sm:$0xf]
    %v5251 = vld [vmem:[#allocation3 + $0x2c0] sm:$0xf]
    %v5252 = vld [vmem:[#allocation3 + $0x2c4] sm:$0xf]
    %v5253 = vld [vmem:[#allocation3 + $0x2c8] sm:$0xf]
    %v5254 = vld [vmem:[#allocation3 + $0x2cc] sm:$0xf]
    %v5255 = vld [vmem:[#allocation3 + $0x2d0] sm:$0xf]
    %v5256 = vld [vmem:[#allocation3 + $0x2d4] sm:$0xf]
    %v5257 = vld [vmem:[#allocation3 + $0x2d8] sm:$0xf]
    %v5258 = vld [vmem:[#allocation3 + $0x2dc] sm:$0xf]
    %v5259 = vld [vmem:[#allocation3 + $0x2e0] sm:$0xf]
    %v5260 = vld [vmem:[#allocation3 + $0x2e4] sm:$0xf]
    %v5261 = vld [vmem:[#allocation3 + $0x2e8] sm:$0xf]
    %v5262 = vld [vmem:[#allocation3 + $0x2ec] sm:$0xf]
    %v5263 = vld [vmem:[#allocation3 + $0x2f0] sm:$0xf]
    %v5264 = vld [vmem:[#allocation3 + $0x2f4] sm:$0xf]
    %v5265 = vld [vmem:[#allocation3 + $0x2f8] sm:$0xf]
    %v5266 = vld [vmem:[#allocation3 + $0x2fc] sm:$0xf]
    %v5267 = vld [vmem:[#allocation3 + $0x300] sm:$0xf]
    %v5268 = vld [vmem:[#allocation3 + $0x304] sm:$0xf]
    %v5269 = vld [vmem:[#allocation3 + $0x308] sm:$0xf]
    %v5270 = vld [vmem:[#allocation3 + $0x30c] sm:$0xf]
    %v5271 = vld [vmem:[#allocation3 + $0x310] sm:$0xf]
    %v5272 = vld [vmem:[#allocation3 + $0x314] sm:$0xf]
    %v5273 = vld [vmem:[#allocation3 + $0x318] sm:$0xf]
    %v5274 = vld [vmem:[#allocation3 + $0x31c] sm:$0xf]
    %v5275 = vld [vmem:[#allocation3 + $0x320] sm:$0xf]
    %v5276 = vld [vmem:[#allocation3 + $0x324] sm:$0xf]
    %v5277 = vld [vmem:[#allocation3 + $0x328] sm:$0xf]
    %v5278 = vld [vmem:[#allocation3 + $0x32c] sm:$0xf]
    %v5279 = vld [vmem:[#allocation3 + $0x330] sm:$0xf]
    %v5280 = vld [vmem:[#allocation3 + $0x334] sm:$0xf]
    %v5281 = vld [vmem:[#allocation3 + $0x338] sm:$0xf]
    %v5282 = vld [vmem:[#allocation3 + $0x33c] sm:$0xf]
    %v5283 = vld [vmem:[#allocation3 + $0x340] sm:$0xf]
    %v5284 = vld [vmem:[#allocation3 + $0x344] sm:$0xf]
    %v5285 = vld [vmem:[#allocation3 + $0x348] sm:$0xf]
    %v5286 = vld [vmem:[#allocation3 + $0x34c] sm:$0xf]
    %v5287 = vld [vmem:[#allocation3 + $0x350] sm:$0xf]
    %v5288 = vld [vmem:[#allocation3 + $0x354] sm:$0xf]
    %v5289 = vld [vmem:[#allocation3 + $0x358] sm:$0xf]
    %v5290 = vld [vmem:[#allocation3 + $0x35c] sm:$0xf]
    %v5291 = vld [vmem:[#allocation3 + $0x360] sm:$0xf]
    %v5292 = vld [vmem:[#allocation3 + $0x364] sm:$0xf]
    %v5293 = vld [vmem:[#allocation3 + $0x368] sm:$0xf]
    %v5294 = vld [vmem:[#allocation3 + $0x36c] sm:$0xf]
    %v5295 = vld [vmem:[#allocation3 + $0x370] sm:$0xf]
    %v5296 = vld [vmem:[#allocation3 + $0x374] sm:$0xf]
    %v5297 = vld [vmem:[#allocation3 + $0x378] sm:$0xf]
    %v5298 = vld [vmem:[#allocation3 + $0x37c] sm:$0xf]
    %v5299 = vld [vmem:[#allocation3 + $0x380] sm:$0xf]
    %v5300 = vld [vmem:[#allocation3 + $0x384] sm:$0xf]
    %v5301 = vld [vmem:[#allocation3 + $0x388] sm:$0xf]
    %v5302 = vld [vmem:[#allocation3 + $0x38c] sm:$0xf]
    %v5303 = vld [vmem:[#allocation3 + $0x390] sm:$0xf]
    %v5304 = vld [vmem:[#allocation3 + $0x394] sm:$0xf]
    %v5305 = vld [vmem:[#allocation3 + $0x398] sm:$0xf]
    %v5306 = vld [vmem:[#allocation3 + $0x39c] sm:$0xf]
    %v5307 = vld [vmem:[#allocation3 + $0x3a0] sm:$0xf]
    %v5308 = vld [vmem:[#allocation3 + $0x3a4] sm:$0xf]
    %v5309 = vld [vmem:[#allocation3 + $0x3a8] sm:$0xf]
    %v5310 = vld [vmem:[#allocation3 + $0x3ac] sm:$0xf]
    %v5311 = vld [vmem:[#allocation3 + $0x3b0] sm:$0xf]
    %v5312 = vld [vmem:[#allocation3 + $0x3b4] sm:$0xf]
    %v5313 = vld [vmem:[#allocation3 + $0x3b8] sm:$0xf]
    %v5314 = vld [vmem:[#allocation3 + $0x3bc] sm:$0xf]
    %v5315 = vld [vmem:[#allocation3 + $0x3c0] sm:$0xf]
    %v5316 = vld [vmem:[#allocation3 + $0x3c4] sm:$0xf]
    %v5317 = vld [vmem:[#allocation3 + $0x3c8] sm:$0xf]
    %v5318 = vld [vmem:[#allocation3 + $0x3cc] sm:$0xf]
    %v5319 = vld [vmem:[#allocation3 + $0x3d0] sm:$0xf]
    %v5320 = vld [vmem:[#allocation3 + $0x3d4] sm:$0xf]
    %v5321 = vld [vmem:[#allocation3 + $0x3d8] sm:$0xf]
    %v5322 = vld [vmem:[#allocation3 + $0x3dc] sm:$0xf]
    %v5323 = vld [vmem:[#allocation3 + $0x3e0] sm:$0xf]
    %v5324 = vld [vmem:[#allocation3 + $0x3e4] sm:$0xf]
    %v5325 = vld [vmem:[#allocation3 + $0x3e8] sm:$0xf]
    %v5326 = vld [vmem:[#allocation3 + $0x3ec] sm:$0xf]
    %v5327 = vld [vmem:[#allocation3 + $0x3f0] sm:$0xf]
    %v5328 = vld [vmem:[#allocation3 + $0x3f4] sm:$0xf]
    %v5329 = vld [vmem:[#allocation3 + $0x3f8] sm:$0xf]
    %v5330 = vld [vmem:[#allocation3 + $0x3fc] sm:$0xf]
    %v5331 = vld [vmem:[#allocation3 + $0x400] sm:$0xf]
    %v5332 = vld [vmem:[#allocation3 + $0x404] sm:$0xf]
    %v5333 = vld [vmem:[#allocation3 + $0x408] sm:$0xf]
    %v5334 = vld [vmem:[#allocation3 + $0x40c] sm:$0xf]
    %v5335 = vld [vmem:[#allocation3 + $0x410] sm:$0xf]
    %v5336 = vld [vmem:[#allocation3 + $0x414] sm:$0xf]
    %v5337 = vld [vmem:[#allocation3 + $0x418] sm:$0xf]
    %v5338 = vld [vmem:[#allocation3 + $0x41c] sm:$0xf]
    %v5339 = vld [vmem:[#allocation3 + $0x420] sm:$0xf]
    %v5340 = vld [vmem:[#allocation3 + $0x424] sm:$0xf]
    %v5341 = vld [vmem:[#allocation3 + $0x428] sm:$0xf]
    %v5342 = vld [vmem:[#allocation3 + $0x42c] sm:$0xf]
    %v5343 = vld [vmem:[#allocation3 + $0x430] sm:$0xf]
    %v5344 = vld [vmem:[#allocation3 + $0x434] sm:$0xf]
    %v5345 = vld [vmem:[#allocation3 + $0x438] sm:$0xf]
    %v5346 = vld [vmem:[#allocation3 + $0x43c] sm:$0xf]
    %v5347 = vld [vmem:[#allocation3 + $0x440] sm:$0xf]
    %v5348 = vld [vmem:[#allocation3 + $0x444] sm:$0xf]
    %v5349 = vld [vmem:[#allocation3 + $0x448] sm:$0xf]
    %v5350 = vld [vmem:[#allocation3 + $0x44c] sm:$0xf]
    %v5351 = vld [vmem:[#allocation3 + $0x450] sm:$0xf]
    %v5352 = vld [vmem:[#allocation3 + $0x454] sm:$0xf]
    %v5353 = vld [vmem:[#allocation3 + $0x458] sm:$0xf]
    %v5354 = vld [vmem:[#allocation3 + $0x45c] sm:$0xf]
    %v5355 = vld [vmem:[#allocation3 + $0x460] sm:$0xf]
    %v5356 = vld [vmem:[#allocation3 + $0x464] sm:$0xf]
    %v5357 = vld [vmem:[#allocation3 + $0x468] sm:$0xf]
    %v5358 = vld [vmem:[#allocation3 + $0x46c] sm:$0xf]
    %v5359 = vld [vmem:[#allocation3 + $0x470] sm:$0xf]
    %v5360 = vld [vmem:[#allocation3 + $0x474] sm:$0xf]
    %v5361 = vld [vmem:[#allocation3 + $0x478] sm:$0xf]
    %v5362 = vld [vmem:[#allocation3 + $0x47c] sm:$0xf]
    %v5363 = vld [vmem:[#allocation3 + $0x480] sm:$0xf]
    %v5364 = vld [vmem:[#allocation3 + $0x484] sm:$0xf]
    %v5365 = vld [vmem:[#allocation3 + $0x488] sm:$0xf]
    %v5366 = vld [vmem:[#allocation3 + $0x48c] sm:$0xf]
    %v5367 = vld [vmem:[#allocation3 + $0x490] sm:$0xf]
    %v5368 = vld [vmem:[#allocation3 + $0x494] sm:$0xf]
    %v5369 = vld [vmem:[#allocation3 + $0x498] sm:$0xf]
    %v5370 = vld [vmem:[#allocation3 + $0x49c] sm:$0xf]
    %v5371 = vld [vmem:[#allocation3 + $0x4a0] sm:$0xf]
    %v5372 = vld [vmem:[#allocation3 + $0x4a4] sm:$0xf]
    %v5373 = vld [vmem:[#allocation3 + $0x4a8] sm:$0xf]
    %v5374 = vld [vmem:[#allocation3 + $0x4ac] sm:$0xf]
    %v5375 = vld [vmem:[#allocation3 + $0x4b0] sm:$0xf]
    %v5376 = vld [vmem:[#allocation3 + $0x4b4] sm:$0xf]
    %v5377 = vld [vmem:[#allocation3 + $0x4b8] sm:$0xf]
    %v5378 = vld [vmem:[#allocation3 + $0x4bc] sm:$0xf]
    %v5379 = vld [vmem:[#allocation3 + $0x4c0] sm:$0xf]
    %v5380 = vld [vmem:[#allocation3 + $0x4c4] sm:$0xf]
    %v5381 = vld [vmem:[#allocation3 + $0x4c8] sm:$0xf]
    %v5382 = vld [vmem:[#allocation3 + $0x4cc] sm:$0xf]
    %v5383 = vld [vmem:[#allocation3 + $0x4d0] sm:$0xf]
    %v5384 = vld [vmem:[#allocation3 + $0x4d4] sm:$0xf]
    %v5385 = vld [vmem:[#allocation3 + $0x4d8] sm:$0xf]
    %v5386 = vld [vmem:[#allocation3 + $0x4dc] sm:$0xf]
    %v5387 = vld [vmem:[#allocation3 + $0x4e0] sm:$0xf]
    %v5388 = vld [vmem:[#allocation3 + $0x4e4] sm:$0xf]
    %v5389 = vld [vmem:[#allocation3 + $0x4e8] sm:$0xf]
    %v5390 = vld [vmem:[#allocation3 + $0x4ec] sm:$0xf]
    %v5391 = vld [vmem:[#allocation3 + $0x4f0] sm:$0xf]
    %v5392 = vld [vmem:[#allocation3 + $0x4f4] sm:$0xf]
    %v5393 = vld [vmem:[#allocation3 + $0x4f8] sm:$0xf]
    %v5394 = vld [vmem:[#allocation3 + $0x4fc] sm:$0xf]
    %v5395 = vld [vmem:[#allocation3 + $0x500] sm:$0xf]
    %v5396 = vld [vmem:[#allocation3 + $0x504] sm:$0xf]
    %v5397 = vld [vmem:[#allocation3 + $0x508] sm:$0xf]
    %v5398 = vld [vmem:[#allocation3 + $0x50c] sm:$0xf]
    %v5399 = vld [vmem:[#allocation3 + $0x510] sm:$0xf]
    %v5400 = vld [vmem:[#allocation3 + $0x514] sm:$0xf]
    %v5401 = vld [vmem:[#allocation3 + $0x518] sm:$0xf]
    %v5402 = vld [vmem:[#allocation3 + $0x51c] sm:$0xf]
    %v5403 = vld [vmem:[#allocation3 + $0x520] sm:$0xf]
    %v5404 = vld [vmem:[#allocation3 + $0x524] sm:$0xf]
    %v5405 = vld [vmem:[#allocation3 + $0x528] sm:$0xf]
    %v5406 = vld [vmem:[#allocation3 + $0x52c] sm:$0xf]
    %v5407 = vld [vmem:[#allocation3 + $0x530] sm:$0xf]
    %v5408 = vld [vmem:[#allocation3 + $0x534] sm:$0xf]
    %v5409 = vld [vmem:[#allocation3 + $0x538] sm:$0xf]
    %v5410 = vld [vmem:[#allocation3 + $0x53c] sm:$0xf]
    %v5411 = vld [vmem:[#allocation3 + $0x540] sm:$0xf]
    %v5412 = vld [vmem:[#allocation3 + $0x544] sm:$0xf]
    %v5413 = vld [vmem:[#allocation3 + $0x548] sm:$0xf]
    %v5414 = vld [vmem:[#allocation3 + $0x54c] sm:$0xf]
    %v5415 = vld [vmem:[#allocation3 + $0x550] sm:$0xf]
    %v5416 = vld [vmem:[#allocation3 + $0x554] sm:$0xf]
    %v5417 = vld [vmem:[#allocation3 + $0x558] sm:$0xf]
    %v5418 = vld [vmem:[#allocation3 + $0x55c] sm:$0xf]
    %v5419 = vld [vmem:[#allocation3 + $0x560] sm:$0xf]
    %v5420 = vld [vmem:[#allocation3 + $0x564] sm:$0xf]
    %v5421 = vld [vmem:[#allocation3 + $0x568] sm:$0xf]
    %v5422 = vld [vmem:[#allocation3 + $0x56c] sm:$0xf]
    %v5423 = vld [vmem:[#allocation3 + $0x570] sm:$0xf]
    %v5424 = vld [vmem:[#allocation3 + $0x574] sm:$0xf]
    %v5425 = vld [vmem:[#allocation3 + $0x578] sm:$0xf]
    %v5426 = vld [vmem:[#allocation3 + $0x57c] sm:$0xf]
    %v5427 = vld [vmem:[#allocation3 + $0x580] sm:$0xf]
    %v5428 = vld [vmem:[#allocation3 + $0x584] sm:$0xf]
    %v5429 = vld [vmem:[#allocation3 + $0x588] sm:$0xf]
    %v5430 = vld [vmem:[#allocation3 + $0x58c] sm:$0xf]
    %v5431 = vld [vmem:[#allocation3 + $0x590] sm:$0xf]
    %v5432 = vld [vmem:[#allocation3 + $0x594] sm:$0xf]
    %v5433 = vld [vmem:[#allocation3 + $0x598] sm:$0xf]
    %v5434 = vld [vmem:[#allocation3 + $0x59c] sm:$0xf]
    %v5435 = vld [vmem:[#allocation3 + $0x5a0] sm:$0xf]
    %v5436 = vld [vmem:[#allocation3 + $0x5a4] sm:$0xf]
    %v5437 = vld [vmem:[#allocation3 + $0x5a8] sm:$0xf]
    %v5438 = vld [vmem:[#allocation3 + $0x5ac] sm:$0xf]
    %v5439 = vld [vmem:[#allocation3 + $0x5b0] sm:$0xf]
    %v5440 = vld [vmem:[#allocation3 + $0x5b4] sm:$0xf]
    %v5441 = vld [vmem:[#allocation3 + $0x5b8] sm:$0xf]
    %v5442 = vld [vmem:[#allocation3 + $0x5bc] sm:$0xf]
    %v5443 = vld [vmem:[#allocation3 + $0x5c0] sm:$0xf]
    %v5444 = vld [vmem:[#allocation3 + $0x5c4] sm:$0xf]
    %v5445 = vld [vmem:[#allocation3 + $0x5c8] sm:$0xf]
    %v5446 = vld [vmem:[#allocation3 + $0x5cc] sm:$0xf]
    %v5447 = vld [vmem:[#allocation3 + $0x5d0] sm:$0xf]
    %v5448 = vld [vmem:[#allocation3 + $0x5d4] sm:$0xf]
    %v5449 = vld [vmem:[#allocation3 + $0x5d8] sm:$0xf]
    %v5450 = vld [vmem:[#allocation3 + $0x5dc] sm:$0xf]
    %v5451 = vld [vmem:[#allocation3 + $0x5e0] sm:$0xf]
    %v5452 = vld [vmem:[#allocation3 + $0x5e4] sm:$0xf]
    %v5453 = vld [vmem:[#allocation3 + $0x5e8] sm:$0xf]
    %v5454 = vld [vmem:[#allocation3 + $0x5ec] sm:$0xf]
    %v5455 = vld [vmem:[#allocation3 + $0x5f0] sm:$0xf]
    %v5456 = vld [vmem:[#allocation3 + $0x5f4] sm:$0xf]
    %v5457 = vld [vmem:[#allocation3 + $0x5f8] sm:$0xf]
    %v5458 = vld [vmem:[#allocation3 + $0x5fc] sm:$0xf]
    %v5459 = vld [vmem:[#allocation3 + $0x600] sm:$0xf]
    %v5460 = vld [vmem:[#allocation3 + $0x604] sm:$0xf]
    %v5461 = vld [vmem:[#allocation3 + $0x608] sm:$0xf]
    %v5462 = vld [vmem:[#allocation3 + $0x60c] sm:$0xf]
    %v5463 = vld [vmem:[#allocation3 + $0x610] sm:$0xf]
    %v5464 = vld [vmem:[#allocation3 + $0x614] sm:$0xf]
    %v5465 = vld [vmem:[#allocation3 + $0x618] sm:$0xf]
    %v5466 = vld [vmem:[#allocation3 + $0x61c] sm:$0xf]
    %v5467 = vld [vmem:[#allocation3 + $0x620] sm:$0xf]
    %v5468 = vld [vmem:[#allocation3 + $0x624] sm:$0xf]
    %v5469 = vld [vmem:[#allocation3 + $0x628] sm:$0xf]
    %v5470 = vld [vmem:[#allocation3 + $0x62c] sm:$0xf]
    %v5471 = vld [vmem:[#allocation3 + $0x630] sm:$0xf]
    %v5472 = vld [vmem:[#allocation3 + $0x634] sm:$0xf]
    %v5473 = vld [vmem:[#allocation3 + $0x638] sm:$0xf]
    %v5474 = vld [vmem:[#allocation3 + $0x63c] sm:$0xf]
    %v5475 = vld [vmem:[#allocation3 + $0x640] sm:$0xf]
    %v5476 = vld [vmem:[#allocation3 + $0x644] sm:$0xf]
    %v5477 = vld [vmem:[#allocation3 + $0x648] sm:$0xf]
    %v5478 = vld [vmem:[#allocation3 + $0x64c] sm:$0xf]
    %v5479 = vld [vmem:[#allocation3 + $0x650] sm:$0xf]
    %v5480 = vld [vmem:[#allocation3 + $0x654] sm:$0xf]
    %v5481 = vld [vmem:[#allocation3 + $0x658] sm:$0xf]
    %v5482 = vld [vmem:[#allocation3 + $0x65c] sm:$0xf]
    %v5483 = vld [vmem:[#allocation3 + $0x660] sm:$0xf]
    %v5484 = vld [vmem:[#allocation3 + $0x664] sm:$0xf]
    %v5485 = vld [vmem:[#allocation3 + $0x668] sm:$0xf]
    %v5486 = vld [vmem:[#allocation3 + $0x66c] sm:$0xf]
    %v5487 = vld [vmem:[#allocation3 + $0x670] sm:$0xf]
    %v5488 = vld [vmem:[#allocation3 + $0x674] sm:$0xf]
    %v5489 = vld [vmem:[#allocation3 + $0x678] sm:$0xf]
    %v5490 = vld [vmem:[#allocation3 + $0x67c] sm:$0xf]
    %v5491 = vld [vmem:[#allocation3 + $0x680] sm:$0xf]
    %v5492 = vld [vmem:[#allocation3 + $0x684] sm:$0xf]
    %v5493 = vld [vmem:[#allocation3 + $0x688] sm:$0xf]
    %v5494 = vld [vmem:[#allocation3 + $0x68c] sm:$0xf]
    %v5495 = vld [vmem:[#allocation3 + $0x690] sm:$0xf]
    %v5496 = vld [vmem:[#allocation3 + $0x694] sm:$0xf]
    %v5497 = vld [vmem:[#allocation3 + $0x698] sm:$0xf]
    %v5498 = vld [vmem:[#allocation3 + $0x69c] sm:$0xf]
    %v5499 = vld [vmem:[#allocation3 + $0x6a0] sm:$0xf]
    %v5500 = vld [vmem:[#allocation3 + $0x6a4] sm:$0xf]
    %v5501 = vld [vmem:[#allocation3 + $0x6a8] sm:$0xf]
    %v5502 = vld [vmem:[#allocation3 + $0x6ac] sm:$0xf]
    %v5503 = vld [vmem:[#allocation3 + $0x6b0] sm:$0xf]
    %v5504 = vld [vmem:[#allocation3 + $0x6b4] sm:$0xf]
    %v5505 = vld [vmem:[#allocation3 + $0x6b8] sm:$0xf]
    %v5506 = vld [vmem:[#allocation3 + $0x6bc] sm:$0xf]
    %v5507 = vld [vmem:[#allocation3 + $0x6c0] sm:$0xf]
    %v5508 = vld [vmem:[#allocation3 + $0x6c4] sm:$0xf]
    %v5509 = vld [vmem:[#allocation3 + $0x6c8] sm:$0xf]
    %v5510 = vld [vmem:[#allocation3 + $0x6cc] sm:$0xf]
    %v5511 = vld [vmem:[#allocation3 + $0x6d0] sm:$0xf]
    %v5512 = vld [vmem:[#allocation3 + $0x6d4] sm:$0xf]
    %v5513 = vld [vmem:[#allocation3 + $0x6d8] sm:$0xf]
    %v5514 = vld [vmem:[#allocation3 + $0x6dc] sm:$0xf]
    %v5515 = vld [vmem:[#allocation3 + $0x6e0] sm:$0xf]
    %v5516 = vld [vmem:[#allocation3 + $0x6e4] sm:$0xf]
    %v5517 = vld [vmem:[#allocation3 + $0x6e8] sm:$0xf]
    %v5518 = vld [vmem:[#allocation3 + $0x6ec] sm:$0xf]
    %v5519 = vld [vmem:[#allocation3 + $0x6f0] sm:$0xf]
    %v5520 = vld [vmem:[#allocation3 + $0x6f4] sm:$0xf]
    %v5521 = vld [vmem:[#allocation3 + $0x6f8] sm:$0xf]
    %v5522 = vld [vmem:[#allocation3 + $0x6fc] sm:$0xf]
    %v5523 = vld [vmem:[#allocation3 + $0x700] sm:$0xf]
    %v5524 = vld [vmem:[#allocation3 + $0x704] sm:$0xf]
    %v5525 = vld [vmem:[#allocation3 + $0x708] sm:$0xf]
    %v5526 = vld [vmem:[#allocation3 + $0x70c] sm:$0xf]
    %v5527 = vld [vmem:[#allocation3 + $0x710] sm:$0xf]
    %v5528 = vld [vmem:[#allocation3 + $0x714] sm:$0xf]
    %v5529 = vld [vmem:[#allocation3 + $0x718] sm:$0xf]
    %v5530 = vld [vmem:[#allocation3 + $0x71c] sm:$0xf]
    %v5531 = vld [vmem:[#allocation3 + $0x720] sm:$0xf]
    %v5532 = vld [vmem:[#allocation3 + $0x724] sm:$0xf]
    %v5533 = vld [vmem:[#allocation3 + $0x728] sm:$0xf]
    %v5534 = vld [vmem:[#allocation3 + $0x72c] sm:$0xf]
    %v5535 = vld [vmem:[#allocation3 + $0x730] sm:$0xf]
    %v5536 = vld [vmem:[#allocation3 + $0x734] sm:$0xf]
    %v5537 = vld [vmem:[#allocation3 + $0x738] sm:$0xf]
    %v5538 = vld [vmem:[#allocation3 + $0x73c] sm:$0xf]
    %v5539 = vld [vmem:[#allocation3 + $0x740] sm:$0xf]
    %v5540 = vld [vmem:[#allocation3 + $0x744] sm:$0xf]
    %v5541 = vld [vmem:[#allocation3 + $0x748] sm:$0xf]
    %v5542 = vld [vmem:[#allocation3 + $0x74c] sm:$0xf]
    %v5543 = vld [vmem:[#allocation3 + $0x750] sm:$0xf]
    %v5544 = vld [vmem:[#allocation3 + $0x754] sm:$0xf]
    %v5545 = vld [vmem:[#allocation3 + $0x758] sm:$0xf]
    %v5546 = vld [vmem:[#allocation3 + $0x75c] sm:$0xf]
    %v5547 = vld [vmem:[#allocation3 + $0x760] sm:$0xf]
    %v5548 = vld [vmem:[#allocation3 + $0x764] sm:$0xf]
    %v5549 = vld [vmem:[#allocation3 + $0x768] sm:$0xf]
    %v5550 = vld [vmem:[#allocation3 + $0x76c] sm:$0xf]
    %v5551 = vld [vmem:[#allocation3 + $0x770] sm:$0xf]
    %v5552 = vld [vmem:[#allocation3 + $0x774] sm:$0xf]
    %v5553 = vld [vmem:[#allocation3 + $0x778] sm:$0xf]
    %v5554 = vld [vmem:[#allocation3 + $0x77c] sm:$0xf]
    %v5555 = vld [vmem:[#allocation3 + $0x780] sm:$0xf]
    %v5556 = vld [vmem:[#allocation3 + $0x784] sm:$0xf]
    %v5557 = vld [vmem:[#allocation3 + $0x788] sm:$0xf]
    %v5558 = vld [vmem:[#allocation3 + $0x78c] sm:$0xf]
    %v5559 = vld [vmem:[#allocation3 + $0x790] sm:$0xf]
    %v5560 = vld [vmem:[#allocation3 + $0x794] sm:$0xf]
    %v5561 = vld [vmem:[#allocation3 + $0x798] sm:$0xf]
    %v5562 = vld [vmem:[#allocation3 + $0x79c] sm:$0xf]
    %v5563 = vld [vmem:[#allocation3 + $0x7a0] sm:$0xf]
    %v5564 = vld [vmem:[#allocation3 + $0x7a4] sm:$0xf]
    %v5565 = vld [vmem:[#allocation3 + $0x7a8] sm:$0xf]
    %v5566 = vld [vmem:[#allocation3 + $0x7ac] sm:$0xf]
    %v5567 = vld [vmem:[#allocation3 + $0x7b0] sm:$0xf]
    %v5568 = vld [vmem:[#allocation3 + $0x7b4] sm:$0xf]
    %v5569 = vld [vmem:[#allocation3 + $0x7b8] sm:$0xf]
    %v5570 = vld [vmem:[#allocation3 + $0x7bc] sm:$0xf]
    %v5571 = vld [vmem:[#allocation3 + $0x7c0] sm:$0xf]
    %v5572 = vld [vmem:[#allocation3 + $0x7c4] sm:$0xf]
    %v5573 = vld [vmem:[#allocation3 + $0x7c8] sm:$0xf]
    %v5574 = vld [vmem:[#allocation3 + $0x7cc] sm:$0xf]
    %v5575 = vld [vmem:[#allocation3 + $0x7d0] sm:$0xf]
    %v5576 = vld [vmem:[#allocation3 + $0x7d4] sm:$0xf]
    %v5577 = vld [vmem:[#allocation3 + $0x7d8] sm:$0xf]
    %v5578 = vld [vmem:[#allocation3 + $0x7dc] sm:$0xf]
    %v5579 = vld [vmem:[#allocation3 + $0x7e0] sm:$0xf]
    %v5580 = vld [vmem:[#allocation3 + $0x7e4] sm:$0xf]
    %v5581 = vld [vmem:[#allocation3 + $0x7e8] sm:$0xf]
    %v5582 = vld [vmem:[#allocation3 + $0x7ec] sm:$0xf]
    %v5583 = vld [vmem:[#allocation3 + $0x7f0] sm:$0xf]
    %v5584 = vld [vmem:[#allocation3 + $0x7f4] sm:$0xf]
    %v5585 = vld [vmem:[#allocation3 + $0x7f8] sm:$0xf]
    %v5586 = vld [vmem:[#allocation3 + $0x7fc] sm:$0xf]
    %v5587 = vld [vmem:[%s11] sm:$0x1]
    %v6100 = vunpack.c.l.b16 %v5075
    %v6101 = vunpack.c.l.b16 %v5076
    %v6102 = vunpack.c.l.b16 %v5077
    %v6103 = vunpack.c.l.b16 %v5078
    %v6104 = vunpack.c.l.b16 %v5079
    %v6105 = vunpack.c.l.b16 %v5080
    %v6106 = vunpack.c.l.b16 %v5081
    %v6107 = vunpack.c.l.b16 %v5082
    %v6108 = vunpack.c.l.b16 %v5083
    %v6109 = vunpack.c.l.b16 %v5084
    %v6110 = vunpack.c.l.b16 %v5085
    %v6111 = vunpack.c.l.b16 %v5086
    %v6112 = vunpack.c.l.b16 %v5087
    %v6113 = vunpack.c.l.b16 %v5088
    %v6114 = vunpack.c.l.b16 %v5089
    %v6115 = vunpack.c.l.b16 %v5090
    %v6116 = vunpack.c.l.b16 %v5091
    %v6117 = vunpack.c.l.b16 %v5092
    %v6118 = vunpack.c.l.b16 %v5093
    %v6119 = vunpack.c.l.b16 %v5094
    %v6120 = vunpack.c.l.b16 %v5095
    %v6121 = vunpack.c.l.b16 %v5096
    %v6122 = vunpack.c.l.b16 %v5097
    %v6123 = vunpack.c.l.b16 %v5098
    %v6124 = vunpack.c.l.b16 %v5099
    %v6125 = vunpack.c.l.b16 %v5100
    %v6126 = vunpack.c.l.b16 %v5101
    %v6127 = vunpack.c.l.b16 %v5102
    %v6128 = vunpack.c.l.b16 %v5103
    %v6129 = vunpack.c.l.b16 %v5104
    %v6130 = vunpack.c.l.b16 %v5105
    %v6131 = vunpack.c.l.b16 %v5106
    %v6132 = vunpack.c.l.b16 %v5107
    %v6133 = vunpack.c.l.b16 %v5108
    %v6134 = vunpack.c.l.b16 %v5109
    %v6135 = vunpack.c.l.b16 %v5110
    %v6136 = vunpack.c.l.b16 %v5111
    %v6137 = vunpack.c.l.b16 %v5112
    %v6138 = vunpack.c.l.b16 %v5113
    %v6139 = vunpack.c.l.b16 %v5114
    %v6140 = vunpack.c.l.b16 %v5115
    %v6141 = vunpack.c.l.b16 %v5116
    %v6142 = vunpack.c.l.b16 %v5117
    %v6143 = vunpack.c.l.b16 %v5118
    %v6144 = vunpack.c.l.b16 %v5119
    %v6145 = vunpack.c.l.b16 %v5120
    %v6146 = vunpack.c.l.b16 %v5121
    %v6147 = vunpack.c.l.b16 %v5122
    %v6148 = vunpack.c.l.b16 %v5123
    %v6149 = vunpack.c.l.b16 %v5124
    %v6150 = vunpack.c.l.b16 %v5125
    %v6151 = vunpack.c.l.b16 %v5126
    %v6152 = vunpack.c.l.b16 %v5127
    %v6153 = vunpack.c.l.b16 %v5128
    %v6154 = vunpack.c.l.b16 %v5129
    %v6155 = vunpack.c.l.b16 %v5130
    %v6156 = vunpack.c.l.b16 %v5131
    %v6157 = vunpack.c.l.b16 %v5132
    %v6158 = vunpack.c.l.b16 %v5133
    %v6159 = vunpack.c.l.b16 %v5134
    %v6160 = vunpack.c.l.b16 %v5135
    %v6161 = vunpack.c.l.b16 %v5136
    %v6162 = vunpack.c.l.b16 %v5137
    %v6163 = vunpack.c.l.b16 %v5138
    %v6164 = vunpack.c.l.b16 %v5139
    %v6165 = vunpack.c.l.b16 %v5140
    %v6166 = vunpack.c.l.b16 %v5141
    %v6167 = vunpack.c.l.b16 %v5142
    %v6168 = vunpack.c.l.b16 %v5143
    %v6169 = vunpack.c.l.b16 %v5144
    %v6170 = vunpack.c.l.b16 %v5145
    %v6171 = vunpack.c.l.b16 %v5146
    %v6172 = vunpack.c.l.b16 %v5147
    %v6173 = vunpack.c.l.b16 %v5148
    %v6174 = vunpack.c.l.b16 %v5149
    %v6175 = vunpack.c.l.b16 %v5150
    %v6176 = vunpack.c.l.b16 %v5151
    %v6177 = vunpack.c.l.b16 %v5152
    %v6178 = vunpack.c.l.b16 %v5153
    %v6179 = vunpack.c.l.b16 %v5154
    %v6180 = vunpack.c.l.b16 %v5155
    %v6181 = vunpack.c.l.b16 %v5156
    %v6182 = vunpack.c.l.b16 %v5157
    %v6183 = vunpack.c.l.b16 %v5158
    %v6184 = vunpack.c.l.b16 %v5159
    %v6185 = vunpack.c.l.b16 %v5160
    %v6186 = vunpack.c.l.b16 %v5161
    %v6187 = vunpack.c.l.b16 %v5162
    %v6188 = vunpack.c.l.b16 %v5163
    %v6189 = vunpack.c.l.b16 %v5164
    %v6190 = vunpack.c.l.b16 %v5165
    %v6191 = vunpack.c.l.b16 %v5166
    %v6192 = vunpack.c.l.b16 %v5167
    %v6193 = vunpack.c.l.b16 %v5168
    %v6194 = vunpack.c.l.b16 %v5169
    %v6195 = vunpack.c.l.b16 %v5170
    %v6196 = vunpack.c.l.b16 %v5171
    %v6197 = vunpack.c.l.b16 %v5172
    %v6198 = vunpack.c.l.b16 %v5173
    %v6199 = vunpack.c.l.b16 %v5174
    %v6200 = vunpack.c.l.b16 %v5175
    %v6201 = vunpack.c.l.b16 %v5176
    %v6202 = vunpack.c.l.b16 %v5177
    %v6203 = vunpack.c.l.b16 %v5178
    %v6204 = vunpack.c.l.b16 %v5179
    %v6205 = vunpack.c.l.b16 %v5180
    %v6206 = vunpack.c.l.b16 %v5181
    %v6207 = vunpack.c.l.b16 %v5182
    %v6208 = vunpack.c.l.b16 %v5183
    %v6209 = vunpack.c.l.b16 %v5184
    %v6210 = vunpack.c.l.b16 %v5185
    %v6211 = vunpack.c.l.b16 %v5186
    %v6212 = vunpack.c.l.b16 %v5187
    %v6213 = vunpack.c.l.b16 %v5188
    %v6214 = vunpack.c.l.b16 %v5189
    %v6215 = vunpack.c.l.b16 %v5190
    %v6216 = vunpack.c.l.b16 %v5191
    %v6217 = vunpack.c.l.b16 %v5192
    %v6218 = vunpack.c.l.b16 %v5193
    %v6219 = vunpack.c.l.b16 %v5194
    %v6220 = vunpack.c.l.b16 %v5195
    %v6221 = vunpack.c.l.b16 %v5196
    %v6222 = vunpack.c.l.b16 %v5197
    %v6223 = vunpack.c.l.b16 %v5198
    %v6224 = vunpack.c.l.b16 %v5199
    %v6225 = vunpack.c.l.b16 %v5200
    %v6226 = vunpack.c.l.b16 %v5201
    %v6227 = vunpack.c.l.b16 %v5202
    %v6228 = vunpack.c.l.b16 %v5203
    %v6229 = vunpack.c.l.b16 %v5204
    %v6230 = vunpack.c.l.b16 %v5205
    %v6231 = vunpack.c.l.b16 %v5206
    %v6232 = vunpack.c.l.b16 %v5207
    %v6233 = vunpack.c.l.b16 %v5208
    %v6234 = vunpack.c.l.b16 %v5209
    %v6235 = vunpack.c.l.b16 %v5210
    %v6236 = vunpack.c.l.b16 %v5211
    %v6237 = vunpack.c.l.b16 %v5212
    %v6238 = vunpack.c.l.b16 %v5213
    %v6239 = vunpack.c.l.b16 %v5214
    %v6240 = vunpack.c.l.b16 %v5215
    %v6241 = vunpack.c.l.b16 %v5216
    %v6242 = vunpack.c.l.b16 %v5217
    %v6243 = vunpack.c.l.b16 %v5218
    %v6244 = vunpack.c.l.b16 %v5219
    %v6245 = vunpack.c.l.b16 %v5220
    %v6246 = vunpack.c.l.b16 %v5221
    %v6247 = vunpack.c.l.b16 %v5222
    %v6248 = vunpack.c.l.b16 %v5223
    %v6249 = vunpack.c.l.b16 %v5224
    %v6250 = vunpack.c.l.b16 %v5225
    %v6251 = vunpack.c.l.b16 %v5226
    %v6252 = vunpack.c.l.b16 %v5227
    %v6253 = vunpack.c.l.b16 %v5228
    %v6254 = vunpack.c.l.b16 %v5229
    %v6255 = vunpack.c.l.b16 %v5230
    %v6256 = vunpack.c.l.b16 %v5231
    %v6257 = vunpack.c.l.b16 %v5232
    %v6258 = vunpack.c.l.b16 %v5233
    %v6259 = vunpack.c.l.b16 %v5234
    %v6260 = vunpack.c.l.b16 %v5235
    %v6261 = vunpack.c.l.b16 %v5236
    %v6262 = vunpack.c.l.b16 %v5237
    %v6263 = vunpack.c.l.b16 %v5238
    %v6264 = vunpack.c.l.b16 %v5239
    %v6265 = vunpack.c.l.b16 %v5240
    %v6266 = vunpack.c.l.b16 %v5241
    %v6267 = vunpack.c.l.b16 %v5242
    %v6268 = vunpack.c.l.b16 %v5243
    %v6269 = vunpack.c.l.b16 %v5244
    %v6270 = vunpack.c.l.b16 %v5245
    %v6271 = vunpack.c.l.b16 %v5246
    %v6272 = vunpack.c.l.b16 %v5247
    %v6273 = vunpack.c.l.b16 %v5248
    %v6274 = vunpack.c.l.b16 %v5249
    %v6275 = vunpack.c.l.b16 %v5250
    %v6276 = vunpack.c.l.b16 %v5251
    %v6277 = vunpack.c.l.b16 %v5252
    %v6278 = vunpack.c.l.b16 %v5253
    %v6279 = vunpack.c.l.b16 %v5254
    %v6280 = vunpack.c.l.b16 %v5255
    %v6281 = vunpack.c.l.b16 %v5256
    %v6282 = vunpack.c.l.b16 %v5257
    %v6283 = vunpack.c.l.b16 %v5258
    %v6284 = vunpack.c.l.b16 %v5259
    %v6285 = vunpack.c.l.b16 %v5260
    %v6286 = vunpack.c.l.b16 %v5261
    %v6287 = vunpack.c.l.b16 %v5262
    %v6288 = vunpack.c.l.b16 %v5263
    %v6289 = vunpack.c.l.b16 %v5264
    %v6290 = vunpack.c.l.b16 %v5265
    %v6291 = vunpack.c.l.b16 %v5266
    %v6292 = vunpack.c.l.b16 %v5267
    %v6293 = vunpack.c.l.b16 %v5268
    %v6294 = vunpack.c.l.b16 %v5269
    %v6295 = vunpack.c.l.b16 %v5270
    %v6296 = vunpack.c.l.b16 %v5271
    %v6297 = vunpack.c.l.b16 %v5272
    %v6298 = vunpack.c.l.b16 %v5273
    %v6299 = vunpack.c.l.b16 %v5274
    %v6300 = vunpack.c.l.b16 %v5275
    %v6301 = vunpack.c.l.b16 %v5276
    %v6302 = vunpack.c.l.b16 %v5277
    %v6303 = vunpack.c.l.b16 %v5278
    %v6304 = vunpack.c.l.b16 %v5279
    %v6305 = vunpack.c.l.b16 %v5280
    %v6306 = vunpack.c.l.b16 %v5281
    %v6307 = vunpack.c.l.b16 %v5282
    %v6308 = vunpack.c.l.b16 %v5283
    %v6309 = vunpack.c.l.b16 %v5284
    %v6310 = vunpack.c.l.b16 %v5285
    %v6311 = vunpack.c.l.b16 %v5286
    %v6312 = vunpack.c.l.b16 %v5287
    %v6313 = vunpack.c.l.b16 %v5288
    %v6314 = vunpack.c.l.b16 %v5289
    %v6315 = vunpack.c.l.b16 %v5290
    %v6316 = vunpack.c.l.b16 %v5291
    %v6317 = vunpack.c.l.b16 %v5292
    %v6318 = vunpack.c.l.b16 %v5293
    %v6319 = vunpack.c.l.b16 %v5294
    %v6320 = vunpack.c.l.b16 %v5295
    %v6321 = vunpack.c.l.b16 %v5296
    %v6322 = vunpack.c.l.b16 %v5297
    %v6323 = vunpack.c.l.b16 %v5298
    %v6324 = vunpack.c.l.b16 %v5299
    %v6325 = vunpack.c.l.b16 %v5300
    %v6326 = vunpack.c.l.b16 %v5301
    %v6327 = vunpack.c.l.b16 %v5302
    %v6328 = vunpack.c.l.b16 %v5303
    %v6329 = vunpack.c.l.b16 %v5304
    %v6330 = vunpack.c.l.b16 %v5305
    %v6331 = vunpack.c.l.b16 %v5306
    %v6332 = vunpack.c.l.b16 %v5307
    %v6333 = vunpack.c.l.b16 %v5308
    %v6334 = vunpack.c.l.b16 %v5309
    %v6335 = vunpack.c.l.b16 %v5310
    %v6336 = vunpack.c.l.b16 %v5311
    %v6337 = vunpack.c.l.b16 %v5312
    %v6338 = vunpack.c.l.b16 %v5313
    %v6339 = vunpack.c.l.b16 %v5314
    %v6340 = vunpack.c.l.b16 %v5315
    %v6341 = vunpack.c.l.b16 %v5316
    %v6342 = vunpack.c.l.b16 %v5317
    %v6343 = vunpack.c.l.b16 %v5318
    %v6344 = vunpack.c.l.b16 %v5319
    %v6345 = vunpack.c.l.b16 %v5320
    %v6346 = vunpack.c.l.b16 %v5321
    %v6347 = vunpack.c.l.b16 %v5322
    %v6348 = vunpack.c.l.b16 %v5323
    %v6349 = vunpack.c.l.b16 %v5324
    %v6350 = vunpack.c.l.b16 %v5325
    %v6351 = vunpack.c.l.b16 %v5326
    %v6352 = vunpack.c.l.b16 %v5327
    %v6353 = vunpack.c.l.b16 %v5328
    %v6354 = vunpack.c.l.b16 %v5329
    %v6355 = vunpack.c.l.b16 %v5330
    %v6356 = vunpack.c.l.b16 %v5331
    %v6357 = vunpack.c.l.b16 %v5332
    %v6358 = vunpack.c.l.b16 %v5333
    %v6359 = vunpack.c.l.b16 %v5334
    %v6360 = vunpack.c.l.b16 %v5335
    %v6361 = vunpack.c.l.b16 %v5336
    %v6362 = vunpack.c.l.b16 %v5337
    %v6363 = vunpack.c.l.b16 %v5338
    %v6364 = vunpack.c.l.b16 %v5339
    %v6365 = vunpack.c.l.b16 %v5340
    %v6366 = vunpack.c.l.b16 %v5341
    %v6367 = vunpack.c.l.b16 %v5342
    %v6368 = vunpack.c.l.b16 %v5343
    %v6369 = vunpack.c.l.b16 %v5344
    %v6370 = vunpack.c.l.b16 %v5345
    %v6371 = vunpack.c.l.b16 %v5346
    %v6372 = vunpack.c.l.b16 %v5347
    %v6373 = vunpack.c.l.b16 %v5348
    %v6374 = vunpack.c.l.b16 %v5349
    %v6375 = vunpack.c.l.b16 %v5350
    %v6376 = vunpack.c.l.b16 %v5351
    %v6377 = vunpack.c.l.b16 %v5352
    %v6378 = vunpack.c.l.b16 %v5353
    %v6379 = vunpack.c.l.b16 %v5354
    %v6380 = vunpack.c.l.b16 %v5355
    %v6381 = vunpack.c.l.b16 %v5356
    %v6382 = vunpack.c.l.b16 %v5357
    %v6383 = vunpack.c.l.b16 %v5358
    %v6384 = vunpack.c.l.b16 %v5359
    %v6385 = vunpack.c.l.b16 %v5360
    %v6386 = vunpack.c.l.b16 %v5361
    %v6387 = vunpack.c.l.b16 %v5362
    %v6388 = vunpack.c.l.b16 %v5363
    %v6389 = vunpack.c.l.b16 %v5364
    %v6390 = vunpack.c.l.b16 %v5365
    %v6391 = vunpack.c.l.b16 %v5366
    %v6392 = vunpack.c.l.b16 %v5367
    %v6393 = vunpack.c.l.b16 %v5368
    %v6394 = vunpack.c.l.b16 %v5369
    %v6395 = vunpack.c.l.b16 %v5370
    %v6396 = vunpack.c.l.b16 %v5371
    %v6397 = vunpack.c.l.b16 %v5372
    %v6398 = vunpack.c.l.b16 %v5373
    %v6399 = vunpack.c.l.b16 %v5374
    %v6400 = vunpack.c.l.b16 %v5375
    %v6401 = vunpack.c.l.b16 %v5376
    %v6402 = vunpack.c.l.b16 %v5377
    %v6403 = vunpack.c.l.b16 %v5378
    %v6404 = vunpack.c.l.b16 %v5379
    %v6405 = vunpack.c.l.b16 %v5380
    %v6406 = vunpack.c.l.b16 %v5381
    %v6407 = vunpack.c.l.b16 %v5382
    %v6408 = vunpack.c.l.b16 %v5383
    %v6409 = vunpack.c.l.b16 %v5384
    %v6410 = vunpack.c.l.b16 %v5385
    %v6411 = vunpack.c.l.b16 %v5386
    %v6412 = vunpack.c.l.b16 %v5387
    %v6413 = vunpack.c.l.b16 %v5388
    %v6414 = vunpack.c.l.b16 %v5389
    %v6415 = vunpack.c.l.b16 %v5390
    %v6416 = vunpack.c.l.b16 %v5391
    %v6417 = vunpack.c.l.b16 %v5392
    %v6418 = vunpack.c.l.b16 %v5393
    %v6419 = vunpack.c.l.b16 %v5394
    %v6420 = vunpack.c.l.b16 %v5395
    %v6421 = vunpack.c.l.b16 %v5396
    %v6422 = vunpack.c.l.b16 %v5397
    %v6423 = vunpack.c.l.b16 %v5398
    %v6424 = vunpack.c.l.b16 %v5399
    %v6425 = vunpack.c.l.b16 %v5400
    %v6426 = vunpack.c.l.b16 %v5401
    %v6427 = vunpack.c.l.b16 %v5402
    %v6428 = vunpack.c.l.b16 %v5403
    %v6429 = vunpack.c.l.b16 %v5404
    %v6430 = vunpack.c.l.b16 %v5405
    %v6431 = vunpack.c.l.b16 %v5406
    %v6432 = vunpack.c.l.b16 %v5407
    %v6433 = vunpack.c.l.b16 %v5408
    %v6434 = vunpack.c.l.b16 %v5409
    %v6435 = vunpack.c.l.b16 %v5410
    %v6436 = vunpack.c.l.b16 %v5411
    %v6437 = vunpack.c.l.b16 %v5412
    %v6438 = vunpack.c.l.b16 %v5413
    %v6439 = vunpack.c.l.b16 %v5414
    %v6440 = vunpack.c.l.b16 %v5415
    %v6441 = vunpack.c.l.b16 %v5416
    %v6442 = vunpack.c.l.b16 %v5417
    %v6443 = vunpack.c.l.b16 %v5418
    %v6444 = vunpack.c.l.b16 %v5419
    %v6445 = vunpack.c.l.b16 %v5420
    %v6446 = vunpack.c.l.b16 %v5421
    %v6447 = vunpack.c.l.b16 %v5422
    %v6448 = vunpack.c.l.b16 %v5423
    %v6449 = vunpack.c.l.b16 %v5424
    %v6450 = vunpack.c.l.b16 %v5425
    %v6451 = vunpack.c.l.b16 %v5426
    %v6452 = vunpack.c.l.b16 %v5427
    %v6453 = vunpack.c.l.b16 %v5428
    %v6454 = vunpack.c.l.b16 %v5429
    %v6455 = vunpack.c.l.b16 %v5430
    %v6456 = vunpack.c.l.b16 %v5431
    %v6457 = vunpack.c.l.b16 %v5432
    %v6458 = vunpack.c.l.b16 %v5433
    %v6459 = vunpack.c.l.b16 %v5434
    %v6460 = vunpack.c.l.b16 %v5435
    %v6461 = vunpack.c.l.b16 %v5436
    %v6462 = vunpack.c.l.b16 %v5437
    %v6463 = vunpack.c.l.b16 %v5438
    %v6464 = vunpack.c.l.b16 %v5439
    %v6465 = vunpack.c.l.b16 %v5440
    %v6466 = vunpack.c.l.b16 %v5441
    %v6467 = vunpack.c.l.b16 %v5442
    %v6468 = vunpack.c.l.b16 %v5443
    %v6469 = vunpack.c.l.b16 %v5444
    %v6470 = vunpack.c.l.b16 %v5445
    %v6471 = vunpack.c.l.b16 %v5446
    %v6472 = vunpack.c.l.b16 %v5447
    %v6473 = vunpack.c.l.b16 %v5448
    %v6474 = vunpack.c.l.b16 %v5449
    %v6475 = vunpack.c.l.b16 %v5450
    %v6476 = vunpack.c.l.b16 %v5451
    %v6477 = vunpack.c.l.b16 %v5452
    %v6478 = vunpack.c.l.b16 %v5453
    %v6479 = vunpack.c.l.b16 %v5454
    %v6480 = vunpack.c.l.b16 %v5455
    %v6481 = vunpack.c.l.b16 %v5456
    %v6482 = vunpack.c.l.b16 %v5457
    %v6483 = vunpack.c.l.b16 %v5458
    %v6484 = vunpack.c.l.b16 %v5459
    %v6485 = vunpack.c.l.b16 %v5460
    %v6486 = vunpack.c.l.b16 %v5461
    %v6487 = vunpack.c.l.b16 %v5462
    %v6488 = vunpack.c.l.b16 %v5463
    %v6489 = vunpack.c.l.b16 %v5464
    %v6490 = vunpack.c.l.b16 %v5465
    %v6491 = vunpack.c.l.b16 %v5466
    %v6492 = vunpack.c.l.b16 %v5467
    %v6493 = vunpack.c.l.b16 %v5468
    %v6494 = vunpack.c.l.b16 %v5469
    %v6495 = vunpack.c.l.b16 %v5470
    %v6496 = vunpack.c.l.b16 %v5471
    %v6497 = vunpack.c.l.b16 %v5472
    %v6498 = vunpack.c.l.b16 %v5473
    %v6499 = vunpack.c.l.b16 %v5474
    %v6500 = vunpack.c.l.b16 %v5475
    %v6501 = vunpack.c.l.b16 %v5476
    %v6502 = vunpack.c.l.b16 %v5477
    %v6503 = vunpack.c.l.b16 %v5478
    %v6504 = vunpack.c.l.b16 %v5479
    %v6505 = vunpack.c.l.b16 %v5480
    %v6506 = vunpack.c.l.b16 %v5481
    %v6507 = vunpack.c.l.b16 %v5482
    %v6508 = vunpack.c.l.b16 %v5483
    %v6509 = vunpack.c.l.b16 %v5484
    %v6510 = vunpack.c.l.b16 %v5485
    %v6511 = vunpack.c.l.b16 %v5486
    %v6512 = vunpack.c.l.b16 %v5487
    %v6513 = vunpack.c.l.b16 %v5488
    %v6514 = vunpack.c.l.b16 %v5489
    %v6515 = vunpack.c.l.b16 %v5490
    %v6516 = vunpack.c.l.b16 %v5491
    %v6517 = vunpack.c.l.b16 %v5492
    %v6518 = vunpack.c.l.b16 %v5493
    %v6519 = vunpack.c.l.b16 %v5494
    %v6520 = vunpack.c.l.b16 %v5495
    %v6521 = vunpack.c.l.b16 %v5496
    %v6522 = vunpack.c.l.b16 %v5497
    %v6523 = vunpack.c.l.b16 %v5498
    %v6524 = vunpack.c.l.b16 %v5499
    %v6525 = vunpack.c.l.b16 %v5500
    %v6526 = vunpack.c.l.b16 %v5501
    %v6527 = vunpack.c.l.b16 %v5502
    %v6528 = vunpack.c.l.b16 %v5503
    %v6529 = vunpack.c.l.b16 %v5504
    %v6530 = vunpack.c.l.b16 %v5505
    %v6531 = vunpack.c.l.b16 %v5506
    %v6532 = vunpack.c.l.b16 %v5507
    %v6533 = vunpack.c.l.b16 %v5508
    %v6534 = vunpack.c.l.b16 %v5509
    %v6535 = vunpack.c.l.b16 %v5510
    %v6536 = vunpack.c.l.b16 %v5511
    %v6537 = vunpack.c.l.b16 %v5512
    %v6538 = vunpack.c.l.b16 %v5513
    %v6539 = vunpack.c.l.b16 %v5514
    %v6540 = vunpack.c.l.b16 %v5515
    %v6541 = vunpack.c.l.b16 %v5516
    %v6542 = vunpack.c.l.b16 %v5517
    %v6543 = vunpack.c.l.b16 %v5518
    %v6544 = vunpack.c.l.b16 %v5519
    %v6545 = vunpack.c.l.b16 %v5520
    %v6546 = vunpack.c.l.b16 %v5521
    %v6547 = vunpack.c.l.b16 %v5522
    %v6548 = vunpack.c.l.b16 %v5523
    %v6549 = vunpack.c.l.b16 %v5524
    %v6550 = vunpack.c.l.b16 %v5525
    %v6551 = vunpack.c.l.b16 %v5526
    %v6552 = vunpack.c.l.b16 %v5527
    %v6553 = vunpack.c.l.b16 %v5528
    %v6554 = vunpack.c.l.b16 %v5529
    %v6555 = vunpack.c.l.b16 %v5530
    %v6556 = vunpack.c.l.b16 %v5531
    %v6557 = vunpack.c.l.b16 %v5532
    %v6558 = vunpack.c.l.b16 %v5533
    %v6559 = vunpack.c.l.b16 %v5534
    %v6560 = vunpack.c.l.b16 %v5535
    %v6561 = vunpack.c.l.b16 %v5536
    %v6562 = vunpack.c.l.b16 %v5537
    %v6563 = vunpack.c.l.b16 %v5538
    %v6564 = vunpack.c.l.b16 %v5539
    %v6565 = vunpack.c.l.b16 %v5540
    %v6566 = vunpack.c.l.b16 %v5541
    %v6567 = vunpack.c.l.b16 %v5542
    %v6568 = vunpack.c.l.b16 %v5543
    %v6569 = vunpack.c.l.b16 %v5544
    %v6570 = vunpack.c.l.b16 %v5545
    %v6571 = vunpack.c.l.b16 %v5546
    %v6572 = vunpack.c.l.b16 %v5547
    %v6573 = vunpack.c.l.b16 %v5548
    %v6574 = vunpack.c.l.b16 %v5549
    %v6575 = vunpack.c.l.b16 %v5550
    %v6576 = vunpack.c.l.b16 %v5551
    %v6577 = vunpack.c.l.b16 %v5552
    %v6578 = vunpack.c.l.b16 %v5553
    %v6579 = vunpack.c.l.b16 %v5554
    %v6580 = vunpack.c.l.b16 %v5555
    %v6581 = vunpack.c.l.b16 %v5556
    %v6582 = vunpack.c.l.b16 %v5557
    %v6583 = vunpack.c.l.b16 %v5558
    %v6584 = vunpack.c.l.b16 %v5559
    %v6585 = vunpack.c.l.b16 %v5560
    %v6586 = vunpack.c.l.b16 %v5561
    %v6587 = vunpack.c.l.b16 %v5562
    %v6588 = vunpack.c.l.b16 %v5563
    %v6589 = vunpack.c.l.b16 %v5564
    %v6590 = vunpack.c.l.b16 %v5565
    %v6591 = vunpack.c.l.b16 %v5566
    %v6592 = vunpack.c.l.b16 %v5567
    %v6593 = vunpack.c.l.b16 %v5568
    %v6594 = vunpack.c.l.b16 %v5569
    %v6595 = vunpack.c.l.b16 %v5570
    %v6596 = vunpack.c.l.b16 %v5571
    %v6597 = vunpack.c.l.b16 %v5572
    %v6598 = vunpack.c.l.b16 %v5573
    %v6599 = vunpack.c.l.b16 %v5574
    %v6600 = vunpack.c.l.b16 %v5575
    %v6601 = vunpack.c.l.b16 %v5576
    %v6602 = vunpack.c.l.b16 %v5577
    %v6603 = vunpack.c.l.b16 %v5578
    %v6604 = vunpack.c.l.b16 %v5579
    %v6605 = vunpack.c.l.b16 %v5580
    %v6606 = vunpack.c.l.b16 %v5581
    %v6607 = vunpack.c.l.b16 %v5582
    %v6608 = vunpack.c.l.b16 %v5583
    %v6609 = vunpack.c.l.b16 %v5584
    %v6610 = vunpack.c.l.b16 %v5585
    %v6611 = vunpack.c.l.b16 %v5586
    %v6612 = vpack.c.b16 %v6101, %v6100
    %v6613 = vpack.c.b16 %v6103, %v6102
    %v6614 = vpack.c.b16 %v6105, %v6104
    %v6615 = vpack.c.b16 %v6107, %v6106
    %v6616 = vpack.c.b16 %v6109, %v6108
    %v6617 = vpack.c.b16 %v6111, %v6110
    %v6618 = vpack.c.b16 %v6113, %v6112
    %v6619 = vpack.c.b16 %v6115, %v6114
    %v6620 = vpack.c.b16 %v6117, %v6116
    %v6621 = vpack.c.b16 %v6119, %v6118
    %v6622 = vpack.c.b16 %v6121, %v6120
    %v6623 = vpack.c.b16 %v6123, %v6122
    %v6624 = vpack.c.b16 %v6125, %v6124
    %v6625 = vpack.c.b16 %v6127, %v6126
    %v6626 = vpack.c.b16 %v6129, %v6128
    %v6627 = vpack.c.b16 %v6131, %v6130
    %v6628 = vpack.c.b16 %v6133, %v6132
    %v6629 = vpack.c.b16 %v6135, %v6134
    %v6630 = vpack.c.b16 %v6137, %v6136
    %v6631 = vpack.c.b16 %v6139, %v6138
    %v6632 = vpack.c.b16 %v6141, %v6140
    %v6633 = vpack.c.b16 %v6143, %v6142
    %v6634 = vpack.c.b16 %v6145, %v6144
    %v6635 = vpack.c.b16 %v6147, %v6146
    %v6636 = vpack.c.b16 %v6149, %v6148
    %v6637 = vpack.c.b16 %v6151, %v6150
    %v6638 = vpack.c.b16 %v6153, %v6152
    %v6639 = vpack.c.b16 %v6155, %v6154
    %v6640 = vpack.c.b16 %v6157, %v6156
    %v6641 = vpack.c.b16 %v6159, %v6158
    %v6642 = vpack.c.b16 %v6161, %v6160
    %v6643 = vpack.c.b16 %v6163, %v6162
    %v6644 = vpack.c.b16 %v6165, %v6164
    %v6645 = vpack.c.b16 %v6167, %v6166
    %v6646 = vpack.c.b16 %v6169, %v6168
    %v6647 = vpack.c.b16 %v6171, %v6170
    %v6648 = vpack.c.b16 %v6173, %v6172
    %v6649 = vpack.c.b16 %v6175, %v6174
    %v6650 = vpack.c.b16 %v6177, %v6176
    %v6651 = vpack.c.b16 %v6179, %v6178
    %v6652 = vpack.c.b16 %v6181, %v6180
    %v6653 = vpack.c.b16 %v6183, %v6182
    %v6654 = vpack.c.b16 %v6185, %v6184
    %v6655 = vpack.c.b16 %v6187, %v6186
    %v6656 = vpack.c.b16 %v6189, %v6188
    %v6657 = vpack.c.b16 %v6191, %v6190
    %v6658 = vpack.c.b16 %v6193, %v6192
    %v6659 = vpack.c.b16 %v6195, %v6194
    %v6660 = vpack.c.b16 %v6197, %v6196
    %v6661 = vpack.c.b16 %v6199, %v6198
    %v6662 = vpack.c.b16 %v6201, %v6200
    %v6663 = vpack.c.b16 %v6203, %v6202
    %v6664 = vpack.c.b16 %v6205, %v6204
    %v6665 = vpack.c.b16 %v6207, %v6206
    %v6666 = vpack.c.b16 %v6209, %v6208
    %v6667 = vpack.c.b16 %v6211, %v6210
    %v6668 = vpack.c.b16 %v6213, %v6212
    %v6669 = vpack.c.b16 %v6215, %v6214
    %v6670 = vpack.c.b16 %v6217, %v6216
    %v6671 = vpack.c.b16 %v6219, %v6218
    %v6672 = vpack.c.b16 %v6221, %v6220
    %v6673 = vpack.c.b16 %v6223, %v6222
    %v6674 = vpack.c.b16 %v6225, %v6224
    %v6675 = vpack.c.b16 %v6227, %v6226
    %v6676 = vpack.c.b16 %v6229, %v6228
    %v6677 = vpack.c.b16 %v6231, %v6230
    %v6678 = vpack.c.b16 %v6233, %v6232
    %v6679 = vpack.c.b16 %v6235, %v6234
    %v6680 = vpack.c.b16 %v6237, %v6236
    %v6681 = vpack.c.b16 %v6239, %v6238
    %v6682 = vpack.c.b16 %v6241, %v6240
    %v6683 = vpack.c.b16 %v6243, %v6242
    %v6684 = vpack.c.b16 %v6245, %v6244
    %v6685 = vpack.c.b16 %v6247, %v6246
    %v6686 = vpack.c.b16 %v6249, %v6248
    %v6687 = vpack.c.b16 %v6251, %v6250
    %v6688 = vpack.c.b16 %v6253, %v6252
    %v6689 = vpack.c.b16 %v6255, %v6254
    %v6690 = vpack.c.b16 %v6257, %v6256
    %v6691 = vpack.c.b16 %v6259, %v6258
    %v6692 = vpack.c.b16 %v6261, %v6260
    %v6693 = vpack.c.b16 %v6263, %v6262
    %v6694 = vpack.c.b16 %v6265, %v6264
    %v6695 = vpack.c.b16 %v6267, %v6266
    %v6696 = vpack.c.b16 %v6269, %v6268
    %v6697 = vpack.c.b16 %v6271, %v6270
    %v6698 = vpack.c.b16 %v6273, %v6272
    %v6699 = vpack.c.b16 %v6275, %v6274
    %v6700 = vpack.c.b16 %v6277, %v6276
    %v6701 = vpack.c.b16 %v6279, %v6278
    %v6702 = vpack.c.b16 %v6281, %v6280
    %v6703 = vpack.c.b16 %v6283, %v6282
    %v6704 = vpack.c.b16 %v6285, %v6284
    %v6705 = vpack.c.b16 %v6287, %v6286
    %v6706 = vpack.c.b16 %v6289, %v6288
    %v6707 = vpack.c.b16 %v6291, %v6290
    %v6708 = vpack.c.b16 %v6293, %v6292
    %v6709 = vpack.c.b16 %v6295, %v6294
    %v6710 = vpack.c.b16 %v6297, %v6296
    %v6711 = vpack.c.b16 %v6299, %v6298
    %v6712 = vpack.c.b16 %v6301, %v6300
    %v6713 = vpack.c.b16 %v6303, %v6302
    %v6714 = vpack.c.b16 %v6305, %v6304
    %v6715 = vpack.c.b16 %v6307, %v6306
    %v6716 = vpack.c.b16 %v6309, %v6308
    %v6717 = vpack.c.b16 %v6311, %v6310
    %v6718 = vpack.c.b16 %v6313, %v6312
    %v6719 = vpack.c.b16 %v6315, %v6314
    %v6720 = vpack.c.b16 %v6317, %v6316
    %v6721 = vpack.c.b16 %v6319, %v6318
    %v6722 = vpack.c.b16 %v6321, %v6320
    %v6723 = vpack.c.b16 %v6323, %v6322
    %v6724 = vpack.c.b16 %v6325, %v6324
    %v6725 = vpack.c.b16 %v6327, %v6326
    %v6726 = vpack.c.b16 %v6329, %v6328
    %v6727 = vpack.c.b16 %v6331, %v6330
    %v6728 = vpack.c.b16 %v6333, %v6332
    %v6729 = vpack.c.b16 %v6335, %v6334
    %v6730 = vpack.c.b16 %v6337, %v6336
    %v6731 = vpack.c.b16 %v6339, %v6338
    %v6732 = vpack.c.b16 %v6341, %v6340
    %v6733 = vpack.c.b16 %v6343, %v6342
    %v6734 = vpack.c.b16 %v6345, %v6344
    %v6735 = vpack.c.b16 %v6347, %v6346
    %v6736 = vpack.c.b16 %v6349, %v6348
    %v6737 = vpack.c.b16 %v6351, %v6350
    %v6738 = vpack.c.b16 %v6353, %v6352
    %v6739 = vpack.c.b16 %v6355, %v6354
    %v6740 = vpack.c.b16 %v6357, %v6356
    %v6741 = vpack.c.b16 %v6359, %v6358
    %v6742 = vpack.c.b16 %v6361, %v6360
    %v6743 = vpack.c.b16 %v6363, %v6362
    %v6744 = vpack.c.b16 %v6365, %v6364
    %v6745 = vpack.c.b16 %v6367, %v6366
    %v6746 = vpack.c.b16 %v6369, %v6368
    %v6747 = vpack.c.b16 %v6371, %v6370
    %v6748 = vpack.c.b16 %v6373, %v6372
    %v6749 = vpack.c.b16 %v6375, %v6374
    %v6750 = vpack.c.b16 %v6377, %v6376
    %v6751 = vpack.c.b16 %v6379, %v6378
    %v6752 = vpack.c.b16 %v6381, %v6380
    %v6753 = vpack.c.b16 %v6383, %v6382
    %v6754 = vpack.c.b16 %v6385, %v6384
    %v6755 = vpack.c.b16 %v6387, %v6386
    %v6756 = vpack.c.b16 %v6389, %v6388
    %v6757 = vpack.c.b16 %v6391, %v6390
    %v6758 = vpack.c.b16 %v6393, %v6392
    %v6759 = vpack.c.b16 %v6395, %v6394
    %v6760 = vpack.c.b16 %v6397, %v6396
    %v6761 = vpack.c.b16 %v6399, %v6398
    %v6762 = vpack.c.b16 %v6401, %v6400
    %v6763 = vpack.c.b16 %v6403, %v6402
    %v6764 = vpack.c.b16 %v6405, %v6404
    %v6765 = vpack.c.b16 %v6407, %v6406
    %v6766 = vpack.c.b16 %v6409, %v6408
    %v6767 = vpack.c.b16 %v6411, %v6410
    %v6768 = vpack.c.b16 %v6413, %v6412
    %v6769 = vpack.c.b16 %v6415, %v6414
    %v6770 = vpack.c.b16 %v6417, %v6416
    %v6771 = vpack.c.b16 %v6419, %v6418
    %v6772 = vpack.c.b16 %v6421, %v6420
    %v6773 = vpack.c.b16 %v6423, %v6422
    %v6774 = vpack.c.b16 %v6425, %v6424
    %v6775 = vpack.c.b16 %v6427, %v6426
    %v6776 = vpack.c.b16 %v6429, %v6428
    %v6777 = vpack.c.b16 %v6431, %v6430
    %v6778 = vpack.c.b16 %v6433, %v6432
    %v6779 = vpack.c.b16 %v6435, %v6434
    %v6780 = vpack.c.b16 %v6437, %v6436
    %v6781 = vpack.c.b16 %v6439, %v6438
    %v6782 = vpack.c.b16 %v6441, %v6440
    %v6783 = vpack.c.b16 %v6443, %v6442
    %v6784 = vpack.c.b16 %v6445, %v6444
    %v6785 = vpack.c.b16 %v6447, %v6446
    %v6786 = vpack.c.b16 %v6449, %v6448
    %v6787 = vpack.c.b16 %v6451, %v6450
    %v6788 = vpack.c.b16 %v6453, %v6452
    %v6789 = vpack.c.b16 %v6455, %v6454
    %v6790 = vpack.c.b16 %v6457, %v6456
    %v6791 = vpack.c.b16 %v6459, %v6458
    %v6792 = vpack.c.b16 %v6461, %v6460
    %v6793 = vpack.c.b16 %v6463, %v6462
    %v6794 = vpack.c.b16 %v6465, %v6464
    %v6795 = vpack.c.b16 %v6467, %v6466
    %v6796 = vpack.c.b16 %v6469, %v6468
    %v6797 = vpack.c.b16 %v6471, %v6470
    %v6798 = vpack.c.b16 %v6473, %v6472
    %v6799 = vpack.c.b16 %v6475, %v6474
    %v6800 = vpack.c.b16 %v6477, %v6476
    %v6801 = vpack.c.b16 %v6479, %v6478
    %v6802 = vpack.c.b16 %v6481, %v6480
    %v6803 = vpack.c.b16 %v6483, %v6482
    %v6804 = vpack.c.b16 %v6485, %v6484
    %v6805 = vpack.c.b16 %v6487, %v6486
    %v6806 = vpack.c.b16 %v6489, %v6488
    %v6807 = vpack.c.b16 %v6491, %v6490
    %v6808 = vpack.c.b16 %v6493, %v6492
    %v6809 = vpack.c.b16 %v6495, %v6494
    %v6810 = vpack.c.b16 %v6497, %v6496
    %v6811 = vpack.c.b16 %v6499, %v6498
    %v6812 = vpack.c.b16 %v6501, %v6500
    %v6813 = vpack.c.b16 %v6503, %v6502
    %v6814 = vpack.c.b16 %v6505, %v6504
    %v6815 = vpack.c.b16 %v6507, %v6506
    %v6816 = vpack.c.b16 %v6509, %v6508
    %v6817 = vpack.c.b16 %v6511, %v6510
    %v6818 = vpack.c.b16 %v6513, %v6512
    %v6819 = vpack.c.b16 %v6515, %v6514
    %v6820 = vpack.c.b16 %v6517, %v6516
    %v6821 = vpack.c.b16 %v6519, %v6518
    %v6822 = vpack.c.b16 %v6521, %v6520
    %v6823 = vpack.c.b16 %v6523, %v6522
    %v6824 = vpack.c.b16 %v6525, %v6524
    %v6825 = vpack.c.b16 %v6527, %v6526
    %v6826 = vpack.c.b16 %v6529, %v6528
    %v6827 = vpack.c.b16 %v6531, %v6530
    %v6828 = vpack.c.b16 %v6533, %v6532
    %v6829 = vpack.c.b16 %v6535, %v6534
    %v6830 = vpack.c.b16 %v6537, %v6536
    %v6831 = vpack.c.b16 %v6539, %v6538
    %v6832 = vpack.c.b16 %v6541, %v6540
    %v6833 = vpack.c.b16 %v6543, %v6542
    %v6834 = vpack.c.b16 %v6545, %v6544
    %v6835 = vpack.c.b16 %v6547, %v6546
    %v6836 = vpack.c.b16 %v6549, %v6548
    %v6837 = vpack.c.b16 %v6551, %v6550
    %v6838 = vpack.c.b16 %v6553, %v6552
    %v6839 = vpack.c.b16 %v6555, %v6554
    %v6840 = vpack.c.b16 %v6557, %v6556
    %v6841 = vpack.c.b16 %v6559, %v6558
    %v6842 = vpack.c.b16 %v6561, %v6560
    %v6843 = vpack.c.b16 %v6563, %v6562
    %v6844 = vpack.c.b16 %v6565, %v6564
    %v6845 = vpack.c.b16 %v6567, %v6566
    %v6846 = vpack.c.b16 %v6569, %v6568
    %v6847 = vpack.c.b16 %v6571, %v6570
    %v6848 = vpack.c.b16 %v6573, %v6572
    %v6849 = vpack.c.b16 %v6575, %v6574
    %v6850 = vpack.c.b16 %v6577, %v6576
    %v6851 = vpack.c.b16 %v6579, %v6578
    %v6852 = vpack.c.b16 %v6581, %v6580
    %v6853 = vpack.c.b16 %v6583, %v6582
    %v6854 = vpack.c.b16 %v6585, %v6584
    %v6855 = vpack.c.b16 %v6587, %v6586
    %v6856 = vpack.c.b16 %v6589, %v6588
    %v6857 = vpack.c.b16 %v6591, %v6590
    %v6858 = vpack.c.b16 %v6593, %v6592
    %v6859 = vpack.c.b16 %v6595, %v6594
    %v6860 = vpack.c.b16 %v6597, %v6596
    %v6861 = vpack.c.b16 %v6599, %v6598
    %v6862 = vpack.c.b16 %v6601, %v6600
    %v6863 = vpack.c.b16 %v6603, %v6602
    %v6864 = vpack.c.b16 %v6605, %v6604
    %v6865 = vpack.c.b16 %v6607, %v6606
    %v6866 = vpack.c.b16 %v6609, %v6608
    %v6867 = vpack.c.b16 %v6611, %v6610
    %7124 = vmatprep.subr.bf16.mxu0 0
    %7125 = vmatpush1.bf16.msra.mxu0 %v6612
    %7126 = vmatprep.subr.bf16.mxu0 0
    %7127 = vmatpush1.bf16.msra.mxu0 %v6613
    %7128 = vmatprep.subr.bf16.mxu0 0
    %7129 = vmatpush1.bf16.msra.mxu0 %v6614
    %7130 = vmatprep.subr.bf16.mxu0 0
    %7131 = vmatpush1.bf16.msra.mxu0 %v6615
    %7132 = vmatprep.subr.bf16.mxu0 0
    %7133 = vmatpush1.bf16.msra.mxu0 %v6616
    %7134 = vmatprep.subr.bf16.mxu0 0
    %7135 = vmatpush1.bf16.msra.mxu0 %v6617
    %7136 = vmatprep.subr.bf16.mxu0 0
    %7137 = vmatpush1.bf16.msra.mxu0 %v6618
    %7138 = vmatprep.subr.bf16.mxu0 0
    %7139 = vmatpush1.bf16.msra.mxu0 %v6619
    %7140 = vmatprep.subr.bf16.mxu0 0
    %7141 = vmatpush1.bf16.msra.mxu0 %v6620
    %7142 = vmatprep.subr.bf16.mxu0 0
    %7143 = vmatpush1.bf16.msra.mxu0 %v6621
    %7144 = vmatprep.subr.bf16.mxu0 0
    %7145 = vmatpush1.bf16.msra.mxu0 %v6622
    %7146 = vmatprep.subr.bf16.mxu0 0
    %7147 = vmatpush1.bf16.msra.mxu0 %v6623
    %7148 = vmatprep.subr.bf16.mxu0 0
    %7149 = vmatpush1.bf16.msra.mxu0 %v6624
    %7150 = vmatprep.subr.bf16.mxu0 0
    %7151 = vmatpush1.bf16.msra.mxu0 %v6625
    %7152 = vmatprep.subr.bf16.mxu0 0
    %7153 = vmatpush1.bf16.msra.mxu0 %v6626
    %7154 = vmatprep.subr.bf16.mxu0 0
    %7155 = vmatpush1.bf16.msra.mxu0 %v6627
    %7156 = vmatprep.mubr.bf16.mxu0 %v5044
    %7157 = vmatmul.mubr.bf16.gmra.mrb[0].mxu0 %v5043
    %v7158 = vpop.f32.mrb[0].mxu0
    %v7159 = vadd.f32 %v5587, %v7158
    %v7160 = vpop.f32.mrb[0].mxu0
    %v7161 = vpop.f32.mrb[0].mxu0
    %v7162 = vpop.f32.mrb[0].mxu0
    %7163 = vdwg.mxu0
    %7164 = vmatprep.subr.bf16.mxu0 0
    %7165 = vmatpush1.bf16.msra.mxu0 %v6628
    %7166 = vmatprep.subr.bf16.mxu0 0
    %7167 = vmatpush1.bf16.msra.mxu0 %v6629
    %7168 = vmatprep.subr.bf16.mxu0 0
    %7169 = vmatpush1.bf16.msra.mxu0 %v6630
    %7170 = vmatprep.subr.bf16.mxu0 0
    %7171 = vmatpush1.bf16.msra.mxu0 %v6631
    %7172 = vmatprep.subr.bf16.mxu0 0
    %7173 = vmatpush1.bf16.msra.mxu0 %v6632
    %7174 = vmatprep.subr.bf16.mxu0 0
    %7175 = vmatpush1.bf16.msra.mxu0 %v6633
    %7176 = vmatprep.subr.bf16.mxu0 0
    %7177 = vmatpush1.bf16.msra.mxu0 %v6634
    %7178 = vmatprep.subr.bf16.mxu0 0
    %7179 = vmatpush1.bf16.msra.mxu0 %v6635
    %7180 = vmatprep.subr.bf16.mxu0 0
    %7181 = vmatpush1.bf16.msra.mxu0 %v6636
    %7182 = vmatprep.subr.bf16.mxu0 0
    %7183 = vmatpush1.bf16.msra.mxu0 %v6637
    %7184 = vmatprep.subr.bf16.mxu0 0
    %7185 = vmatpush1.bf16.msra.mxu0 %v6638
    %7186 = vmatprep.subr.bf16.mxu0 0
    %7187 = vmatpush1.bf16.msra.mxu0 %v6639
    %7188 = vmatprep.subr.bf16.mxu0 0
    %7189 = vmatpush1.bf16.msra.mxu0 %v6640
    %7190 = vmatprep.subr.bf16.mxu0 0
    %7191 = vmatpush1.bf16.msra.mxu0 %v6641
    %7192 = vmatprep.subr.bf16.mxu0 0
    %7193 = vmatpush1.bf16.msra.mxu0 %v6642
    %7194 = vmatprep.subr.bf16.mxu0 0
    %7195 = vmatpush1.bf16.msra.mxu0 %v6643
    %7196 = vmatprep.mubr.bf16.mxu0 %v5046
    %7197 = vmatmul.mubr.bf16.gmra.mrb[0].mxu0 %v5045
    %v7198 = vpop.f32.mrb[0].mxu0
    %v7199 = vadd.f32 %v7159, %v7198
    %v7200 = vpop.f32.mrb[0].mxu0
    %v7201 = vpop.f32.mrb[0].mxu0
    %v7202 = vpop.f32.mrb[0].mxu0
    %7203 = vdwg.mxu0
    %7204 = vmatprep.subr.bf16.mxu0 0
    %7205 = vmatpush1.bf16.msra.mxu0 %v6644
    %7206 = vmatprep.subr.bf16.mxu0 0
    %7207 = vmatpush1.bf16.msra.mxu0 %v6645
    %7208 = vmatprep.subr.bf16.mxu0 0
    %7209 = vmatpush1.bf16.msra.mxu0 %v6646
    %7210 = vmatprep.subr.bf16.mxu0 0
    %7211 = vmatpush1.bf16.msra.mxu0 %v6647
    %7212 = vmatprep.subr.bf16.mxu0 0
    %7213 = vmatpush1.bf16.msra.mxu0 %v6648
    %7214 = vmatprep.subr.bf16.mxu0 0
    %7215 = vmatpush1.bf16.msra.mxu0 %v6649
    %7216 = vmatprep.subr.bf16.mxu0 0
    %7217 = vmatpush1.bf16.msra.mxu0 %v6650
    %7218 = vmatprep.subr.bf16.mxu0 0
    %7219 = vmatpush1.bf16.msra.mxu0 %v6651
    %7220 = vmatprep.subr.bf16.mxu0 0
    %7221 = vmatpush1.bf16.msra.mxu0 %v6652
    %7222 = vmatprep.subr.bf16.mxu0 0
    %7223 = vmatpush1.bf16.msra.mxu0 %v6653
    %7224 = vmatprep.subr.bf16.mxu0 0
    %7225 = vmatpush1.bf16.msra.mxu0 %v6654
    %7226 = vmatprep.subr.bf16.mxu0 0
    %7227 = vmatpush1.bf16.msra.mxu0 %v6655
    %7228 = vmatprep.subr.bf16.mxu0 0
    %7229 = vmatpush1.bf16.msra.mxu0 %v6656
    %7230 = vmatprep.subr.bf16.mxu0 0
    %7231 = vmatpush1.bf16.msra.mxu0 %v6657
    %7232 = vmatprep.subr.bf16.mxu0 0
    %7233 = vmatpush1.bf16.msra.mxu0 %v6658
    %7234 = vmatprep.subr.bf16.mxu0 0
    %7235 = vmatpush1.bf16.msra.mxu0 %v6659
    %7236 = vmatprep.mubr.bf16.mxu0 %v5048
    %7237 = vmatmul.mubr.bf16.gmra.mrb[0].mxu0 %v5047
    %v7238 = vpop.f32.mrb[0].mxu0
    %v7239 = vadd.f32 %v7199, %v7238
    %v7240 = vpop.f32.mrb[0].mxu0
    %v7241 = vpop.f32.mrb[0].mxu0
    %v7242 = vpop.f32.mrb[0].mxu0
    %7243 = vdwg.mxu0
    %7244 = vmatprep.subr.bf16.mxu0 0
    %7245 = vmatpush1.bf16.msra.mxu0 %v6660
    %7246 = vmatprep.subr.bf16.mxu0 0
    %7247 = vmatpush1.bf16.msra.mxu0 %v6661
    %7248 = vmatprep.subr.bf16.mxu0 0
    %7249 = vmatpush1.bf16.msra.mxu0 %v6662
    %7250 = vmatprep.subr.bf16.mxu0 0
    %7251 = vmatpush1.bf16.msra.mxu0 %v6663
    %7252 = vmatprep.subr.bf16.mxu0 0
    %7253 = vmatpush1.bf16.msra.mxu0 %v6664
    %7254 = vmatprep.subr.bf16.mxu0 0
    %7255 = vmatpush1.bf16.msra.mxu0 %v6665
    %7256 = vmatprep.subr.bf16.mxu0 0
    %7257 = vmatpush1.bf16.msra.mxu0 %v6666
    %7258 = vmatprep.subr.bf16.mxu0 0
    %7259 = vmatpush1.bf16.msra.mxu0 %v6667
    %7260 = vmatprep.subr.bf16.mxu0 0
    %7261 = vmatpush1.bf16.msra.mxu0 %v6668
    %7262 = vmatprep.subr.bf16.mxu0 0
    %7263 = vmatpush1.bf16.msra.mxu0 %v6669
    %7264 = vmatprep.subr.bf16.mxu0 0
    %7265 = vmatpush1.bf16.msra.mxu0 %v6670
    %7266 = vmatprep.subr.bf16.mxu0 0
    %7267 = vmatpush1.bf16.msra.mxu0 %v6671
    %7268 = vmatprep.subr.bf16.mxu0 0
    %7269 = vmatpush1.bf16.msra.mxu0 %v6672
    %7270 = vmatprep.subr.bf16.mxu0 0
    %7271 = vmatpush1.bf16.msra.mxu0 %v6673
    %7272 = vmatprep.subr.bf16.mxu0 0
    %7273 = vmatpush1.bf16.msra.mxu0 %v6674
    %7274 = vmatprep.subr.bf16.mxu0 0
    %7275 = vmatpush1.bf16.msra.mxu0 %v6675
    %7276 = vmatprep.mubr.bf16.mxu0 %v5050
    %7277 = vmatmul.mubr.bf16.gmra.mrb[0].mxu0 %v5049
    %v7278 = vpop.f32.mrb[0].mxu0
    %v7279 = vadd.f32 %v7239, %v7278
    %v7280 = vpop.f32.mrb[0].mxu0
    %v7281 = vpop.f32.mrb[0].mxu0
    %v7282 = vpop.f32.mrb[0].mxu0
    %7283 = vdwg.mxu0
    %7284 = vmatprep.subr.bf16.mxu0 0
    %7285 = vmatpush1.bf16.msra.mxu0 %v6676
    %7286 = vmatprep.subr.bf16.mxu0 0
    %7287 = vmatpush1.bf16.msra.mxu0 %v6677
    %7288 = vmatprep.subr.bf16.mxu0 0
    %7289 = vmatpush1.bf16.msra.mxu0 %v6678
    %7290 = vmatprep.subr.bf16.mxu0 0
    %7291 = vmatpush1.bf16.msra.mxu0 %v6679
    %7292 = vmatprep.subr.bf16.mxu0 0
    %7293 = vmatpush1.bf16.msra.mxu0 %v6680
    %7294 = vmatprep.subr.bf16.mxu0 0
    %7295 = vmatpush1.bf16.msra.mxu0 %v6681
    %7296 = vmatprep.subr.bf16.mxu0 0
    %7297 = vmatpush1.bf16.msra.mxu0 %v6682
    %7298 = vmatprep.subr.bf16.mxu0 0
    %7299 = vmatpush1.bf16.msra.mxu0 %v6683
    %7300 = vmatprep.subr.bf16.mxu0 0
    %7301 = vmatpush1.bf16.msra.mxu0 %v6684
    %7302 = vmatprep.subr.bf16.mxu0 0
    %7303 = vmatpush1.bf16.msra.mxu0 %v6685
    %7304 = vmatprep.subr.bf16.mxu0 0
    %7305 = vmatpush1.bf16.msra.mxu0 %v6686
    %7306 = vmatprep.subr.bf16.mxu0 0
    %7307 = vmatpush1.bf16.msra.mxu0 %v6687
    %7308 = vmatprep.subr.bf16.mxu0 0
    %7309 = vmatpush1.bf16.msra.mxu0 %v6688
    %7310 = vmatprep.subr.bf16.mxu0 0
    %7311 = vmatpush1.bf16.msra.mxu0 %v6689
    %7312 = vmatprep.subr.bf16.mxu0 0
    %7313 = vmatpush1.bf16.msra.mxu0 %v6690
    %7314 = vmatprep.subr.bf16.mxu0 0
    %7315 = vmatpush1.bf16.msra.mxu0 %v6691
    %7316 = vmatprep.mubr.bf16.mxu0 %v5052
    %7317 = vmatmul.mubr.bf16.gmra.mrb[0].mxu0 %v5051
    %v7318 = vpop.f32.mrb[0].mxu0
    %v7319 = vadd.f32 %v7279, %v7318
    %v7320 = vpop.f32.mrb[0].mxu0
    %v7321 = vpop.f32.mrb[0].mxu0
    %v7322 = vpop.f32.mrb[0].mxu0
    %7323 = vdwg.mxu0
    %7324 = vmatprep.subr.bf16.mxu0 0
    %7325 = vmatpush1.bf16.msra.mxu0 %v6692
    %7326 = vmatprep.subr.bf16.mxu0 0
    %7327 = vmatpush1.bf16.msra.mxu0 %v6693
    %7328 = vmatprep.subr.bf16.mxu0 0
    %7329 = vmatpush1.bf16.msra.mxu0 %v6694
    %7330 = vmatprep.subr.bf16.mxu0 0
    %7331 = vmatpush1.bf16.msra.mxu0 %v6695
    %7332 = vmatprep.subr.bf16.mxu0 0
    %7333 = vmatpush1.bf16.msra.mxu0 %v6696
    %7334 = vmatprep.subr.bf16.mxu0 0
    %7335 = vmatpush1.bf16.msra.mxu0 %v6697
    %7336 = vmatprep.subr.bf16.mxu0 0
    %7337 = vmatpush1.bf16.msra.mxu0 %v6698
    %7338 = vmatprep.subr.bf16.mxu0 0
    %7339 = vmatpush1.bf16.msra.mxu0 %v6699
    %7340 = vmatprep.subr.bf16.mxu0 0
    %7341 = vmatpush1.bf16.msra.mxu0 %v6700
    %7342 = vmatprep.subr.bf16.mxu0 0
    %7343 = vmatpush1.bf16.msra.mxu0 %v6701
    %7344 = vmatprep.subr.bf16.mxu0 0
    %7345 = vmatpush1.bf16.msra.mxu0 %v6702
    %7346 = vmatprep.subr.bf16.mxu0 0
    %7347 = vmatpush1.bf16.msra.mxu0 %v6703
    %7348 = vmatprep.subr.bf16.mxu0 0
    %7349 = vmatpush1.bf16.msra.mxu0 %v6704
    %7350 = vmatprep.subr.bf16.mxu0 0
    %7351 = vmatpush1.bf16.msra.mxu0 %v6705
    %7352 = vmatprep.subr.bf16.mxu0 0
    %7353 = vmatpush1.bf16.msra.mxu0 %v6706
    %7354 = vmatprep.subr.bf16.mxu0 0
    %7355 = vmatpush1.bf16.msra.mxu0 %v6707
    %7356 = vmatprep.mubr.bf16.mxu0 %v5054
    %7357 = vmatmul.mubr.bf16.gmra.mrb[0].mxu0 %v5053
    %v7358 = vpop.f32.mrb[0].mxu0
    %v7359 = vadd.f32 %v7319, %v7358
    %v7360 = vpop.f32.mrb[0].mxu0
    %v7361 = vpop.f32.mrb[0].mxu0
    %v7362 = vpop.f32.mrb[0].mxu0
    %7363 = vdwg.mxu0
    %7364 = vmatprep.subr.bf16.mxu0 0
    %7365 = vmatpush1.bf16.msra.mxu0 %v6708
    %7366 = vmatprep.subr.bf16.mxu0 0
    %7367 = vmatpush1.bf16.msra.mxu0 %v6709
    %7368 = vmatprep.subr.bf16.mxu0 0
    %7369 = vmatpush1.bf16.msra.mxu0 %v6710
    %7370 = vmatprep.subr.bf16.mxu0 0
    %7371 = vmatpush1.bf16.msra.mxu0 %v6711
    %7372 = vmatprep.subr.bf16.mxu0 0
    %7373 = vmatpush1.bf16.msra.mxu0 %v6712
    %7374 = vmatprep.subr.bf16.mxu0 0
    %7375 = vmatpush1.bf16.msra.mxu0 %v6713
    %7376 = vmatprep.subr.bf16.mxu0 0
    %7377 = vmatpush1.bf16.msra.mxu0 %v6714
    %7378 = vmatprep.subr.bf16.mxu0 0
    %7379 = vmatpush1.bf16.msra.mxu0 %v6715
    %7380 = vmatprep.subr.bf16.mxu0 0
    %7381 = vmatpush1.bf16.msra.mxu0 %v6716
    %7382 = vmatprep.subr.bf16.mxu0 0
    %7383 = vmatpush1.bf16.msra.mxu0 %v6717
    %7384 = vmatprep.subr.bf16.mxu0 0
    %7385 = vmatpush1.bf16.msra.mxu0 %v6718
    %7386 = vmatprep.subr.bf16.mxu0 0
    %7387 = vmatpush1.bf16.msra.mxu0 %v6719
    %7388 = vmatprep.subr.bf16.mxu0 0
    %7389 = vmatpush1.bf16.msra.mxu0 %v6720
    %7390 = vmatprep.subr.bf16.mxu0 0
    %7391 = vmatpush1.bf16.msra.mxu0 %v6721
    %7392 = vmatprep.subr.bf16.mxu0 0
    %7393 = vmatpush1.bf16.msra.mxu0 %v6722
    %7394 = vmatprep.subr.bf16.mxu0 0
    %7395 = vmatpush1.bf16.msra.mxu0 %v6723
    %7396 = vmatprep.mubr.bf16.mxu0 %v5056
    %7397 = vmatmul.mubr.bf16.gmra.mrb[0].mxu0 %v5055
    %v7398 = vpop.f32.mrb[0].mxu0
    %v7399 = vadd.f32 %v7359, %v7398
    %v7400 = vpop.f32.mrb[0].mxu0
    %v7401 = vpop.f32.mrb[0].mxu0
    %v7402 = vpop.f32.mrb[0].mxu0
    %7403 = vdwg.mxu0
    %7404 = vmatprep.subr.bf16.mxu0 0
    %7405 = vmatpush1.bf16.msra.mxu0 %v6724
    %7406 = vmatprep.subr.bf16.mxu0 0
    %7407 = vmatpush1.bf16.msra.mxu0 %v6725
    %7408 = vmatprep.subr.bf16.mxu0 0
    %7409 = vmatpush1.bf16.msra.mxu0 %v6726
    %7410 = vmatprep.subr.bf16.mxu0 0
    %7411 = vmatpush1.bf16.msra.mxu0 %v6727
    %7412 = vmatprep.subr.bf16.mxu0 0
    %7413 = vmatpush1.bf16.msra.mxu0 %v6728
    %7414 = vmatprep.subr.bf16.mxu0 0
    %7415 = vmatpush1.bf16.msra.mxu0 %v6729
    %7416 = vmatprep.subr.bf16.mxu0 0
    %7417 = vmatpush1.bf16.msra.mxu0 %v6730
    %7418 = vmatprep.subr.bf16.mxu0 0
    %7419 = vmatpush1.bf16.msra.mxu0 %v6731
    %7420 = vmatprep.subr.bf16.mxu0 0
    %7421 = vmatpush1.bf16.msra.mxu0 %v6732
    %7422 = vmatprep.subr.bf16.mxu0 0
    %7423 = vmatpush1.bf16.msra.mxu0 %v6733
    %7424 = vmatprep.subr.bf16.mxu0 0
    %7425 = vmatpush1.bf16.msra.mxu0 %v6734
    %7426 = vmatprep.subr.bf16.mxu0 0
    %7427 = vmatpush1.bf16.msra.mxu0 %v6735
    %7428 = vmatprep.subr.bf16.mxu0 0
    %7429 = vmatpush1.bf16.msra.mxu0 %v6736
    %7430 = vmatprep.subr.bf16.mxu0 0
    %7431 = vmatpush1.bf16.msra.mxu0 %v6737
    %7432 = vmatprep.subr.bf16.mxu0 0
    %7433 = vmatpush1.bf16.msra.mxu0 %v6738
    %7434 = vmatprep.subr.bf16.mxu0 0
    %7435 = vmatpush1.bf16.msra.mxu0 %v6739
    %7436 = vmatprep.mubr.bf16.mxu0 %v5058
    %7437 = vmatmul.mubr.bf16.gmra.mrb[0].mxu0 %v5057
    %v7438 = vpop.f32.mrb[0].mxu0
    %v7439 = vadd.f32 %v7399, %v7438
    %v7440 = vpop.f32.mrb[0].mxu0
    %v7441 = vpop.f32.mrb[0].mxu0
    %v7442 = vpop.f32.mrb[0].mxu0
    %7443 = vdwg.mxu0
    %7444 = vmatprep.subr.bf16.mxu0 0
    %7445 = vmatpush1.bf16.msra.mxu0 %v6740
    %7446 = vmatprep.subr.bf16.mxu0 0
    %7447 = vmatpush1.bf16.msra.mxu0 %v6741
    %7448 = vmatprep.subr.bf16.mxu0 0
    %7449 = vmatpush1.bf16.msra.mxu0 %v6742
    %7450 = vmatprep.subr.bf16.mxu0 0
    %7451 = vmatpush1.bf16.msra.mxu0 %v6743
    %7452 = vmatprep.subr.bf16.mxu0 0
    %7453 = vmatpush1.bf16.msra.mxu0 %v6744
    %7454 = vmatprep.subr.bf16.mxu0 0
    %7455 = vmatpush1.bf16.msra.mxu0 %v6745
    %7456 = vmatprep.subr.bf16.mxu0 0
    %7457 = vmatpush1.bf16.msra.mxu0 %v6746
    %7458 = vmatprep.subr.bf16.mxu0 0
    %7459 = vmatpush1.bf16.msra.mxu0 %v6747
    %7460 = vmatprep.subr.bf16.mxu0 0
    %7461 = vmatpush1.bf16.msra.mxu0 %v6748
    %7462 = vmatprep.subr.bf16.mxu0 0
    %7463 = vmatpush1.bf16.msra.mxu0 %v6749
    %7464 = vmatprep.subr.bf16.mxu0 0
    %7465 = vmatpush1.bf16.msra.mxu0 %v6750
    %7466 = vmatprep.subr.bf16.mxu0 0
    %7467 = vmatpush1.bf16.msra.mxu0 %v6751
    %7468 = vmatprep.subr.bf16.mxu0 0
    %7469 = vmatpush1.bf16.msra.mxu0 %v6752
    %7470 = vmatprep.subr.bf16.mxu0 0
    %7471 = vmatpush1.bf16.msra.mxu0 %v6753
    %7472 = vmatprep.subr.bf16.mxu0 0
    %7473 = vmatpush1.bf16.msra.mxu0 %v6754
    %7474 = vmatprep.subr.bf16.mxu0 0
    %7475 = vmatpush1.bf16.msra.mxu0 %v6755
    %7476 = vmatprep.mubr.bf16.mxu0 %v5060
    %7477 = vmatmul.mubr.bf16.gmra.mrb[0].mxu0 %v5059
    %v7478 = vpop.f32.mrb[0].mxu0
    %v7479 = vadd.f32 %v7439, %v7478
    %v7480 = vpop.f32.mrb[0].mxu0
    %v7481 = vpop.f32.mrb[0].mxu0
    %v7482 = vpop.f32.mrb[0].mxu0
    %7483 = vdwg.mxu0
    %7484 = vmatprep.subr.bf16.mxu0 0
    %7485 = vmatpush1.bf16.msra.mxu0 %v6756
    %7486 = vmatprep.subr.bf16.mxu0 0
    %7487 = vmatpush1.bf16.msra.mxu0 %v6757
    %7488 = vmatprep.subr.bf16.mxu0 0
    %7489 = vmatpush1.bf16.msra.mxu0 %v6758
    %7490 = vmatprep.subr.bf16.mxu0 0
    %7491 = vmatpush1.bf16.msra.mxu0 %v6759
    %7492 = vmatprep.subr.bf16.mxu0 0
    %7493 = vmatpush1.bf16.msra.mxu0 %v6760
    %7494 = vmatprep.subr.bf16.mxu0 0
    %7495 = vmatpush1.bf16.msra.mxu0 %v6761
    %7496 = vmatprep.subr.bf16.mxu0 0
    %7497 = vmatpush1.bf16.msra.mxu0 %v6762
    %7498 = vmatprep.subr.bf16.mxu0 0
    %7499 = vmatpush1.bf16.msra.mxu0 %v6763
    %7500 = vmatprep.subr.bf16.mxu0 0
    %7501 = vmatpush1.bf16.msra.mxu0 %v6764
    %7502 = vmatprep.subr.bf16.mxu0 0
    %7503 = vmatpush1.bf16.msra.mxu0 %v6765
    %7504 = vmatprep.subr.bf16.mxu0 0
    %7505 = vmatpush1.bf16.msra.mxu0 %v6766
    %7506 = vmatprep.subr.bf16.mxu0 0
    %7507 = vmatpush1.bf16.msra.mxu0 %v6767
    %7508 = vmatprep.subr.bf16.mxu0 0
    %7509 = vmatpush1.bf16.msra.mxu0 %v6768
    %7510 = vmatprep.subr.bf16.mxu0 0
    %7511 = vmatpush1.bf16.msra.mxu0 %v6769
    %7512 = vmatprep.subr.bf16.mxu0 0
    %7513 = vmatpush1.bf16.msra.mxu0 %v6770
    %7514 = vmatprep.subr.bf16.mxu0 0
    %7515 = vmatpush1.bf16.msra.mxu0 %v6771
    %7516 = vmatprep.mubr.bf16.mxu0 %v5062
    %7517 = vmatmul.mubr.bf16.gmra.mrb[0].mxu0 %v5061
    %v7518 = vpop.f32.mrb[0].mxu0
    %v7519 = vadd.f32 %v7479, %v7518
    %v7520 = vpop.f32.mrb[0].mxu0
    %v7521 = vpop.f32.mrb[0].mxu0
    %v7522 = vpop.f32.mrb[0].mxu0
    %7523 = vdwg.mxu0
    %7524 = vmatprep.subr.bf16.mxu0 0
    %7525 = vmatpush1.bf16.msra.mxu0 %v6772
    %7526 = vmatprep.subr.bf16.mxu0 0
    %7527 = vmatpush1.bf16.msra.mxu0 %v6773
    %7528 = vmatprep.subr.bf16.mxu0 0
    %7529 = vmatpush1.bf16.msra.mxu0 %v6774
    %7530 = vmatprep.subr.bf16.mxu0 0
    %7531 = vmatpush1.bf16.msra.mxu0 %v6775
    %7532 = vmatprep.subr.bf16.mxu0 0
    %7533 = vmatpush1.bf16.msra.mxu0 %v6776
    %7534 = vmatprep.subr.bf16.mxu0 0
    %7535 = vmatpush1.bf16.msra.mxu0 %v6777
    %7536 = vmatprep.subr.bf16.mxu0 0
    %7537 = vmatpush1.bf16.msra.mxu0 %v6778
    %7538 = vmatprep.subr.bf16.mxu0 0
    %7539 = vmatpush1.bf16.msra.mxu0 %v6779
    %7540 = vmatprep.subr.bf16.mxu0 0
    %7541 = vmatpush1.bf16.msra.mxu0 %v6780
    %7542 = vmatprep.subr.bf16.mxu0 0
    %7543 = vmatpush1.bf16.msra.mxu0 %v6781
    %7544 = vmatprep.subr.bf16.mxu0 0
    %7545 = vmatpush1.bf16.msra.mxu0 %v6782
    %7546 = vmatprep.subr.bf16.mxu0 0
    %7547 = vmatpush1.bf16.msra.mxu0 %v6783
    %7548 = vmatprep.subr.bf16.mxu0 0
    %7549 = vmatpush1.bf16.msra.mxu0 %v6784
    %7550 = vmatprep.subr.bf16.mxu0 0
    %7551 = vmatpush1.bf16.msra.mxu0 %v6785
    %7552 = vmatprep.subr.bf16.mxu0 0
    %7553 = vmatpush1.bf16.msra.mxu0 %v6786
    %7554 = vmatprep.subr.bf16.mxu0 0
    %7555 = vmatpush1.bf16.msra.mxu0 %v6787
    %7556 = vmatprep.mubr.bf16.mxu0 %v5064
    %7557 = vmatmul.mubr.bf16.gmra.mrb[0].mxu0 %v5063
    %v7558 = vpop.f32.mrb[0].mxu0
    %v7559 = vadd.f32 %v7519, %v7558
    %v7560 = vpop.f32.mrb[0].mxu0
    %v7561 = vpop.f32.mrb[0].mxu0
    %v7562 = vpop.f32.mrb[0].mxu0
    %7563 = vdwg.mxu0
    %7564 = vmatprep.subr.bf16.mxu0 0
    %7565 = vmatpush1.bf16.msra.mxu0 %v6788
    %7566 = vmatprep.subr.bf16.mxu0 0
    %7567 = vmatpush1.bf16.msra.mxu0 %v6789
    %7568 = vmatprep.subr.bf16.mxu0 0
    %7569 = vmatpush1.bf16.msra.mxu0 %v6790
    %7570 = vmatprep.subr.bf16.mxu0 0
    %7571 = vmatpush1.bf16.msra.mxu0 %v6791
    %7572 = vmatprep.subr.bf16.mxu0 0
    %7573 = vmatpush1.bf16.msra.mxu0 %v6792
    %7574 = vmatprep.subr.bf16.mxu0 0
    %7575 = vmatpush1.bf16.msra.mxu0 %v6793
    %7576 = vmatprep.subr.bf16.mxu0 0
    %7577 = vmatpush1.bf16.msra.mxu0 %v6794
    %7578 = vmatprep.subr.bf16.mxu0 0
    %7579 = vmatpush1.bf16.msra.mxu0 %v6795
    %7580 = vmatprep.subr.bf16.mxu0 0
    %7581 = vmatpush1.bf16.msra.mxu0 %v6796
    %7582 = vmatprep.subr.bf16.mxu0 0
    %7583 = vmatpush1.bf16.msra.mxu0 %v6797
    %7584 = vmatprep.subr.bf16.mxu0 0
    %7585 = vmatpush1.bf16.msra.mxu0 %v6798
    %7586 = vmatprep.subr.bf16.mxu0 0
    %7587 = vmatpush1.bf16.msra.mxu0 %v6799
    %7588 = vmatprep.subr.bf16.mxu0 0
    %7589 = vmatpush1.bf16.msra.mxu0 %v6800
    %7590 = vmatprep.subr.bf16.mxu0 0
    %7591 = vmatpush1.bf16.msra.mxu0 %v6801
    %7592 = vmatprep.subr.bf16.mxu0 0
    %7593 = vmatpush1.bf16.msra.mxu0 %v6802
    %7594 = vmatprep.subr.bf16.mxu0 0
    %7595 = vmatpush1.bf16.msra.mxu0 %v6803
    %7596 = vmatprep.mubr.bf16.mxu0 %v5066
    %7597 = vmatmul.mubr.bf16.gmra.mrb[0].mxu0 %v5065
    %v7598 = vpop.f32.mrb[0].mxu0
    %v7599 = vadd.f32 %v7559, %v7598
    %v7600 = vpop.f32.mrb[0].mxu0
    %v7601 = vpop.f32.mrb[0].mxu0
    %v7602 = vpop.f32.mrb[0].mxu0
    %7603 = vdwg.mxu0
    %7604 = vmatprep.subr.bf16.mxu0 0
    %7605 = vmatpush1.bf16.msra.mxu0 %v6804
    %7606 = vmatprep.subr.bf16.mxu0 0
    %7607 = vmatpush1.bf16.msra.mxu0 %v6805
    %7608 = vmatprep.subr.bf16.mxu0 0
    %7609 = vmatpush1.bf16.msra.mxu0 %v6806
    %7610 = vmatprep.subr.bf16.mxu0 0
    %7611 = vmatpush1.bf16.msra.mxu0 %v6807
    %7612 = vmatprep.subr.bf16.mxu0 0
    %7613 = vmatpush1.bf16.msra.mxu0 %v6808
    %7614 = vmatprep.subr.bf16.mxu0 0
    %7615 = vmatpush1.bf16.msra.mxu0 %v6809
    %7616 = vmatprep.subr.bf16.mxu0 0
    %7617 = vmatpush1.bf16.msra.mxu0 %v6810
    %7618 = vmatprep.subr.bf16.mxu0 0
    %7619 = vmatpush1.bf16.msra.mxu0 %v6811
    %7620 = vmatprep.subr.bf16.mxu0 0
    %7621 = vmatpush1.bf16.msra.mxu0 %v6812
    %7622 = vmatprep.subr.bf16.mxu0 0
    %7623 = vmatpush1.bf16.msra.mxu0 %v6813
    %7624 = vmatprep.subr.bf16.mxu0 0
    %7625 = vmatpush1.bf16.msra.mxu0 %v6814
    %7626 = vmatprep.subr.bf16.mxu0 0
    %7627 = vmatpush1.bf16.msra.mxu0 %v6815
    %7628 = vmatprep.subr.bf16.mxu0 0
    %7629 = vmatpush1.bf16.msra.mxu0 %v6816
    %7630 = vmatprep.subr.bf16.mxu0 0
    %7631 = vmatpush1.bf16.msra.mxu0 %v6817
    %7632 = vmatprep.subr.bf16.mxu0 0
    %7633 = vmatpush1.bf16.msra.mxu0 %v6818
    %7634 = vmatprep.subr.bf16.mxu0 0
    %7635 = vmatpush1.bf16.msra.mxu0 %v6819
    %7636 = vmatprep.mubr.bf16.mxu0 %v5068
    %7637 = vmatmul.mubr.bf16.gmra.mrb[0].mxu0 %v5067
    %v7638 = vpop.f32.mrb[0].mxu0
    %v7639 = vadd.f32 %v7599, %v7638
    %v7640 = vpop.f32.mrb[0].mxu0
    %v7641 = vpop.f32.mrb[0].mxu0
    %v7642 = vpop.f32.mrb[0].mxu0
    %7643 = vdwg.mxu0
    %7644 = vmatprep.subr.bf16.mxu0 0
    %7645 = vmatpush1.bf16.msra.mxu0 %v6820
    %7646 = vmatprep.subr.bf16.mxu0 0
    %7647 = vmatpush1.bf16.msra.mxu0 %v6821
    %7648 = vmatprep.subr.bf16.mxu0 0
    %7649 = vmatpush1.bf16.msra.mxu0 %v6822
    %7650 = vmatprep.subr.bf16.mxu0 0
    %7651 = vmatpush1.bf16.msra.mxu0 %v6823
    %7652 = vmatprep.subr.bf16.mxu0 0
    %7653 = vmatpush1.bf16.msra.mxu0 %v6824
    %7654 = vmatprep.subr.bf16.mxu0 0
    %7655 = vmatpush1.bf16.msra.mxu0 %v6825
    %7656 = vmatprep.subr.bf16.mxu0 0
    %7657 = vmatpush1.bf16.msra.mxu0 %v6826
    %7658 = vmatprep.subr.bf16.mxu0 0
    %7659 = vmatpush1.bf16.msra.mxu0 %v6827
    %7660 = vmatprep.subr.bf16.mxu0 0
    %7661 = vmatpush1.bf16.msra.mxu0 %v6828
    %7662 = vmatprep.subr.bf16.mxu0 0
    %7663 = vmatpush1.bf16.msra.mxu0 %v6829
    %7664 = vmatprep.subr.bf16.mxu0 0
    %7665 = vmatpush1.bf16.msra.mxu0 %v6830
    %7666 = vmatprep.subr.bf16.mxu0 0
    %7667 = vmatpush1.bf16.msra.mxu0 %v6831
    %7668 = vmatprep.subr.bf16.mxu0 0
    %7669 = vmatpush1.bf16.msra.mxu0 %v6832
    %7670 = vmatprep.subr.bf16.mxu0 0
    %7671 = vmatpush1.bf16.msra.mxu0 %v6833
    %7672 = vmatprep.subr.bf16.mxu0 0
    %7673 = vmatpush1.bf16.msra.mxu0 %v6834
    %7674 = vmatprep.subr.bf16.mxu0 0
    %7675 = vmatpush1.bf16.msra.mxu0 %v6835
    %7676 = vmatprep.mubr.bf16.mxu0 %v5070
    %7677 = vmatmul.mubr.bf16.gmra.mrb[0].mxu0 %v5069
    %v7678 = vpop.f32.mrb[0].mxu0
    %v7679 = vadd.f32 %v7639, %v7678
    %v7680 = vpop.f32.mrb[0].mxu0
    %v7681 = vpop.f32.mrb[0].mxu0
    %v7682 = vpop.f32.mrb[0].mxu0
    %7683 = vdwg.mxu0
    %7684 = vmatprep.subr.bf16.mxu0 0
    %7685 = vmatpush1.bf16.msra.mxu0 %v6836
    %7686 = vmatprep.subr.bf16.mxu0 0
    %7687 = vmatpush1.bf16.msra.mxu0 %v6837
    %7688 = vmatprep.subr.bf16.mxu0 0
    %7689 = vmatpush1.bf16.msra.mxu0 %v6838
    %7690 = vmatprep.subr.bf16.mxu0 0
    %7691 = vmatpush1.bf16.msra.mxu0 %v6839
    %7692 = vmatprep.subr.bf16.mxu0 0
    %7693 = vmatpush1.bf16.msra.mxu0 %v6840
    %7694 = vmatprep.subr.bf16.mxu0 0
    %7695 = vmatpush1.bf16.msra.mxu0 %v6841
    %7696 = vmatprep.subr.bf16.mxu0 0
    %7697 = vmatpush1.bf16.msra.mxu0 %v6842
    %7698 = vmatprep.subr.bf16.mxu0 0
    %7699 = vmatpush1.bf16.msra.mxu0 %v6843
    %7700 = vmatprep.subr.bf16.mxu0 0
    %7701 = vmatpush1.bf16.msra.mxu0 %v6844
    %7702 = vmatprep.subr.bf16.mxu0 0
    %7703 = vmatpush1.bf16.msra.mxu0 %v6845
    %7704 = vmatprep.subr.bf16.mxu0 0
    %7705 = vmatpush1.bf16.msra.mxu0 %v6846
    %7706 = vmatprep.subr.bf16.mxu0 0
    %7707 = vmatpush1.bf16.msra.mxu0 %v6847
    %7708 = vmatprep.subr.bf16.mxu0 0
    %7709 = vmatpush1.bf16.msra.mxu0 %v6848
    %7710 = vmatprep.subr.bf16.mxu0 0
    %7711 = vmatpush1.bf16.msra.mxu0 %v6849
    %7712 = vmatprep.subr.bf16.mxu0 0
    %7713 = vmatpush1.bf16.msra.mxu0 %v6850
    %7714 = vmatprep.subr.bf16.mxu0 0
    %7715 = vmatpush1.bf16.msra.mxu0 %v6851
    %7716 = vmatprep.mubr.bf16.mxu0 %v5072
    %7717 = vmatmul.mubr.bf16.gmra.mrb[0].mxu0 %v5071
    %v7718 = vpop.f32.mrb[0].mxu0
    %v7719 = vadd.f32 %v7679, %v7718
    %v7720 = vpop.f32.mrb[0].mxu0
    %v7721 = vpop.f32.mrb[0].mxu0
    %v7722 = vpop.f32.mrb[0].mxu0
    %7723 = vdwg.mxu0
    %7724 = vmatprep.subr.bf16.mxu0 0
    %7725 = vmatpush1.bf16.msra.mxu0 %v6852
    %7726 = vmatprep.subr.bf16.mxu0 0
    %7727 = vmatpush1.bf16.msra.mxu0 %v6853
    %7728 = vmatprep.subr.bf16.mxu0 0
    %7729 = vmatpush1.bf16.msra.mxu0 %v6854
    %7730 = vmatprep.subr.bf16.mxu0 0
    %7731 = vmatpush1.bf16.msra.mxu0 %v6855
    %7732 = vmatprep.subr.bf16.mxu0 0
    %7733 = vmatpush1.bf16.msra.mxu0 %v6856
    %7734 = vmatprep.subr.bf16.mxu0 0
    %7735 = vmatpush1.bf16.msra.mxu0 %v6857
    %7736 = vmatprep.subr.bf16.mxu0 0
    %7737 = vmatpush1.bf16.msra.mxu0 %v6858
    %7738 = vmatprep.subr.bf16.mxu0 0
    %7739 = vmatpush1.bf16.msra.mxu0 %v6859
    %7740 = vmatprep.subr.bf16.mxu0 0
    %7741 = vmatpush1.bf16.msra.mxu0 %v6860
    %7742 = vmatprep.subr.bf16.mxu0 0
    %7743 = vmatpush1.bf16.msra.mxu0 %v6861
    %7744 = vmatprep.subr.bf16.mxu0 0
    %7745 = vmatpush1.bf16.msra.mxu0 %v6862
    %7746 = vmatprep.subr.bf16.mxu0 0
    %7747 = vmatpush1.bf16.msra.mxu0 %v6863
    %7748 = vmatprep.subr.bf16.mxu0 0
    %7749 = vmatpush1.bf16.msra.mxu0 %v6864
    %7750 = vmatprep.subr.bf16.mxu0 0
    %7751 = vmatpush1.bf16.msra.mxu0 %v6865
    %7752 = vmatprep.subr.bf16.mxu0 0
    %7753 = vmatpush1.bf16.msra.mxu0 %v6866
    %7754 = vmatprep.subr.bf16.mxu0 0
    %7755 = vmatpush1.bf16.msra.mxu0 %v6867
    %7756 = vmatprep.mubr.bf16.mxu0 %v5074
    %7757 = vmatmul.mubr.bf16.gmra.mrb[0].mxu0 %v5073
    %v7758 = vpop.f32.mrb[0].mxu0
    %v7759 = vadd.f32 %v7719, %v7758
    %v7760 = vpop.f32.mrb[0].mxu0
    %v7761 = vpop.f32.mrb[0].mxu0
    %v7762 = vpop.f32.mrb[0].mxu0
    %7763 = vdwg.mxu0
    %v7764 = vmax.f32 %v7759, 0.0
    %v7765 = vld [vmem:[%s12] sm:$0xff]
    %v7766 = vld [vmem:[%s12 + $0x8] sm:$0xff]
    %v7767 = vld [vmem:[%s12 + $0x10] sm:$0xff]
    %v7768 = vld [vmem:[%s12 + $0x18] sm:$0xff]
    %v7769 = vld [vmem:[%s12 + $0x20] sm:$0xff]
    %v7770 = vld [vmem:[%s12 + $0x28] sm:$0xff]
    %v7771 = vld [vmem:[%s12 + $0x30] sm:$0xff]
    %v7772 = vld [vmem:[%s12 + $0x38] sm:$0xff]
    %v7773 = vld [vmem:[%s12 + $0x40] sm:$0xff]
    %v7774 = vld [vmem:[%s12 + $0x48] sm:$0xff]
    %v7775 = vld [vmem:[%s12 + $0x50] sm:$0xff]
    %v7776 = vld [vmem:[%s12 + $0x58] sm:$0xff]
    %v7777 = vld [vmem:[%s12 + $0x60] sm:$0xff]
    %v7778 = vld [vmem:[%s12 + $0x68] sm:$0xff]
    %v7779 = vld [vmem:[%s12 + $0x70] sm:$0xff]
    %v7780 = vld [vmem:[%s12 + $0x78] sm:$0xff]
    %v7781 = vld [vmem:[%s13] sm:$0x1]
    %7782 = vmatprep.subr.mxu0 0.0
    %7783 = vmatpush1.msra.mxu0 %v7765
    %7784 = vmatprep.subr.mxu0 0.0
    %7785 = vmatpush1.msra.mxu0 %v7766
    %7786 = vmatprep.subr.mxu0 0.0
    %7787 = vmatpush1.msra.mxu0 %v7767
    %7788 = vmatprep.subr.mxu0 0.0
    %7789 = vmatpush1.msra.mxu0 %v7768
    %7790 = vmatprep.subr.mxu0 0.0
    %7791 = vmatpush1.msra.mxu0 %v7769
    %7792 = vmatprep.subr.mxu0 0.0
    %7793 = vmatpush1.msra.mxu0 %v7770
    %7794 = vmatprep.subr.mxu0 0.0
    %7795 = vmatpush1.msra.mxu0 %v7771
    %7796 = vmatprep.subr.mxu0 0.0
    %7797 = vmatpush1.msra.mxu0 %v7772
    %7798 = vmatprep.subr.mxu0 0.0
    %7799 = vmatpush1.msra.mxu0 %v7773
    %7800 = vmatprep.subr.mxu0 0.0
    %7801 = vmatpush1.msra.mxu0 %v7774
    %7802 = vmatprep.subr.mxu0 0.0
    %7803 = vmatpush1.msra.mxu0 %v7775
    %7804 = vmatprep.subr.mxu0 0.0
    %7805 = vmatpush1.msra.mxu0 %v7776
    %7806 = vmatprep.subr.mxu0 0.0
    %7807 = vmatpush1.msra.mxu0 %v7777
    %7808 = vmatprep.subr.mxu0 0.0
    %7809 = vmatpush1.msra.mxu0 %v7778
    %7810 = vmatprep.subr.mxu0 0.0
    %7811 = vmatpush1.msra.mxu0 %v7779
    %7812 = vmatprep.subr.mxu0 0.0
    %7813 = vmatpush1.msra.mxu0 %v7780
    %7814 = vmatprep.subr.mxu0 0.0
    %7815 = vmatpush1.msra.mxu0 0.0
    %7816 = vmatprep.subr.mxu0 0.0
    %7817 = vmatpush1.msra.mxu0 0.0
    %7818 = vmatprep.subr.mxu0 0.0
    %7819 = vmatpush1.msra.mxu0 0.0
    %7820 = vmatprep.subr.mxu0 0.0
    %7821 = vmatpush1.msra.mxu0 0.0
    %7822 = vmatprep.subr.mxu0 0.0
    %7823 = vmatpush1.msra.mxu0 0.0
    %7824 = vmatprep.subr.mxu0 0.0
    %7825 = vmatpush1.msra.mxu0 0.0
    %7826 = vmatprep.subr.mxu0 0.0
    %7827 = vmatpush1.msra.mxu0 0.0
    %7828 = vmatprep.subr.mxu0 0.0
    %7829 = vmatpush1.msra.mxu0 0.0
    %7830 = vmatprep.subr.mxu0 0.0
    %7831 = vmatpush1.msra.mxu0 0.0
    %7832 = vmatprep.subr.mxu0 0.0
    %7833 = vmatpush1.msra.mxu0 0.0
    %7834 = vmatprep.subr.mxu0 0.0
    %7835 = vmatpush1.msra.mxu0 0.0
    %7836 = vmatprep.subr.mxu0 0.0
    %7837 = vmatpush1.msra.mxu0 0.0
    %7838 = vmatprep.subr.mxu0 0.0
    %7839 = vmatpush1.msra.mxu0 0.0
    %7840 = vmatprep.subr.mxu0 0.0
    %7841 = vmatpush1.msra.mxu0 0.0
    %7842 = vmatprep.subr.mxu0 0.0
    %7843 = vmatpush1.msra.mxu0 0.0
    %7844 = vmatprep.subr.mxu0 0.0
    %7845 = vmatpush1.msra.mxu0 0.0
    %7846 = vmatprep.mubr.f32.mxu0 0.0
    %7847 = vmatmul.mubr.f32.gmra.mrb[0].mxu0 %v7764
    %v7848 = vpop.f32.mrb[0].mxu0
    %v7849 = vadd.f32 %v7781, %v7848
    %v7850 = vpop.f32.mrb[0].mxu0
    %7851 = vdwg.mxu0
    %v7852 = vmax.f32 %v7849, 0.0
    %v7853 = vld [vmem:[%s14] sm:$0x3]
    %v7854 = vld [vmem:[%s15] sm:$0x3]
    %vm7855 = vcmask 15360
    %v7857 = vsel %vm7855, %v4980, 0
    %vm7859 = vcmask 1041408
    %v7861 = vsel %vm7859, %v7854, 0
    %7863 = vmatprep.subr.mxu0 0.0
    %7864 = vmatpush1.msra.mxu0 %v7861
    %7865 = vmatprep.subr.mxu0 0.0
    %7866 = vmatpush1.msra.mxu0 0.0
    %7867 = vmatprep.subr.mxu0 0.0
    %7868 = vmatpush1.msra.mxu0 0.0
    %7869 = vmatprep.subr.mxu0 0.0
    %7870 = vmatpush1.msra.mxu0 0.0
    %7871 = vmatprep.subr.mxu0 0.0
    %7872 = vmatpush1.msra.mxu0 0.0
    %7873 = vmatprep.subr.mxu0 0.0
    %7874 = vmatpush1.msra.mxu0 0.0
    %7875 = vmatprep.subr.mxu0 0.0
    %7876 = vmatpush1.msra.mxu0 0.0
    %7877 = vmatprep.subr.mxu0 0.0
    %7878 = vmatpush1.msra.mxu0 0.0
    %7879 = vmatprep.subr.mxu0 0.0
    %7880 = vmatpush1.msra.mxu0 0.0
    %7881 = vmatprep.subr.mxu0 0.0
    %7882 = vmatpush1.msra.mxu0 0.0
    %7883 = vmatprep.subr.mxu0 0.0
    %7884 = vmatpush1.msra.mxu0 0.0
    %7885 = vmatprep.subr.mxu0 0.0
    %7886 = vmatpush1.msra.mxu0 0.0
    %7887 = vmatprep.subr.mxu0 0.0
    %7888 = vmatpush1.msra.mxu0 0.0
    %7889 = vmatprep.subr.mxu0 0.0
    %7890 = vmatpush1.msra.mxu0 0.0
    %7891 = vmatprep.subr.mxu0 0.0
    %7892 = vmatpush1.msra.mxu0 0.0
    %7893 = vmatprep.subr.mxu0 0.0
    %7894 = vmatpush1.msra.mxu0 0.0
    %7895 = vmatprep.subr.mxu0 0.0
    %7896 = vmatpush1.msra.mxu0 0.0
    %7897 = vmatprep.subr.mxu0 0.0
    %7898 = vmatpush1.msra.mxu0 0.0
    %7899 = vmatprep.subr.mxu0 0.0
    %7900 = vmatpush1.msra.mxu0 0.0
    %7901 = vmatprep.subr.mxu0 0.0
    %7902 = vmatpush1.msra.mxu0 0.0
    %7903 = vmatprep.subr.mxu0 0.0
    %7904 = vmatpush1.msra.mxu0 0.0
    %7905 = vmatprep.subr.mxu0 0.0
    %7906 = vmatpush1.msra.mxu0 0.0
    %7907 = vmatprep.subr.mxu0 0.0
    %7908 = vmatpush1.msra.mxu0 0.0
    %7909 = vmatprep.subr.mxu0 0.0
    %7910 = vmatpush1.msra.mxu0 0.0
    %7911 = vmatprep.subr.mxu0 0.0
    %7912 = vmatpush1.msra.mxu0 0.0
    %7913 = vmatprep.subr.mxu0 0.0
    %7914 = vmatpush1.msra.mxu0 0.0
    %7915 = vmatprep.subr.mxu0 0.0
    %7916 = vmatpush1.msra.mxu0 0.0
    %7917 = vmatprep.subr.mxu0 0.0
    %7918 = vmatpush1.msra.mxu0 0.0
    %7919 = vmatprep.subr.mxu0 0.0
    %7920 = vmatpush1.msra.mxu0 0.0
    %7921 = vmatprep.subr.mxu0 0.0
    %7922 = vmatpush1.msra.mxu0 0.0
    %7923 = vmatprep.subr.mxu0 0.0
    %7924 = vmatpush1.msra.mxu0 0.0
    %7925 = vmatprep.subr.mxu0 0.0
    %7926 = vmatpush1.msra.mxu0 0.0
    %7927 = vmatprep.mubr.f32.mxu0 0.0
    %7928 = vmatmul.mubr.f32.gmra.mrb[0].mxu0 %v7857
    %v7929 = vpop.f32.mrb[0].mxu0
    %v7930 = vadd.f32 0.0, %v7929
    %v7931 = vpop.f32.mrb[0].mxu0
    %7932 = vdwg.mxu0
    %v7934 = vsel %vm7855, %v7852, 0
    %v7937 = vsel %vm7859, %v7853, 0
    %7939 = vmatprep.subr.mxu0 0.0
    %7940 = vmatpush1.msra.mxu0 %v7937
    %7941 = vmatprep.subr.mxu0 0.0
    %7942 = vmatpush1.msra.mxu0 0.0
    %7943 = vmatprep.subr.mxu0 0.0
    %7944 = vmatpush1.msra.mxu0 0.0
    %7945 = vmatprep.subr.mxu0 0.0
    %7946 = vmatpush1.msra.mxu0 0.0
    %7947 = vmatprep.subr.mxu0 0.0
    %7948 = vmatpush1.msra.mxu0 0.0
    %7949 = vmatprep.subr.mxu0 0.0
    %7950 = vmatpush1.msra.mxu0 0.0
    %7951 = vmatprep.subr.mxu0 0.0
    %7952 = vmatpush1.msra.mxu0 0.0
    %7953 = vmatprep.subr.mxu0 0.0
    %7954 = vmatpush1.msra.mxu0 0.0
    %7955 = vmatprep.subr.mxu0 0.0
    %7956 = vmatpush1.msra.mxu0 0.0
    %7957 = vmatprep.subr.mxu0 0.0
    %7958 = vmatpush1.msra.mxu0 0.0
    %7959 = vmatprep.subr.mxu0 0.0
    %7960 = vmatpush1.msra.mxu0 0.0
    %7961 = vmatprep.subr.mxu0 0.0
    %7962 = vmatpush1.msra.mxu0 0.0
    %7963 = vmatprep.subr.mxu0 0.0
    %7964 = vmatpush1.msra.mxu0 0.0
    %7965 = vmatprep.subr.mxu0 0.0
    %7966 = vmatpush1.msra.mxu0 0.0
    %7967 = vmatprep.subr.mxu0 0.0
    %7968 = vmatpush1.msra.mxu0 0.0
    %7969 = vmatprep.subr.mxu0 0.0
    %7970 = vmatpush1.msra.mxu0 0.0
    %7971 = vmatprep.subr.mxu0 0.0
    %7972 = vmatpush1.msra.mxu0 0.0
    %7973 = vmatprep.subr.mxu0 0.0
    %7974 = vmatpush1.msra.mxu0 0.0
    %7975 = vmatprep.subr.mxu0 0.0
    %7976 = vmatpush1.msra.mxu0 0.0
    %7977 = vmatprep.subr.mxu0 0.0
    %7978 = vmatpush1.msra.mxu0 0.0
    %7979 = vmatprep.subr.mxu0 0.0
    %7980 = vmatpush1.msra.mxu0 0.0
    %7981 = vmatprep.subr.mxu0 0.0
    %7982 = vmatpush1.msra.mxu0 0.0
    %7983 = vmatprep.subr.mxu0 0.0
    %7984 = vmatpush1.msra.mxu0 0.0
    %7985 = vmatprep.subr.mxu0 0.0
    %7986 = vmatpush1.msra.mxu0 0.0
    %7987 = vmatprep.subr.mxu0 0.0
    %7988 = vmatpush1.msra.mxu0 0.0
    %7989 = vmatprep.subr.mxu0 0.0
    %7990 = vmatpush1.msra.mxu0 0.0
    %7991 = vmatprep.subr.mxu0 0.0
    %7992 = vmatpush1.msra.mxu0 0.0
    %7993 = vmatprep.subr.mxu0 0.0
    %7994 = vmatpush1.msra.mxu0 0.0
    %7995 = vmatprep.subr.mxu0 0.0
    %7996 = vmatpush1.msra.mxu0 0.0
    %7997 = vmatprep.subr.mxu0 0.0
    %7998 = vmatpush1.msra.mxu0 0.0
    %7999 = vmatprep.subr.mxu0 0.0
    %8000 = vmatpush1.msra.mxu0 0.0
    %8001 = vmatprep.subr.mxu0 0.0
    %8002 = vmatpush1.msra.mxu0 0.0
    %8003 = vmatprep.mubr.f32.mxu0 0.0
    %8004 = vmatmul.mubr.f32.gmra.mrb[0].mxu0 %v7934
    %v8005 = vpop.f32.mrb[0].mxu0
    %v8006 = vadd.f32 %v7930, %v8005
    %v8007 = vpop.f32.mrb[0].mxu0
    %8008 = vdwg.mxu0
    %v8009 = vld [vmem:[%s16] sm:$0x1]
    %v8010 = vadd.f32 %v8006, %v8009
    %v8011 = vmax.f32 %v8010, 0.0
    %8013 = vrot.lane.b32.xlu0 %v8011, 2
    %v8014 = vpop.permute.xlu0 %8013
    %vm8016 = vcmask 24592
    %8017 = vst.msk [vmem:[%s17] sm:$0x1] %vm8016, %v8014
    %v8019 = vrot.slane %v4785, 1
    %v8021 = vrot.slane %v4785, 2
    %v8023 = vrot.slane %v4785, 3
    %v8025 = vrot.slane %v4785, 4
    %v8027 = vrot.slane %v4785, 5
    %v8029 = vrot.slane %v4785, 6
    %v8031 = vrot.slane %v4785, 7
    %v8034 = vrot.slane %v4787, 1
    %v8036 = vrot.slane %v4787, 2
    %v8038 = vrot.slane %v4787, 3
    %v8040 = vrot.slane %v4787, 4
    %v8042 = vrot.slane %v4787, 5
    %v8044 = vrot.slane %v4787, 6
    %v8046 = vrot.slane %v4787, 7
    %v8049 = vrot.slane %v4789, 1
    %v8051 = vrot.slane %v4789, 2
    %v8053 = vrot.slane %v4789, 3
    %v8055 = vrot.slane %v4789, 4
    %v8057 = vrot.slane %v4789, 5
    %v8059 = vrot.slane %v4789, 6
    %v8061 = vrot.slane %v4789, 7
    %v8064 = vrot.slane %v4791, 1
    %v8066 = vrot.slane %v4791, 2
    %v8068 = vrot.slane %v4791, 3
    %v8070 = vrot.slane %v4791, 4
    %v8072 = vrot.slane %v4791, 5
    %v8074 = vrot.slane %v4791, 6
    %v8076 = vrot.slane %v4791, 7
    %v8078 = vpack.c.bf16 %v4785, %v4785
    %v8079 = vpack.c.bf16 %v8019, %v8019
    %v8080 = vpack.c.bf16 %v8021, %v8021
    %v8081 = vpack.c.bf16 %v8023, %v8023
    %v8082 = vpack.c.bf16 %v8025, %v8025
    %v8083 = vpack.c.bf16 %v8027, %v8027
    %v8084 = vpack.c.bf16 %v8029, %v8029
    %v8085 = vpack.c.bf16 %v8031, %v8031
    %v8086 = vpack.c.bf16 %v4787, %v4787
    %v8087 = vpack.c.bf16 %v8034, %v8034
    %v8088 = vpack.c.bf16 %v8036, %v8036
    %v8089 = vpack.c.bf16 %v8038, %v8038
    %v8090 = vpack.c.bf16 %v8040, %v8040
    %v8091 = vpack.c.bf16 %v8042, %v8042
    %v8092 = vpack.c.bf16 %v8044, %v8044
    %v8093 = vpack.c.bf16 %v8046, %v8046
    %v8094 = vpack.c.bf16 %v4789, %v4789
    %v8095 = vpack.c.bf16 %v8049, %v8049
    %v8096 = vpack.c.bf16 %v8051, %v8051
    %v8097 = vpack.c.bf16 %v8053, %v8053
    %v8098 = vpack.c.bf16 %v8055, %v8055
    %v8099 = vpack.c.bf16 %v8057, %v8057
    %v8100 = vpack.c.bf16 %v8059, %v8059
    %v8101 = vpack.c.bf16 %v8061, %v8061
    %v8102 = vpack.c.bf16 %v4791, %v4791
    %v8103 = vpack.c.bf16 %v8064, %v8064
    %v8104 = vpack.c.bf16 %v8066, %v8066
    %v8105 = vpack.c.bf16 %v8068, %v8068
    %v8106 = vpack.c.bf16 %v8070, %v8070
    %v8107 = vpack.c.bf16 %v8072, %v8072
    %v8108 = vpack.c.bf16 %v8074, %v8074
    %v8109 = vpack.c.bf16 %v8076, %v8076
    %v8110 = vld [vmem:[#allocation3] sm:$0xf]
    %v8111 = vld [vmem:[#allocation3 + $0x4] sm:$0xf]
    %v8112 = vld [vmem:[#allocation3 + $0x8] sm:$0xf]
    %v8113 = vld [vmem:[#allocation3 + $0xc] sm:$0xf]
    %v8114 = vld [vmem:[#allocation3 + $0x10] sm:$0xf]
    %v8115 = vld [vmem:[#allocation3 + $0x14] sm:$0xf]
    %v8116 = vld [vmem:[#allocation3 + $0x18] sm:$0xf]
    %v8117 = vld [vmem:[#allocation3 + $0x1c] sm:$0xf]
    %v8118 = vld [vmem:[#allocation3 + $0x20] sm:$0xf]
    %v8119 = vld [vmem:[#allocation3 + $0x24] sm:$0xf]
    %v8120 = vld [vmem:[#allocation3 + $0x28] sm:$0xf]
    %v8121 = vld [vmem:[#allocation3 + $0x2c] sm:$0xf]
    %v8122 = vld [vmem:[#allocation3 + $0x30] sm:$0xf]
    %v8123 = vld [vmem:[#allocation3 + $0x34] sm:$0xf]
    %v8124 = vld [vmem:[#allocation3 + $0x38] sm:$0xf]
    %v8125 = vld [vmem:[#allocation3 + $0x3c] sm:$0xf]
    %v8126 = vld [vmem:[#allocation3 + $0x40] sm:$0xf]
    %v8127 = vld [vmem:[#allocation3 + $0x44] sm:$0xf]
    %v8128 = vld [vmem:[#allocation3 + $0x48] sm:$0xf]
    %v8129 = vld [vmem:[#allocation3 + $0x4c] sm:$0xf]
    %v8130 = vld [vmem:[#allocation3 + $0x50] sm:$0xf]
    %v8131 = vld [vmem:[#allocation3 + $0x54] sm:$0xf]
    %v8132 = vld [vmem:[#allocation3 + $0x58] sm:$0xf]
    %v8133 = vld [vmem:[#allocation3 + $0x5c] sm:$0xf]
    %v8134 = vld [vmem:[#allocation3 + $0x60] sm:$0xf]
    %v8135 = vld [vmem:[#allocation3 + $0x64] sm:$0xf]
    %v8136 = vld [vmem:[#allocation3 + $0x68] sm:$0xf]
    %v8137 = vld [vmem:[#allocation3 + $0x6c] sm:$0xf]
    %v8138 = vld [vmem:[#allocation3 + $0x70] sm:$0xf]
    %v8139 = vld [vmem:[#allocation3 + $0x74] sm:$0xf]
    %v8140 = vld [vmem:[#allocation3 + $0x78] sm:$0xf]
    %v8141 = vld [vmem:[#allocation3 + $0x7c] sm:$0xf]
    %v8142 = vld [vmem:[#allocation3 + $0x80] sm:$0xf]
    %v8143 = vld [vmem:[#allocation3 + $0x84] sm:$0xf]
    %v8144 = vld [vmem:[#allocation3 + $0x88] sm:$0xf]
    %v8145 = vld [vmem:[#allocation3 + $0x8c] sm:$0xf]
    %v8146 = vld [vmem:[#allocation3 + $0x90] sm:$0xf]
    %v8147 = vld [vmem:[#allocation3 + $0x94] sm:$0xf]
    %v8148 = vld [vmem:[#allocation3 + $0x98] sm:$0xf]
    %v8149 = vld [vmem:[#allocation3 + $0x9c] sm:$0xf]
    %v8150 = vld [vmem:[#allocation3 + $0xa0] sm:$0xf]
    %v8151 = vld [vmem:[#allocation3 + $0xa4] sm:$0xf]
    %v8152 = vld [vmem:[#allocation3 + $0xa8] sm:$0xf]
    %v8153 = vld [vmem:[#allocation3 + $0xac] sm:$0xf]
    %v8154 = vld [vmem:[#allocation3 + $0xb0] sm:$0xf]
    %v8155 = vld [vmem:[#allocation3 + $0xb4] sm:$0xf]
    %v8156 = vld [vmem:[#allocation3 + $0xb8] sm:$0xf]
    %v8157 = vld [vmem:[#allocation3 + $0xbc] sm:$0xf]
    %v8158 = vld [vmem:[#allocation3 + $0xc0] sm:$0xf]
    %v8159 = vld [vmem:[#allocation3 + $0xc4] sm:$0xf]
    %v8160 = vld [vmem:[#allocation3 + $0xc8] sm:$0xf]
    %v8161 = vld [vmem:[#allocation3 + $0xcc] sm:$0xf]
    %v8162 = vld [vmem:[#allocation3 + $0xd0] sm:$0xf]
    %v8163 = vld [vmem:[#allocation3 + $0xd4] sm:$0xf]
    %v8164 = vld [vmem:[#allocation3 + $0xd8] sm:$0xf]
    %v8165 = vld [vmem:[#allocation3 + $0xdc] sm:$0xf]
    %v8166 = vld [vmem:[#allocation3 + $0xe0] sm:$0xf]
    %v8167 = vld [vmem:[#allocation3 + $0xe4] sm:$0xf]
    %v8168 = vld [vmem:[#allocation3 + $0xe8] sm:$0xf]
    %v8169 = vld [vmem:[#allocation3 + $0xec] sm:$0xf]
    %v8170 = vld [vmem:[#allocation3 + $0xf0] sm:$0xf]
    %v8171 = vld [vmem:[#allocation3 + $0xf4] sm:$0xf]
    %v8172 = vld [vmem:[#allocation3 + $0xf8] sm:$0xf]
    %v8173 = vld [vmem:[#allocation3 + $0xfc] sm:$0xf]
    %v8174 = vld [vmem:[#allocation3 + $0x100] sm:$0xf]
    %v8175 = vld [vmem:[#allocation3 + $0x104] sm:$0xf]
    %v8176 = vld [vmem:[#allocation3 + $0x108] sm:$0xf]
    %v8177 = vld [vmem:[#allocation3 + $0x10c] sm:$0xf]
    %v8178 = vld [vmem:[#allocation3 + $0x110] sm:$0xf]
    %v8179 = vld [vmem:[#allocation3 + $0x114] sm:$0xf]
    %v8180 = vld [vmem:[#allocation3 + $0x118] sm:$0xf]
    %v8181 = vld [vmem:[#allocation3 + $0x11c] sm:$0xf]
    %v8182 = vld [vmem:[#allocation3 + $0x120] sm:$0xf]
    %v8183 = vld [vmem:[#allocation3 + $0x124] sm:$0xf]
    %v8184 = vld [vmem:[#allocation3 + $0x128] sm:$0xf]
    %v8185 = vld [vmem:[#allocation3 + $0x12c] sm:$0xf]
    %v8186 = vld [vmem:[#allocation3 + $0x130] sm:$0xf]
    %v8187 = vld [vmem:[#allocation3 + $0x134] sm:$0xf]
    %v8188 = vld [vmem:[#allocation3 + $0x138] sm:$0xf]
    %v8189 = vld [vmem:[#allocation3 + $0x13c] sm:$0xf]
    %v8190 = vld [vmem:[#allocation3 + $0x140] sm:$0xf]
    %v8191 = vld [vmem:[#allocation3 + $0x144] sm:$0xf]
    %v8192 = vld [vmem:[#allocation3 + $0x148] sm:$0xf]
    %v8193 = vld [vmem:[#allocation3 + $0x14c] sm:$0xf]
    %v8194 = vld [vmem:[#allocation3 + $0x150] sm:$0xf]
    %v8195 = vld [vmem:[#allocation3 + $0x154] sm:$0xf]
    %v8196 = vld [vmem:[#allocation3 + $0x158] sm:$0xf]
    %v8197 = vld [vmem:[#allocation3 + $0x15c] sm:$0xf]
    %v8198 = vld [vmem:[#allocation3 + $0x160] sm:$0xf]
    %v8199 = vld [vmem:[#allocation3 + $0x164] sm:$0xf]
    %v8200 = vld [vmem:[#allocation3 + $0x168] sm:$0xf]
    %v8201 = vld [vmem:[#allocation3 + $0x16c] sm:$0xf]
    %v8202 = vld [vmem:[#allocation3 + $0x170] sm:$0xf]
    %v8203 = vld [vmem:[#allocation3 + $0x174] sm:$0xf]
    %v8204 = vld [vmem:[#allocation3 + $0x178] sm:$0xf]
    %v8205 = vld [vmem:[#allocation3 + $0x17c] sm:$0xf]
    %v8206 = vld [vmem:[#allocation3 + $0x180] sm:$0xf]
    %v8207 = vld [vmem:[#allocation3 + $0x184] sm:$0xf]
    %v8208 = vld [vmem:[#allocation3 + $0x188] sm:$0xf]
    %v8209 = vld [vmem:[#allocation3 + $0x18c] sm:$0xf]
    %v8210 = vld [vmem:[#allocation3 + $0x190] sm:$0xf]
    %v8211 = vld [vmem:[#allocation3 + $0x194] sm:$0xf]
    %v8212 = vld [vmem:[#allocation3 + $0x198] sm:$0xf]
    %v8213 = vld [vmem:[#allocation3 + $0x19c] sm:$0xf]
    %v8214 = vld [vmem:[#allocation3 + $0x1a0] sm:$0xf]
    %v8215 = vld [vmem:[#allocation3 + $0x1a4] sm:$0xf]
    %v8216 = vld [vmem:[#allocation3 + $0x1a8] sm:$0xf]
    %v8217 = vld [vmem:[#allocation3 + $0x1ac] sm:$0xf]
    %v8218 = vld [vmem:[#allocation3 + $0x1b0] sm:$0xf]
    %v8219 = vld [vmem:[#allocation3 + $0x1b4] sm:$0xf]
    %v8220 = vld [vmem:[#allocation3 + $0x1b8] sm:$0xf]
    %v8221 = vld [vmem:[#allocation3 + $0x1bc] sm:$0xf]
    %v8222 = vld [vmem:[#allocation3 + $0x1c0] sm:$0xf]
    %v8223 = vld [vmem:[#allocation3 + $0x1c4] sm:$0xf]
    %v8224 = vld [vmem:[#allocation3 + $0x1c8] sm:$0xf]
    %v8225 = vld [vmem:[#allocation3 + $0x1cc] sm:$0xf]
    %v8226 = vld [vmem:[#allocation3 + $0x1d0] sm:$0xf]
    %v8227 = vld [vmem:[#allocation3 + $0x1d4] sm:$0xf]
    %v8228 = vld [vmem:[#allocation3 + $0x1d8] sm:$0xf]
    %v8229 = vld [vmem:[#allocation3 + $0x1dc] sm:$0xf]
    %v8230 = vld [vmem:[#allocation3 + $0x1e0] sm:$0xf]
    %v8231 = vld [vmem:[#allocation3 + $0x1e4] sm:$0xf]
    %v8232 = vld [vmem:[#allocation3 + $0x1e8] sm:$0xf]
    %v8233 = vld [vmem:[#allocation3 + $0x1ec] sm:$0xf]
    %v8234 = vld [vmem:[#allocation3 + $0x1f0] sm:$0xf]
    %v8235 = vld [vmem:[#allocation3 + $0x1f4] sm:$0xf]
    %v8236 = vld [vmem:[#allocation3 + $0x1f8] sm:$0xf]
    %v8237 = vld [vmem:[#allocation3 + $0x1fc] sm:$0xf]
    %v8238 = vld [vmem:[#allocation3 + $0x200] sm:$0xf]
    %v8239 = vld [vmem:[#allocation3 + $0x204] sm:$0xf]
    %v8240 = vld [vmem:[#allocation3 + $0x208] sm:$0xf]
    %v8241 = vld [vmem:[#allocation3 + $0x20c] sm:$0xf]
    %v8242 = vld [vmem:[#allocation3 + $0x210] sm:$0xf]
    %v8243 = vld [vmem:[#allocation3 + $0x214] sm:$0xf]
    %v8244 = vld [vmem:[#allocation3 + $0x218] sm:$0xf]
    %v8245 = vld [vmem:[#allocation3 + $0x21c] sm:$0xf]
    %v8246 = vld [vmem:[#allocation3 + $0x220] sm:$0xf]
    %v8247 = vld [vmem:[#allocation3 + $0x224] sm:$0xf]
    %v8248 = vld [vmem:[#allocation3 + $0x228] sm:$0xf]
    %v8249 = vld [vmem:[#allocation3 + $0x22c] sm:$0xf]
    %v8250 = vld [vmem:[#allocation3 + $0x230] sm:$0xf]
    %v8251 = vld [vmem:[#allocation3 + $0x234] sm:$0xf]
    %v8252 = vld [vmem:[#allocation3 + $0x238] sm:$0xf]
    %v8253 = vld [vmem:[#allocation3 + $0x23c] sm:$0xf]
    %v8254 = vld [vmem:[#allocation3 + $0x240] sm:$0xf]
    %v8255 = vld [vmem:[#allocation3 + $0x244] sm:$0xf]
    %v8256 = vld [vmem:[#allocation3 + $0x248] sm:$0xf]
    %v8257 = vld [vmem:[#allocation3 + $0x24c] sm:$0xf]
    %v8258 = vld [vmem:[#allocation3 + $0x250] sm:$0xf]
    %v8259 = vld [vmem:[#allocation3 + $0x254] sm:$0xf]
    %v8260 = vld [vmem:[#allocation3 + $0x258] sm:$0xf]
    %v8261 = vld [vmem:[#allocation3 + $0x25c] sm:$0xf]
    %v8262 = vld [vmem:[#allocation3 + $0x260] sm:$0xf]
    %v8263 = vld [vmem:[#allocation3 + $0x264] sm:$0xf]
    %v8264 = vld [vmem:[#allocation3 + $0x268] sm:$0xf]
    %v8265 = vld [vmem:[#allocation3 + $0x26c] sm:$0xf]
    %v8266 = vld [vmem:[#allocation3 + $0x270] sm:$0xf]
    %v8267 = vld [vmem:[#allocation3 + $0x274] sm:$0xf]
    %v8268 = vld [vmem:[#allocation3 + $0x278] sm:$0xf]
    %v8269 = vld [vmem:[#allocation3 + $0x27c] sm:$0xf]
    %v8270 = vld [vmem:[#allocation3 + $0x280] sm:$0xf]
    %v8271 = vld [vmem:[#allocation3 + $0x284] sm:$0xf]
    %v8272 = vld [vmem:[#allocation3 + $0x288] sm:$0xf]
    %v8273 = vld [vmem:[#allocation3 + $0x28c] sm:$0xf]
    %v8274 = vld [vmem:[#allocation3 + $0x290] sm:$0xf]
    %v8275 = vld [vmem:[#allocation3 + $0x294] sm:$0xf]
    %v8276 = vld [vmem:[#allocation3 + $0x298] sm:$0xf]
    %v8277 = vld [vmem:[#allocation3 + $0x29c] sm:$0xf]
    %v8278 = vld [vmem:[#allocation3 + $0x2a0] sm:$0xf]
    %v8279 = vld [vmem:[#allocation3 + $0x2a4] sm:$0xf]
    %v8280 = vld [vmem:[#allocation3 + $0x2a8] sm:$0xf]
    %v8281 = vld [vmem:[#allocation3 + $0x2ac] sm:$0xf]
    %v8282 = vld [vmem:[#allocation3 + $0x2b0] sm:$0xf]
    %v8283 = vld [vmem:[#allocation3 + $0x2b4] sm:$0xf]
    %v8284 = vld [vmem:[#allocation3 + $0x2b8] sm:$0xf]
    %v8285 = vld [vmem:[#allocation3 + $0x2bc] sm:$0xf]
    %v8286 = vld [vmem:[#allocation3 + $0x2c0] sm:$0xf]
    %v8287 = vld [vmem:[#allocation3 + $0x2c4] sm:$0xf]
    %v8288 = vld [vmem:[#allocation3 + $0x2c8] sm:$0xf]
    %v8289 = vld [vmem:[#allocation3 + $0x2cc] sm:$0xf]
    %v8290 = vld [vmem:[#allocation3 + $0x2d0] sm:$0xf]
    %v8291 = vld [vmem:[#allocation3 + $0x2d4] sm:$0xf]
    %v8292 = vld [vmem:[#allocation3 + $0x2d8] sm:$0xf]
    %v8293 = vld [vmem:[#allocation3 + $0x2dc] sm:$0xf]
    %v8294 = vld [vmem:[#allocation3 + $0x2e0] sm:$0xf]
    %v8295 = vld [vmem:[#allocation3 + $0x2e4] sm:$0xf]
    %v8296 = vld [vmem:[#allocation3 + $0x2e8] sm:$0xf]
    %v8297 = vld [vmem:[#allocation3 + $0x2ec] sm:$0xf]
    %v8298 = vld [vmem:[#allocation3 + $0x2f0] sm:$0xf]
    %v8299 = vld [vmem:[#allocation3 + $0x2f4] sm:$0xf]
    %v8300 = vld [vmem:[#allocation3 + $0x2f8] sm:$0xf]
    %v8301 = vld [vmem:[#allocation3 + $0x2fc] sm:$0xf]
    %v8302 = vld [vmem:[#allocation3 + $0x300] sm:$0xf]
    %v8303 = vld [vmem:[#allocation3 + $0x304] sm:$0xf]
    %v8304 = vld [vmem:[#allocation3 + $0x308] sm:$0xf]
    %v8305 = vld [vmem:[#allocation3 + $0x30c] sm:$0xf]
    %v8306 = vld [vmem:[#allocation3 + $0x310] sm:$0xf]
    %v8307 = vld [vmem:[#allocation3 + $0x314] sm:$0xf]
    %v8308 = vld [vmem:[#allocation3 + $0x318] sm:$0xf]
    %v8309 = vld [vmem:[#allocation3 + $0x31c] sm:$0xf]
    %v8310 = vld [vmem:[#allocation3 + $0x320] sm:$0xf]
    %v8311 = vld [vmem:[#allocation3 + $0x324] sm:$0xf]
    %v8312 = vld [vmem:[#allocation3 + $0x328] sm:$0xf]
    %v8313 = vld [vmem:[#allocation3 + $0x32c] sm:$0xf]
    %v8314 = vld [vmem:[#allocation3 + $0x330] sm:$0xf]
    %v8315 = vld [vmem:[#allocation3 + $0x334] sm:$0xf]
    %v8316 = vld [vmem:[#allocation3 + $0x338] sm:$0xf]
    %v8317 = vld [vmem:[#allocation3 + $0x33c] sm:$0xf]
    %v8318 = vld [vmem:[#allocation3 + $0x340] sm:$0xf]
    %v8319 = vld [vmem:[#allocation3 + $0x344] sm:$0xf]
    %v8320 = vld [vmem:[#allocation3 + $0x348] sm:$0xf]
    %v8321 = vld [vmem:[#allocation3 + $0x34c] sm:$0xf]
    %v8322 = vld [vmem:[#allocation3 + $0x350] sm:$0xf]
    %v8323 = vld [vmem:[#allocation3 + $0x354] sm:$0xf]
    %v8324 = vld [vmem:[#allocation3 + $0x358] sm:$0xf]
    %v8325 = vld [vmem:[#allocation3 + $0x35c] sm:$0xf]
    %v8326 = vld [vmem:[#allocation3 + $0x360] sm:$0xf]
    %v8327 = vld [vmem:[#allocation3 + $0x364] sm:$0xf]
    %v8328 = vld [vmem:[#allocation3 + $0x368] sm:$0xf]
    %v8329 = vld [vmem:[#allocation3 + $0x36c] sm:$0xf]
    %v8330 = vld [vmem:[#allocation3 + $0x370] sm:$0xf]
    %v8331 = vld [vmem:[#allocation3 + $0x374] sm:$0xf]
    %v8332 = vld [vmem:[#allocation3 + $0x378] sm:$0xf]
    %v8333 = vld [vmem:[#allocation3 + $0x37c] sm:$0xf]
    %v8334 = vld [vmem:[#allocation3 + $0x380] sm:$0xf]
    %v8335 = vld [vmem:[#allocation3 + $0x384] sm:$0xf]
    %v8336 = vld [vmem:[#allocation3 + $0x388] sm:$0xf]
    %v8337 = vld [vmem:[#allocation3 + $0x38c] sm:$0xf]
    %v8338 = vld [vmem:[#allocation3 + $0x390] sm:$0xf]
    %v8339 = vld [vmem:[#allocation3 + $0x394] sm:$0xf]
    %v8340 = vld [vmem:[#allocation3 + $0x398] sm:$0xf]
    %v8341 = vld [vmem:[#allocation3 + $0x39c] sm:$0xf]
    %v8342 = vld [vmem:[#allocation3 + $0x3a0] sm:$0xf]
    %v8343 = vld [vmem:[#allocation3 + $0x3a4] sm:$0xf]
    %v8344 = vld [vmem:[#allocation3 + $0x3a8] sm:$0xf]
    %v8345 = vld [vmem:[#allocation3 + $0x3ac] sm:$0xf]
    %v8346 = vld [vmem:[#allocation3 + $0x3b0] sm:$0xf]
    %v8347 = vld [vmem:[#allocation3 + $0x3b4] sm:$0xf]
    %v8348 = vld [vmem:[#allocation3 + $0x3b8] sm:$0xf]
    %v8349 = vld [vmem:[#allocation3 + $0x3bc] sm:$0xf]
    %v8350 = vld [vmem:[#allocation3 + $0x3c0] sm:$0xf]
    %v8351 = vld [vmem:[#allocation3 + $0x3c4] sm:$0xf]
    %v8352 = vld [vmem:[#allocation3 + $0x3c8] sm:$0xf]
    %v8353 = vld [vmem:[#allocation3 + $0x3cc] sm:$0xf]
    %v8354 = vld [vmem:[#allocation3 + $0x3d0] sm:$0xf]
    %v8355 = vld [vmem:[#allocation3 + $0x3d4] sm:$0xf]
    %v8356 = vld [vmem:[#allocation3 + $0x3d8] sm:$0xf]
    %v8357 = vld [vmem:[#allocation3 + $0x3dc] sm:$0xf]
    %v8358 = vld [vmem:[#allocation3 + $0x3e0] sm:$0xf]
    %v8359 = vld [vmem:[#allocation3 + $0x3e4] sm:$0xf]
    %v8360 = vld [vmem:[#allocation3 + $0x3e8] sm:$0xf]
    %v8361 = vld [vmem:[#allocation3 + $0x3ec] sm:$0xf]
    %v8362 = vld [vmem:[#allocation3 + $0x3f0] sm:$0xf]
    %v8363 = vld [vmem:[#allocation3 + $0x3f4] sm:$0xf]
    %v8364 = vld [vmem:[#allocation3 + $0x3f8] sm:$0xf]
    %v8365 = vld [vmem:[#allocation3 + $0x3fc] sm:$0xf]
    %v8366 = vld [vmem:[#allocation3 + $0x400] sm:$0xf]
    %v8367 = vld [vmem:[#allocation3 + $0x404] sm:$0xf]
    %v8368 = vld [vmem:[#allocation3 + $0x408] sm:$0xf]
    %v8369 = vld [vmem:[#allocation3 + $0x40c] sm:$0xf]
    %v8370 = vld [vmem:[#allocation3 + $0x410] sm:$0xf]
    %v8371 = vld [vmem:[#allocation3 + $0x414] sm:$0xf]
    %v8372 = vld [vmem:[#allocation3 + $0x418] sm:$0xf]
    %v8373 = vld [vmem:[#allocation3 + $0x41c] sm:$0xf]
    %v8374 = vld [vmem:[#allocation3 + $0x420] sm:$0xf]
    %v8375 = vld [vmem:[#allocation3 + $0x424] sm:$0xf]
    %v8376 = vld [vmem:[#allocation3 + $0x428] sm:$0xf]
    %v8377 = vld [vmem:[#allocation3 + $0x42c] sm:$0xf]
    %v8378 = vld [vmem:[#allocation3 + $0x430] sm:$0xf]
    %v8379 = vld [vmem:[#allocation3 + $0x434] sm:$0xf]
    %v8380 = vld [vmem:[#allocation3 + $0x438] sm:$0xf]
    %v8381 = vld [vmem:[#allocation3 + $0x43c] sm:$0xf]
    %v8382 = vld [vmem:[#allocation3 + $0x440] sm:$0xf]
    %v8383 = vld [vmem:[#allocation3 + $0x444] sm:$0xf]
    %v8384 = vld [vmem:[#allocation3 + $0x448] sm:$0xf]
    %v8385 = vld [vmem:[#allocation3 + $0x44c] sm:$0xf]
    %v8386 = vld [vmem:[#allocation3 + $0x450] sm:$0xf]
    %v8387 = vld [vmem:[#allocation3 + $0x454] sm:$0xf]
    %v8388 = vld [vmem:[#allocation3 + $0x458] sm:$0xf]
    %v8389 = vld [vmem:[#allocation3 + $0x45c] sm:$0xf]
    %v8390 = vld [vmem:[#allocation3 + $0x460] sm:$0xf]
    %v8391 = vld [vmem:[#allocation3 + $0x464] sm:$0xf]
    %v8392 = vld [vmem:[#allocation3 + $0x468] sm:$0xf]
    %v8393 = vld [vmem:[#allocation3 + $0x46c] sm:$0xf]
    %v8394 = vld [vmem:[#allocation3 + $0x470] sm:$0xf]
    %v8395 = vld [vmem:[#allocation3 + $0x474] sm:$0xf]
    %v8396 = vld [vmem:[#allocation3 + $0x478] sm:$0xf]
    %v8397 = vld [vmem:[#allocation3 + $0x47c] sm:$0xf]
    %v8398 = vld [vmem:[#allocation3 + $0x480] sm:$0xf]
    %v8399 = vld [vmem:[#allocation3 + $0x484] sm:$0xf]
    %v8400 = vld [vmem:[#allocation3 + $0x488] sm:$0xf]
    %v8401 = vld [vmem:[#allocation3 + $0x48c] sm:$0xf]
    %v8402 = vld [vmem:[#allocation3 + $0x490] sm:$0xf]
    %v8403 = vld [vmem:[#allocation3 + $0x494] sm:$0xf]
    %v8404 = vld [vmem:[#allocation3 + $0x498] sm:$0xf]
    %v8405 = vld [vmem:[#allocation3 + $0x49c] sm:$0xf]
    %v8406 = vld [vmem:[#allocation3 + $0x4a0] sm:$0xf]
    %v8407 = vld [vmem:[#allocation3 + $0x4a4] sm:$0xf]
    %v8408 = vld [vmem:[#allocation3 + $0x4a8] sm:$0xf]
    %v8409 = vld [vmem:[#allocation3 + $0x4ac] sm:$0xf]
    %v8410 = vld [vmem:[#allocation3 + $0x4b0] sm:$0xf]
    %v8411 = vld [vmem:[#allocation3 + $0x4b4] sm:$0xf]
    %v8412 = vld [vmem:[#allocation3 + $0x4b8] sm:$0xf]
    %v8413 = vld [vmem:[#allocation3 + $0x4bc] sm:$0xf]
    %v8414 = vld [vmem:[#allocation3 + $0x4c0] sm:$0xf]
    %v8415 = vld [vmem:[#allocation3 + $0x4c4] sm:$0xf]
    %v8416 = vld [vmem:[#allocation3 + $0x4c8] sm:$0xf]
    %v8417 = vld [vmem:[#allocation3 + $0x4cc] sm:$0xf]
    %v8418 = vld [vmem:[#allocation3 + $0x4d0] sm:$0xf]
    %v8419 = vld [vmem:[#allocation3 + $0x4d4] sm:$0xf]
    %v8420 = vld [vmem:[#allocation3 + $0x4d8] sm:$0xf]
    %v8421 = vld [vmem:[#allocation3 + $0x4dc] sm:$0xf]
    %v8422 = vld [vmem:[#allocation3 + $0x4e0] sm:$0xf]
    %v8423 = vld [vmem:[#allocation3 + $0x4e4] sm:$0xf]
    %v8424 = vld [vmem:[#allocation3 + $0x4e8] sm:$0xf]
    %v8425 = vld [vmem:[#allocation3 + $0x4ec] sm:$0xf]
    %v8426 = vld [vmem:[#allocation3 + $0x4f0] sm:$0xf]
    %v8427 = vld [vmem:[#allocation3 + $0x4f4] sm:$0xf]
    %v8428 = vld [vmem:[#allocation3 + $0x4f8] sm:$0xf]
    %v8429 = vld [vmem:[#allocation3 + $0x4fc] sm:$0xf]
    %v8430 = vld [vmem:[#allocation3 + $0x500] sm:$0xf]
    %v8431 = vld [vmem:[#allocation3 + $0x504] sm:$0xf]
    %v8432 = vld [vmem:[#allocation3 + $0x508] sm:$0xf]
    %v8433 = vld [vmem:[#allocation3 + $0x50c] sm:$0xf]
    %v8434 = vld [vmem:[#allocation3 + $0x510] sm:$0xf]
    %v8435 = vld [vmem:[#allocation3 + $0x514] sm:$0xf]
    %v8436 = vld [vmem:[#allocation3 + $0x518] sm:$0xf]
    %v8437 = vld [vmem:[#allocation3 + $0x51c] sm:$0xf]
    %v8438 = vld [vmem:[#allocation3 + $0x520] sm:$0xf]
    %v8439 = vld [vmem:[#allocation3 + $0x524] sm:$0xf]
    %v8440 = vld [vmem:[#allocation3 + $0x528] sm:$0xf]
    %v8441 = vld [vmem:[#allocation3 + $0x52c] sm:$0xf]
    %v8442 = vld [vmem:[#allocation3 + $0x530] sm:$0xf]
    %v8443 = vld [vmem:[#allocation3 + $0x534] sm:$0xf]
    %v8444 = vld [vmem:[#allocation3 + $0x538] sm:$0xf]
    %v8445 = vld [vmem:[#allocation3 + $0x53c] sm:$0xf]
    %v8446 = vld [vmem:[#allocation3 + $0x540] sm:$0xf]
    %v8447 = vld [vmem:[#allocation3 + $0x544] sm:$0xf]
    %v8448 = vld [vmem:[#allocation3 + $0x548] sm:$0xf]
    %v8449 = vld [vmem:[#allocation3 + $0x54c] sm:$0xf]
    %v8450 = vld [vmem:[#allocation3 + $0x550] sm:$0xf]
    %v8451 = vld [vmem:[#allocation3 + $0x554] sm:$0xf]
    %v8452 = vld [vmem:[#allocation3 + $0x558] sm:$0xf]
    %v8453 = vld [vmem:[#allocation3 + $0x55c] sm:$0xf]
    %v8454 = vld [vmem:[#allocation3 + $0x560] sm:$0xf]
    %v8455 = vld [vmem:[#allocation3 + $0x564] sm:$0xf]
    %v8456 = vld [vmem:[#allocation3 + $0x568] sm:$0xf]
    %v8457 = vld [vmem:[#allocation3 + $0x56c] sm:$0xf]
    %v8458 = vld [vmem:[#allocation3 + $0x570] sm:$0xf]
    %v8459 = vld [vmem:[#allocation3 + $0x574] sm:$0xf]
    %v8460 = vld [vmem:[#allocation3 + $0x578] sm:$0xf]
    %v8461 = vld [vmem:[#allocation3 + $0x57c] sm:$0xf]
    %v8462 = vld [vmem:[#allocation3 + $0x580] sm:$0xf]
    %v8463 = vld [vmem:[#allocation3 + $0x584] sm:$0xf]
    %v8464 = vld [vmem:[#allocation3 + $0x588] sm:$0xf]
    %v8465 = vld [vmem:[#allocation3 + $0x58c] sm:$0xf]
    %v8466 = vld [vmem:[#allocation3 + $0x590] sm:$0xf]
    %v8467 = vld [vmem:[#allocation3 + $0x594] sm:$0xf]
    %v8468 = vld [vmem:[#allocation3 + $0x598] sm:$0xf]
    %v8469 = vld [vmem:[#allocation3 + $0x59c] sm:$0xf]
    %v8470 = vld [vmem:[#allocation3 + $0x5a0] sm:$0xf]
    %v8471 = vld [vmem:[#allocation3 + $0x5a4] sm:$0xf]
    %v8472 = vld [vmem:[#allocation3 + $0x5a8] sm:$0xf]
    %v8473 = vld [vmem:[#allocation3 + $0x5ac] sm:$0xf]
    %v8474 = vld [vmem:[#allocation3 + $0x5b0] sm:$0xf]
    %v8475 = vld [vmem:[#allocation3 + $0x5b4] sm:$0xf]
    %v8476 = vld [vmem:[#allocation3 + $0x5b8] sm:$0xf]
    %v8477 = vld [vmem:[#allocation3 + $0x5bc] sm:$0xf]
    %v8478 = vld [vmem:[#allocation3 + $0x5c0] sm:$0xf]
    %v8479 = vld [vmem:[#allocation3 + $0x5c4] sm:$0xf]
    %v8480 = vld [vmem:[#allocation3 + $0x5c8] sm:$0xf]
    %v8481 = vld [vmem:[#allocation3 + $0x5cc] sm:$0xf]
    %v8482 = vld [vmem:[#allocation3 + $0x5d0] sm:$0xf]
    %v8483 = vld [vmem:[#allocation3 + $0x5d4] sm:$0xf]
    %v8484 = vld [vmem:[#allocation3 + $0x5d8] sm:$0xf]
    %v8485 = vld [vmem:[#allocation3 + $0x5dc] sm:$0xf]
    %v8486 = vld [vmem:[#allocation3 + $0x5e0] sm:$0xf]
    %v8487 = vld [vmem:[#allocation3 + $0x5e4] sm:$0xf]
    %v8488 = vld [vmem:[#allocation3 + $0x5e8] sm:$0xf]
    %v8489 = vld [vmem:[#allocation3 + $0x5ec] sm:$0xf]
    %v8490 = vld [vmem:[#allocation3 + $0x5f0] sm:$0xf]
    %v8491 = vld [vmem:[#allocation3 + $0x5f4] sm:$0xf]
    %v8492 = vld [vmem:[#allocation3 + $0x5f8] sm:$0xf]
    %v8493 = vld [vmem:[#allocation3 + $0x5fc] sm:$0xf]
    %v8494 = vld [vmem:[#allocation3 + $0x600] sm:$0xf]
    %v8495 = vld [vmem:[#allocation3 + $0x604] sm:$0xf]
    %v8496 = vld [vmem:[#allocation3 + $0x608] sm:$0xf]
    %v8497 = vld [vmem:[#allocation3 + $0x60c] sm:$0xf]
    %v8498 = vld [vmem:[#allocation3 + $0x610] sm:$0xf]
    %v8499 = vld [vmem:[#allocation3 + $0x614] sm:$0xf]
    %v8500 = vld [vmem:[#allocation3 + $0x618] sm:$0xf]
    %v8501 = vld [vmem:[#allocation3 + $0x61c] sm:$0xf]
    %v8502 = vld [vmem:[#allocation3 + $0x620] sm:$0xf]
    %v8503 = vld [vmem:[#allocation3 + $0x624] sm:$0xf]
    %v8504 = vld [vmem:[#allocation3 + $0x628] sm:$0xf]
    %v8505 = vld [vmem:[#allocation3 + $0x62c] sm:$0xf]
    %v8506 = vld [vmem:[#allocation3 + $0x630] sm:$0xf]
    %v8507 = vld [vmem:[#allocation3 + $0x634] sm:$0xf]
    %v8508 = vld [vmem:[#allocation3 + $0x638] sm:$0xf]
    %v8509 = vld [vmem:[#allocation3 + $0x63c] sm:$0xf]
    %v8510 = vld [vmem:[#allocation3 + $0x640] sm:$0xf]
    %v8511 = vld [vmem:[#allocation3 + $0x644] sm:$0xf]
    %v8512 = vld [vmem:[#allocation3 + $0x648] sm:$0xf]
    %v8513 = vld [vmem:[#allocation3 + $0x64c] sm:$0xf]
    %v8514 = vld [vmem:[#allocation3 + $0x650] sm:$0xf]
    %v8515 = vld [vmem:[#allocation3 + $0x654] sm:$0xf]
    %v8516 = vld [vmem:[#allocation3 + $0x658] sm:$0xf]
    %v8517 = vld [vmem:[#allocation3 + $0x65c] sm:$0xf]
    %v8518 = vld [vmem:[#allocation3 + $0x660] sm:$0xf]
    %v8519 = vld [vmem:[#allocation3 + $0x664] sm:$0xf]
    %v8520 = vld [vmem:[#allocation3 + $0x668] sm:$0xf]
    %v8521 = vld [vmem:[#allocation3 + $0x66c] sm:$0xf]
    %v8522 = vld [vmem:[#allocation3 + $0x670] sm:$0xf]
    %v8523 = vld [vmem:[#allocation3 + $0x674] sm:$0xf]
    %v8524 = vld [vmem:[#allocation3 + $0x678] sm:$0xf]
    %v8525 = vld [vmem:[#allocation3 + $0x67c] sm:$0xf]
    %v8526 = vld [vmem:[#allocation3 + $0x680] sm:$0xf]
    %v8527 = vld [vmem:[#allocation3 + $0x684] sm:$0xf]
    %v8528 = vld [vmem:[#allocation3 + $0x688] sm:$0xf]
    %v8529 = vld [vmem:[#allocation3 + $0x68c] sm:$0xf]
    %v8530 = vld [vmem:[#allocation3 + $0x690] sm:$0xf]
    %v8531 = vld [vmem:[#allocation3 + $0x694] sm:$0xf]
    %v8532 = vld [vmem:[#allocation3 + $0x698] sm:$0xf]
    %v8533 = vld [vmem:[#allocation3 + $0x69c] sm:$0xf]
    %v8534 = vld [vmem:[#allocation3 + $0x6a0] sm:$0xf]
    %v8535 = vld [vmem:[#allocation3 + $0x6a4] sm:$0xf]
    %v8536 = vld [vmem:[#allocation3 + $0x6a8] sm:$0xf]
    %v8537 = vld [vmem:[#allocation3 + $0x6ac] sm:$0xf]
    %v8538 = vld [vmem:[#allocation3 + $0x6b0] sm:$0xf]
    %v8539 = vld [vmem:[#allocation3 + $0x6b4] sm:$0xf]
    %v8540 = vld [vmem:[#allocation3 + $0x6b8] sm:$0xf]
    %v8541 = vld [vmem:[#allocation3 + $0x6bc] sm:$0xf]
    %v8542 = vld [vmem:[#allocation3 + $0x6c0] sm:$0xf]
    %v8543 = vld [vmem:[#allocation3 + $0x6c4] sm:$0xf]
    %v8544 = vld [vmem:[#allocation3 + $0x6c8] sm:$0xf]
    %v8545 = vld [vmem:[#allocation3 + $0x6cc] sm:$0xf]
    %v8546 = vld [vmem:[#allocation3 + $0x6d0] sm:$0xf]
    %v8547 = vld [vmem:[#allocation3 + $0x6d4] sm:$0xf]
    %v8548 = vld [vmem:[#allocation3 + $0x6d8] sm:$0xf]
    %v8549 = vld [vmem:[#allocation3 + $0x6dc] sm:$0xf]
    %v8550 = vld [vmem:[#allocation3 + $0x6e0] sm:$0xf]
    %v8551 = vld [vmem:[#allocation3 + $0x6e4] sm:$0xf]
    %v8552 = vld [vmem:[#allocation3 + $0x6e8] sm:$0xf]
    %v8553 = vld [vmem:[#allocation3 + $0x6ec] sm:$0xf]
    %v8554 = vld [vmem:[#allocation3 + $0x6f0] sm:$0xf]
    %v8555 = vld [vmem:[#allocation3 + $0x6f4] sm:$0xf]
    %v8556 = vld [vmem:[#allocation3 + $0x6f8] sm:$0xf]
    %v8557 = vld [vmem:[#allocation3 + $0x6fc] sm:$0xf]
    %v8558 = vld [vmem:[#allocation3 + $0x700] sm:$0xf]
    %v8559 = vld [vmem:[#allocation3 + $0x704] sm:$0xf]
    %v8560 = vld [vmem:[#allocation3 + $0x708] sm:$0xf]
    %v8561 = vld [vmem:[#allocation3 + $0x70c] sm:$0xf]
    %v8562 = vld [vmem:[#allocation3 + $0x710] sm:$0xf]
    %v8563 = vld [vmem:[#allocation3 + $0x714] sm:$0xf]
    %v8564 = vld [vmem:[#allocation3 + $0x718] sm:$0xf]
    %v8565 = vld [vmem:[#allocation3 + $0x71c] sm:$0xf]
    %v8566 = vld [vmem:[#allocation3 + $0x720] sm:$0xf]
    %v8567 = vld [vmem:[#allocation3 + $0x724] sm:$0xf]
    %v8568 = vld [vmem:[#allocation3 + $0x728] sm:$0xf]
    %v8569 = vld [vmem:[#allocation3 + $0x72c] sm:$0xf]
    %v8570 = vld [vmem:[#allocation3 + $0x730] sm:$0xf]
    %v8571 = vld [vmem:[#allocation3 + $0x734] sm:$0xf]
    %v8572 = vld [vmem:[#allocation3 + $0x738] sm:$0xf]
    %v8573 = vld [vmem:[#allocation3 + $0x73c] sm:$0xf]
    %v8574 = vld [vmem:[#allocation3 + $0x740] sm:$0xf]
    %v8575 = vld [vmem:[#allocation3 + $0x744] sm:$0xf]
    %v8576 = vld [vmem:[#allocation3 + $0x748] sm:$0xf]
    %v8577 = vld [vmem:[#allocation3 + $0x74c] sm:$0xf]
    %v8578 = vld [vmem:[#allocation3 + $0x750] sm:$0xf]
    %v8579 = vld [vmem:[#allocation3 + $0x754] sm:$0xf]
    %v8580 = vld [vmem:[#allocation3 + $0x758] sm:$0xf]
    %v8581 = vld [vmem:[#allocation3 + $0x75c] sm:$0xf]
    %v8582 = vld [vmem:[#allocation3 + $0x760] sm:$0xf]
    %v8583 = vld [vmem:[#allocation3 + $0x764] sm:$0xf]
    %v8584 = vld [vmem:[#allocation3 + $0x768] sm:$0xf]
    %v8585 = vld [vmem:[#allocation3 + $0x76c] sm:$0xf]
    %v8586 = vld [vmem:[#allocation3 + $0x770] sm:$0xf]
    %v8587 = vld [vmem:[#allocation3 + $0x774] sm:$0xf]
    %v8588 = vld [vmem:[#allocation3 + $0x778] sm:$0xf]
    %v8589 = vld [vmem:[#allocation3 + $0x77c] sm:$0xf]
    %v8590 = vld [vmem:[#allocation3 + $0x780] sm:$0xf]
    %v8591 = vld [vmem:[#allocation3 + $0x784] sm:$0xf]
    %v8592 = vld [vmem:[#allocation3 + $0x788] sm:$0xf]
    %v8593 = vld [vmem:[#allocation3 + $0x78c] sm:$0xf]
    %v8594 = vld [vmem:[#allocation3 + $0x790] sm:$0xf]
    %v8595 = vld [vmem:[#allocation3 + $0x794] sm:$0xf]
    %v8596 = vld [vmem:[#allocation3 + $0x798] sm:$0xf]
    %v8597 = vld [vmem:[#allocation3 + $0x79c] sm:$0xf]
    %v8598 = vld [vmem:[#allocation3 + $0x7a0] sm:$0xf]
    %v8599 = vld [vmem:[#allocation3 + $0x7a4] sm:$0xf]
    %v8600 = vld [vmem:[#allocation3 + $0x7a8] sm:$0xf]
    %v8601 = vld [vmem:[#allocation3 + $0x7ac] sm:$0xf]
    %v8602 = vld [vmem:[#allocation3 + $0x7b0] sm:$0xf]
    %v8603 = vld [vmem:[#allocation3 + $0x7b4] sm:$0xf]
    %v8604 = vld [vmem:[#allocation3 + $0x7b8] sm:$0xf]
    %v8605 = vld [vmem:[#allocation3 + $0x7bc] sm:$0xf]
    %v8606 = vld [vmem:[#allocation3 + $0x7c0] sm:$0xf]
    %v8607 = vld [vmem:[#allocation3 + $0x7c4] sm:$0xf]
    %v8608 = vld [vmem:[#allocation3 + $0x7c8] sm:$0xf]
    %v8609 = vld [vmem:[#allocation3 + $0x7cc] sm:$0xf]
    %v8610 = vld [vmem:[#allocation3 + $0x7d0] sm:$0xf]
    %v8611 = vld [vmem:[#allocation3 + $0x7d4] sm:$0xf]
    %v8612 = vld [vmem:[#allocation3 + $0x7d8] sm:$0xf]
    %v8613 = vld [vmem:[#allocation3 + $0x7dc] sm:$0xf]
    %v8614 = vld [vmem:[#allocation3 + $0x7e0] sm:$0xf]
    %v8615 = vld [vmem:[#allocation3 + $0x7e4] sm:$0xf]
    %v8616 = vld [vmem:[#allocation3 + $0x7e8] sm:$0xf]
    %v8617 = vld [vmem:[#allocation3 + $0x7ec] sm:$0xf]
    %v8618 = vld [vmem:[#allocation3 + $0x7f0] sm:$0xf]
    %v8619 = vld [vmem:[#allocation3 + $0x7f4] sm:$0xf]
    %v8620 = vld [vmem:[#allocation3 + $0x7f8] sm:$0xf]
    %v8621 = vld [vmem:[#allocation3 + $0x7fc] sm:$0xf]
    %v8622 = vld [vmem:[%s11] sm:$0x1]
    %v9135 = vunpack.c.l.b16 %v8110
    %v9136 = vunpack.c.l.b16 %v8111
    %v9137 = vunpack.c.l.b16 %v8112
    %v9138 = vunpack.c.l.b16 %v8113
    %v9139 = vunpack.c.l.b16 %v8114
    %v9140 = vunpack.c.l.b16 %v8115
    %v9141 = vunpack.c.l.b16 %v8116
    %v9142 = vunpack.c.l.b16 %v8117
    %v9143 = vunpack.c.l.b16 %v8118
    %v9144 = vunpack.c.l.b16 %v8119
    %v9145 = vunpack.c.l.b16 %v8120
    %v9146 = vunpack.c.l.b16 %v8121
    %v9147 = vunpack.c.l.b16 %v8122
    %v9148 = vunpack.c.l.b16 %v8123
    %v9149 = vunpack.c.l.b16 %v8124
    %v9150 = vunpack.c.l.b16 %v8125
    %v9151 = vunpack.c.l.b16 %v8126
    %v9152 = vunpack.c.l.b16 %v8127
    %v9153 = vunpack.c.l.b16 %v8128
    %v9154 = vunpack.c.l.b16 %v8129
    %v9155 = vunpack.c.l.b16 %v8130
    %v9156 = vunpack.c.l.b16 %v8131
    %v9157 = vunpack.c.l.b16 %v8132
    %v9158 = vunpack.c.l.b16 %v8133
    %v9159 = vunpack.c.l.b16 %v8134
    %v9160 = vunpack.c.l.b16 %v8135
    %v9161 = vunpack.c.l.b16 %v8136
    %v9162 = vunpack.c.l.b16 %v8137
    %v9163 = vunpack.c.l.b16 %v8138
    %v9164 = vunpack.c.l.b16 %v8139
    %v9165 = vunpack.c.l.b16 %v8140
    %v9166 = vunpack.c.l.b16 %v8141
    %v9167 = vunpack.c.l.b16 %v8142
    %v9168 = vunpack.c.l.b16 %v8143
    %v9169 = vunpack.c.l.b16 %v8144
    %v9170 = vunpack.c.l.b16 %v8145
    %v9171 = vunpack.c.l.b16 %v8146
    %v9172 = vunpack.c.l.b16 %v8147
    %v9173 = vunpack.c.l.b16 %v8148
    %v9174 = vunpack.c.l.b16 %v8149
    %v9175 = vunpack.c.l.b16 %v8150
    %v9176 = vunpack.c.l.b16 %v8151
    %v9177 = vunpack.c.l.b16 %v8152
    %v9178 = vunpack.c.l.b16 %v8153
    %v9179 = vunpack.c.l.b16 %v8154
    %v9180 = vunpack.c.l.b16 %v8155
    %v9181 = vunpack.c.l.b16 %v8156
    %v9182 = vunpack.c.l.b16 %v8157
    %v9183 = vunpack.c.l.b16 %v8158
    %v9184 = vunpack.c.l.b16 %v8159
    %v9185 = vunpack.c.l.b16 %v8160
    %v9186 = vunpack.c.l.b16 %v8161
    %v9187 = vunpack.c.l.b16 %v8162
    %v9188 = vunpack.c.l.b16 %v8163
    %v9189 = vunpack.c.l.b16 %v8164
    %v9190 = vunpack.c.l.b16 %v8165
    %v9191 = vunpack.c.l.b16 %v8166
    %v9192 = vunpack.c.l.b16 %v8167
    %v9193 = vunpack.c.l.b16 %v8168
    %v9194 = vunpack.c.l.b16 %v8169
    %v9195 = vunpack.c.l.b16 %v8170
    %v9196 = vunpack.c.l.b16 %v8171
    %v9197 = vunpack.c.l.b16 %v8172
    %v9198 = vunpack.c.l.b16 %v8173
    %v9199 = vunpack.c.l.b16 %v8174
    %v9200 = vunpack.c.l.b16 %v8175
    %v9201 = vunpack.c.l.b16 %v8176
    %v9202 = vunpack.c.l.b16 %v8177
    %v9203 = vunpack.c.l.b16 %v8178
    %v9204 = vunpack.c.l.b16 %v8179
    %v9205 = vunpack.c.l.b16 %v8180
    %v9206 = vunpack.c.l.b16 %v8181
    %v9207 = vunpack.c.l.b16 %v8182
    %v9208 = vunpack.c.l.b16 %v8183
    %v9209 = vunpack.c.l.b16 %v8184
    %v9210 = vunpack.c.l.b16 %v8185
    %v9211 = vunpack.c.l.b16 %v8186
    %v9212 = vunpack.c.l.b16 %v8187
    %v9213 = vunpack.c.l.b16 %v8188
    %v9214 = vunpack.c.l.b16 %v8189
    %v9215 = vunpack.c.l.b16 %v8190
    %v9216 = vunpack.c.l.b16 %v8191
    %v9217 = vunpack.c.l.b16 %v8192
    %v9218 = vunpack.c.l.b16 %v8193
    %v9219 = vunpack.c.l.b16 %v8194
    %v9220 = vunpack.c.l.b16 %v8195
    %v9221 = vunpack.c.l.b16 %v8196
    %v9222 = vunpack.c.l.b16 %v8197
    %v9223 = vunpack.c.l.b16 %v8198
    %v9224 = vunpack.c.l.b16 %v8199
    %v9225 = vunpack.c.l.b16 %v8200
    %v9226 = vunpack.c.l.b16 %v8201
    %v9227 = vunpack.c.l.b16 %v8202
    %v9228 = vunpack.c.l.b16 %v8203
    %v9229 = vunpack.c.l.b16 %v8204
    %v9230 = vunpack.c.l.b16 %v8205
    %v9231 = vunpack.c.l.b16 %v8206
    %v9232 = vunpack.c.l.b16 %v8207
    %v9233 = vunpack.c.l.b16 %v8208
    %v9234 = vunpack.c.l.b16 %v8209
    %v9235 = vunpack.c.l.b16 %v8210
    %v9236 = vunpack.c.l.b16 %v8211
    %v9237 = vunpack.c.l.b16 %v8212
    %v9238 = vunpack.c.l.b16 %v8213
    %v9239 = vunpack.c.l.b16 %v8214
    %v9240 = vunpack.c.l.b16 %v8215
    %v9241 = vunpack.c.l.b16 %v8216
    %v9242 = vunpack.c.l.b16 %v8217
    %v9243 = vunpack.c.l.b16 %v8218
    %v9244 = vunpack.c.l.b16 %v8219
    %v9245 = vunpack.c.l.b16 %v8220
    %v9246 = vunpack.c.l.b16 %v8221
    %v9247 = vunpack.c.l.b16 %v8222
    %v9248 = vunpack.c.l.b16 %v8223
    %v9249 = vunpack.c.l.b16 %v8224
    %v9250 = vunpack.c.l.b16 %v8225
    %v9251 = vunpack.c.l.b16 %v8226
    %v9252 = vunpack.c.l.b16 %v8227
    %v9253 = vunpack.c.l.b16 %v8228
    %v9254 = vunpack.c.l.b16 %v8229
    %v9255 = vunpack.c.l.b16 %v8230
    %v9256 = vunpack.c.l.b16 %v8231
    %v9257 = vunpack.c.l.b16 %v8232
    %v9258 = vunpack.c.l.b16 %v8233
    %v9259 = vunpack.c.l.b16 %v8234
    %v9260 = vunpack.c.l.b16 %v8235
    %v9261 = vunpack.c.l.b16 %v8236
    %v9262 = vunpack.c.l.b16 %v8237
    %v9263 = vunpack.c.l.b16 %v8238
    %v9264 = vunpack.c.l.b16 %v8239
    %v9265 = vunpack.c.l.b16 %v8240
    %v9266 = vunpack.c.l.b16 %v8241
    %v9267 = vunpack.c.l.b16 %v8242
    %v9268 = vunpack.c.l.b16 %v8243
    %v9269 = vunpack.c.l.b16 %v8244
    %v9270 = vunpack.c.l.b16 %v8245
    %v9271 = vunpack.c.l.b16 %v8246
    %v9272 = vunpack.c.l.b16 %v8247
    %v9273 = vunpack.c.l.b16 %v8248
    %v9274 = vunpack.c.l.b16 %v8249
    %v9275 = vunpack.c.l.b16 %v8250
    %v9276 = vunpack.c.l.b16 %v8251
    %v9277 = vunpack.c.l.b16 %v8252
    %v9278 = vunpack.c.l.b16 %v8253
    %v9279 = vunpack.c.l.b16 %v8254
    %v9280 = vunpack.c.l.b16 %v8255
    %v9281 = vunpack.c.l.b16 %v8256
    %v9282 = vunpack.c.l.b16 %v8257
    %v9283 = vunpack.c.l.b16 %v8258
    %v9284 = vunpack.c.l.b16 %v8259
    %v9285 = vunpack.c.l.b16 %v8260
    %v9286 = vunpack.c.l.b16 %v8261
    %v9287 = vunpack.c.l.b16 %v8262
    %v9288 = vunpack.c.l.b16 %v8263
    %v9289 = vunpack.c.l.b16 %v8264
    %v9290 = vunpack.c.l.b16 %v8265
    %v9291 = vunpack.c.l.b16 %v8266
    %v9292 = vunpack.c.l.b16 %v8267
    %v9293 = vunpack.c.l.b16 %v8268
    %v9294 = vunpack.c.l.b16 %v8269
    %v9295 = vunpack.c.l.b16 %v8270
    %v9296 = vunpack.c.l.b16 %v8271
    %v9297 = vunpack.c.l.b16 %v8272
    %v9298 = vunpack.c.l.b16 %v8273
    %v9299 = vunpack.c.l.b16 %v8274
    %v9300 = vunpack.c.l.b16 %v8275
    %v9301 = vunpack.c.l.b16 %v8276
    %v9302 = vunpack.c.l.b16 %v8277
    %v9303 = vunpack.c.l.b16 %v8278
    %v9304 = vunpack.c.l.b16 %v8279
    %v9305 = vunpack.c.l.b16 %v8280
    %v9306 = vunpack.c.l.b16 %v8281
    %v9307 = vunpack.c.l.b16 %v8282
    %v9308 = vunpack.c.l.b16 %v8283
    %v9309 = vunpack.c.l.b16 %v8284
    %v9310 = vunpack.c.l.b16 %v8285
    %v9311 = vunpack.c.l.b16 %v8286
    %v9312 = vunpack.c.l.b16 %v8287
    %v9313 = vunpack.c.l.b16 %v8288
    %v9314 = vunpack.c.l.b16 %v8289
    %v9315 = vunpack.c.l.b16 %v8290
    %v9316 = vunpack.c.l.b16 %v8291
    %v9317 = vunpack.c.l.b16 %v8292
    %v9318 = vunpack.c.l.b16 %v8293
    %v9319 = vunpack.c.l.b16 %v8294
    %v9320 = vunpack.c.l.b16 %v8295
    %v9321 = vunpack.c.l.b16 %v8296
    %v9322 = vunpack.c.l.b16 %v8297
    %v9323 = vunpack.c.l.b16 %v8298
    %v9324 = vunpack.c.l.b16 %v8299
    %v9325 = vunpack.c.l.b16 %v8300
    %v9326 = vunpack.c.l.b16 %v8301
    %v9327 = vunpack.c.l.b16 %v8302
    %v9328 = vunpack.c.l.b16 %v8303
    %v9329 = vunpack.c.l.b16 %v8304
    %v9330 = vunpack.c.l.b16 %v8305
    %v9331 = vunpack.c.l.b16 %v8306
    %v9332 = vunpack.c.l.b16 %v8307
    %v9333 = vunpack.c.l.b16 %v8308
    %v9334 = vunpack.c.l.b16 %v8309
    %v9335 = vunpack.c.l.b16 %v8310
    %v9336 = vunpack.c.l.b16 %v8311
    %v9337 = vunpack.c.l.b16 %v8312
    %v9338 = vunpack.c.l.b16 %v8313
    %v9339 = vunpack.c.l.b16 %v8314
    %v9340 = vunpack.c.l.b16 %v8315
    %v9341 = vunpack.c.l.b16 %v8316
    %v9342 = vunpack.c.l.b16 %v8317
    %v9343 = vunpack.c.l.b16 %v8318
    %v9344 = vunpack.c.l.b16 %v8319
    %v9345 = vunpack.c.l.b16 %v8320
    %v9346 = vunpack.c.l.b16 %v8321
    %v9347 = vunpack.c.l.b16 %v8322
    %v9348 = vunpack.c.l.b16 %v8323
    %v9349 = vunpack.c.l.b16 %v8324
    %v9350 = vunpack.c.l.b16 %v8325
    %v9351 = vunpack.c.l.b16 %v8326
    %v9352 = vunpack.c.l.b16 %v8327
    %v9353 = vunpack.c.l.b16 %v8328
    %v9354 = vunpack.c.l.b16 %v8329
    %v9355 = vunpack.c.l.b16 %v8330
    %v9356 = vunpack.c.l.b16 %v8331
    %v9357 = vunpack.c.l.b16 %v8332
    %v9358 = vunpack.c.l.b16 %v8333
    %v9359 = vunpack.c.l.b16 %v8334
    %v9360 = vunpack.c.l.b16 %v8335
    %v9361 = vunpack.c.l.b16 %v8336
    %v9362 = vunpack.c.l.b16 %v8337
    %v9363 = vunpack.c.l.b16 %v8338
    %v9364 = vunpack.c.l.b16 %v8339
    %v9365 = vunpack.c.l.b16 %v8340
    %v9366 = vunpack.c.l.b16 %v8341
    %v9367 = vunpack.c.l.b16 %v8342
    %v9368 = vunpack.c.l.b16 %v8343
    %v9369 = vunpack.c.l.b16 %v8344
    %v9370 = vunpack.c.l.b16 %v8345
    %v9371 = vunpack.c.l.b16 %v8346
    %v9372 = vunpack.c.l.b16 %v8347
    %v9373 = vunpack.c.l.b16 %v8348
    %v9374 = vunpack.c.l.b16 %v8349
    %v9375 = vunpack.c.l.b16 %v8350
    %v9376 = vunpack.c.l.b16 %v8351
    %v9377 = vunpack.c.l.b16 %v8352
    %v9378 = vunpack.c.l.b16 %v8353
    %v9379 = vunpack.c.l.b16 %v8354
    %v9380 = vunpack.c.l.b16 %v8355
    %v9381 = vunpack.c.l.b16 %v8356
    %v9382 = vunpack.c.l.b16 %v8357
    %v9383 = vunpack.c.l.b16 %v8358
    %v9384 = vunpack.c.l.b16 %v8359
    %v9385 = vunpack.c.l.b16 %v8360
    %v9386 = vunpack.c.l.b16 %v8361
    %v9387 = vunpack.c.l.b16 %v8362
    %v9388 = vunpack.c.l.b16 %v8363
    %v9389 = vunpack.c.l.b16 %v8364
    %v9390 = vunpack.c.l.b16 %v8365
    %v9391 = vunpack.c.l.b16 %v8366
    %v9392 = vunpack.c.l.b16 %v8367
    %v9393 = vunpack.c.l.b16 %v8368
    %v9394 = vunpack.c.l.b16 %v8369
    %v9395 = vunpack.c.l.b16 %v8370
    %v9396 = vunpack.c.l.b16 %v8371
    %v9397 = vunpack.c.l.b16 %v8372
    %v9398 = vunpack.c.l.b16 %v8373
    %v9399 = vunpack.c.l.b16 %v8374
    %v9400 = vunpack.c.l.b16 %v8375
    %v9401 = vunpack.c.l.b16 %v8376
    %v9402 = vunpack.c.l.b16 %v8377
    %v9403 = vunpack.c.l.b16 %v8378
    %v9404 = vunpack.c.l.b16 %v8379
    %v9405 = vunpack.c.l.b16 %v8380
    %v9406 = vunpack.c.l.b16 %v8381
    %v9407 = vunpack.c.l.b16 %v8382
    %v9408 = vunpack.c.l.b16 %v8383
    %v9409 = vunpack.c.l.b16 %v8384
    %v9410 = vunpack.c.l.b16 %v8385
    %v9411 = vunpack.c.l.b16 %v8386
    %v9412 = vunpack.c.l.b16 %v8387
    %v9413 = vunpack.c.l.b16 %v8388
    %v9414 = vunpack.c.l.b16 %v8389
    %v9415 = vunpack.c.l.b16 %v8390
    %v9416 = vunpack.c.l.b16 %v8391
    %v9417 = vunpack.c.l.b16 %v8392
    %v9418 = vunpack.c.l.b16 %v8393
    %v9419 = vunpack.c.l.b16 %v8394
    %v9420 = vunpack.c.l.b16 %v8395
    %v9421 = vunpack.c.l.b16 %v8396
    %v9422 = vunpack.c.l.b16 %v8397
    %v9423 = vunpack.c.l.b16 %v8398
    %v9424 = vunpack.c.l.b16 %v8399
    %v9425 = vunpack.c.l.b16 %v8400
    %v9426 = vunpack.c.l.b16 %v8401
    %v9427 = vunpack.c.l.b16 %v8402
    %v9428 = vunpack.c.l.b16 %v8403
    %v9429 = vunpack.c.l.b16 %v8404
    %v9430 = vunpack.c.l.b16 %v8405
    %v9431 = vunpack.c.l.b16 %v8406
    %v9432 = vunpack.c.l.b16 %v8407
    %v9433 = vunpack.c.l.b16 %v8408
    %v9434 = vunpack.c.l.b16 %v8409
    %v9435 = vunpack.c.l.b16 %v8410
    %v9436 = vunpack.c.l.b16 %v8411
    %v9437 = vunpack.c.l.b16 %v8412
    %v9438 = vunpack.c.l.b16 %v8413
    %v9439 = vunpack.c.l.b16 %v8414
    %v9440 = vunpack.c.l.b16 %v8415
    %v9441 = vunpack.c.l.b16 %v8416
    %v9442 = vunpack.c.l.b16 %v8417
    %v9443 = vunpack.c.l.b16 %v8418
    %v9444 = vunpack.c.l.b16 %v8419
    %v9445 = vunpack.c.l.b16 %v8420
    %v9446 = vunpack.c.l.b16 %v8421
    %v9447 = vunpack.c.l.b16 %v8422
    %v9448 = vunpack.c.l.b16 %v8423
    %v9449 = vunpack.c.l.b16 %v8424
    %v9450 = vunpack.c.l.b16 %v8425
    %v9451 = vunpack.c.l.b16 %v8426
    %v9452 = vunpack.c.l.b16 %v8427
    %v9453 = vunpack.c.l.b16 %v8428
    %v9454 = vunpack.c.l.b16 %v8429
    %v9455 = vunpack.c.l.b16 %v8430
    %v9456 = vunpack.c.l.b16 %v8431
    %v9457 = vunpack.c.l.b16 %v8432
    %v9458 = vunpack.c.l.b16 %v8433
    %v9459 = vunpack.c.l.b16 %v8434
    %v9460 = vunpack.c.l.b16 %v8435
    %v9461 = vunpack.c.l.b16 %v8436
    %v9462 = vunpack.c.l.b16 %v8437
    %v9463 = vunpack.c.l.b16 %v8438
    %v9464 = vunpack.c.l.b16 %v8439
    %v9465 = vunpack.c.l.b16 %v8440
    %v9466 = vunpack.c.l.b16 %v8441
    %v9467 = vunpack.c.l.b16 %v8442
    %v9468 = vunpack.c.l.b16 %v8443
    %v9469 = vunpack.c.l.b16 %v8444
    %v9470 = vunpack.c.l.b16 %v8445
    %v9471 = vunpack.c.l.b16 %v8446
    %v9472 = vunpack.c.l.b16 %v8447
    %v9473 = vunpack.c.l.b16 %v8448
    %v9474 = vunpack.c.l.b16 %v8449
    %v9475 = vunpack.c.l.b16 %v8450
    %v9476 = vunpack.c.l.b16 %v8451
    %v9477 = vunpack.c.l.b16 %v8452
    %v9478 = vunpack.c.l.b16 %v8453
    %v9479 = vunpack.c.l.b16 %v8454
    %v9480 = vunpack.c.l.b16 %v8455
    %v9481 = vunpack.c.l.b16 %v8456
    %v9482 = vunpack.c.l.b16 %v8457
    %v9483 = vunpack.c.l.b16 %v8458
    %v9484 = vunpack.c.l.b16 %v8459
    %v9485 = vunpack.c.l.b16 %v8460
    %v9486 = vunpack.c.l.b16 %v8461
    %v9487 = vunpack.c.l.b16 %v8462
    %v9488 = vunpack.c.l.b16 %v8463
    %v9489 = vunpack.c.l.b16 %v8464
    %v9490 = vunpack.c.l.b16 %v8465
    %v9491 = vunpack.c.l.b16 %v8466
    %v9492 = vunpack.c.l.b16 %v8467
    %v9493 = vunpack.c.l.b16 %v8468
    %v9494 = vunpack.c.l.b16 %v8469
    %v9495 = vunpack.c.l.b16 %v8470
    %v9496 = vunpack.c.l.b16 %v8471
    %v9497 = vunpack.c.l.b16 %v8472
    %v9498 = vunpack.c.l.b16 %v8473
    %v9499 = vunpack.c.l.b16 %v8474
    %v9500 = vunpack.c.l.b16 %v8475
    %v9501 = vunpack.c.l.b16 %v8476
    %v9502 = vunpack.c.l.b16 %v8477
    %v9503 = vunpack.c.l.b16 %v8478
    %v9504 = vunpack.c.l.b16 %v8479
    %v9505 = vunpack.c.l.b16 %v8480
    %v9506 = vunpack.c.l.b16 %v8481
    %v9507 = vunpack.c.l.b16 %v8482
    %v9508 = vunpack.c.l.b16 %v8483
    %v9509 = vunpack.c.l.b16 %v8484
    %v9510 = vunpack.c.l.b16 %v8485
    %v9511 = vunpack.c.l.b16 %v8486
    %v9512 = vunpack.c.l.b16 %v8487
    %v9513 = vunpack.c.l.b16 %v8488
    %v9514 = vunpack.c.l.b16 %v8489
    %v9515 = vunpack.c.l.b16 %v8490
    %v9516 = vunpack.c.l.b16 %v8491
    %v9517 = vunpack.c.l.b16 %v8492
    %v9518 = vunpack.c.l.b16 %v8493
    %v9519 = vunpack.c.l.b16 %v8494
    %v9520 = vunpack.c.l.b16 %v8495
    %v9521 = vunpack.c.l.b16 %v8496
    %v9522 = vunpack.c.l.b16 %v8497
    %v9523 = vunpack.c.l.b16 %v8498
    %v9524 = vunpack.c.l.b16 %v8499
    %v9525 = vunpack.c.l.b16 %v8500
    %v9526 = vunpack.c.l.b16 %v8501
    %v9527 = vunpack.c.l.b16 %v8502
    %v9528 = vunpack.c.l.b16 %v8503
    %v9529 = vunpack.c.l.b16 %v8504
    %v9530 = vunpack.c.l.b16 %v8505
    %v9531 = vunpack.c.l.b16 %v8506
    %v9532 = vunpack.c.l.b16 %v8507
    %v9533 = vunpack.c.l.b16 %v8508
    %v9534 = vunpack.c.l.b16 %v8509
    %v9535 = vunpack.c.l.b16 %v8510
    %v9536 = vunpack.c.l.b16 %v8511
    %v9537 = vunpack.c.l.b16 %v8512
    %v9538 = vunpack.c.l.b16 %v8513
    %v9539 = vunpack.c.l.b16 %v8514
    %v9540 = vunpack.c.l.b16 %v8515
    %v9541 = vunpack.c.l.b16 %v8516
    %v9542 = vunpack.c.l.b16 %v8517
    %v9543 = vunpack.c.l.b16 %v8518
    %v9544 = vunpack.c.l.b16 %v8519
    %v9545 = vunpack.c.l.b16 %v8520
    %v9546 = vunpack.c.l.b16 %v8521
    %v9547 = vunpack.c.l.b16 %v8522
    %v9548 = vunpack.c.l.b16 %v8523
    %v9549 = vunpack.c.l.b16 %v8524
    %v9550 = vunpack.c.l.b16 %v8525
    %v9551 = vunpack.c.l.b16 %v8526
    %v9552 = vunpack.c.l.b16 %v8527
    %v9553 = vunpack.c.l.b16 %v8528
    %v9554 = vunpack.c.l.b16 %v8529
    %v9555 = vunpack.c.l.b16 %v8530
    %v9556 = vunpack.c.l.b16 %v8531
    %v9557 = vunpack.c.l.b16 %v8532
    %v9558 = vunpack.c.l.b16 %v8533
    %v9559 = vunpack.c.l.b16 %v8534
    %v9560 = vunpack.c.l.b16 %v8535
    %v9561 = vunpack.c.l.b16 %v8536
    %v9562 = vunpack.c.l.b16 %v8537
    %v9563 = vunpack.c.l.b16 %v8538
    %v9564 = vunpack.c.l.b16 %v8539
    %v9565 = vunpack.c.l.b16 %v8540
    %v9566 = vunpack.c.l.b16 %v8541
    %v9567 = vunpack.c.l.b16 %v8542
    %v9568 = vunpack.c.l.b16 %v8543
    %v9569 = vunpack.c.l.b16 %v8544
    %v9570 = vunpack.c.l.b16 %v8545
    %v9571 = vunpack.c.l.b16 %v8546
    %v9572 = vunpack.c.l.b16 %v8547
    %v9573 = vunpack.c.l.b16 %v8548
    %v9574 = vunpack.c.l.b16 %v8549
    %v9575 = vunpack.c.l.b16 %v8550
    %v9576 = vunpack.c.l.b16 %v8551
    %v9577 = vunpack.c.l.b16 %v8552
    %v9578 = vunpack.c.l.b16 %v8553
    %v9579 = vunpack.c.l.b16 %v8554
    %v9580 = vunpack.c.l.b16 %v8555
    %v9581 = vunpack.c.l.b16 %v8556
    %v9582 = vunpack.c.l.b16 %v8557
    %v9583 = vunpack.c.l.b16 %v8558
    %v9584 = vunpack.c.l.b16 %v8559
    %v9585 = vunpack.c.l.b16 %v8560
    %v9586 = vunpack.c.l.b16 %v8561
    %v9587 = vunpack.c.l.b16 %v8562
    %v9588 = vunpack.c.l.b16 %v8563
    %v9589 = vunpack.c.l.b16 %v8564
    %v9590 = vunpack.c.l.b16 %v8565
    %v9591 = vunpack.c.l.b16 %v8566
    %v9592 = vunpack.c.l.b16 %v8567
    %v9593 = vunpack.c.l.b16 %v8568
    %v9594 = vunpack.c.l.b16 %v8569
    %v9595 = vunpack.c.l.b16 %v8570
    %v9596 = vunpack.c.l.b16 %v8571
    %v9597 = vunpack.c.l.b16 %v8572
    %v9598 = vunpack.c.l.b16 %v8573
    %v9599 = vunpack.c.l.b16 %v8574
    %v9600 = vunpack.c.l.b16 %v8575
    %v9601 = vunpack.c.l.b16 %v8576
    %v9602 = vunpack.c.l.b16 %v8577
    %v9603 = vunpack.c.l.b16 %v8578
    %v9604 = vunpack.c.l.b16 %v8579
    %v9605 = vunpack.c.l.b16 %v8580
    %v9606 = vunpack.c.l.b16 %v8581
    %v9607 = vunpack.c.l.b16 %v8582
    %v9608 = vunpack.c.l.b16 %v8583
    %v9609 = vunpack.c.l.b16 %v8584
    %v9610 = vunpack.c.l.b16 %v8585
    %v9611 = vunpack.c.l.b16 %v8586
    %v9612 = vunpack.c.l.b16 %v8587
    %v9613 = vunpack.c.l.b16 %v8588
    %v9614 = vunpack.c.l.b16 %v8589
    %v9615 = vunpack.c.l.b16 %v8590
    %v9616 = vunpack.c.l.b16 %v8591
    %v9617 = vunpack.c.l.b16 %v8592
    %v9618 = vunpack.c.l.b16 %v8593
    %v9619 = vunpack.c.l.b16 %v8594
    %v9620 = vunpack.c.l.b16 %v8595
    %v9621 = vunpack.c.l.b16 %v8596
    %v9622 = vunpack.c.l.b16 %v8597
    %v9623 = vunpack.c.l.b16 %v8598
    %v9624 = vunpack.c.l.b16 %v8599
    %v9625 = vunpack.c.l.b16 %v8600
    %v9626 = vunpack.c.l.b16 %v8601
    %v9627 = vunpack.c.l.b16 %v8602
    %v9628 = vunpack.c.l.b16 %v8603
    %v9629 = vunpack.c.l.b16 %v8604
    %v9630 = vunpack.c.l.b16 %v8605
    %v9631 = vunpack.c.l.b16 %v8606
    %v9632 = vunpack.c.l.b16 %v8607
    %v9633 = vunpack.c.l.b16 %v8608
    %v9634 = vunpack.c.l.b16 %v8609
    %v9635 = vunpack.c.l.b16 %v8610
    %v9636 = vunpack.c.l.b16 %v8611
    %v9637 = vunpack.c.l.b16 %v8612
    %v9638 = vunpack.c.l.b16 %v8613
    %v9639 = vunpack.c.l.b16 %v8614
    %v9640 = vunpack.c.l.b16 %v8615
    %v9641 = vunpack.c.l.b16 %v8616
    %v9642 = vunpack.c.l.b16 %v8617
    %v9643 = vunpack.c.l.b16 %v8618
    %v9644 = vunpack.c.l.b16 %v8619
    %v9645 = vunpack.c.l.b16 %v8620
    %v9646 = vunpack.c.l.b16 %v8621
    %v9647 = vpack.c.b16 %v9136, %v9135
    %v9648 = vpack.c.b16 %v9138, %v9137
    %v9649 = vpack.c.b16 %v9140, %v9139
    %v9650 = vpack.c.b16 %v9142, %v9141
    %v9651 = vpack.c.b16 %v9144, %v9143
    %v9652 = vpack.c.b16 %v9146, %v9145
    %v9653 = vpack.c.b16 %v9148, %v9147
    %v9654 = vpack.c.b16 %v9150, %v9149
    %v9655 = vpack.c.b16 %v9152, %v9151
    %v9656 = vpack.c.b16 %v9154, %v9153
    %v9657 = vpack.c.b16 %v9156, %v9155
    %v9658 = vpack.c.b16 %v9158, %v9157
    %v9659 = vpack.c.b16 %v9160, %v9159
    %v9660 = vpack.c.b16 %v9162, %v9161
    %v9661 = vpack.c.b16 %v9164, %v9163
    %v9662 = vpack.c.b16 %v9166, %v9165
    %v9663 = vpack.c.b16 %v9168, %v9167
    %v9664 = vpack.c.b16 %v9170, %v9169
    %v9665 = vpack.c.b16 %v9172, %v9171
    %v9666 = vpack.c.b16 %v9174, %v9173
    %v9667 = vpack.c.b16 %v9176, %v9175
    %v9668 = vpack.c.b16 %v9178, %v9177
    %v9669 = vpack.c.b16 %v9180, %v9179
    %v9670 = vpack.c.b16 %v9182, %v9181
    %v9671 = vpack.c.b16 %v9184, %v9183
    %v9672 = vpack.c.b16 %v9186, %v9185
    %v9673 = vpack.c.b16 %v9188, %v9187
    %v9674 = vpack.c.b16 %v9190, %v9189
    %v9675 = vpack.c.b16 %v9192, %v9191
    %v9676 = vpack.c.b16 %v9194, %v9193
    %v9677 = vpack.c.b16 %v9196, %v9195
    %v9678 = vpack.c.b16 %v9198, %v9197
    %v9679 = vpack.c.b16 %v9200, %v9199
    %v9680 = vpack.c.b16 %v9202, %v9201
    %v9681 = vpack.c.b16 %v9204, %v9203
    %v9682 = vpack.c.b16 %v9206, %v9205
    %v9683 = vpack.c.b16 %v9208, %v9207
    %v9684 = vpack.c.b16 %v9210, %v9209
    %v9685 = vpack.c.b16 %v9212, %v9211
    %v9686 = vpack.c.b16 %v9214, %v9213
    %v9687 = vpack.c.b16 %v9216, %v9215
    %v9688 = vpack.c.b16 %v9218, %v9217
    %v9689 = vpack.c.b16 %v9220, %v9219
    %v9690 = vpack.c.b16 %v9222, %v9221
    %v9691 = vpack.c.b16 %v9224, %v9223
    %v9692 = vpack.c.b16 %v9226, %v9225
    %v9693 = vpack.c.b16 %v9228, %v9227
    %v9694 = vpack.c.b16 %v9230, %v9229
    %v9695 = vpack.c.b16 %v9232, %v9231
    %v9696 = vpack.c.b16 %v9234, %v9233
    %v9697 = vpack.c.b16 %v9236, %v9235
    %v9698 = vpack.c.b16 %v9238, %v9237
    %v9699 = vpack.c.b16 %v9240, %v9239
    %v9700 = vpack.c.b16 %v9242, %v9241
    %v9701 = vpack.c.b16 %v9244, %v9243
    %v9702 = vpack.c.b16 %v9246, %v9245
    %v9703 = vpack.c.b16 %v9248, %v9247
    %v9704 = vpack.c.b16 %v9250, %v9249
    %v9705 = vpack.c.b16 %v9252, %v9251
    %v9706 = vpack.c.b16 %v9254, %v9253
    %v9707 = vpack.c.b16 %v9256, %v9255
    %v9708 = vpack.c.b16 %v9258, %v9257
    %v9709 = vpack.c.b16 %v9260, %v9259
    %v9710 = vpack.c.b16 %v9262, %v9261
    %v9711 = vpack.c.b16 %v9264, %v9263
    %v9712 = vpack.c.b16 %v9266, %v9265
    %v9713 = vpack.c.b16 %v9268, %v9267
    %v9714 = vpack.c.b16 %v9270, %v9269
    %v9715 = vpack.c.b16 %v9272, %v9271
    %v9716 = vpack.c.b16 %v9274, %v9273
    %v9717 = vpack.c.b16 %v9276, %v9275
    %v9718 = vpack.c.b16 %v9278, %v9277
    %v9719 = vpack.c.b16 %v9280, %v9279
    %v9720 = vpack.c.b16 %v9282, %v9281
    %v9721 = vpack.c.b16 %v9284, %v9283
    %v9722 = vpack.c.b16 %v9286, %v9285
    %v9723 = vpack.c.b16 %v9288, %v9287
    %v9724 = vpack.c.b16 %v9290, %v9289
    %v9725 = vpack.c.b16 %v9292, %v9291
    %v9726 = vpack.c.b16 %v9294, %v9293
    %v9727 = vpack.c.b16 %v9296, %v9295
    %v9728 = vpack.c.b16 %v9298, %v9297
    %v9729 = vpack.c.b16 %v9300, %v9299
    %v9730 = vpack.c.b16 %v9302, %v9301
    %v9731 = vpack.c.b16 %v9304, %v9303
    %v9732 = vpack.c.b16 %v9306, %v9305
    %v9733 = vpack.c.b16 %v9308, %v9307
    %v9734 = vpack.c.b16 %v9310, %v9309
    %v9735 = vpack.c.b16 %v9312, %v9311
    %v9736 = vpack.c.b16 %v9314, %v9313
    %v9737 = vpack.c.b16 %v9316, %v9315
    %v9738 = vpack.c.b16 %v9318, %v9317
    %v9739 = vpack.c.b16 %v9320, %v9319
    %v9740 = vpack.c.b16 %v9322, %v9321
    %v9741 = vpack.c.b16 %v9324, %v9323
    %v9742 = vpack.c.b16 %v9326, %v9325
    %v9743 = vpack.c.b16 %v9328, %v9327
    %v9744 = vpack.c.b16 %v9330, %v9329
    %v9745 = vpack.c.b16 %v9332, %v9331
    %v9746 = vpack.c.b16 %v9334, %v9333
    %v9747 = vpack.c.b16 %v9336, %v9335
    %v9748 = vpack.c.b16 %v9338, %v9337
    %v9749 = vpack.c.b16 %v9340, %v9339
    %v9750 = vpack.c.b16 %v9342, %v9341
    %v9751 = vpack.c.b16 %v9344, %v9343
    %v9752 = vpack.c.b16 %v9346, %v9345
    %v9753 = vpack.c.b16 %v9348, %v9347
    %v9754 = vpack.c.b16 %v9350, %v9349
    %v9755 = vpack.c.b16 %v9352, %v9351
    %v9756 = vpack.c.b16 %v9354, %v9353
    %v9757 = vpack.c.b16 %v9356, %v9355
    %v9758 = vpack.c.b16 %v9358, %v9357
    %v9759 = vpack.c.b16 %v9360, %v9359
    %v9760 = vpack.c.b16 %v9362, %v9361
    %v9761 = vpack.c.b16 %v9364, %v9363
    %v9762 = vpack.c.b16 %v9366, %v9365
    %v9763 = vpack.c.b16 %v9368, %v9367
    %v9764 = vpack.c.b16 %v9370, %v9369
    %v9765 = vpack.c.b16 %v9372, %v9371
    %v9766 = vpack.c.b16 %v9374, %v9373
    %v9767 = vpack.c.b16 %v9376, %v9375
    %v9768 = vpack.c.b16 %v9378, %v9377
    %v9769 = vpack.c.b16 %v9380, %v9379
    %v9770 = vpack.c.b16 %v9382, %v9381
    %v9771 = vpack.c.b16 %v9384, %v9383
    %v9772 = vpack.c.b16 %v9386, %v9385
    %v9773 = vpack.c.b16 %v9388, %v9387
    %v9774 = vpack.c.b16 %v9390, %v9389
    %v9775 = vpack.c.b16 %v9392, %v9391
    %v9776 = vpack.c.b16 %v9394, %v9393
    %v9777 = vpack.c.b16 %v9396, %v9395
    %v9778 = vpack.c.b16 %v9398, %v9397
    %v9779 = vpack.c.b16 %v9400, %v9399
    %v9780 = vpack.c.b16 %v9402, %v9401
    %v9781 = vpack.c.b16 %v9404, %v9403
    %v9782 = vpack.c.b16 %v9406, %v9405
    %v9783 = vpack.c.b16 %v9408, %v9407
    %v9784 = vpack.c.b16 %v9410, %v9409
    %v9785 = vpack.c.b16 %v9412, %v9411
    %v9786 = vpack.c.b16 %v9414, %v9413
    %v9787 = vpack.c.b16 %v9416, %v9415
    %v9788 = vpack.c.b16 %v9418, %v9417
    %v9789 = vpack.c.b16 %v9420, %v9419
    %v9790 = vpack.c.b16 %v9422, %v9421
    %v9791 = vpack.c.b16 %v9424, %v9423
    %v9792 = vpack.c.b16 %v9426, %v9425
    %v9793 = vpack.c.b16 %v9428, %v9427
    %v9794 = vpack.c.b16 %v9430, %v9429
    %v9795 = vpack.c.b16 %v9432, %v9431
    %v9796 = vpack.c.b16 %v9434, %v9433
    %v9797 = vpack.c.b16 %v9436, %v9435
    %v9798 = vpack.c.b16 %v9438, %v9437
    %v9799 = vpack.c.b16 %v9440, %v9439
    %v9800 = vpack.c.b16 %v9442, %v9441
    %v9801 = vpack.c.b16 %v9444, %v9443
    %v9802 = vpack.c.b16 %v9446, %v9445
    %v9803 = vpack.c.b16 %v9448, %v9447
    %v9804 = vpack.c.b16 %v9450, %v9449
    %v9805 = vpack.c.b16 %v9452, %v9451
    %v9806 = vpack.c.b16 %v9454, %v9453
    %v9807 = vpack.c.b16 %v9456, %v9455
    %v9808 = vpack.c.b16 %v9458, %v9457
    %v9809 = vpack.c.b16 %v9460, %v9459
    %v9810 = vpack.c.b16 %v9462, %v9461
    %v9811 = vpack.c.b16 %v9464, %v9463
    %v9812 = vpack.c.b16 %v9466, %v9465
    %v9813 = vpack.c.b16 %v9468, %v9467
    %v9814 = vpack.c.b16 %v9470, %v9469
    %v9815 = vpack.c.b16 %v9472, %v9471
    %v9816 = vpack.c.b16 %v9474, %v9473
    %v9817 = vpack.c.b16 %v9476, %v9475
    %v9818 = vpack.c.b16 %v9478, %v9477
    %v9819 = vpack.c.b16 %v9480, %v9479
    %v9820 = vpack.c.b16 %v9482, %v9481
    %v9821 = vpack.c.b16 %v9484, %v9483
    %v9822 = vpack.c.b16 %v9486, %v9485
    %v9823 = vpack.c.b16 %v9488, %v9487
    %v9824 = vpack.c.b16 %v9490, %v9489
    %v9825 = vpack.c.b16 %v9492, %v9491
    %v9826 = vpack.c.b16 %v9494, %v9493
    %v9827 = vpack.c.b16 %v9496, %v9495
    %v9828 = vpack.c.b16 %v9498, %v9497
    %v9829 = vpack.c.b16 %v9500, %v9499
    %v9830 = vpack.c.b16 %v9502, %v9501
    %v9831 = vpack.c.b16 %v9504, %v9503
    %v9832 = vpack.c.b16 %v9506, %v9505
    %v9833 = vpack.c.b16 %v9508, %v9507
    %v9834 = vpack.c.b16 %v9510, %v9509
    %v9835 = vpack.c.b16 %v9512, %v9511
    %v9836 = vpack.c.b16 %v9514, %v9513
    %v9837 = vpack.c.b16 %v9516, %v9515
    %v9838 = vpack.c.b16 %v9518, %v9517
    %v9839 = vpack.c.b16 %v9520, %v9519
    %v9840 = vpack.c.b16 %v9522, %v9521
    %v9841 = vpack.c.b16 %v9524, %v9523
    %v9842 = vpack.c.b16 %v9526, %v9525
    %v9843 = vpack.c.b16 %v9528, %v9527
    %v9844 = vpack.c.b16 %v9530, %v9529
    %v9845 = vpack.c.b16 %v9532, %v9531
    %v9846 = vpack.c.b16 %v9534, %v9533
    %v9847 = vpack.c.b16 %v9536, %v9535
    %v9848 = vpack.c.b16 %v9538, %v9537
    %v9849 = vpack.c.b16 %v9540, %v9539
    %v9850 = vpack.c.b16 %v9542, %v9541
    %v9851 = vpack.c.b16 %v9544, %v9543
    %v9852 = vpack.c.b16 %v9546, %v9545
    %v9853 = vpack.c.b16 %v9548, %v9547
    %v9854 = vpack.c.b16 %v9550, %v9549
    %v9855 = vpack.c.b16 %v9552, %v9551
    %v9856 = vpack.c.b16 %v9554, %v9553
    %v9857 = vpack.c.b16 %v9556, %v9555
    %v9858 = vpack.c.b16 %v9558, %v9557
    %v9859 = vpack.c.b16 %v9560, %v9559
    %v9860 = vpack.c.b16 %v9562, %v9561
    %v9861 = vpack.c.b16 %v9564, %v9563
    %v9862 = vpack.c.b16 %v9566, %v9565
    %v9863 = vpack.c.b16 %v9568, %v9567
    %v9864 = vpack.c.b16 %v9570, %v9569
    %v9865 = vpack.c.b16 %v9572, %v9571
    %v9866 = vpack.c.b16 %v9574, %v9573
    %v9867 = vpack.c.b16 %v9576, %v9575
    %v9868 = vpack.c.b16 %v9578, %v9577
    %v9869 = vpack.c.b16 %v9580, %v9579
    %v9870 = vpack.c.b16 %v9582, %v9581
    %v9871 = vpack.c.b16 %v9584, %v9583
    %v9872 = vpack.c.b16 %v9586, %v9585
    %v9873 = vpack.c.b16 %v9588, %v9587
    %v9874 = vpack.c.b16 %v9590, %v9589
    %v9875 = vpack.c.b16 %v9592, %v9591
    %v9876 = vpack.c.b16 %v9594, %v9593
    %v9877 = vpack.c.b16 %v9596, %v9595
    %v9878 = vpack.c.b16 %v9598, %v9597
    %v9879 = vpack.c.b16 %v9600, %v9599
    %v9880 = vpack.c.b16 %v9602, %v9601
    %v9881 = vpack.c.b16 %v9604, %v9603
    %v9882 = vpack.c.b16 %v9606, %v9605
    %v9883 = vpack.c.b16 %v9608, %v9607
    %v9884 = vpack.c.b16 %v9610, %v9609
    %v9885 = vpack.c.b16 %v9612, %v9611
    %v9886 = vpack.c.b16 %v9614, %v9613
    %v9887 = vpack.c.b16 %v9616, %v9615
    %v9888 = vpack.c.b16 %v9618, %v9617
    %v9889 = vpack.c.b16 %v9620, %v9619
    %v9890 = vpack.c.b16 %v9622, %v9621
    %v9891 = vpack.c.b16 %v9624, %v9623
    %v9892 = vpack.c.b16 %v9626, %v9625
    %v9893 = vpack.c.b16 %v9628, %v9627
    %v9894 = vpack.c.b16 %v9630, %v9629
    %v9895 = vpack.c.b16 %v9632, %v9631
    %v9896 = vpack.c.b16 %v9634, %v9633
    %v9897 = vpack.c.b16 %v9636, %v9635
    %v9898 = vpack.c.b16 %v9638, %v9637
    %v9899 = vpack.c.b16 %v9640, %v9639
    %v9900 = vpack.c.b16 %v9642, %v9641
    %v9901 = vpack.c.b16 %v9644, %v9643
    %v9902 = vpack.c.b16 %v9646, %v9645
    %10159 = vmatprep.subr.bf16.mxu0 0
    %10160 = vmatpush1.bf16.msra.mxu0 %v9647
    %10161 = vmatprep.subr.bf16.mxu0 0
    %10162 = vmatpush1.bf16.msra.mxu0 %v9648
    %10163 = vmatprep.subr.bf16.mxu0 0
    %10164 = vmatpush1.bf16.msra.mxu0 %v9649
    %10165 = vmatprep.subr.bf16.mxu0 0
    %10166 = vmatpush1.bf16.msra.mxu0 %v9650
    %10167 = vmatprep.subr.bf16.mxu0 0
    %10168 = vmatpush1.bf16.msra.mxu0 %v9651
    %10169 = vmatprep.subr.bf16.mxu0 0
    %10170 = vmatpush1.bf16.msra.mxu0 %v9652
    %10171 = vmatprep.subr.bf16.mxu0 0
    %10172 = vmatpush1.bf16.msra.mxu0 %v9653
    %10173 = vmatprep.subr.bf16.mxu0 0
    %10174 = vmatpush1.bf16.msra.mxu0 %v9654
    %10175 = vmatprep.subr.bf16.mxu0 0
    %10176 = vmatpush1.bf16.msra.mxu0 %v9655
    %10177 = vmatprep.subr.bf16.mxu0 0
    %10178 = vmatpush1.bf16.msra.mxu0 %v9656
    %10179 = vmatprep.subr.bf16.mxu0 0
    %10180 = vmatpush1.bf16.msra.mxu0 %v9657
    %10181 = vmatprep.subr.bf16.mxu0 0
    %10182 = vmatpush1.bf16.msra.mxu0 %v9658
    %10183 = vmatprep.subr.bf16.mxu0 0
    %10184 = vmatpush1.bf16.msra.mxu0 %v9659
    %10185 = vmatprep.subr.bf16.mxu0 0
    %10186 = vmatpush1.bf16.msra.mxu0 %v9660
    %10187 = vmatprep.subr.bf16.mxu0 0
    %10188 = vmatpush1.bf16.msra.mxu0 %v9661
    %10189 = vmatprep.subr.bf16.mxu0 0
    %10190 = vmatpush1.bf16.msra.mxu0 %v9662
    %10191 = vmatprep.mubr.bf16.mxu0 %v8079
    %10192 = vmatmul.mubr.bf16.gmra.mrb[0].mxu0 %v8078
    %v10193 = vpop.f32.mrb[0].mxu0
    %v10194 = vadd.f32 %v8622, %v10193
    %v10195 = vpop.f32.mrb[0].mxu0
    %v10196 = vpop.f32.mrb[0].mxu0
    %v10197 = vpop.f32.mrb[0].mxu0
    %10198 = vdwg.mxu0
    %10199 = vmatprep.subr.bf16.mxu0 0
    %10200 = vmatpush1.bf16.msra.mxu0 %v9663
    %10201 = vmatprep.subr.bf16.mxu0 0
    %10202 = vmatpush1.bf16.msra.mxu0 %v9664
    %10203 = vmatprep.subr.bf16.mxu0 0
    %10204 = vmatpush1.bf16.msra.mxu0 %v9665
    %10205 = vmatprep.subr.bf16.mxu0 0
    %10206 = vmatpush1.bf16.msra.mxu0 %v9666
    %10207 = vmatprep.subr.bf16.mxu0 0
    %10208 = vmatpush1.bf16.msra.mxu0 %v9667
    %10209 = vmatprep.subr.bf16.mxu0 0
    %10210 = vmatpush1.bf16.msra.mxu0 %v9668
    %10211 = vmatprep.subr.bf16.mxu0 0
    %10212 = vmatpush1.bf16.msra.mxu0 %v9669
    %10213 = vmatprep.subr.bf16.mxu0 0
    %10214 = vmatpush1.bf16.msra.mxu0 %v9670
    %10215 = vmatprep.subr.bf16.mxu0 0
    %10216 = vmatpush1.bf16.msra.mxu0 %v9671
    %10217 = vmatprep.subr.bf16.mxu0 0
    %10218 = vmatpush1.bf16.msra.mxu0 %v9672
    %10219 = vmatprep.subr.bf16.mxu0 0
    %10220 = vmatpush1.bf16.msra.mxu0 %v9673
    %10221 = vmatprep.subr.bf16.mxu0 0
    %10222 = vmatpush1.bf16.msra.mxu0 %v9674
    %10223 = vmatprep.subr.bf16.mxu0 0
    %10224 = vmatpush1.bf16.msra.mxu0 %v9675
    %10225 = vmatprep.subr.bf16.mxu0 0
    %10226 = vmatpush1.bf16.msra.mxu0 %v9676
    %10227 = vmatprep.subr.bf16.mxu0 0
    %10228 = vmatpush1.bf16.msra.mxu0 %v9677
    %10229 = vmatprep.subr.bf16.mxu0 0
    %10230 = vmatpush1.bf16.msra.mxu0 %v9678
    %10231 = vmatprep.mubr.bf16.mxu0 %v8081
    %10232 = vmatmul.mubr.bf16.gmra.mrb[0].mxu0 %v8080
    %v10233 = vpop.f32.mrb[0].mxu0
    %v10234 = vadd.f32 %v10194, %v10233
    %v10235 = vpop.f32.mrb[0].mxu0
    %v10236 = vpop.f32.mrb[0].mxu0
    %v10237 = vpop.f32.mrb[0].mxu0
    %10238 = vdwg.mxu0
    %10239 = vmatprep.subr.bf16.mxu0 0
    %10240 = vmatpush1.bf16.msra.mxu0 %v9679
    %10241 = vmatprep.subr.bf16.mxu0 0
    %10242 = vmatpush1.bf16.msra.mxu0 %v9680
    %10243 = vmatprep.subr.bf16.mxu0 0
    %10244 = vmatpush1.bf16.msra.mxu0 %v9681
    %10245 = vmatprep.subr.bf16.mxu0 0
    %10246 = vmatpush1.bf16.msra.mxu0 %v9682
    %10247 = vmatprep.subr.bf16.mxu0 0
    %10248 = vmatpush1.bf16.msra.mxu0 %v9683
    %10249 = vmatprep.subr.bf16.mxu0 0
    %10250 = vmatpush1.bf16.msra.mxu0 %v9684
    %10251 = vmatprep.subr.bf16.mxu0 0
    %10252 = vmatpush1.bf16.msra.mxu0 %v9685
    %10253 = vmatprep.subr.bf16.mxu0 0
    %10254 = vmatpush1.bf16.msra.mxu0 %v9686
    %10255 = vmatprep.subr.bf16.mxu0 0
    %10256 = vmatpush1.bf16.msra.mxu0 %v9687
    %10257 = vmatprep.subr.bf16.mxu0 0
    %10258 = vmatpush1.bf16.msra.mxu0 %v9688
    %10259 = vmatprep.subr.bf16.mxu0 0
    %10260 = vmatpush1.bf16.msra.mxu0 %v9689
    %10261 = vmatprep.subr.bf16.mxu0 0
    %10262 = vmatpush1.bf16.msra.mxu0 %v9690
    %10263 = vmatprep.subr.bf16.mxu0 0
    %10264 = vmatpush1.bf16.msra.mxu0 %v9691
    %10265 = vmatprep.subr.bf16.mxu0 0
    %10266 = vmatpush1.bf16.msra.mxu0 %v9692
    %10267 = vmatprep.subr.bf16.mxu0 0
    %10268 = vmatpush1.bf16.msra.mxu0 %v9693
    %10269 = vmatprep.subr.bf16.mxu0 0
    %10270 = vmatpush1.bf16.msra.mxu0 %v9694
    %10271 = vmatprep.mubr.bf16.mxu0 %v8083
    %10272 = vmatmul.mubr.bf16.gmra.mrb[0].mxu0 %v8082
    %v10273 = vpop.f32.mrb[0].mxu0
    %v10274 = vadd.f32 %v10234, %v10273
    %v10275 = vpop.f32.mrb[0].mxu0
    %v10276 = vpop.f32.mrb[0].mxu0
    %v10277 = vpop.f32.mrb[0].mxu0
    %10278 = vdwg.mxu0
    %10279 = vmatprep.subr.bf16.mxu0 0
    %10280 = vmatpush1.bf16.msra.mxu0 %v9695
    %10281 = vmatprep.subr.bf16.mxu0 0
    %10282 = vmatpush1.bf16.msra.mxu0 %v9696
    %10283 = vmatprep.subr.bf16.mxu0 0
    %10284 = vmatpush1.bf16.msra.mxu0 %v9697
    %10285 = vmatprep.subr.bf16.mxu0 0
    %10286 = vmatpush1.bf16.msra.mxu0 %v9698
    %10287 = vmatprep.subr.bf16.mxu0 0
    %10288 = vmatpush1.bf16.msra.mxu0 %v9699
    %10289 = vmatprep.subr.bf16.mxu0 0
    %10290 = vmatpush1.bf16.msra.mxu0 %v9700
    %10291 = vmatprep.subr.bf16.mxu0 0
    %10292 = vmatpush1.bf16.msra.mxu0 %v9701
    %10293 = vmatprep.subr.bf16.mxu0 0
    %10294 = vmatpush1.bf16.msra.mxu0 %v9702
    %10295 = vmatprep.subr.bf16.mxu0 0
    %10296 = vmatpush1.bf16.msra.mxu0 %v9703
    %10297 = vmatprep.subr.bf16.mxu0 0
    %10298 = vmatpush1.bf16.msra.mxu0 %v9704
    %10299 = vmatprep.subr.bf16.mxu0 0
    %10300 = vmatpush1.bf16.msra.mxu0 %v9705
    %10301 = vmatprep.subr.bf16.mxu0 0
    %10302 = vmatpush1.bf16.msra.mxu0 %v9706
    %10303 = vmatprep.subr.bf16.mxu0 0
    %10304 = vmatpush1.bf16.msra.mxu0 %v9707
    %10305 = vmatprep.subr.bf16.mxu0 0
    %10306 = vmatpush1.bf16.msra.mxu0 %v9708
    %10307 = vmatprep.subr.bf16.mxu0 0
    %10308 = vmatpush1.bf16.msra.mxu0 %v9709
    %10309 = vmatprep.subr.bf16.mxu0 0
    %10310 = vmatpush1.bf16.msra.mxu0 %v9710
    %10311 = vmatprep.mubr.bf16.mxu0 %v8085
    %10312 = vmatmul.mubr.bf16.gmra.mrb[0].mxu0 %v8084
    %v10313 = vpop.f32.mrb[0].mxu0
    %v10314 = vadd.f32 %v10274, %v10313
    %v10315 = vpop.f32.mrb[0].mxu0
    %v10316 = vpop.f32.mrb[0].mxu0
    %v10317 = vpop.f32.mrb[0].mxu0
    %10318 = vdwg.mxu0
    %10319 = vmatprep.subr.bf16.mxu0 0
    %10320 = vmatpush1.bf16.msra.mxu0 %v9711
    %10321 = vmatprep.subr.bf16.mxu0 0
    %10322 = vmatpush1.bf16.msra.mxu0 %v9712
    %10323 = vmatprep.subr.bf16.mxu0 0
    %10324 = vmatpush1.bf16.msra.mxu0 %v9713
    %10325 = vmatprep.subr.bf16.mxu0 0
    %10326 = vmatpush1.bf16.msra.mxu0 %v9714
    %10327 = vmatprep.subr.bf16.mxu0 0
    %10328 = vmatpush1.bf16.msra.mxu0 %v9715
    %10329 = vmatprep.subr.bf16.mxu0 0
    %10330 = vmatpush1.bf16.msra.mxu0 %v9716
    %10331 = vmatprep.subr.bf16.mxu0 0
    %10332 = vmatpush1.bf16.msra.mxu0 %v9717
    %10333 = vmatprep.subr.bf16.mxu0 0
    %10334 = vmatpush1.bf16.msra.mxu0 %v9718
    %10335 = vmatprep.subr.bf16.mxu0 0
    %10336 = vmatpush1.bf16.msra.mxu0 %v9719
    %10337 = vmatprep.subr.bf16.mxu0 0
    %10338 = vmatpush1.bf16.msra.mxu0 %v9720
    %10339 = vmatprep.subr.bf16.mxu0 0
    %10340 = vmatpush1.bf16.msra.mxu0 %v9721
    %10341 = vmatprep.subr.bf16.mxu0 0
    %10342 = vmatpush1.bf16.msra.mxu0 %v9722
    %10343 = vmatprep.subr.bf16.mxu0 0
    %10344 = vmatpush1.bf16.msra.mxu0 %v9723
    %10345 = vmatprep.subr.bf16.mxu0 0
    %10346 = vmatpush1.bf16.msra.mxu0 %v9724
    %10347 = vmatprep.subr.bf16.mxu0 0
    %10348 = vmatpush1.bf16.msra.mxu0 %v9725
    %10349 = vmatprep.subr.bf16.mxu0 0
    %10350 = vmatpush1.bf16.msra.mxu0 %v9726
    %10351 = vmatprep.mubr.bf16.mxu0 %v8087
    %10352 = vmatmul.mubr.bf16.gmra.mrb[0].mxu0 %v8086
    %v10353 = vpop.f32.mrb[0].mxu0
    %v10354 = vadd.f32 %v10314, %v10353
    %v10355 = vpop.f32.mrb[0].mxu0
    %v10356 = vpop.f32.mrb[0].mxu0
    %v10357 = vpop.f32.mrb[0].mxu0
    %10358 = vdwg.mxu0
    %10359 = vmatprep.subr.bf16.mxu0 0
    %10360 = vmatpush1.bf16.msra.mxu0 %v9727
    %10361 = vmatprep.subr.bf16.mxu0 0
    %10362 = vmatpush1.bf16.msra.mxu0 %v9728
    %10363 = vmatprep.subr.bf16.mxu0 0
    %10364 = vmatpush1.bf16.msra.mxu0 %v9729
    %10365 = vmatprep.subr.bf16.mxu0 0
    %10366 = vmatpush1.bf16.msra.mxu0 %v9730
    %10367 = vmatprep.subr.bf16.mxu0 0
    %10368 = vmatpush1.bf16.msra.mxu0 %v9731
    %10369 = vmatprep.subr.bf16.mxu0 0
    %10370 = vmatpush1.bf16.msra.mxu0 %v9732
    %10371 = vmatprep.subr.bf16.mxu0 0
    %10372 = vmatpush1.bf16.msra.mxu0 %v9733
    %10373 = vmatprep.subr.bf16.mxu0 0
    %10374 = vmatpush1.bf16.msra.mxu0 %v9734
    %10375 = vmatprep.subr.bf16.mxu0 0
    %10376 = vmatpush1.bf16.msra.mxu0 %v9735
    %10377 = vmatprep.subr.bf16.mxu0 0
    %10378 = vmatpush1.bf16.msra.mxu0 %v9736
    %10379 = vmatprep.subr.bf16.mxu0 0
    %10380 = vmatpush1.bf16.msra.mxu0 %v9737
    %10381 = vmatprep.subr.bf16.mxu0 0
    %10382 = vmatpush1.bf16.msra.mxu0 %v9738
    %10383 = vmatprep.subr.bf16.mxu0 0
    %10384 = vmatpush1.bf16.msra.mxu0 %v9739
    %10385 = vmatprep.subr.bf16.mxu0 0
    %10386 = vmatpush1.bf16.msra.mxu0 %v9740
    %10387 = vmatprep.subr.bf16.mxu0 0
    %10388 = vmatpush1.bf16.msra.mxu0 %v9741
    %10389 = vmatprep.subr.bf16.mxu0 0
    %10390 = vmatpush1.bf16.msra.mxu0 %v9742
    %10391 = vmatprep.mubr.bf16.mxu0 %v8089
    %10392 = vmatmul.mubr.bf16.gmra.mrb[0].mxu0 %v8088
    %v10393 = vpop.f32.mrb[0].mxu0
    %v10394 = vadd.f32 %v10354, %v10393
    %v10395 = vpop.f32.mrb[0].mxu0
    %v10396 = vpop.f32.mrb[0].mxu0
    %v10397 = vpop.f32.mrb[0].mxu0
    %10398 = vdwg.mxu0
    %10399 = vmatprep.subr.bf16.mxu0 0
    %10400 = vmatpush1.bf16.msra.mxu0 %v9743
    %10401 = vmatprep.subr.bf16.mxu0 0
    %10402 = vmatpush1.bf16.msra.mxu0 %v9744
    %10403 = vmatprep.subr.bf16.mxu0 0
    %10404 = vmatpush1.bf16.msra.mxu0 %v9745
    %10405 = vmatprep.subr.bf16.mxu0 0
    %10406 = vmatpush1.bf16.msra.mxu0 %v9746
    %10407 = vmatprep.subr.bf16.mxu0 0
    %10408 = vmatpush1.bf16.msra.mxu0 %v9747
    %10409 = vmatprep.subr.bf16.mxu0 0
    %10410 = vmatpush1.bf16.msra.mxu0 %v9748
    %10411 = vmatprep.subr.bf16.mxu0 0
    %10412 = vmatpush1.bf16.msra.mxu0 %v9749
    %10413 = vmatprep.subr.bf16.mxu0 0
    %10414 = vmatpush1.bf16.msra.mxu0 %v9750
    %10415 = vmatprep.subr.bf16.mxu0 0
    %10416 = vmatpush1.bf16.msra.mxu0 %v9751
    %10417 = vmatprep.subr.bf16.mxu0 0
    %10418 = vmatpush1.bf16.msra.mxu0 %v9752
    %10419 = vmatprep.subr.bf16.mxu0 0
    %10420 = vmatpush1.bf16.msra.mxu0 %v9753
    %10421 = vmatprep.subr.bf16.mxu0 0
    %10422 = vmatpush1.bf16.msra.mxu0 %v9754
    %10423 = vmatprep.subr.bf16.mxu0 0
    %10424 = vmatpush1.bf16.msra.mxu0 %v9755
    %10425 = vmatprep.subr.bf16.mxu0 0
    %10426 = vmatpush1.bf16.msra.mxu0 %v9756
    %10427 = vmatprep.subr.bf16.mxu0 0
    %10428 = vmatpush1.bf16.msra.mxu0 %v9757
    %10429 = vmatprep.subr.bf16.mxu0 0
    %10430 = vmatpush1.bf16.msra.mxu0 %v9758
    %10431 = vmatprep.mubr.bf16.mxu0 %v8091
    %10432 = vmatmul.mubr.bf16.gmra.mrb[0].mxu0 %v8090
    %v10433 = vpop.f32.mrb[0].mxu0
    %v10434 = vadd.f32 %v10394, %v10433
    %v10435 = vpop.f32.mrb[0].mxu0
    %v10436 = vpop.f32.mrb[0].mxu0
    %v10437 = vpop.f32.mrb[0].mxu0
    %10438 = vdwg.mxu0
    %10439 = vmatprep.subr.bf16.mxu0 0
    %10440 = vmatpush1.bf16.msra.mxu0 %v9759
    %10441 = vmatprep.subr.bf16.mxu0 0
    %10442 = vmatpush1.bf16.msra.mxu0 %v9760
    %10443 = vmatprep.subr.bf16.mxu0 0
    %10444 = vmatpush1.bf16.msra.mxu0 %v9761
    %10445 = vmatprep.subr.bf16.mxu0 0
    %10446 = vmatpush1.bf16.msra.mxu0 %v9762
    %10447 = vmatprep.subr.bf16.mxu0 0
    %10448 = vmatpush1.bf16.msra.mxu0 %v9763
    %10449 = vmatprep.subr.bf16.mxu0 0
    %10450 = vmatpush1.bf16.msra.mxu0 %v9764
    %10451 = vmatprep.subr.bf16.mxu0 0
    %10452 = vmatpush1.bf16.msra.mxu0 %v9765
    %10453 = vmatprep.subr.bf16.mxu0 0
    %10454 = vmatpush1.bf16.msra.mxu0 %v9766
    %10455 = vmatprep.subr.bf16.mxu0 0
    %10456 = vmatpush1.bf16.msra.mxu0 %v9767
    %10457 = vmatprep.subr.bf16.mxu0 0
    %10458 = vmatpush1.bf16.msra.mxu0 %v9768
    %10459 = vmatprep.subr.bf16.mxu0 0
    %10460 = vmatpush1.bf16.msra.mxu0 %v9769
    %10461 = vmatprep.subr.bf16.mxu0 0
    %10462 = vmatpush1.bf16.msra.mxu0 %v9770
    %10463 = vmatprep.subr.bf16.mxu0 0
    %10464 = vmatpush1.bf16.msra.mxu0 %v9771
    %10465 = vmatprep.subr.bf16.mxu0 0
    %10466 = vmatpush1.bf16.msra.mxu0 %v9772
    %10467 = vmatprep.subr.bf16.mxu0 0
    %10468 = vmatpush1.bf16.msra.mxu0 %v9773
    %10469 = vmatprep.subr.bf16.mxu0 0
    %10470 = vmatpush1.bf16.msra.mxu0 %v9774
    %10471 = vmatprep.mubr.bf16.mxu0 %v8093
    %10472 = vmatmul.mubr.bf16.gmra.mrb[0].mxu0 %v8092
    %v10473 = vpop.f32.mrb[0].mxu0
    %v10474 = vadd.f32 %v10434, %v10473
    %v10475 = vpop.f32.mrb[0].mxu0
    %v10476 = vpop.f32.mrb[0].mxu0
    %v10477 = vpop.f32.mrb[0].mxu0
    %10478 = vdwg.mxu0
    %10479 = vmatprep.subr.bf16.mxu0 0
    %10480 = vmatpush1.bf16.msra.mxu0 %v9775
    %10481 = vmatprep.subr.bf16.mxu0 0
    %10482 = vmatpush1.bf16.msra.mxu0 %v9776
    %10483 = vmatprep.subr.bf16.mxu0 0
    %10484 = vmatpush1.bf16.msra.mxu0 %v9777
    %10485 = vmatprep.subr.bf16.mxu0 0
    %10486 = vmatpush1.bf16.msra.mxu0 %v9778
    %10487 = vmatprep.subr.bf16.mxu0 0
    %10488 = vmatpush1.bf16.msra.mxu0 %v9779
    %10489 = vmatprep.subr.bf16.mxu0 0
    %10490 = vmatpush1.bf16.msra.mxu0 %v9780
    %10491 = vmatprep.subr.bf16.mxu0 0
    %10492 = vmatpush1.bf16.msra.mxu0 %v9781
    %10493 = vmatprep.subr.bf16.mxu0 0
    %10494 = vmatpush1.bf16.msra.mxu0 %v9782
    %10495 = vmatprep.subr.bf16.mxu0 0
    %10496 = vmatpush1.bf16.msra.mxu0 %v9783
    %10497 = vmatprep.subr.bf16.mxu0 0
    %10498 = vmatpush1.bf16.msra.mxu0 %v9784
    %10499 = vmatprep.subr.bf16.mxu0 0
    %10500 = vmatpush1.bf16.msra.mxu0 %v9785
    %10501 = vmatprep.subr.bf16.mxu0 0
    %10502 = vmatpush1.bf16.msra.mxu0 %v9786
    %10503 = vmatprep.subr.bf16.mxu0 0
    %10504 = vmatpush1.bf16.msra.mxu0 %v9787
    %10505 = vmatprep.subr.bf16.mxu0 0
    %10506 = vmatpush1.bf16.msra.mxu0 %v9788
    %10507 = vmatprep.subr.bf16.mxu0 0
    %10508 = vmatpush1.bf16.msra.mxu0 %v9789
    %10509 = vmatprep.subr.bf16.mxu0 0
    %10510 = vmatpush1.bf16.msra.mxu0 %v9790
    %10511 = vmatprep.mubr.bf16.mxu0 %v8095
    %10512 = vmatmul.mubr.bf16.gmra.mrb[0].mxu0 %v8094
    %v10513 = vpop.f32.mrb[0].mxu0
    %v10514 = vadd.f32 %v10474, %v10513
    %v10515 = vpop.f32.mrb[0].mxu0
    %v10516 = vpop.f32.mrb[0].mxu0
    %v10517 = vpop.f32.mrb[0].mxu0
    %10518 = vdwg.mxu0
    %10519 = vmatprep.subr.bf16.mxu0 0
    %10520 = vmatpush1.bf16.msra.mxu0 %v9791
    %10521 = vmatprep.subr.bf16.mxu0 0
    %10522 = vmatpush1.bf16.msra.mxu0 %v9792
    %10523 = vmatprep.subr.bf16.mxu0 0
    %10524 = vmatpush1.bf16.msra.mxu0 %v9793
    %10525 = vmatprep.subr.bf16.mxu0 0
    %10526 = vmatpush1.bf16.msra.mxu0 %v9794
    %10527 = vmatprep.subr.bf16.mxu0 0
    %10528 = vmatpush1.bf16.msra.mxu0 %v9795
    %10529 = vmatprep.subr.bf16.mxu0 0
    %10530 = vmatpush1.bf16.msra.mxu0 %v9796
    %10531 = vmatprep.subr.bf16.mxu0 0
    %10532 = vmatpush1.bf16.msra.mxu0 %v9797
    %10533 = vmatprep.subr.bf16.mxu0 0
    %10534 = vmatpush1.bf16.msra.mxu0 %v9798
    %10535 = vmatprep.subr.bf16.mxu0 0
    %10536 = vmatpush1.bf16.msra.mxu0 %v9799
    %10537 = vmatprep.subr.bf16.mxu0 0
    %10538 = vmatpush1.bf16.msra.mxu0 %v9800
    %10539 = vmatprep.subr.bf16.mxu0 0
    %10540 = vmatpush1.bf16.msra.mxu0 %v9801
    %10541 = vmatprep.subr.bf16.mxu0 0
    %10542 = vmatpush1.bf16.msra.mxu0 %v9802
    %10543 = vmatprep.subr.bf16.mxu0 0
    %10544 = vmatpush1.bf16.msra.mxu0 %v9803
    %10545 = vmatprep.subr.bf16.mxu0 0
    %10546 = vmatpush1.bf16.msra.mxu0 %v9804
    %10547 = vmatprep.subr.bf16.mxu0 0
    %10548 = vmatpush1.bf16.msra.mxu0 %v9805
    %10549 = vmatprep.subr.bf16.mxu0 0
    %10550 = vmatpush1.bf16.msra.mxu0 %v9806
    %10551 = vmatprep.mubr.bf16.mxu0 %v8097
    %10552 = vmatmul.mubr.bf16.gmra.mrb[0].mxu0 %v8096
    %v10553 = vpop.f32.mrb[0].mxu0
    %v10554 = vadd.f32 %v10514, %v10553
    %v10555 = vpop.f32.mrb[0].mxu0
    %v10556 = vpop.f32.mrb[0].mxu0
    %v10557 = vpop.f32.mrb[0].mxu0
    %10558 = vdwg.mxu0
    %10559 = vmatprep.subr.bf16.mxu0 0
    %10560 = vmatpush1.bf16.msra.mxu0 %v9807
    %10561 = vmatprep.subr.bf16.mxu0 0
    %10562 = vmatpush1.bf16.msra.mxu0 %v9808
    %10563 = vmatprep.subr.bf16.mxu0 0
    %10564 = vmatpush1.bf16.msra.mxu0 %v9809
    %10565 = vmatprep.subr.bf16.mxu0 0
    %10566 = vmatpush1.bf16.msra.mxu0 %v9810
    %10567 = vmatprep.subr.bf16.mxu0 0
    %10568 = vmatpush1.bf16.msra.mxu0 %v9811
    %10569 = vmatprep.subr.bf16.mxu0 0
    %10570 = vmatpush1.bf16.msra.mxu0 %v9812
    %10571 = vmatprep.subr.bf16.mxu0 0
    %10572 = vmatpush1.bf16.msra.mxu0 %v9813
    %10573 = vmatprep.subr.bf16.mxu0 0
    %10574 = vmatpush1.bf16.msra.mxu0 %v9814
    %10575 = vmatprep.subr.bf16.mxu0 0
    %10576 = vmatpush1.bf16.msra.mxu0 %v9815
    %10577 = vmatprep.subr.bf16.mxu0 0
    %10578 = vmatpush1.bf16.msra.mxu0 %v9816
    %10579 = vmatprep.subr.bf16.mxu0 0
    %10580 = vmatpush1.bf16.msra.mxu0 %v9817
    %10581 = vmatprep.subr.bf16.mxu0 0
    %10582 = vmatpush1.bf16.msra.mxu0 %v9818
    %10583 = vmatprep.subr.bf16.mxu0 0
    %10584 = vmatpush1.bf16.msra.mxu0 %v9819
    %10585 = vmatprep.subr.bf16.mxu0 0
    %10586 = vmatpush1.bf16.msra.mxu0 %v9820
    %10587 = vmatprep.subr.bf16.mxu0 0
    %10588 = vmatpush1.bf16.msra.mxu0 %v9821
    %10589 = vmatprep.subr.bf16.mxu0 0
    %10590 = vmatpush1.bf16.msra.mxu0 %v9822
    %10591 = vmatprep.mubr.bf16.mxu0 %v8099
    %10592 = vmatmul.mubr.bf16.gmra.mrb[0].mxu0 %v8098
    %v10593 = vpop.f32.mrb[0].mxu0
    %v10594 = vadd.f32 %v10554, %v10593
    %v10595 = vpop.f32.mrb[0].mxu0
    %v10596 = vpop.f32.mrb[0].mxu0
    %v10597 = vpop.f32.mrb[0].mxu0
    %10598 = vdwg.mxu0
    %10599 = vmatprep.subr.bf16.mxu0 0
    %10600 = vmatpush1.bf16.msra.mxu0 %v9823
    %10601 = vmatprep.subr.bf16.mxu0 0
    %10602 = vmatpush1.bf16.msra.mxu0 %v9824
    %10603 = vmatprep.subr.bf16.mxu0 0
    %10604 = vmatpush1.bf16.msra.mxu0 %v9825
    %10605 = vmatprep.subr.bf16.mxu0 0
    %10606 = vmatpush1.bf16.msra.mxu0 %v9826
    %10607 = vmatprep.subr.bf16.mxu0 0
    %10608 = vmatpush1.bf16.msra.mxu0 %v9827
    %10609 = vmatprep.subr.bf16.mxu0 0
    %10610 = vmatpush1.bf16.msra.mxu0 %v9828
    %10611 = vmatprep.subr.bf16.mxu0 0
    %10612 = vmatpush1.bf16.msra.mxu0 %v9829
    %10613 = vmatprep.subr.bf16.mxu0 0
    %10614 = vmatpush1.bf16.msra.mxu0 %v9830
    %10615 = vmatprep.subr.bf16.mxu0 0
    %10616 = vmatpush1.bf16.msra.mxu0 %v9831
    %10617 = vmatprep.subr.bf16.mxu0 0
    %10618 = vmatpush1.bf16.msra.mxu0 %v9832
    %10619 = vmatprep.subr.bf16.mxu0 0
    %10620 = vmatpush1.bf16.msra.mxu0 %v9833
    %10621 = vmatprep.subr.bf16.mxu0 0
    %10622 = vmatpush1.bf16.msra.mxu0 %v9834
    %10623 = vmatprep.subr.bf16.mxu0 0
    %10624 = vmatpush1.bf16.msra.mxu0 %v9835
    %10625 = vmatprep.subr.bf16.mxu0 0
    %10626 = vmatpush1.bf16.msra.mxu0 %v9836
    %10627 = vmatprep.subr.bf16.mxu0 0
    %10628 = vmatpush1.bf16.msra.mxu0 %v9837
    %10629 = vmatprep.subr.bf16.mxu0 0
    %10630 = vmatpush1.bf16.msra.mxu0 %v9838
    %10631 = vmatprep.mubr.bf16.mxu0 %v8101
    %10632 = vmatmul.mubr.bf16.gmra.mrb[0].mxu0 %v8100
    %v10633 = vpop.f32.mrb[0].mxu0
    %v10634 = vadd.f32 %v10594, %v10633
    %v10635 = vpop.f32.mrb[0].mxu0
    %v10636 = vpop.f32.mrb[0].mxu0
    %v10637 = vpop.f32.mrb[0].mxu0
    %10638 = vdwg.mxu0
    %10639 = vmatprep.subr.bf16.mxu0 0
    %10640 = vmatpush1.bf16.msra.mxu0 %v9839
    %10641 = vmatprep.subr.bf16.mxu0 0
    %10642 = vmatpush1.bf16.msra.mxu0 %v9840
    %10643 = vmatprep.subr.bf16.mxu0 0
    %10644 = vmatpush1.bf16.msra.mxu0 %v9841
    %10645 = vmatprep.subr.bf16.mxu0 0
    %10646 = vmatpush1.bf16.msra.mxu0 %v9842
    %10647 = vmatprep.subr.bf16.mxu0 0
    %10648 = vmatpush1.bf16.msra.mxu0 %v9843
    %10649 = vmatprep.subr.bf16.mxu0 0
    %10650 = vmatpush1.bf16.msra.mxu0 %v9844
    %10651 = vmatprep.subr.bf16.mxu0 0
    %10652 = vmatpush1.bf16.msra.mxu0 %v9845
    %10653 = vmatprep.subr.bf16.mxu0 0
    %10654 = vmatpush1.bf16.msra.mxu0 %v9846
    %10655 = vmatprep.subr.bf16.mxu0 0
    %10656 = vmatpush1.bf16.msra.mxu0 %v9847
    %10657 = vmatprep.subr.bf16.mxu0 0
    %10658 = vmatpush1.bf16.msra.mxu0 %v9848
    %10659 = vmatprep.subr.bf16.mxu0 0
    %10660 = vmatpush1.bf16.msra.mxu0 %v9849
    %10661 = vmatprep.subr.bf16.mxu0 0
    %10662 = vmatpush1.bf16.msra.mxu0 %v9850
    %10663 = vmatprep.subr.bf16.mxu0 0
    %10664 = vmatpush1.bf16.msra.mxu0 %v9851
    %10665 = vmatprep.subr.bf16.mxu0 0
    %10666 = vmatpush1.bf16.msra.mxu0 %v9852
    %10667 = vmatprep.subr.bf16.mxu0 0
    %10668 = vmatpush1.bf16.msra.mxu0 %v9853
    %10669 = vmatprep.subr.bf16.mxu0 0
    %10670 = vmatpush1.bf16.msra.mxu0 %v9854
    %10671 = vmatprep.mubr.bf16.mxu0 %v8103
    %10672 = vmatmul.mubr.bf16.gmra.mrb[0].mxu0 %v8102
    %v10673 = vpop.f32.mrb[0].mxu0
    %v10674 = vadd.f32 %v10634, %v10673
    %v10675 = vpop.f32.mrb[0].mxu0
    %v10676 = vpop.f32.mrb[0].mxu0
    %v10677 = vpop.f32.mrb[0].mxu0
    %10678 = vdwg.mxu0
    %10679 = vmatprep.subr.bf16.mxu0 0
    %10680 = vmatpush1.bf16.msra.mxu0 %v9855
    %10681 = vmatprep.subr.bf16.mxu0 0
    %10682 = vmatpush1.bf16.msra.mxu0 %v9856
    %10683 = vmatprep.subr.bf16.mxu0 0
    %10684 = vmatpush1.bf16.msra.mxu0 %v9857
    %10685 = vmatprep.subr.bf16.mxu0 0
    %10686 = vmatpush1.bf16.msra.mxu0 %v9858
    %10687 = vmatprep.subr.bf16.mxu0 0
    %10688 = vmatpush1.bf16.msra.mxu0 %v9859
    %10689 = vmatprep.subr.bf16.mxu0 0
    %10690 = vmatpush1.bf16.msra.mxu0 %v9860
    %10691 = vmatprep.subr.bf16.mxu0 0
    %10692 = vmatpush1.bf16.msra.mxu0 %v9861
    %10693 = vmatprep.subr.bf16.mxu0 0
    %10694 = vmatpush1.bf16.msra.mxu0 %v9862
    %10695 = vmatprep.subr.bf16.mxu0 0
    %10696 = vmatpush1.bf16.msra.mxu0 %v9863
    %10697 = vmatprep.subr.bf16.mxu0 0
    %10698 = vmatpush1.bf16.msra.mxu0 %v9864
    %10699 = vmatprep.subr.bf16.mxu0 0
    %10700 = vmatpush1.bf16.msra.mxu0 %v9865
    %10701 = vmatprep.subr.bf16.mxu0 0
    %10702 = vmatpush1.bf16.msra.mxu0 %v9866
    %10703 = vmatprep.subr.bf16.mxu0 0
    %10704 = vmatpush1.bf16.msra.mxu0 %v9867
    %10705 = vmatprep.subr.bf16.mxu0 0
    %10706 = vmatpush1.bf16.msra.mxu0 %v9868
    %10707 = vmatprep.subr.bf16.mxu0 0
    %10708 = vmatpush1.bf16.msra.mxu0 %v9869
    %10709 = vmatprep.subr.bf16.mxu0 0
    %10710 = vmatpush1.bf16.msra.mxu0 %v9870
    %10711 = vmatprep.mubr.bf16.mxu0 %v8105
    %10712 = vmatmul.mubr.bf16.gmra.mrb[0].mxu0 %v8104
    %v10713 = vpop.f32.mrb[0].mxu0
    %v10714 = vadd.f32 %v10674, %v10713
    %v10715 = vpop.f32.mrb[0].mxu0
    %v10716 = vpop.f32.mrb[0].mxu0
    %v10717 = vpop.f32.mrb[0].mxu0
    %10718 = vdwg.mxu0
    %10719 = vmatprep.subr.bf16.mxu0 0
    %10720 = vmatpush1.bf16.msra.mxu0 %v9871
    %10721 = vmatprep.subr.bf16.mxu0 0
    %10722 = vmatpush1.bf16.msra.mxu0 %v9872
    %10723 = vmatprep.subr.bf16.mxu0 0
    %10724 = vmatpush1.bf16.msra.mxu0 %v9873
    %10725 = vmatprep.subr.bf16.mxu0 0
    %10726 = vmatpush1.bf16.msra.mxu0 %v9874
    %10727 = vmatprep.subr.bf16.mxu0 0
    %10728 = vmatpush1.bf16.msra.mxu0 %v9875
    %10729 = vmatprep.subr.bf16.mxu0 0
    %10730 = vmatpush1.bf16.msra.mxu0 %v9876
    %10731 = vmatprep.subr.bf16.mxu0 0
    %10732 = vmatpush1.bf16.msra.mxu0 %v9877
    %10733 = vmatprep.subr.bf16.mxu0 0
    %10734 = vmatpush1.bf16.msra.mxu0 %v9878
    %10735 = vmatprep.subr.bf16.mxu0 0
    %10736 = vmatpush1.bf16.msra.mxu0 %v9879
    %10737 = vmatprep.subr.bf16.mxu0 0
    %10738 = vmatpush1.bf16.msra.mxu0 %v9880
    %10739 = vmatprep.subr.bf16.mxu0 0
    %10740 = vmatpush1.bf16.msra.mxu0 %v9881
    %10741 = vmatprep.subr.bf16.mxu0 0
    %10742 = vmatpush1.bf16.msra.mxu0 %v9882
    %10743 = vmatprep.subr.bf16.mxu0 0
    %10744 = vmatpush1.bf16.msra.mxu0 %v9883
    %10745 = vmatprep.subr.bf16.mxu0 0
    %10746 = vmatpush1.bf16.msra.mxu0 %v9884
    %10747 = vmatprep.subr.bf16.mxu0 0
    %10748 = vmatpush1.bf16.msra.mxu0 %v9885
    %10749 = vmatprep.subr.bf16.mxu0 0
    %10750 = vmatpush1.bf16.msra.mxu0 %v9886
    %10751 = vmatprep.mubr.bf16.mxu0 %v8107
    %10752 = vmatmul.mubr.bf16.gmra.mrb[0].mxu0 %v8106
    %v10753 = vpop.f32.mrb[0].mxu0
    %v10754 = vadd.f32 %v10714, %v10753
    %v10755 = vpop.f32.mrb[0].mxu0
    %v10756 = vpop.f32.mrb[0].mxu0
    %v10757 = vpop.f32.mrb[0].mxu0
    %10758 = vdwg.mxu0
    %10759 = vmatprep.subr.bf16.mxu0 0
    %10760 = vmatpush1.bf16.msra.mxu0 %v9887
    %10761 = vmatprep.subr.bf16.mxu0 0
    %10762 = vmatpush1.bf16.msra.mxu0 %v9888
    %10763 = vmatprep.subr.bf16.mxu0 0
    %10764 = vmatpush1.bf16.msra.mxu0 %v9889
    %10765 = vmatprep.subr.bf16.mxu0 0
    %10766 = vmatpush1.bf16.msra.mxu0 %v9890
    %10767 = vmatprep.subr.bf16.mxu0 0
    %10768 = vmatpush1.bf16.msra.mxu0 %v9891
    %10769 = vmatprep.subr.bf16.mxu0 0
    %10770 = vmatpush1.bf16.msra.mxu0 %v9892
    %10771 = vmatprep.subr.bf16.mxu0 0
    %10772 = vmatpush1.bf16.msra.mxu0 %v9893
    %10773 = vmatprep.subr.bf16.mxu0 0
    %10774 = vmatpush1.bf16.msra.mxu0 %v9894
    %10775 = vmatprep.subr.bf16.mxu0 0
    %10776 = vmatpush1.bf16.msra.mxu0 %v9895
    %10777 = vmatprep.subr.bf16.mxu0 0
    %10778 = vmatpush1.bf16.msra.mxu0 %v9896
    %10779 = vmatprep.subr.bf16.mxu0 0
    %10780 = vmatpush1.bf16.msra.mxu0 %v9897
    %10781 = vmatprep.subr.bf16.mxu0 0
    %10782 = vmatpush1.bf16.msra.mxu0 %v9898
    %10783 = vmatprep.subr.bf16.mxu0 0
    %10784 = vmatpush1.bf16.msra.mxu0 %v9899
    %10785 = vmatprep.subr.bf16.mxu0 0
    %10786 = vmatpush1.bf16.msra.mxu0 %v9900
    %10787 = vmatprep.subr.bf16.mxu0 0
    %10788 = vmatpush1.bf16.msra.mxu0 %v9901
    %10789 = vmatprep.subr.bf16.mxu0 0
    %10790 = vmatpush1.bf16.msra.mxu0 %v9902
    %10791 = vmatprep.mubr.bf16.mxu0 %v8109
    %10792 = vmatmul.mubr.bf16.gmra.mrb[0].mxu0 %v8108
    %v10793 = vpop.f32.mrb[0].mxu0
    %v10794 = vadd.f32 %v10754, %v10793
    %v10795 = vpop.f32.mrb[0].mxu0
    %v10796 = vpop.f32.mrb[0].mxu0
    %v10797 = vpop.f32.mrb[0].mxu0
    %10798 = vdwg.mxu0
    %v10799 = vmax.f32 %v10794, 0.0
    %v10800 = vld [vmem:[%s12] sm:$0xff]
    %v10801 = vld [vmem:[%s12 + $0x8] sm:$0xff]
    %v10802 = vld [vmem:[%s12 + $0x10] sm:$0xff]
    %v10803 = vld [vmem:[%s12 + $0x18] sm:$0xff]
    %v10804 = vld [vmem:[%s12 + $0x20] sm:$0xff]
    %v10805 = vld [vmem:[%s12 + $0x28] sm:$0xff]
    %v10806 = vld [vmem:[%s12 + $0x30] sm:$0xff]
    %v10807 = vld [vmem:[%s12 + $0x38] sm:$0xff]
    %v10808 = vld [vmem:[%s12 + $0x40] sm:$0xff]
    %v10809 = vld [vmem:[%s12 + $0x48] sm:$0xff]
    %v10810 = vld [vmem:[%s12 + $0x50] sm:$0xff]
    %v10811 = vld [vmem:[%s12 + $0x58] sm:$0xff]
    %v10812 = vld [vmem:[%s12 + $0x60] sm:$0xff]
    %v10813 = vld [vmem:[%s12 + $0x68] sm:$0xff]
    %v10814 = vld [vmem:[%s12 + $0x70] sm:$0xff]
    %v10815 = vld [vmem:[%s12 + $0x78] sm:$0xff]
    %v10816 = vld [vmem:[%s13] sm:$0x1]
    %10817 = vmatprep.subr.mxu0 0.0
    %10818 = vmatpush1.msra.mxu0 %v10800
    %10819 = vmatprep.subr.mxu0 0.0
    %10820 = vmatpush1.msra.mxu0 %v10801
    %10821 = vmatprep.subr.mxu0 0.0
    %10822 = vmatpush1.msra.mxu0 %v10802
    %10823 = vmatprep.subr.mxu0 0.0
    %10824 = vmatpush1.msra.mxu0 %v10803
    %10825 = vmatprep.subr.mxu0 0.0
    %10826 = vmatpush1.msra.mxu0 %v10804
    %10827 = vmatprep.subr.mxu0 0.0
    %10828 = vmatpush1.msra.mxu0 %v10805
    %10829 = vmatprep.subr.mxu0 0.0
    %10830 = vmatpush1.msra.mxu0 %v10806
    %10831 = vmatprep.subr.mxu0 0.0
    %10832 = vmatpush1.msra.mxu0 %v10807
    %10833 = vmatprep.subr.mxu0 0.0
    %10834 = vmatpush1.msra.mxu0 %v10808
    %10835 = vmatprep.subr.mxu0 0.0
    %10836 = vmatpush1.msra.mxu0 %v10809
    %10837 = vmatprep.subr.mxu0 0.0
    %10838 = vmatpush1.msra.mxu0 %v10810
    %10839 = vmatprep.subr.mxu0 0.0
    %10840 = vmatpush1.msra.mxu0 %v10811
    %10841 = vmatprep.subr.mxu0 0.0
    %10842 = vmatpush1.msra.mxu0 %v10812
    %10843 = vmatprep.subr.mxu0 0.0
    %10844 = vmatpush1.msra.mxu0 %v10813
    %10845 = vmatprep.subr.mxu0 0.0
    %10846 = vmatpush1.msra.mxu0 %v10814
    %10847 = vmatprep.subr.mxu0 0.0
    %10848 = vmatpush1.msra.mxu0 %v10815
    %10849 = vmatprep.subr.mxu0 0.0
    %10850 = vmatpush1.msra.mxu0 0.0
    %10851 = vmatprep.subr.mxu0 0.0
    %10852 = vmatpush1.msra.mxu0 0.0
    %10853 = vmatprep.subr.mxu0 0.0
    %10854 = vmatpush1.msra.mxu0 0.0
    %10855 = vmatprep.subr.mxu0 0.0
    %10856 = vmatpush1.msra.mxu0 0.0
    %10857 = vmatprep.subr.mxu0 0.0
    %10858 = vmatpush1.msra.mxu0 0.0
    %10859 = vmatprep.subr.mxu0 0.0
    %10860 = vmatpush1.msra.mxu0 0.0
    %10861 = vmatprep.subr.mxu0 0.0
    %10862 = vmatpush1.msra.mxu0 0.0
    %10863 = vmatprep.subr.mxu0 0.0
    %10864 = vmatpush1.msra.mxu0 0.0
    %10865 = vmatprep.subr.mxu0 0.0
    %10866 = vmatpush1.msra.mxu0 0.0
    %10867 = vmatprep.subr.mxu0 0.0
    %10868 = vmatpush1.msra.mxu0 0.0
    %10869 = vmatprep.subr.mxu0 0.0
    %10870 = vmatpush1.msra.mxu0 0.0
    %10871 = vmatprep.subr.mxu0 0.0
    %10872 = vmatpush1.msra.mxu0 0.0
    %10873 = vmatprep.subr.mxu0 0.0
    %10874 = vmatpush1.msra.mxu0 0.0
    %10875 = vmatprep.subr.mxu0 0.0
    %10876 = vmatpush1.msra.mxu0 0.0
    %10877 = vmatprep.subr.mxu0 0.0
    %10878 = vmatpush1.msra.mxu0 0.0
    %10879 = vmatprep.subr.mxu0 0.0
    %10880 = vmatpush1.msra.mxu0 0.0
    %10881 = vmatprep.mubr.f32.mxu0 0.0
    %10882 = vmatmul.mubr.f32.gmra.mrb[0].mxu0 %v10799
    %v10883 = vpop.f32.mrb[0].mxu0
    %v10884 = vadd.f32 %v10816, %v10883
    %v10885 = vpop.f32.mrb[0].mxu0
    %10886 = vdwg.mxu0
    %v10887 = vmax.f32 %v10884, 0.0
    %v10888 = vld [vmem:[%s14] sm:$0x3]
    %v10889 = vld [vmem:[%s15] sm:$0x3]
    %v10890 = vrot.slane %v4980, 1
    %v10891 = vsel %vm7855, %v10890, 0
    %v10894 = vsel %vm7859, %v10889, 0
    %10896 = vmatprep.subr.mxu0 0.0
    %10897 = vmatpush1.msra.mxu0 %v10894
    %10898 = vmatprep.subr.mxu0 0.0
    %10899 = vmatpush1.msra.mxu0 0.0
    %10900 = vmatprep.subr.mxu0 0.0
    %10901 = vmatpush1.msra.mxu0 0.0
    %10902 = vmatprep.subr.mxu0 0.0
    %10903 = vmatpush1.msra.mxu0 0.0
    %10904 = vmatprep.subr.mxu0 0.0
    %10905 = vmatpush1.msra.mxu0 0.0
    %10906 = vmatprep.subr.mxu0 0.0
    %10907 = vmatpush1.msra.mxu0 0.0
    %10908 = vmatprep.subr.mxu0 0.0
    %10909 = vmatpush1.msra.mxu0 0.0
    %10910 = vmatprep.subr.mxu0 0.0
    %10911 = vmatpush1.msra.mxu0 0.0
    %10912 = vmatprep.subr.mxu0 0.0
    %10913 = vmatpush1.msra.mxu0 0.0
    %10914 = vmatprep.subr.mxu0 0.0
    %10915 = vmatpush1.msra.mxu0 0.0
    %10916 = vmatprep.subr.mxu0 0.0
    %10917 = vmatpush1.msra.mxu0 0.0
    %10918 = vmatprep.subr.mxu0 0.0
    %10919 = vmatpush1.msra.mxu0 0.0
    %10920 = vmatprep.subr.mxu0 0.0
    %10921 = vmatpush1.msra.mxu0 0.0
    %10922 = vmatprep.subr.mxu0 0.0
    %10923 = vmatpush1.msra.mxu0 0.0
    %10924 = vmatprep.subr.mxu0 0.0
    %10925 = vmatpush1.msra.mxu0 0.0
    %10926 = vmatprep.subr.mxu0 0.0
    %10927 = vmatpush1.msra.mxu0 0.0
    %10928 = vmatprep.subr.mxu0 0.0
    %10929 = vmatpush1.msra.mxu0 0.0
    %10930 = vmatprep.subr.mxu0 0.0
    %10931 = vmatpush1.msra.mxu0 0.0
    %10932 = vmatprep.subr.mxu0 0.0
    %10933 = vmatpush1.msra.mxu0 0.0
    %10934 = vmatprep.subr.mxu0 0.0
    %10935 = vmatpush1.msra.mxu0 0.0
    %10936 = vmatprep.subr.mxu0 0.0
    %10937 = vmatpush1.msra.mxu0 0.0
    %10938 = vmatprep.subr.mxu0 0.0
    %10939 = vmatpush1.msra.mxu0 0.0
    %10940 = vmatprep.subr.mxu0 0.0
    %10941 = vmatpush1.msra.mxu0 0.0
    %10942 = vmatprep.subr.mxu0 0.0
    %10943 = vmatpush1.msra.mxu0 0.0
    %10944 = vmatprep.subr.mxu0 0.0
    %10945 = vmatpush1.msra.mxu0 0.0
    %10946 = vmatprep.subr.mxu0 0.0
    %10947 = vmatpush1.msra.mxu0 0.0
    %10948 = vmatprep.subr.mxu0 0.0
    %10949 = vmatpush1.msra.mxu0 0.0
    %10950 = vmatprep.subr.mxu0 0.0
    %10951 = vmatpush1.msra.mxu0 0.0
    %10952 = vmatprep.subr.mxu0 0.0
    %10953 = vmatpush1.msra.mxu0 0.0
    %10954 = vmatprep.subr.mxu0 0.0
    %10955 = vmatpush1.msra.mxu0 0.0
    %10956 = vmatprep.subr.mxu0 0.0
    %10957 = vmatpush1.msra.mxu0 0.0
    %10958 = vmatprep.subr.mxu0 0.0
    %10959 = vmatpush1.msra.mxu0 0.0
    %10960 = vmatprep.mubr.f32.mxu0 0.0
    %10961 = vmatmul.mubr.f32.gmra.mrb[0].mxu0 %v10891
    %v10962 = vpop.f32.mrb[0].mxu0
    %v10963 = vadd.f32 0.0, %v10962
    %v10964 = vpop.f32.mrb[0].mxu0
    %10965 = vdwg.mxu0
    %v10967 = vsel %vm7855, %v10887, 0
    %v10970 = vsel %vm7859, %v10888, 0
    %10972 = vmatprep.subr.mxu0 0.0
    %10973 = vmatpush1.msra.mxu0 %v10970
    %10974 = vmatprep.subr.mxu0 0.0
    %10975 = vmatpush1.msra.mxu0 0.0
    %10976 = vmatprep.subr.mxu0 0.0
    %10977 = vmatpush1.msra.mxu0 0.0
    %10978 = vmatprep.subr.mxu0 0.0
    %10979 = vmatpush1.msra.mxu0 0.0
    %10980 = vmatprep.subr.mxu0 0.0
    %10981 = vmatpush1.msra.mxu0 0.0
    %10982 = vmatprep.subr.mxu0 0.0
    %10983 = vmatpush1.msra.mxu0 0.0
    %10984 = vmatprep.subr.mxu0 0.0
    %10985 = vmatpush1.msra.mxu0 0.0
    %10986 = vmatprep.subr.mxu0 0.0
    %10987 = vmatpush1.msra.mxu0 0.0
    %10988 = vmatprep.subr.mxu0 0.0
    %10989 = vmatpush1.msra.mxu0 0.0
    %10990 = vmatprep.subr.mxu0 0.0
    %10991 = vmatpush1.msra.mxu0 0.0
    %10992 = vmatprep.subr.mxu0 0.0
    %10993 = vmatpush1.msra.mxu0 0.0
    %10994 = vmatprep.subr.mxu0 0.0
    %10995 = vmatpush1.msra.mxu0 0.0
    %10996 = vmatprep.subr.mxu0 0.0
    %10997 = vmatpush1.msra.mxu0 0.0
    %10998 = vmatprep.subr.mxu0 0.0
    %10999 = vmatpush1.msra.mxu0 0.0
    %11000 = vmatprep.subr.mxu0 0.0
    %11001 = vmatpush1.msra.mxu0 0.0
    %11002 = vmatprep.subr.mxu0 0.0
    %11003 = vmatpush1.msra.mxu0 0.0
    %11004 = vmatprep.subr.mxu0 0.0
    %11005 = vmatpush1.msra.mxu0 0.0
    %11006 = vmatprep.subr.mxu0 0.0
    %11007 = vmatpush1.msra.mxu0 0.0
    %11008 = vmatprep.subr.mxu0 0.0
    %11009 = vmatpush1.msra.mxu0 0.0
    %11010 = vmatprep.subr.mxu0 0.0
    %11011 = vmatpush1.msra.mxu0 0.0
    %11012 = vmatprep.subr.mxu0 0.0
    %11013 = vmatpush1.msra.mxu0 0.0
    %11014 = vmatprep.subr.mxu0 0.0
    %11015 = vmatpush1.msra.mxu0 0.0
    %11016 = vmatprep.subr.mxu0 0.0
    %11017 = vmatpush1.msra.mxu0 0.0
    %11018 = vmatprep.subr.mxu0 0.0
    %11019 = vmatpush1.msra.mxu0 0.0
    %11020 = vmatprep.subr.mxu0 0.0
    %11021 = vmatpush1.msra.mxu0 0.0
    %11022 = vmatprep.subr.mxu0 0.0
    %11023 = vmatpush1.msra.mxu0 0.0
    %11024 = vmatprep.subr.mxu0 0.0
    %11025 = vmatpush1.msra.mxu0 0.0
    %11026 = vmatprep.subr.mxu0 0.0
    %11027 = vmatpush1.msra.mxu0 0.0
    %11028 = vmatprep.subr.mxu0 0.0
    %11029 = vmatpush1.msra.mxu0 0.0
    %11030 = vmatprep.subr.mxu0 0.0
    %11031 = vmatpush1.msra.mxu0 0.0
    %11032 = vmatprep.subr.mxu0 0.0
    %11033 = vmatpush1.msra.mxu0 0.0
    %11034 = vmatprep.subr.mxu0 0.0
    %11035 = vmatpush1.msra.mxu0 0.0
    %11036 = vmatprep.mubr.f32.mxu0 0.0
    %11037 = vmatmul.mubr.f32.gmra.mrb[0].mxu0 %v10967
    %v11038 = vpop.f32.mrb[0].mxu0
    %v11039 = vadd.f32 %v10963, %v11038
    %v11040 = vpop.f32.mrb[0].mxu0
    %11041 = vdwg.mxu0
    %v11042 = vld [vmem:[%s16] sm:$0x1]
    %v11043 = vadd.f32 %v11039, %v11042
    %v11044 = vmax.f32 %v11043, 0.0
    %11046 = vrot.lane.b32.xlu0 %v11044, 2
    %v11047 = vpop.permute.xlu0 %11046
    %11049 = vst.msk [vmem:[%s17 + $0x1] sm:$0x1] %vm8016, %v11047
    // Predicated region
    $region74: #{forward.1} parent=1 // pred_check
      _
    $region75: #{forward.1} parent=1 // pred_check_branch
      %11051 = sbr.rel (0) target = $region77
    $region76: #{forward.1} parent=1 // pred_region
      _
    $region77: #{forward.1} parent=1 // pred_fallthru
      _
    // Predicated region
    $region78: #{forward.1} parent=1 // pred_check
      _
    $region79: #{forward.1} parent=1 // pred_check_branch
      %11053 = sbr.rel (0) target = $region81
    $region80: #{forward.1} parent=1 // pred_region
      _
    $region81: #{forward.1} parent=1 // pred_fallthru
      _
    %11054 = vsyncpa [#allocation4], 1

</llo_original>
